<compile_context>
chip_gen: v5e
topology: v5e:2x2
jax: 0.10.0
libtpu: 0.0.40
codegen_flags: <defaults>
</compile_context>

<pallas_src>
import functools
import math

import jax
import jax.numpy as jnp
from jax.experimental import pallas as pl
from jax.experimental.pallas import tpu as pltpu


_VMEM_LIMIT = 32 * 1024 * 1024  # raise v5e's 16 MiB scoped default; safe on v6e/v7x


def _round_up(x, m):
    return ((x + m - 1) // m) * m


def _pick_row_tile(h):
    """Largest even divisor of H giving >= 2 row tiles (pipelining / megacore)."""
    for cand in (64, 32, 16, 8, 4, 2):
        if h % cand == 0 and h // cand >= 2:
            return cand
    raise ValueError(f"H={h} needs an even divisor with at least 2 row tiles")


# ---------------------------------------------------------------------------
# Kernel A: fused SpatialResBlock (conv3x3 -> ReLU -> conv3x3, + residual)
#           + partial sums for the spectral SE global-average pool.
# ---------------------------------------------------------------------------
def _spatial_kernel(main_ref, top_ref, bot_ref,
                    w1_ref, b1_ref, w2_ref, b2_ref, w3_ref, b3_ref,
                    y_ref, psum_ref,
                    xh_ref, t_ref, psum_sc,
                    *, tr, wp, width, height, res_scale):
    f32 = jnp.float32
    c = main_ref.shape[-1]
    i = pl.program_id(1)

    lx = (tr + 4) * wp          # stitched halo'd input rows (flattened)
    lt = (tr + 2) * wp          # intermediate t rows (flattened)
    ly = tr * wp                # output rows (flattened)

    # ---- stage halo'd input into VMEM scratch (8-pixel bumpers both sides) --
    zeros8 = jnp.zeros((8, c), jnp.bfloat16)
    xh_ref[0:8, :] = zeros8
    xh_ref[8 + lx:16 + lx, :] = zeros8
    xh_ref[8:8 + 2 * wp, :] = top_ref[...]
    xh_ref[8 + 2 * wp:8 + 2 * wp + ly, :] = main_ref[...]
    xh_ref[8 + 2 * wp + ly:8 + lx, :] = bot_ref[...]

    # ---- conv1 (3x3) as 9 shifted-slice matmuls, f32 accumulation -----------
    acc_t = jnp.zeros((lt, c), f32)
    for ky in range(3):
        for kx in range(3):
            off = 8 + ky * wp + kx - 1
            acc_t = acc_t + jnp.dot(xh_ref[off:off + lt, :],
                                    w1_ref[ky * 3 + kx],
                                    preferred_element_type=f32)
    tval = jnp.maximum(acc_t + b1_ref[...], 0.0)

    # validity masks: column mask computed once, reused for the output window
    pos = jax.lax.broadcasted_iota(jnp.int32, (lt, c), 0).astype(f32)
    row = jnp.floor((pos + 0.5) * (1.0 / wp))
    col = pos - row * wp
    col_ok = (col > 0.5) & (col < width + 0.5)
    img_row = row + (i * tr - 1).astype(f32)
    valid_t = col_ok & (img_row > -0.5) & (img_row < height - 0.5)
    tval = jnp.where(valid_t, tval, 0.0)

    t_ref[0:8, :] = zeros8
    t_ref[8 + lt:16 + lt, :] = zeros8
    t_ref[8:8 + lt, :] = tval.astype(jnp.bfloat16)

    # ---- conv2 (3x3) + res_scale + residual ----------------------------------
    acc_y = jnp.zeros((ly, c), f32)
    for ky in range(3):
        for kx in range(3):
            off = 8 + ky * wp + kx - 1
            acc_y = acc_y + jnp.dot(t_ref[off:off + ly, :],
                                    w2_ref[ky * 3 + kx],
                                    preferred_element_type=f32)
    valid_c = col_ok[wp:wp + ly, :]          # wp is a multiple of 8 -> aligned
    yval = jnp.where(valid_c, (acc_y + b2_ref[...]) * res_scale, 0.0)

    out = yval + main_ref[...].astype(f32)
    y_ref[...] = out.astype(y_ref.dtype)

    # ---- partial sums of relu(out @ w3 + b3) over valid pixels (SE pool) -----
    q = jnp.dot(out.astype(jnp.bfloat16), w3_ref[...],
                preferred_element_type=f32) + b3_ref[...]
    q = jnp.where(valid_c, jnp.maximum(q, 0.0), 0.0)
    part = jnp.sum(q, axis=0, keepdims=True)            # (1, C) f32

    @pl.when(i == 0)
    def _():
        psum_sc[...] = jnp.zeros_like(psum_sc)

    psum_sc[...] += part
    psum_ref[...] = psum_sc[...]


# ---------------------------------------------------------------------------
# Kernel B: fused SpectralAttentionResBlock (1x1 convs + CALayer gate + res),
#           row-tiled, consuming the pre-pooled sums from kernel A.  Pad tiles
#           (first/last row blocks) are written as zeros so the output is in
#           the zero-padded layout the next spatial kernel reads directly.
# ---------------------------------------------------------------------------
def _spectral_kernel(y_ref, psum_ref,
                     w3_ref, b3_ref, w4_ref, b4_ref,
                     wd_ref, bd_ref, wu_ref, bu_ref,
                     o_ref,
                     *, wp, width, height):
    f32 = jnp.float32
    j = pl.program_id(1)
    is_pad = jnp.logical_or(j == 0, j == pl.num_programs(1) - 1)

    @pl.when(is_pad)
    def _():
        o_ref[...] = jnp.zeros_like(o_ref)

    @pl.when(jnp.logical_not(is_pad))
    def _():
        y = y_ref[...]                                       # (tr*wp, C) bf16

        # SE gate from pooled sums: mean(z) = (sum relu(y w3 + b3))/HW @ w4 + b4
        s = psum_ref[0:1, :] * (1.0 / (height * width))      # (1, C) f32
        sz = jnp.dot(s, w4_ref[...].astype(f32),
                     preferred_element_type=f32) + b4_ref[...]
        d = jnp.maximum(jnp.dot(sz, wd_ref[...],
                                preferred_element_type=f32) + bd_ref[...], 0.0)
        u = jax.nn.sigmoid(jnp.dot(d, wu_ref[...],
                                   preferred_element_type=f32) + bu_ref[...])

        z = jnp.maximum(jnp.dot(y, w3_ref[...],
                                preferred_element_type=f32) + b3_ref[...], 0.0)
        z = jnp.dot(z.astype(jnp.bfloat16), w4_ref[...],
                    preferred_element_type=f32) + b4_ref[...]
        out = z * u + y.astype(f32)

        # keep zero padding columns exactly zero for the next spatial kernel
        pos = jax.lax.broadcasted_iota(jnp.int32, out.shape, 0).astype(f32)
        row = jnp.floor((pos + 0.5) * (1.0 / wp))
        col = pos - row * wp
        valid_c = (col > 0.5) & (col < width + 0.5)
        out = jnp.where(valid_c, out, 0.0)
        o_ref[...] = out.astype(o_ref.dtype)


# ---------------------------------------------------------------------------
# pallas_call wrappers
# ---------------------------------------------------------------------------
def _spatial_call(xp_flat, kp, *, n, h, w, c, tr, wp, res_scale):
    n_tiles = h // tr
    half = tr // 2
    kernel = functools.partial(_spatial_kernel, tr=tr, wp=wp, width=w, height=h,
                               res_scale=res_scale)
    return pl.pallas_call(
        kernel,
        out_shape=(jax.ShapeDtypeStruct((n, h * wp, c), jnp.bfloat16),
                   jax.ShapeDtypeStruct((n, 8, c), jnp.float32)),
        grid_spec=pltpu.PrefetchScalarGridSpec(
            num_scalar_prefetch=0,
            grid=(n, n_tiles),
            in_specs=[
                # main row tile (padded rows [ (i+1)*tr , (i+2)*tr ))
                pl.BlockSpec((None, tr * wp, c), lambda b, i: (b, i + 1, 0)),
                # 2-row halo above / below the tile
                pl.BlockSpec((None, 2 * wp, c),
                             lambda b, i: (b, (i + 1) * half - 1, 0)),
                pl.BlockSpec((None, 2 * wp, c),
                             lambda b, i: (b, (i + 2) * half, 0)),
                pl.BlockSpec((9, c, c), lambda b, i: (0, 0, 0)),   # w1
                pl.BlockSpec((1, c), lambda b, i: (0, 0)),         # b1
                pl.BlockSpec((9, c, c), lambda b, i: (0, 0, 0)),   # w2
                pl.BlockSpec((1, c), lambda b, i: (0, 0)),         # b2
                pl.BlockSpec((c, c), lambda b, i: (0, 0)),         # w3
                pl.BlockSpec((1, c), lambda b, i: (0, 0)),         # b3
            ],
            out_specs=(
                pl.BlockSpec((None, tr * wp, c), lambda b, i: (b, i, 0)),
                pl.BlockSpec((None, 8, c), lambda b, i: (b, 0, 0)),
            ),
            scratch_shapes=[
                pltpu.VMEM(((tr + 4) * wp + 16, c), jnp.bfloat16),
                pltpu.VMEM(((tr + 2) * wp + 16, c), jnp.bfloat16),
                pltpu.VMEM((8, c), jnp.float32),
            ],
        ),
        compiler_params=pltpu.CompilerParams(
            dimension_semantics=("parallel", "arbitrary"),
            vmem_limit_bytes=_VMEM_LIMIT),
    )(xp_flat, xp_flat, xp_flat,
      kp["w1"], kp["b1"], kp["w2"], kp["b2"], kp["w3"], kp["b3"])


def _spectral_call(y_flat, psum, kp, *, n, h, w, c, tr, wp):
    n_tiles = h // tr
    hp = h + 2 * tr
    cr = kp["wd"].shape[-1]
    kernel = functools.partial(_spectral_kernel, wp=wp, width=w, height=h)
    return pl.pallas_call(
        kernel,
        out_shape=jax.ShapeDtypeStruct((n, hp * wp, c), jnp.bfloat16),
        grid_spec=pltpu.PrefetchScalarGridSpec(
            num_scalar_prefetch=0,
            grid=(n, n_tiles + 2),
            in_specs=[
                pl.BlockSpec((None, tr * wp, c),
                             lambda b, j: (b, jnp.clip(j - 1, 0, n_tiles - 1), 0)),
                pl.BlockSpec((None, 8, c), lambda b, j: (b, 0, 0)),
                pl.BlockSpec((c, c), lambda b, j: (0, 0)),    # w3
                pl.BlockSpec((1, c), lambda b, j: (0, 0)),    # b3
                pl.BlockSpec((c, c), lambda b, j: (0, 0)),    # w4
                pl.BlockSpec((1, c), lambda b, j: (0, 0)),    # b4
                pl.BlockSpec((c, cr), lambda b, j: (0, 0)),   # wd
                pl.BlockSpec((1, cr), lambda b, j: (0, 0)),   # bd
                pl.BlockSpec((cr, c), lambda b, j: (0, 0)),   # wu
                pl.BlockSpec((1, c), lambda b, j: (0, 0)),    # bu
            ],
            out_specs=pl.BlockSpec((None, tr * wp, c), lambda b, j: (b, j, 0)),
        ),
        compiler_params=pltpu.CompilerParams(
            dimension_semantics=("parallel", "parallel"),
            vmem_limit_bytes=_VMEM_LIMIT),
    )(y_flat, psum, kp["w3"], kp["b3"], kp["w4"], kp["b4"],
      kp["wd"], kp["bd"], kp["wu"], kp["bu"])


# ---------------------------------------------------------------------------
# Forward pass
# ---------------------------------------------------------------------------
def _prepare_params(p):
    c = p["w3"].shape[0]
    bf16, f32 = jnp.bfloat16, jnp.float32
    return dict(
        w1=p["w1"].reshape(9, c, c).astype(bf16),
        b1=p["b1"].reshape(1, c).astype(f32),
        w2=p["w2"].reshape(9, c, c).astype(bf16),
        b2=p["b2"].reshape(1, c).astype(f32),
        w3=p["w3"].astype(bf16), b3=p["b3"].reshape(1, c).astype(f32),
        w4=p["w4"].astype(bf16), b4=p["b4"].reshape(1, c).astype(f32),
        wd=p["wd"].astype(f32), bd=p["bd"].reshape(1, -1).astype(f32),
        wu=p["wu"].astype(f32), bu=p["bu"].reshape(1, c).astype(f32),
    )


def sspn_forward(x_nchw, params, res_scale=1.0):
    x = jnp.transpose(x_nchw, (0, 2, 3, 1)).astype(jnp.float32)   # NCHW -> NHWC
    n, h, w, c = x.shape
    tr = _pick_row_tile(h)
    wp = _round_up(w + 2, 8)           # padded width, multiple of 8 (alignment)
    hp = h + 2 * tr                    # padded height (tr zero rows each side)
    kparams = [_prepare_params(p) for p in params]

    # zero-padded, row-major flattened activation layout shared by all kernels
    xp = jnp.pad(x.astype(jnp.bfloat16),
                 ((0, 0), (tr, tr), (1, wp - w - 1), (0, 0)))
    xp = xp.reshape(n, hp * wp, c)

    for kp in kparams:
        y_flat, psum = _spatial_call(xp, kp, n=n, h=h, w=w, c=c,
                                     tr=tr, wp=wp, res_scale=res_scale)
        xp = _spectral_call(y_flat, psum, kp, n=n, h=h, w=w, c=c, tr=tr, wp=wp)

    res = xp.reshape(n, hp, wp, c)[:, tr:tr + h, 1:1 + w, :].astype(jnp.float32)
    res = res + x                                   # SSPN residual
    return jnp.transpose(res, (0, 3, 1, 2))         # back to NCHW


# ---------------------------------------------------------------------------
# Deterministic parameter init (shapes follow the PyTorch module)
# ---------------------------------------------------------------------------
def init_params(key, c, n_blocks, reduction=16):
    cr = max(c // reduction, 1)

    def u(k, shape, fan_in):
        bound = 1.0 / math.sqrt(float(fan_in))
        return jax.random.uniform(k, shape, jnp.float32, -bound, bound)

    params = []
    for _ in range(n_blocks):
        key, *ks = jax.random.split(key, 13)
        params.append(dict(
            w1=u(ks[0], (3, 3, c, c), 9 * c), b1=u(ks[1], (c,), 9 * c),
            w2=u(ks[2], (3, 3, c, c), 9 * c), b2=u(ks[3], (c,), 9 * c),
            w3=u(ks[4], (c, c), c), b3=u(ks[5], (c,), c),
            w4=u(ks[6], (c, c), c), b4=u(ks[7], (c,), c),
            wd=u(ks[8], (c, cr), c), bd=u(ks[9], (cr,), c),
            wu=u(ks[10], (cr, c), cr), bu=u(ks[11], (c,), cr),
        ))
    return params


# ---------------------------------------------------------------------------
# Pure-JAX f32 reference (for numerical verification)
# ---------------------------------------------------------------------------
def _ref_conv3x3(x, w4d, b):
    out = jax.lax.conv_general_dilated(
        x, w4d, (1, 1), "SAME", dimension_numbers=("NHWC", "HWIO", "NHWC"))
    return out + b.reshape(1, 1, 1, -1)


def ref_sspn(x_nchw, params, res_scale=1.0):
    x = jnp.transpose(x_nchw, (0, 2, 3, 1))
    res = x
    for p in params:
        t = jnp.maximum(_ref_conv3x3(res, p["w1"], p["b1"]), 0.0)
        y = _ref_conv3x3(t, p["w2"], p["b2"]) * res_scale + res
        z = jnp.maximum(jnp.einsum("nhwc,cd->nhwd", y, p["w3"])
                        + p["b3"].reshape(1, 1, 1, -1), 0.0)
        z = jnp.einsum("nhwc,cd->nhwd", z, p["w4"]) + p["b4"].reshape(1, 1, 1, -1)
        s = jnp.mean(z, axis=(1, 2), keepdims=True)
        d = jnp.maximum(jnp.einsum("nhwc,cd->nhwd", s, p["wd"])
                        + p["bd"].reshape(1, 1, 1, -1), 0.0)
        u = jax.nn.sigmoid(jnp.einsum("nhwc,cd->nhwd", d, p["wu"])
                           + p["bu"].reshape(1, 1, 1, -1))
        res = z * u + y
    res = res + x
    return jnp.transpose(res, (0, 3, 1, 2))


# ---------------------------------------------------------------------------
if __name__ == "__main__":
    N, C, H, W = 2, 32, 16, 16     # C=32 so the SE reduction C//16 stays >= 1
    n_blocks = 2

    key = jax.random.PRNGKey(0)
    kx, kp = jax.random.split(key)
    x = jax.random.normal(kx, (N, C, H, W), jnp.float32)   # NCHW like PyTorch
    params = init_params(kp, C, n_blocks)

    out = jax.jit(lambda a: sspn_forward(a, params))(x)
    out = jax.block_until_ready(out)

    ref = ref_sspn(x, params)
    assert out.shape == x.shape
    err = float(jnp.max(jnp.abs(out - ref)))
    scale = float(jnp.max(jnp.abs(ref)))
    # bf16 matmuls / activations vs f32 reference -> relative tolerance
    if not (err <= 0.04 * scale + 0.05):
        raise AssertionError(f"Pallas output mismatch: max_err={err}, ref_max={scale}")

    print("KERNEL_OK")
</pallas_src>

<mosaic_0001>
module attributes {stable_mosaic.version = 11 : i64} {
  func.func @_spectral_kernel(%arg0: i32, %arg1: i32, %arg2: memref<1x192x32xbf16, #tpu.memory_space<vmem>>, %arg3: memref<1x8x32xf32, #tpu.memory_space<vmem>>, %arg4: memref<32x32xbf16, #tpu.memory_space<vmem>>, %arg5: memref<1x32xf32, #tpu.memory_space<vmem>>, %arg6: memref<32x32xbf16, #tpu.memory_space<vmem>>, %arg7: memref<1x32xf32, #tpu.memory_space<vmem>>, %arg8: memref<32x2xf32, #tpu.memory_space<vmem>>, %arg9: memref<1x2xf32, #tpu.memory_space<vmem>>, %arg10: memref<2x32xf32, #tpu.memory_space<vmem>>, %arg11: memref<1x32xf32, #tpu.memory_space<vmem>>, %arg12: memref<1x192x32xbf16, #tpu.memory_space<vmem>>) attributes {dimension_semantics = [#tpu.dimension_semantics<parallel>, #tpu.dimension_semantics<parallel>], iteration_bounds = array<i64: 2, 4>, scalar_prefetch = 0 : i64, scratch_operands = 0 : i64, tpu.core_type = #tpu.core_type<tc>, window_params = [{transform_indices = @transform_0, window_bounds = array<i64: 1, 192, 32>}, {transform_indices = @transform_1, window_bounds = array<i64: 1, 8, 32>}, {pipeline_mode = #tpu.pipeline_mode<synchronous>, transform_indices = @transform_2, window_bounds = array<i64: 32, 32>}, {pipeline_mode = #tpu.pipeline_mode<synchronous>, transform_indices = @transform_3, window_bounds = array<i64: 1, 32>}, {pipeline_mode = #tpu.pipeline_mode<synchronous>, transform_indices = @transform_4, window_bounds = array<i64: 32, 32>}, {pipeline_mode = #tpu.pipeline_mode<synchronous>, transform_indices = @transform_5, window_bounds = array<i64: 1, 32>}, {pipeline_mode = #tpu.pipeline_mode<synchronous>, transform_indices = @transform_6, window_bounds = array<i64: 32, 2>}, {pipeline_mode = #tpu.pipeline_mode<synchronous>, transform_indices = @transform_7, window_bounds = array<i64: 1, 2>}, {pipeline_mode = #tpu.pipeline_mode<synchronous>, transform_indices = @transform_8, window_bounds = array<i64: 2, 32>}, {pipeline_mode = #tpu.pipeline_mode<synchronous>, transform_indices = @transform_9, window_bounds = array<i64: 1, 32>}, {transform_indices = @transform_10, window_bounds = array<i64: 1, 192, 32>}]} {
    %c0_i32 = arith.constant 0 : i32
    %0 = arith.cmpi eq, %arg1, %c0_i32 : i32
    %c3_i32 = arith.constant 3 : i32
    %1 = arith.cmpi eq, %arg1, %c3_i32 : i32
    %2 = arith.ori %0, %1 : i1
    %3 = arith.extui %2 : i1 to i32
    %c0_i32_0 = arith.constant 0 : i32
    %4 = arith.cmpi ne, %3, %c0_i32_0 : i32
    scf.if %4 {
      %cst = arith.constant 0.000000e+00 : bf16
      %8 = vector.broadcast %cst : bf16 to vector<192x32xbf16>
      %c0 = arith.constant 0 : index
      %c0_2 = arith.constant 0 : index
      %c0_3 = arith.constant 0 : index
      %9 = vector.load %arg12[%c0, %c0_2, %c0_3] : memref<1x192x32xbf16, #tpu.memory_space<vmem>>, vector<1x192x32xbf16>
      %10 = vector.shape_cast %9 : vector<1x192x32xbf16> to vector<192x32xbf16>
      %11 = vector.shape_cast %8 : vector<192x32xbf16> to vector<1x192x32xbf16>
      tpu.vector_store %arg12[%c0, %c0_2, %c0_3], %11 {strides = array<i32>} : memref<1x192x32xbf16, #tpu.memory_space<vmem>>, vector<1x192x32xbf16>,
    } else {
    }
    %true = arith.constant true
    %5 = arith.xori %2, %true : i1
    %6 = arith.extui %5 : i1 to i32
    %c0_i32_1 = arith.constant 0 : i32
    %7 = arith.cmpi ne, %6, %c0_i32_1 : i32
    scf.if %7 {
      %c0 = arith.constant 0 : index
      %c0_2 = arith.constant 0 : index
      %c0_3 = arith.constant 0 : index
      %8 = vector.load %arg2[%c0, %c0_2, %c0_3] : memref<1x192x32xbf16, #tpu.memory_space<vmem>>, vector<1x192x32xbf16>
      %9 = vector.shape_cast %8 : vector<1x192x32xbf16> to vector<192x32xbf16>
      %c0_4 = arith.constant 0 : index
      %c0_5 = arith.constant 0 : index
      %c0_6 = arith.constant 0 : index
      %10 = vector.load %arg3[%c0_4, %c0_5, %c0_6] : memref<1x8x32xf32, #tpu.memory_space<vmem>>, vector<1x1x32xf32>
      %11 = vector.shape_cast %10 : vector<1x1x32xf32> to vector<1x32xf32>
      %cst = arith.constant 3.906250e-03 : f32
      %12 = vector.broadcast %cst : f32 to vector<1x32xf32>
      %13 = arith.mulf %11, %12 : vector<1x32xf32>
      %c0_7 = arith.constant 0 : index
      %c0_8 = arith.constant 0 : index
      %14 = vector.load %arg6[%c0_7, %c0_8] : memref<32x32xbf16, #tpu.memory_space<vmem>>, vector<32x32xbf16>
      %15 = arith.extf %14 : vector<32x32xbf16> to vector<32x32xf32>
      %cst_9 = arith.constant dense<0.000000e+00> : vector<1x32xf32>
      %16 = tpu.matmul %13, %15, %cst_9 {dimension_numbers = #tpu.dot_dimension_numbers<[1], [0], [0], [1], [0, 0, 1, 1], [], []>} : vector<1x32xf32>, vector<32x32xf32>, vector<1x32xf32> -> vector<1x32xf32>
      %c0_10 = arith.constant 0 : index
      %c0_11 = arith.constant 0 : index
      %17 = vector.load %arg7[%c0_10, %c0_11] : memref<1x32xf32, #tpu.memory_space<vmem>>, vector<1x32xf32>
      %18 = arith.addf %16, %17 : vector<1x32xf32>
      %c0_12 = arith.constant 0 : index
      %c0_13 = arith.constant 0 : index
      %19 = vector.load %arg8[%c0_12, %c0_13] : memref<32x2xf32, #tpu.memory_space<vmem>>, vector<32x2xf32>
      %cst_14 = arith.constant dense<0.000000e+00> : vector<1x2xf32>
      %20 = tpu.matmul %18, %19, %cst_14 {dimension_numbers = #tpu.dot_dimension_numbers<[1], [0], [0], [1], [0, 0, 1, 1], [], []>} : vector<1x32xf32>, vector<32x2xf32>, vector<1x2xf32> -> vector<1x2xf32>
      %c0_15 = arith.constant 0 : index
      %c0_16 = arith.constant 0 : index
      %21 = vector.load %arg9[%c0_15, %c0_16] : memref<1x2xf32, #tpu.memory_space<vmem>>, vector<1x2xf32>
      %22 = arith.addf %20, %21 : vector<1x2xf32>
      %cst_17 = arith.constant 0.000000e+00 : f32
      %23 = vector.broadcast %cst_17 : f32 to vector<1x2xf32>
      %24 = arith.maximumf %22, %23 : vector<1x2xf32>
      %c0_18 = arith.constant 0 : index
      %c0_19 = arith.constant 0 : index
      %25 = vector.load %arg10[%c0_18, %c0_19] : memref<2x32xf32, #tpu.memory_space<vmem>>, vector<2x32xf32>
      %cst_20 = arith.constant dense<0.000000e+00> : vector<1x32xf32>
      %26 = tpu.matmul %24, %25, %cst_20 {dimension_numbers = #tpu.dot_dimension_numbers<[1], [0], [0], [1], [0, 0, 1, 1], [], []>} : vector<1x2xf32>, vector<2x32xf32>, vector<1x32xf32> -> vector<1x32xf32>
      %c0_21 = arith.constant 0 : index
      %c0_22 = arith.constant 0 : index
      %27 = vector.load %arg11[%c0_21, %c0_22] : memref<1x32xf32, #tpu.memory_space<vmem>>, vector<1x32xf32>
      %28 = arith.addf %26, %27 : vector<1x32xf32>
      %29 = arith.negf %28 : vector<1x32xf32>
      %30 = math.exp %29 : vector<1x32xf32>
      %cst_23 = arith.constant 1.000000e+00 : f32
      %31 = vector.broadcast %cst_23 : f32 to vector<1x32xf32>
      %32 = arith.addf %31, %30 : vector<1x32xf32>
      %33 = arith.divf %31, %32 : vector<1x32xf32>
      %c0_24 = arith.constant 0 : index
      %c0_25 = arith.constant 0 : index
      %34 = vector.load %arg4[%c0_24, %c0_25] : memref<32x32xbf16, #tpu.memory_space<vmem>>, vector<32x32xbf16>
      %cst_26 = arith.constant dense<0.000000e+00> : vector<192x32xf32>
      %35 = tpu.matmul %9, %34, %cst_26 {dimension_numbers = #tpu.dot_dimension_numbers<[1], [0], [0], [1], [0, 0, 1, 1], [], []>} : vector<192x32xbf16>, vector<32x32xbf16>, vector<192x32xf32> -> vector<192x32xf32>
      %c0_27 = arith.constant 0 : index
      %c0_28 = arith.constant 0 : index
      %36 = vector.load %arg5[%c0_27, %c0_28] : memref<1x32xf32, #tpu.memory_space<vmem>>, vector<1x32xf32>
      %37 = vector.broadcast %36 : vector<1x32xf32> to vector<192x32xf32>
      %38 = arith.addf %35, %37 : vector<192x32xf32>
      %cst_29 = arith.constant 0.000000e+00 : f32
      %39 = vector.broadcast %cst_29 : f32 to vector<192x32xf32>
      %40 = arith.maximumf %38, %39 : vector<192x32xf32>
      %41 = arith.truncf %40 : vector<192x32xf32> to vector<192x32xbf16>
      %c0_30 = arith.constant 0 : index
      %c0_31 = arith.constant 0 : index
      %42 = vector.load %arg6[%c0_30, %c0_31] : memref<32x32xbf16, #tpu.memory_space<vmem>>, vector<32x32xbf16>
      %cst_32 = arith.constant dense<0.000000e+00> : vector<192x32xf32>
      %43 = tpu.matmul %41, %42, %cst_32 {dimension_numbers = #tpu.dot_dimension_numbers<[1], [0], [0], [1], [0, 0, 1, 1], [], []>} : vector<192x32xbf16>, vector<32x32xbf16>, vector<192x32xf32> -> vector<192x32xf32>
      %c0_33 = arith.constant 0 : index
      %c0_34 = arith.constant 0 : index
      %44 = vector.load %arg7[%c0_33, %c0_34] : memref<1x32xf32, #tpu.memory_space<vmem>>, vector<1x32xf32>
      %45 = vector.broadcast %44 : vector<1x32xf32> to vector<192x32xf32>
      %46 = arith.addf %43, %45 : vector<192x32xf32>
      %47 = vector.broadcast %33 : vector<1x32xf32> to vector<192x32xf32>
      %48 = arith.mulf %46, %47 : vector<192x32xf32>
      %49 = arith.extf %9 : vector<192x32xbf16> to vector<192x32xf32>
      %50 = arith.addf %48, %49 : vector<192x32xf32>
      %51 = tpu.iota {dimensions = array<i32: 0>} : vector<192x32xi32>
      %52 = arith.sitofp %51 : vector<192x32xi32> to vector<192x32xf32>
      %cst_35 = arith.constant 5.000000e-01 : f32
      %53 = vector.broadcast %cst_35 : f32 to vector<192x32xf32>
      %54 = arith.addf %52, %53 : vector<192x32xf32>
      %cst_36 = arith.constant 0.0416666679 : f32
      %55 = vector.broadcast %cst_36 : f32 to vector<192x32xf32>
      %56 = arith.mulf %54, %55 : vector<192x32xf32>
      %57 = math.floor %56 : vector<192x32xf32>
      %cst_37 = arith.constant 2.400000e+01 : f32
      %58 = vector.broadcast %cst_37 : f32 to vector<192x32xf32>
      %59 = arith.mulf %57, %58 : vector<192x32xf32>
      %60 = arith.subf %52, %59 : vector<192x32xf32>
      %cst_38 = arith.constant 5.000000e-01 : f32
      %61 = vector.broadcast %cst_38 : f32 to vector<192x32xf32>
      %62 = arith.cmpf ogt, %60, %61 : vector<192x32xf32>
      %cst_39 = arith.constant 1.650000e+01 : f32
      %63 = vector.broadcast %cst_39 : f32 to vector<192x32xf32>
      %64 = arith.cmpf olt, %60, %63 : vector<192x32xf32>
      %65 = arith.andi %62, %64 : vector<192x32xi1>
      %cst_40 = arith.constant 0.000000e+00 : f32
      %66 = vector.broadcast %cst_40 : f32 to vector<192x32xf32>
      %67 = arith.select %65, %50, %66 : vector<192x32xi1>, vector<192x32xf32>
      %68 = arith.truncf %67 : vector<192x32xf32> to vector<192x32xbf16>
      %c0_41 = arith.constant 0 : index
      %c0_42 = arith.constant 0 : index
      %c0_43 = arith.constant 0 : index
      %69 = vector.load %arg12[%c0_41, %c0_42, %c0_43] : memref<1x192x32xbf16, #tpu.memory_space<vmem>>, vector<1x192x32xbf16>
      %70 = vector.shape_cast %69 : vector<1x192x32xbf16> to vector<192x32xbf16>
      %71 = vector.shape_cast %68 : vector<192x32xbf16> to vector<1x192x32xbf16>
      tpu.vector_store %arg12[%c0_41, %c0_42, %c0_43], %71 {strides = array<i32>} : memref<1x192x32xbf16, #tpu.memory_space<vmem>>, vector<1x192x32xbf16>,
    } else {
    }
    return
  }
  func.func @transform_0(%arg0: i32, %arg1: i32) -> (i32, i32, i32) {
    %c1_i32 = arith.constant 1 : i32
    %0 = arith.subi %arg1, %c1_i32 : i32
    %c0_i32 = arith.constant 0 : i32
    %c1_i32_0 = arith.constant 1 : i32
    %1 = arith.maxsi %c0_i32, %0 : i32
    %2 = arith.minsi %c1_i32_0, %1 : i32
    %c0_i32_1 = arith.constant 0 : i32
    %c0_i32_2 = arith.constant 0 : i32
    return %arg0, %2, %c0_i32_1 : i32, i32, i32
  }
  func.func @transform_1(%arg0: i32, %arg1: i32) -> (i32, i32, i32) {
    %c0_i32 = arith.constant 0 : i32
    %c0_i32_0 = arith.constant 0 : i32
    %c0_i32_1 = arith.constant 0 : i32
    return %arg0, %c0_i32, %c0_i32_0 : i32, i32, i32
  }
  func.func @transform_2(%arg0: i32, %arg1: i32) -> (i32, i32) {
    %c0_i32 = arith.constant 0 : i32
    %c0_i32_0 = arith.constant 0 : i32
    %c0_i32_1 = arith.constant 0 : i32
    return %c0_i32, %c0_i32_0 : i32, i32
  }
  func.func @transform_3(%arg0: i32, %arg1: i32) -> (i32, i32) {
    %c0_i32 = arith.constant 0 : i32
    %c0_i32_0 = arith.constant 0 : i32
    %c0_i32_1 = arith.constant 0 : i32
    return %c0_i32, %c0_i32_0 : i32, i32
  }
  func.func @transform_4(%arg0: i32, %arg1: i32) -> (i32, i32) {
    %c0_i32 = arith.constant 0 : i32
    %c0_i32_0 = arith.constant 0 : i32
    %c0_i32_1 = arith.constant 0 : i32
    return %c0_i32, %c0_i32_0 : i32, i32
  }
  func.func @transform_5(%arg0: i32, %arg1: i32) -> (i32, i32) {
    %c0_i32 = arith.constant 0 : i32
    %c0_i32_0 = arith.constant 0 : i32
    %c0_i32_1 = arith.constant 0 : i32
    return %c0_i32, %c0_i32_0 : i32, i32
  }
  func.func @transform_6(%arg0: i32, %arg1: i32) -> (i32, i32) {
    %c0_i32 = arith.constant 0 : i32
    %c0_i32_0 = arith.constant 0 : i32
    %c0_i32_1 = arith.constant 0 : i32
    return %c0_i32, %c0_i32_0 : i32, i32
  }
  func.func @transform_7(%arg0: i32, %arg1: i32) -> (i32, i32) {
    %c0_i32 = arith.constant 0 : i32
    %c0_i32_0 = arith.constant 0 : i32
    %c0_i32_1 = arith.constant 0 : i32
    return %c0_i32, %c0_i32_0 : i32, i32
  }
  func.func @transform_8(%arg0: i32, %arg1: i32) -> (i32, i32) {
    %c0_i32 = arith.constant 0 : i32
    %c0_i32_0 = arith.constant 0 : i32
    %c0_i32_1 = arith.constant 0 : i32
    return %c0_i32, %c0_i32_0 : i32, i32
  }
  func.func @transform_9(%arg0: i32, %arg1: i32) -> (i32, i32) {
    %c0_i32 = arith.constant 0 : i32
    %c0_i32_0 = arith.constant 0 : i32
    %c0_i32_1 = arith.constant 0 : i32
    return %c0_i32, %c0_i32_0 : i32, i32
  }
  func.func @transform_10(%arg0: i32, %arg1: i32) -> (i32, i32, i32) {
    %c0_i32 = arith.constant 0 : i32
    %c0_i32_0 = arith.constant 0 : i32
    return %arg0, %arg1, %c0_i32 : i32, i32, i32
  }
}

module attributes {stable_mosaic.version = 11 : i64} {
  func.func @_spatial_kernel(%arg0: i32, %arg1: i32, %arg2: memref<1x192x32xbf16, #tpu.memory_space<vmem>>, %arg3: memref<1x48x32xbf16, #tpu.memory_space<vmem>>, %arg4: memref<1x48x32xbf16, #tpu.memory_space<vmem>>, %arg5: memref<9x32x32xbf16, #tpu.memory_space<vmem>>, %arg6: memref<1x32xf32, #tpu.memory_space<vmem>>, %arg7: memref<9x32x32xbf16, #tpu.memory_space<vmem>>, %arg8: memref<1x32xf32, #tpu.memory_space<vmem>>, %arg9: memref<32x32xbf16, #tpu.memory_space<vmem>>, %arg10: memref<1x32xf32, #tpu.memory_space<vmem>>, %arg11: memref<1x192x32xbf16, #tpu.memory_space<vmem>>, %arg12: memref<1x8x32xf32, #tpu.memory_space<vmem>>, %arg13: memref<304x32xbf16, #tpu.memory_space<vmem>>, %arg14: memref<256x32xbf16, #tpu.memory_space<vmem>>, %arg15: memref<8x32xf32, #tpu.memory_space<vmem>>) attributes {dimension_semantics = [#tpu.dimension_semantics<parallel>, #tpu.dimension_semantics<arbitrary>], iteration_bounds = array<i64: 2, 2>, scalar_prefetch = 0 : i64, scratch_operands = 3 : i64, tpu.core_type = #tpu.core_type<tc>, window_params = [{transform_indices = @transform_0, window_bounds = array<i64: 1, 192, 32>}, {transform_indices = @transform_1, window_bounds = array<i64: 1, 48, 32>}, {transform_indices = @transform_2, window_bounds = array<i64: 1, 48, 32>}, {pipeline_mode = #tpu.pipeline_mode<synchronous>, transform_indices = @transform_3, window_bounds = array<i64: 9, 32, 32>}, {pipeline_mode = #tpu.pipeline_mode<synchronous>, transform_indices = @transform_4, window_bounds = array<i64: 1, 32>}, {pipeline_mode = #tpu.pipeline_mode<synchronous>, transform_indices = @transform_5, window_bounds = array<i64: 9, 32, 32>}, {pipeline_mode = #tpu.pipeline_mode<synchronous>, transform_indices = @transform_6, window_bounds = array<i64: 1, 32>}, {pipeline_mode = #tpu.pipeline_mode<synchronous>, transform_indices = @transform_7, window_bounds = array<i64: 32, 32>}, {pipeline_mode = #tpu.pipeline_mode<synchronous>, transform_indices = @transform_8, window_bounds = array<i64: 1, 32>}, {transform_indices = @transform_9, window_bounds = array<i64: 1, 192, 32>}, {transform_indices = @transform_10, window_bounds = array<i64: 1, 8, 32>}]} {
    %cst = arith.constant 0.000000e+00 : bf16
    %0 = vector.broadcast %cst : bf16 to vector<8x32xbf16>
    %c0 = arith.constant 0 : index
    %c0_0 = arith.constant 0 : index
    %1 = vector.load %arg13[%c0, %c0_0] : memref<304x32xbf16, #tpu.memory_space<vmem>>, vector<8x32xbf16>
    tpu.vector_store %arg13[%c0, %c0_0], %0 {strides = array<i32>} : memref<304x32xbf16, #tpu.memory_space<vmem>>, vector<8x32xbf16>,
    %c296 = arith.constant 296 : index
    %c0_1 = arith.constant 0 : index
    %2 = vector.load %arg13[%c296, %c0_1] : memref<304x32xbf16, #tpu.memory_space<vmem>>, vector<8x32xbf16>
    tpu.vector_store %arg13[%c296, %c0_1], %0 {strides = array<i32>} : memref<304x32xbf16, #tpu.memory_space<vmem>>, vector<8x32xbf16>,
    %c0_2 = arith.constant 0 : index
    %c0_3 = arith.constant 0 : index
    %c0_4 = arith.constant 0 : index
    %3 = vector.load %arg3[%c0_2, %c0_3, %c0_4] : memref<1x48x32xbf16, #tpu.memory_space<vmem>>, vector<1x48x32xbf16>
    %4 = vector.shape_cast %3 : vector<1x48x32xbf16> to vector<48x32xbf16>
    %c8 = arith.constant 8 : index
    %c0_5 = arith.constant 0 : index
    %5 = vector.load %arg13[%c8, %c0_5] : memref<304x32xbf16, #tpu.memory_space<vmem>>, vector<48x32xbf16>
    tpu.vector_store %arg13[%c8, %c0_5], %4 {strides = array<i32>} : memref<304x32xbf16, #tpu.memory_space<vmem>>, vector<48x32xbf16>,
    %c0_6 = arith.constant 0 : index
    %c0_7 = arith.constant 0 : index
    %c0_8 = arith.constant 0 : index
    %6 = vector.load %arg2[%c0_6, %c0_7, %c0_8] : memref<1x192x32xbf16, #tpu.memory_space<vmem>>, vector<1x192x32xbf16>
    %7 = vector.shape_cast %6 : vector<1x192x32xbf16> to vector<192x32xbf16>
    %c56 = arith.constant 56 : index
    %c0_9 = arith.constant 0 : index
    %8 = vector.load %arg13[%c56, %c0_9] : memref<304x32xbf16, #tpu.memory_space<vmem>>, vector<192x32xbf16>
    tpu.vector_store %arg13[%c56, %c0_9], %7 {strides = array<i32>} : memref<304x32xbf16, #tpu.memory_space<vmem>>, vector<192x32xbf16>,
    %c0_10 = arith.constant 0 : index
    %c0_11 = arith.constant 0 : index
    %c0_12 = arith.constant 0 : index
    %9 = vector.load %arg4[%c0_10, %c0_11, %c0_12] : memref<1x48x32xbf16, #tpu.memory_space<vmem>>, vector<1x48x32xbf16>
    %10 = vector.shape_cast %9 : vector<1x48x32xbf16> to vector<48x32xbf16>
    %c248 = arith.constant 248 : index
    %c0_13 = arith.constant 0 : index
    %11 = vector.load %arg13[%c248, %c0_13] : memref<304x32xbf16, #tpu.memory_space<vmem>>, vector<48x32xbf16>
    tpu.vector_store %arg13[%c248, %c0_13], %10 {strides = array<i32>} : memref<304x32xbf16, #tpu.memory_space<vmem>>, vector<48x32xbf16>,
    %cst_14 = arith.constant 0.000000e+00 : f32
    %12 = vector.broadcast %cst_14 : f32 to vector<240x32xf32>
    %c7 = arith.constant 7 : index
    %c0_15 = arith.constant 0 : index
    %13 = vector.load %arg13[%c7, %c0_15] : memref<304x32xbf16, #tpu.memory_space<vmem>>, vector<240x32xbf16>
    %c0_16 = arith.constant 0 : index
    %c0_17 = arith.constant 0 : index
    %c0_18 = arith.constant 0 : index
    %14 = vector.load %arg5[%c0_16, %c0_17, %c0_18] : memref<9x32x32xbf16, #tpu.memory_space<vmem>>, vector<1x32x32xbf16>
    %15 = vector.shape_cast %14 : vector<1x32x32xbf16> to vector<32x32xbf16>
    %cst_19 = arith.constant dense<0.000000e+00> : vector<240x32xf32>
    %16 = tpu.matmul %13, %15, %cst_19 {dimension_numbers = #tpu.dot_dimension_numbers<[1], [0], [0], [1], [0, 0, 1, 1], [], []>} : vector<240x32xbf16>, vector<32x32xbf16>, vector<240x32xf32> -> vector<240x32xf32>
    %17 = arith.addf %12, %16 : vector<240x32xf32>
    %c8_20 = arith.constant 8 : index
    %c0_21 = arith.constant 0 : index
    %18 = vector.load %arg13[%c8_20, %c0_21] : memref<304x32xbf16, #tpu.memory_space<vmem>>, vector<240x32xbf16>
    %c1 = arith.constant 1 : index
    %c0_22 = arith.constant 0 : index
    %c0_23 = arith.constant 0 : index
    %19 = vector.load %arg5[%c1, %c0_22, %c0_23] : memref<9x32x32xbf16, #tpu.memory_space<vmem>>, vector<1x32x32xbf16>
    %20 = vector.shape_cast %19 : vector<1x32x32xbf16> to vector<32x32xbf16>
    %cst_24 = arith.constant dense<0.000000e+00> : vector<240x32xf32>
    %21 = tpu.matmul %18, %20, %cst_24 {dimension_numbers = #tpu.dot_dimension_numbers<[1], [0], [0], [1], [0, 0, 1, 1], [], []>} : vector<240x32xbf16>, vector<32x32xbf16>, vector<240x32xf32> -> vector<240x32xf32>
    %22 = arith.addf %17, %21 : vector<240x32xf32>
    %c9 = arith.constant 9 : index
    %c0_25 = arith.constant 0 : index
    %23 = vector.load %arg13[%c9, %c0_25] : memref<304x32xbf16, #tpu.memory_space<vmem>>, vector<240x32xbf16>
    %c2 = arith.constant 2 : index
    %c0_26 = arith.constant 0 : index
    %c0_27 = arith.constant 0 : index
    %24 = vector.load %arg5[%c2, %c0_26, %c0_27] : memref<9x32x32xbf16, #tpu.memory_space<vmem>>, vector<1x32x32xbf16>
    %25 = vector.shape_cast %24 : vector<1x32x32xbf16> to vector<32x32xbf16>
    %cst_28 = arith.constant dense<0.000000e+00> : vector<240x32xf32>
    %26 = tpu.matmul %23, %25, %cst_28 {dimension_numbers = #tpu.dot_dimension_numbers<[1], [0], [0], [1], [0, 0, 1, 1], [], []>} : vector<240x32xbf16>, vector<32x32xbf16>, vector<240x32xf32> -> vector<240x32xf32>
    %27 = arith.addf %22, %26 : vector<240x32xf32>
    %c31 = arith.constant 31 : index
    %c0_29 = arith.constant 0 : index
    %28 = vector.load %arg13[%c31, %c0_29] : memref<304x32xbf16, #tpu.memory_space<vmem>>, vector<240x32xbf16>
    %c3 = arith.constant 3 : index
    %c0_30 = arith.constant 0 : index
    %c0_31 = arith.constant 0 : index
    %29 = vector.load %arg5[%c3, %c0_30, %c0_31] : memref<9x32x32xbf16, #tpu.memory_space<vmem>>, vector<1x32x32xbf16>
    %30 = vector.shape_cast %29 : vector<1x32x32xbf16> to vector<32x32xbf16>
    %cst_32 = arith.constant dense<0.000000e+00> : vector<240x32xf32>
    %31 = tpu.matmul %28, %30, %cst_32 {dimension_numbers = #tpu.dot_dimension_numbers<[1], [0], [0], [1], [0, 0, 1, 1], [], []>} : vector<240x32xbf16>, vector<32x32xbf16>, vector<240x32xf32> -> vector<240x32xf32>
    %32 = arith.addf %27, %31 : vector<240x32xf32>
    %c32 = arith.constant 32 : index
    %c0_33 = arith.constant 0 : index
    %33 = vector.load %arg13[%c32, %c0_33] : memref<304x32xbf16, #tpu.memory_space<vmem>>, vector<240x32xbf16>
    %c4 = arith.constant 4 : index
    %c0_34 = arith.constant 0 : index
    %c0_35 = arith.constant 0 : index
    %34 = vector.load %arg5[%c4, %c0_34, %c0_35] : memref<9x32x32xbf16, #tpu.memory_space<vmem>>, vector<1x32x32xbf16>
    %35 = vector.shape_cast %34 : vector<1x32x32xbf16> to vector<32x32xbf16>
    %cst_36 = arith.constant dense<0.000000e+00> : vector<240x32xf32>
    %36 = tpu.matmul %33, %35, %cst_36 {dimension_numbers = #tpu.dot_dimension_numbers<[1], [0], [0], [1], [0, 0, 1, 1], [], []>} : vector<240x32xbf16>, vector<32x32xbf16>, vector<240x32xf32> -> vector<240x32xf32>
    %37 = arith.addf %32, %36 : vector<240x32xf32>
    %c33 = arith.constant 33 : index
    %c0_37 = arith.constant 0 : index
    %38 = vector.load %arg13[%c33, %c0_37] : memref<304x32xbf16, #tpu.memory_space<vmem>>, vector<240x32xbf16>
    %c5 = arith.constant 5 : index
    %c0_38 = arith.constant 0 : index
    %c0_39 = arith.constant 0 : index
    %39 = vector.load %arg5[%c5, %c0_38, %c0_39] : memref<9x32x32xbf16, #tpu.memory_space<vmem>>, vector<1x32x32xbf16>
    %40 = vector.shape_cast %39 : vector<1x32x32xbf16> to vector<32x32xbf16>
    %cst_40 = arith.constant dense<0.000000e+00> : vector<240x32xf32>
    %41 = tpu.matmul %38, %40, %cst_40 {dimension_numbers = #tpu.dot_dimension_numbers<[1], [0], [0], [1], [0, 0, 1, 1], [], []>} : vector<240x32xbf16>, vector<32x32xbf16>, vector<240x32xf32> -> vector<240x32xf32>
    %42 = arith.addf %37, %41 : vector<240x32xf32>
    %c55 = arith.constant 55 : index
    %c0_41 = arith.constant 0 : index
    %43 = vector.load %arg13[%c55, %c0_41] : memref<304x32xbf16, #tpu.memory_space<vmem>>, vector<240x32xbf16>
    %c6 = arith.constant 6 : index
    %c0_42 = arith.constant 0 : index
    %c0_43 = arith.constant 0 : index
    %44 = vector.load %arg5[%c6, %c0_42, %c0_43] : memref<9x32x32xbf16, #tpu.memory_space<vmem>>, vector<1x32x32xbf16>
    %45 = vector.shape_cast %44 : vector<1x32x32xbf16> to vector<32x32xbf16>
    %cst_44 = arith.constant dense<0.000000e+00> : vector<240x32xf32>
    %46 = tpu.matmul %43, %45, %cst_44 {dimension_numbers = #tpu.dot_dimension_numbers<[1], [0], [0], [1], [0, 0, 1, 1], [], []>} : vector<240x32xbf16>, vector<32x32xbf16>, vector<240x32xf32> -> vector<240x32xf32>
    %47 = arith.addf %42, %46 : vector<240x32xf32>
    %c56_45 = arith.constant 56 : index
    %c0_46 = arith.constant 0 : index
    %48 = vector.load %arg13[%c56_45, %c0_46] : memref<304x32xbf16, #tpu.memory_space<vmem>>, vector<240x32xbf16>
    %c7_47 = arith.constant 7 : index
    %c0_48 = arith.constant 0 : index
    %c0_49 = arith.constant 0 : index
    %49 = vector.load %arg5[%c7_47, %c0_48, %c0_49] : memref<9x32x32xbf16, #tpu.memory_space<vmem>>, vector<1x32x32xbf16>
    %50 = vector.shape_cast %49 : vector<1x32x32xbf16> to vector<32x32xbf16>
    %cst_50 = arith.constant dense<0.000000e+00> : vector<240x32xf32>
    %51 = tpu.matmul %48, %50, %cst_50 {dimension_numbers = #tpu.dot_dimension_numbers<[1], [0], [0], [1], [0, 0, 1, 1], [], []>} : vector<240x32xbf16>, vector<32x32xbf16>, vector<240x32xf32> -> vector<240x32xf32>
    %52 = arith.addf %47, %51 : vector<240x32xf32>
    %c57 = arith.constant 57 : index
    %c0_51 = arith.constant 0 : index
    %53 = vector.load %arg13[%c57, %c0_51] : memref<304x32xbf16, #tpu.memory_space<vmem>>, vector<240x32xbf16>
    %c8_52 = arith.constant 8 : index
    %c0_53 = arith.constant 0 : index
    %c0_54 = arith.constant 0 : index
    %54 = vector.load %arg5[%c8_52, %c0_53, %c0_54] : memref<9x32x32xbf16, #tpu.memory_space<vmem>>, vector<1x32x32xbf16>
    %55 = vector.shape_cast %54 : vector<1x32x32xbf16> to vector<32x32xbf16>
    %cst_55 = arith.constant dense<0.000000e+00> : vector<240x32xf32>
    %56 = tpu.matmul %53, %55, %cst_55 {dimension_numbers = #tpu.dot_dimension_numbers<[1], [0], [0], [1], [0, 0, 1, 1], [], []>} : vector<240x32xbf16>, vector<32x32xbf16>, vector<240x32xf32> -> vector<240x32xf32>
    %57 = arith.addf %52, %56 : vector<240x32xf32>
    %c0_56 = arith.constant 0 : index
    %c0_57 = arith.constant 0 : index
    %58 = vector.load %arg6[%c0_56, %c0_57] : memref<1x32xf32, #tpu.memory_space<vmem>>, vector<1x32xf32>
    %59 = vector.broadcast %58 : vector<1x32xf32> to vector<240x32xf32>
    %60 = arith.addf %57, %59 : vector<240x32xf32>
    %cst_58 = arith.constant 0.000000e+00 : f32
    %61 = vector.broadcast %cst_58 : f32 to vector<240x32xf32>
    %62 = arith.maximumf %60, %61 : vector<240x32xf32>
    %63 = tpu.iota {dimensions = array<i32: 0>} : vector<240x32xi32>
    %64 = arith.sitofp %63 : vector<240x32xi32> to vector<240x32xf32>
    %cst_59 = arith.constant 5.000000e-01 : f32
    %65 = vector.broadcast %cst_59 : f32 to vector<240x32xf32>
    %66 = arith.addf %64, %65 : vector<240x32xf32>
    %cst_60 = arith.constant 0.0416666679 : f32
    %67 = vector.broadcast %cst_60 : f32 to vector<240x32xf32>
    %68 = arith.mulf %66, %67 : vector<240x32xf32>
    %69 = math.floor %68 : vector<240x32xf32>
    %cst_61 = arith.constant 2.400000e+01 : f32
    %70 = vector.broadcast %cst_61 : f32 to vector<240x32xf32>
    %71 = arith.mulf %69, %70 : vector<240x32xf32>
    %72 = arith.subf %64, %71 : vector<240x32xf32>
    %cst_62 = arith.constant 5.000000e-01 : f32
    %73 = vector.broadcast %cst_62 : f32 to vector<240x32xf32>
    %74 = arith.cmpf ogt, %72, %73 : vector<240x32xf32>
    %cst_63 = arith.constant 1.650000e+01 : f32
    %75 = vector.broadcast %cst_63 : f32 to vector<240x32xf32>
    %76 = arith.cmpf olt, %72, %75 : vector<240x32xf32>
    %77 = arith.andi %74, %76 : vector<240x32xi1>
    %c8_i32 = arith.constant 8 : i32
    %78 = arith.muli %arg1, %c8_i32 : i32
    %c1_i32 = arith.constant 1 : i32
    %79 = arith.subi %78, %c1_i32 : i32
    %80 = arith.sitofp %79 : i32 to f32
    %81 = vector.broadcast %80 : f32 to vector<240x32xf32>
    %82 = arith.addf %69, %81 : vector<240x32xf32>
    %cst_64 = arith.constant -5.000000e-01 : f32
    %83 = vector.broadcast %cst_64 : f32 to vector<240x32xf32>
    %84 = arith.cmpf ogt, %82, %83 : vector<240x32xf32>
    %85 = arith.andi %77, %84 : vector<240x32xi1>
    %cst_65 = arith.constant 1.550000e+01 : f32
    %86 = vector.broadcast %cst_65 : f32 to vector<240x32xf32>
    %87 = arith.cmpf olt, %82, %86 : vector<240x32xf32>
    %88 = arith.andi %85, %87 : vector<240x32xi1>
    %cst_66 = arith.constant 0.000000e+00 : f32
    %89 = vector.broadcast %cst_66 : f32 to vector<240x32xf32>
    %90 = arith.select %88, %62, %89 : vector<240x32xi1>, vector<240x32xf32>
    %c0_67 = arith.constant 0 : index
    %c0_68 = arith.constant 0 : index
    %91 = vector.load %arg14[%c0_67, %c0_68] : memref<256x32xbf16, #tpu.memory_space<vmem>>, vector<8x32xbf16>
    tpu.vector_store %arg14[%c0_67, %c0_68], %0 {strides = array<i32>} : memref<256x32xbf16, #tpu.memory_space<vmem>>, vector<8x32xbf16>,
    %c248_69 = arith.constant 248 : index
    %c0_70 = arith.constant 0 : index
    %92 = vector.load %arg14[%c248_69, %c0_70] : memref<256x32xbf16, #tpu.memory_space<vmem>>, vector<8x32xbf16>
    tpu.vector_store %arg14[%c248_69, %c0_70], %0 {strides = array<i32>} : memref<256x32xbf16, #tpu.memory_space<vmem>>, vector<8x32xbf16>,
    %93 = arith.truncf %90 : vector<240x32xf32> to vector<240x32xbf16>
    %c8_71 = arith.constant 8 : index
    %c0_72 = arith.constant 0 : index
    %94 = vector.load %arg14[%c8_71, %c0_72] : memref<256x32xbf16, #tpu.memory_space<vmem>>, vector<240x32xbf16>
    tpu.vector_store %arg14[%c8_71, %c0_72], %93 {strides = array<i32>} : memref<256x32xbf16, #tpu.memory_space<vmem>>, vector<240x32xbf16>,
    %cst_73 = arith.constant 0.000000e+00 : f32
    %95 = vector.broadcast %cst_73 : f32 to vector<192x32xf32>
    %c7_74 = arith.constant 7 : index
    %c0_75 = arith.constant 0 : index
    %96 = vector.load %arg14[%c7_74, %c0_75] : memref<256x32xbf16, #tpu.memory_space<vmem>>, vector<192x32xbf16>
    %c0_76 = arith.constant 0 : index
    %c0_77 = arith.constant 0 : index
    %c0_78 = arith.constant 0 : index
    %97 = vector.load %arg7[%c0_76, %c0_77, %c0_78] : memref<9x32x32xbf16, #tpu.memory_space<vmem>>, vector<1x32x32xbf16>
    %98 = vector.shape_cast %97 : vector<1x32x32xbf16> to vector<32x32xbf16>
    %cst_79 = arith.constant dense<0.000000e+00> : vector<192x32xf32>
    %99 = tpu.matmul %96, %98, %cst_79 {dimension_numbers = #tpu.dot_dimension_numbers<[1], [0], [0], [1], [0, 0, 1, 1], [], []>} : vector<192x32xbf16>, vector<32x32xbf16>, vector<192x32xf32> -> vector<192x32xf32>
    %100 = arith.addf %95, %99 : vector<192x32xf32>
    %c8_80 = arith.constant 8 : index
    %c0_81 = arith.constant 0 : index
    %101 = vector.load %arg14[%c8_80, %c0_81] : memref<256x32xbf16, #tpu.memory_space<vmem>>, vector<192x32xbf16>
    %c1_82 = arith.constant 1 : index
    %c0_83 = arith.constant 0 : index
    %c0_84 = arith.constant 0 : index
    %102 = vector.load %arg7[%c1_82, %c0_83, %c0_84] : memref<9x32x32xbf16, #tpu.memory_space<vmem>>, vector<1x32x32xbf16>
    %103 = vector.shape_cast %102 : vector<1x32x32xbf16> to vector<32x32xbf16>
    %cst_85 = arith.constant dense<0.000000e+00> : vector<192x32xf32>
    %104 = tpu.matmul %101, %103, %cst_85 {dimension_numbers = #tpu.dot_dimension_numbers<[1], [0], [0], [1], [0, 0, 1, 1], [], []>} : vector<192x32xbf16>, vector<32x32xbf16>, vector<192x32xf32> -> vector<192x32xf32>
    %105 = arith.addf %100, %104 : vector<192x32xf32>
    %c9_86 = arith.constant 9 : index
    %c0_87 = arith.constant 0 : index
    %106 = vector.load %arg14[%c9_86, %c0_87] : memref<256x32xbf16, #tpu.memory_space<vmem>>, vector<192x32xbf16>
    %c2_88 = arith.constant 2 : index
    %c0_89 = arith.constant 0 : index
    %c0_90 = arith.constant 0 : index
    %107 = vector.load %arg7[%c2_88, %c0_89, %c0_90] : memref<9x32x32xbf16, #tpu.memory_space<vmem>>, vector<1x32x32xbf16>
    %108 = vector.shape_cast %107 : vector<1x32x32xbf16> to vector<32x32xbf16>
    %cst_91 = arith.constant dense<0.000000e+00> : vector<192x32xf32>
    %109 = tpu.matmul %106, %108, %cst_91 {dimension_numbers = #tpu.dot_dimension_numbers<[1], [0], [0], [1], [0, 0, 1, 1], [], []>} : vector<192x32xbf16>, vector<32x32xbf16>, vector<192x32xf32> -> vector<192x32xf32>
    %110 = arith.addf %105, %109 : vector<192x32xf32>
    %c31_92 = arith.constant 31 : index
    %c0_93 = arith.constant 0 : index
    %111 = vector.load %arg14[%c31_92, %c0_93] : memref<256x32xbf16, #tpu.memory_space<vmem>>, vector<192x32xbf16>
    %c3_94 = arith.constant 3 : index
    %c0_95 = arith.constant 0 : index
    %c0_96 = arith.constant 0 : index
    %112 = vector.load %arg7[%c3_94, %c0_95, %c0_96] : memref<9x32x32xbf16, #tpu.memory_space<vmem>>, vector<1x32x32xbf16>
    %113 = vector.shape_cast %112 : vector<1x32x32xbf16> to vector<32x32xbf16>
    %cst_97 = arith.constant dense<0.000000e+00> : vector<192x32xf32>
    %114 = tpu.matmul %111, %113, %cst_97 {dimension_numbers = #tpu.dot_dimension_numbers<[1], [0], [0], [1], [0, 0, 1, 1], [], []>} : vector<192x32xbf16>, vector<32x32xbf16>, vector<192x32xf32> -> vector<192x32xf32>
    %115 = arith.addf %110, %114 : vector<192x32xf32>
    %c32_98 = arith.constant 32 : index
    %c0_99 = arith.constant 0 : index
    %116 = vector.load %arg14[%c32_98, %c0_99] : memref<256x32xbf16, #tpu.memory_space<vmem>>, vector<192x32xbf16>
    %c4_100 = arith.constant 4 : index
    %c0_101 = arith.constant 0 : index
    %c0_102 = arith.constant 0 : index
    %117 = vector.load %arg7[%c4_100, %c0_101, %c0_102] : memref<9x32x32xbf16, #tpu.memory_space<vmem>>, vector<1x32x32xbf16>
    %118 = vector.shape_cast %117 : vector<1x32x32xbf16> to vector<32x32xbf16>
    %cst_103 = arith.constant dense<0.000000e+00> : vector<192x32xf32>
    %119 = tpu.matmul %116, %118, %cst_103 {dimension_numbers = #tpu.dot_dimension_numbers<[1], [0], [0], [1], [0, 0, 1, 1], [], []>} : vector<192x32xbf16>, vector<32x32xbf16>, vector<192x32xf32> -> vector<192x32xf32>
    %120 = arith.addf %115, %119 : vector<192x32xf32>
    %c33_104 = arith.constant 33 : index
    %c0_105 = arith.constant 0 : index
    %121 = vector.load %arg14[%c33_104, %c0_105] : memref<256x32xbf16, #tpu.memory_space<vmem>>, vector<192x32xbf16>
    %c5_106 = arith.constant 5 : index
    %c0_107 = arith.constant 0 : index
    %c0_108 = arith.constant 0 : index
    %122 = vector.load %arg7[%c5_106, %c0_107, %c0_108] : memref<9x32x32xbf16, #tpu.memory_space<vmem>>, vector<1x32x32xbf16>
    %123 = vector.shape_cast %122 : vector<1x32x32xbf16> to vector<32x32xbf16>
    %cst_109 = arith.constant dense<0.000000e+00> : vector<192x32xf32>
    %124 = tpu.matmul %121, %123, %cst_109 {dimension_numbers = #tpu.dot_dimension_numbers<[1], [0], [0], [1], [0, 0, 1, 1], [], []>} : vector<192x32xbf16>, vector<32x32xbf16>, vector<192x32xf32> -> vector<192x32xf32>
    %125 = arith.addf %120, %124 : vector<192x32xf32>
    %c55_110 = arith.constant 55 : index
    %c0_111 = arith.constant 0 : index
    %126 = vector.load %arg14[%c55_110, %c0_111] : memref<256x32xbf16, #tpu.memory_space<vmem>>, vector<192x32xbf16>
    %c6_112 = arith.constant 6 : index
    %c0_113 = arith.constant 0 : index
    %c0_114 = arith.constant 0 : index
    %127 = vector.load %arg7[%c6_112, %c0_113, %c0_114] : memref<9x32x32xbf16, #tpu.memory_space<vmem>>, vector<1x32x32xbf16>
    %128 = vector.shape_cast %127 : vector<1x32x32xbf16> to vector<32x32xbf16>
    %cst_115 = arith.constant dense<0.000000e+00> : vector<192x32xf32>
    %129 = tpu.matmul %126, %128, %cst_115 {dimension_numbers = #tpu.dot_dimension_numbers<[1], [0], [0], [1], [0, 0, 1, 1], [], []>} : vector<192x32xbf16>, vector<32x32xbf16>, vector<192x32xf32> -> vector<192x32xf32>
    %130 = arith.addf %125, %129 : vector<192x32xf32>
    %c56_116 = arith.constant 56 : index
    %c0_117 = arith.constant 0 : index
    %131 = vector.load %arg14[%c56_116, %c0_117] : memref<256x32xbf16, #tpu.memory_space<vmem>>, vector<192x32xbf16>
    %c7_118 = arith.constant 7 : index
    %c0_119 = arith.constant 0 : index
    %c0_120 = arith.constant 0 : index
    %132 = vector.load %arg7[%c7_118, %c0_119, %c0_120] : memref<9x32x32xbf16, #tpu.memory_space<vmem>>, vector<1x32x32xbf16>
    %133 = vector.shape_cast %132 : vector<1x32x32xbf16> to vector<32x32xbf16>
    %cst_121 = arith.constant dense<0.000000e+00> : vector<192x32xf32>
    %134 = tpu.matmul %131, %133, %cst_121 {dimension_numbers = #tpu.dot_dimension_numbers<[1], [0], [0], [1], [0, 0, 1, 1], [], []>} : vector<192x32xbf16>, vector<32x32xbf16>, vector<192x32xf32> -> vector<192x32xf32>
    %135 = arith.addf %130, %134 : vector<192x32xf32>
    %c57_122 = arith.constant 57 : index
    %c0_123 = arith.constant 0 : index
    %136 = vector.load %arg14[%c57_122, %c0_123] : memref<256x32xbf16, #tpu.memory_space<vmem>>, vector<192x32xbf16>
    %c8_124 = arith.constant 8 : index
    %c0_125 = arith.constant 0 : index
    %c0_126 = arith.constant 0 : index
    %137 = vector.load %arg7[%c8_124, %c0_125, %c0_126] : memref<9x32x32xbf16, #tpu.memory_space<vmem>>, vector<1x32x32xbf16>
    %138 = vector.shape_cast %137 : vector<1x32x32xbf16> to vector<32x32xbf16>
    %cst_127 = arith.constant dense<0.000000e+00> : vector<192x32xf32>
    %139 = tpu.matmul %136, %138, %cst_127 {dimension_numbers = #tpu.dot_dimension_numbers<[1], [0], [0], [1], [0, 0, 1, 1], [], []>} : vector<192x32xbf16>, vector<32x32xbf16>, vector<192x32xf32> -> vector<192x32xf32>
    %140 = arith.addf %135, %139 : vector<192x32xf32>
    %141 = vector.extract_strided_slice %77 {offsets = [24, 0], sizes = [192, 32], strides = [1, 1]} : vector<240x32xi1> to vector<192x32xi1>
    %c0_128 = arith.constant 0 : index
    %c0_129 = arith.constant 0 : index
    %142 = vector.load %arg8[%c0_128, %c0_129] : memref<1x32xf32, #tpu.memory_space<vmem>>, vector<1x32xf32>
    %143 = vector.broadcast %142 : vector<1x32xf32> to vector<192x32xf32>
    %144 = arith.addf %140, %143 : vector<192x32xf32>
    %cst_130 = arith.constant 1.000000e+00 : f32
    %145 = vector.broadcast %cst_130 : f32 to vector<192x32xf32>
    %146 = arith.mulf %144, %145 : vector<192x32xf32>
    %cst_131 = arith.constant 0.000000e+00 : f32
    %147 = vector.broadcast %cst_131 : f32 to vector<192x32xf32>
    %148 = arith.select %141, %146, %147 : vector<192x32xi1>, vector<192x32xf32>
    %c0_132 = arith.constant 0 : index
    %c0_133 = arith.constant 0 : index
    %c0_134 = arith.constant 0 : index
    %149 = vector.load %arg2[%c0_132, %c0_133, %c0_134] : memref<1x192x32xbf16, #tpu.memory_space<vmem>>, vector<1x192x32xbf16>
    %150 = vector.shape_cast %149 : vector<1x192x32xbf16> to vector<192x32xbf16>
    %151 = arith.extf %150 : vector<192x32xbf16> to vector<192x32xf32>
    %152 = arith.addf %148, %151 : vector<192x32xf32>
    %153 = arith.truncf %152 : vector<192x32xf32> to vector<192x32xbf16>
    %c0_135 = arith.constant 0 : index
    %c0_136 = arith.constant 0 : index
    %c0_137 = arith.constant 0 : index
    %154 = vector.load %arg11[%c0_135, %c0_136, %c0_137] : memref<1x192x32xbf16, #tpu.memory_space<vmem>>, vector<1x192x32xbf16>
    %155 = vector.shape_cast %154 : vector<1x192x32xbf16> to vector<192x32xbf16>
    %156 = vector.shape_cast %153 : vector<192x32xbf16> to vector<1x192x32xbf16>
    tpu.vector_store %arg11[%c0_135, %c0_136, %c0_137], %156 {strides = array<i32>} : memref<1x192x32xbf16, #tpu.memory_space<vmem>>, vector<1x192x32xbf16>,
    %157 = arith.truncf %152 : vector<192x32xf32> to vector<192x32xbf16>
    %c0_138 = arith.constant 0 : index
    %c0_139 = arith.constant 0 : index
    %158 = vector.load %arg9[%c0_138, %c0_139] : memref<32x32xbf16, #tpu.memory_space<vmem>>, vector<32x32xbf16>
    %cst_140 = arith.constant dense<0.000000e+00> : vector<192x32xf32>
    %159 = tpu.matmul %157, %158, %cst_140 {dimension_numbers = #tpu.dot_dimension_numbers<[1], [0], [0], [1], [0, 0, 1, 1], [], []>} : vector<192x32xbf16>, vector<32x32xbf16>, vector<192x32xf32> -> vector<192x32xf32>
    %c0_141 = arith.constant 0 : index
    %c0_142 = arith.constant 0 : index
    %160 = vector.load %arg10[%c0_141, %c0_142] : memref<1x32xf32, #tpu.memory_space<vmem>>, vector<1x32xf32>
    %161 = vector.broadcast %160 : vector<1x32xf32> to vector<192x32xf32>
    %162 = arith.addf %159, %161 : vector<192x32xf32>
    %cst_143 = arith.constant 0.000000e+00 : f32
    %163 = vector.broadcast %cst_143 : f32 to vector<192x32xf32>
    %164 = arith.maximumf %162, %163 : vector<192x32xf32>
    %cst_144 = arith.constant 0.000000e+00 : f32
    %165 = vector.broadcast %cst_144 : f32 to vector<192x32xf32>
    %166 = arith.select %141, %164, %165 : vector<192x32xi1>, vector<192x32xf32>
    %cst_145 = arith.constant dense<0.000000e+00> : vector<32xf32>
    %167 = vector.multi_reduction <add>, %166, %cst_145 [0] : vector<192x32xf32> to vector<32xf32>
    %168 = vector.shape_cast %167 : vector<32xf32> to vector<1x32xf32>
    %c0_i32 = arith.constant 0 : i32
    %169 = arith.cmpi eq, %arg1, %c0_i32 : i32
    %170 = arith.extui %169 : i1 to i32
    %c0_i32_146 = arith.constant 0 : i32
    %171 = arith.cmpi ne, %170, %c0_i32_146 : i32
    scf.if %171 {
      %cst_156 = arith.constant 0.000000e+00 : f32
      %180 = vector.broadcast %cst_156 : f32 to vector<8x32xf32>
      %c0_157 = arith.constant 0 : index
      %c0_158 = arith.constant 0 : index
      %181 = vector.load %arg15[%c0_157, %c0_158] : memref<8x32xf32, #tpu.memory_space<vmem>>, vector<8x32xf32>
      tpu.vector_store %arg15[%c0_157, %c0_158], %180 {strides = array<i32>} : memref<8x32xf32, #tpu.memory_space<vmem>>, vector<8x32xf32>,
    } else {
    }
    %c0_147 = arith.constant 0 : index
    %c0_148 = arith.constant 0 : index
    %172 = vector.load %arg15[%c0_147, %c0_148] : memref<8x32xf32, #tpu.memory_space<vmem>>, vector<8x32xf32>
    %173 = vector.broadcast %168 : vector<1x32xf32> to vector<8x32xf32>
    %174 = arith.addf %172, %173 : vector<8x32xf32>
    %c0_149 = arith.constant 0 : index
    %c0_150 = arith.constant 0 : index
    %175 = vector.load %arg15[%c0_149, %c0_150] : memref<8x32xf32, #tpu.memory_space<vmem>>, vector<8x32xf32>
    tpu.vector_store %arg15[%c0_149, %c0_150], %174 {strides = array<i32>} : memref<8x32xf32, #tpu.memory_space<vmem>>, vector<8x32xf32>,
    %c0_151 = arith.constant 0 : index
    %c0_152 = arith.constant 0 : index
    %176 = vector.load %arg15[%c0_151, %c0_152] : memref<8x32xf32, #tpu.memory_space<vmem>>, vector<8x32xf32>
    %c0_153 = arith.constant 0 : index
    %c0_154 = arith.constant 0 : index
    %c0_155 = arith.constant 0 : index
    %177 = vector.load %arg12[%c0_153, %c0_154, %c0_155] : memref<1x8x32xf32, #tpu.memory_space<vmem>>, vector<1x8x32xf32>
    %178 = vector.shape_cast %177 : vector<1x8x32xf32> to vector<8x32xf32>
    %179 = vector.shape_cast %176 : vector<8x32xf32> to vector<1x8x32xf32>
    tpu.vector_store %arg12[%c0_153, %c0_154, %c0_155], %179 {strides = array<i32>} : memref<1x8x32xf32, #tpu.memory_space<vmem>>, vector<1x8x32xf32>,
    return
  }
  func.func @transform_0(%arg0: i32, %arg1: i32) -> (i32, i32, i32) {
    %c1_i32 = arith.constant 1 : i32
    %0 = arith.addi %arg1, %c1_i32 : i32
    %c0_i32 = arith.constant 0 : i32
    %c0_i32_0 = arith.constant 0 : i32
    return %arg0, %0, %c0_i32 : i32, i32, i32
  }
  func.func @transform_1(%arg0: i32, %arg1: i32) -> (i32, i32, i32) {
    %c1_i32 = arith.constant 1 : i32
    %0 = arith.addi %arg1, %c1_i32 : i32
    %c4_i32 = arith.constant 4 : i32
    %1 = arith.muli %0, %c4_i32 : i32
    %c1_i32_0 = arith.constant 1 : i32
    %2 = arith.subi %1, %c1_i32_0 : i32
    %c0_i32 = arith.constant 0 : i32
    %c0_i32_1 = arith.constant 0 : i32
    return %arg0, %2, %c0_i32 : i32, i32, i32
  }
  func.func @transform_2(%arg0: i32, %arg1: i32) -> (i32, i32, i32) {
    %c2_i32 = arith.constant 2 : i32
    %0 = arith.addi %arg1, %c2_i32 : i32
    %c4_i32 = arith.constant 4 : i32
    %1 = arith.muli %0, %c4_i32 : i32
    %c0_i32 = arith.constant 0 : i32
    %c0_i32_0 = arith.constant 0 : i32
    return %arg0, %1, %c0_i32 : i32, i32, i32
  }
  func.func @transform_3(%arg0: i32, %arg1: i32) -> (i32, i32, i32) {
    %c0_i32 = arith.constant 0 : i32
    %c0_i32_0 = arith.constant 0 : i32
    %c0_i32_1 = arith.constant 0 : i32
    %c0_i32_2 = arith.constant 0 : i32
    return %c0_i32, %c0_i32_0, %c0_i32_1 : i32, i32, i32
  }
  func.func @transform_4(%arg0: i32, %arg1: i32) -> (i32, i32) {
    %c0_i32 = arith.constant 0 : i32
    %c0_i32_0 = arith.constant 0 : i32
    %c0_i32_1 = arith.constant 0 : i32
    return %c0_i32, %c0_i32_0 : i32, i32
  }
  func.func @transform_5(%arg0: i32, %arg1: i32) -> (i32, i32, i32) {
    %c0_i32 = arith.constant 0 : i32
    %c0_i32_0 = arith.constant 0 : i32
    %c0_i32_1 = arith.constant 0 : i32
    %c0_i32_2 = arith.constant 0 : i32
    return %c0_i32, %c0_i32_0, %c0_i32_1 : i32, i32, i32
  }
  func.func @transform_6(%arg0: i32, %arg1: i32) -> (i32, i32) {
    %c0_i32 = arith.constant 0 : i32
    %c0_i32_0 = arith.constant 0 : i32
    %c0_i32_1 = arith.constant 0 : i32
    return %c0_i32, %c0_i32_0 : i32, i32
  }
  func.func @transform_7(%arg0: i32, %arg1: i32) -> (i32, i32) {
    %c0_i32 = arith.constant 0 : i32
    %c0_i32_0 = arith.constant 0 : i32
    %c0_i32_1 = arith.constant 0 : i32
    return %c0_i32, %c0_i32_0 : i32, i32
  }
  func.func @transform_8(%arg0: i32, %arg1: i32) -> (i32, i32) {
    %c0_i32 = arith.constant 0 : i32
    %c0_i32_0 = arith.constant 0 : i32
    %c0_i32_1 = arith.constant 0 : i32
    return %c0_i32, %c0_i32_0 : i32, i32
  }
  func.func @transform_9(%arg0: i32, %arg1: i32) -> (i32, i32, i32) {
    %c0_i32 = arith.constant 0 : i32
    %c0_i32_0 = arith.constant 0 : i32
    return %arg0, %arg1, %c0_i32 : i32, i32, i32
  }
  func.func @transform_10(%arg0: i32, %arg1: i32) -> (i32, i32, i32) {
    %c0_i32 = arith.constant 0 : i32
    %c0_i32_0 = arith.constant 0 : i32
    %c0_i32_1 = arith.constant 0 : i32
    return %arg0, %c0_i32, %c0_i32_0 : i32, i32, i32
  }
}

</mosaic_0001>

<llo_original>
// kernel: _lambda_.5
$region0: #{_lambda_.5}
  #allocation0 [shape = 'u32[]', space=smem, size = 0x4, offset = 0x4, fixed_abs, tag = 'smem constant byte address 0x4 - core index']
  #allocation1 [shape = 'u32[72,128]{1,0:T(1,128)}', space=vmem, size = 0x9000, scoped, tag = 'internal scratch']
  %s0 = inlined_call_operand.vmem [shape: bf16[2,384,32], index: 0, kind: input, shape index: {}]
  %s1 = inlined_call_operand.vmem [shape: f32[2,8,32], index: 1, kind: input, shape index: {}]
  %s2 = inlined_call_operand.vmem [shape: bf16[32,32], index: 2, kind: input, shape index: {}]
  %s3 = inlined_call_operand.vmem [shape: f32[1,32], index: 3, kind: input, shape index: {}]
  %s4 = inlined_call_operand.vmem [shape: bf16[32,32], index: 4, kind: input, shape index: {}]
  %s5 = inlined_call_operand.vmem [shape: f32[1,32], index: 5, kind: input, shape index: {}]
  %s6 = inlined_call_operand.vmem [shape: f32[32,2], index: 6, kind: input, shape index: {}]
  %s7 = inlined_call_operand.vmem [shape: f32[1,2], index: 7, kind: input, shape index: {}]
  %s8 = inlined_call_operand.vmem [shape: f32[2,32], index: 8, kind: input, shape index: {}]
  %s9 = inlined_call_operand.vmem [shape: f32[1,32], index: 9, kind: input, shape index: {}]
  %s10 = inlined_call_operand.vmem [shape: bf16[2,768,32], index: 10, kind: output, shape index: {}]
  %s11 = sld [smem:[#allocation0]]
  $region81: #{_lambda_.5} parent=0
    _
  %s13 = ssub.s32 1, %s11
  %s14 = scalar_select 0, %s13, %s11
  loop: start=0, step=1, limit=10
  $region2: #{_lambda_.5} parent=0 // loop_pre_header
    _
  $region3: #{_lambda_.5} parent=0 // loop_header
    %s16 = sphi 0, %s20
    %p17 = scmp.ge.s32.totalorder %s16, 10
    %s23 = sphi 0, %s35
    %s24 = sphi 0, %s31
    %s25 = sphi 0, %s23
    %s26 = sphi 0, %s24
    %s27 = sphi 0, %s25
    %s28 = sphi 0, %s26
    %s50 = sphi 0, %s52
    %s53 = sphi 0, %s50
    %s54 = sphi 0, %s53
    %s70 = sphi 0, %s54
    %s76 = sphi 0, %s78
    %s79 = sphi 0, %s76
    %s80 = sphi 0, %s79
    %s96 = sphi 0, %s80
    %s100 = sphi 0, %s100
    %s102 = sphi 0, %s100
    %s103 = sphi 0, %s102
    %s117 = sphi 0, %s103
    %s121 = sphi 0, %s121
    %s123 = sphi 0, %s121
    %s124 = sphi 0, %s123
    %s138 = sphi 0, %s124
    %s142 = sphi 0, %s142
    %s144 = sphi 0, %s142
    %s145 = sphi 0, %s144
    %s159 = sphi 0, %s145
    %s163 = sphi 0, %s163
    %s165 = sphi 0, %s163
    %s166 = sphi 0, %s165
    %s180 = sphi 0, %s166
    %s184 = sphi 0, %s184
    %s186 = sphi 0, %s184
    %s187 = sphi 0, %s186
    %s201 = sphi 0, %s187
    %s205 = sphi 0, %s205
    %s207 = sphi 0, %s205
    %s208 = sphi 0, %s207
    %s222 = sphi 0, %s208
    %s226 = sphi 0, %s226
    %s228 = sphi 0, %s226
    %s229 = sphi 0, %s228
    %s243 = sphi 0, %s229
    %s247 = sphi 0, %s247
    %s249 = sphi 0, %s247
    %s250 = sphi 0, %s249
    %s264 = sphi 0, %s250
    %s272 = sphi 0, %s274
    %s275 = sphi 0, %s272
    %s276 = sphi 0, %s275
    %s292 = sphi 0, %s276
  $region4: #{_lambda_.5} parent=0 // loop_header_branch
    %19 = sbr.rel (%p17) target = $region8
  $region5: #{_lambda_.5} parent=0 // loop_body
    %s21 = ssub.s32 %s16, 1
    %s22 = ssub.s32 %s16, 2
    %s29 = sadd.s32 1, %s24
    %p30 = scmp.ge.s32.totalorder %s29, 4
    %s31 = scalar_select %p30, 0, %s29
    %s32 = sadd.s32 1, %s23
    %s33 = scalar_select %p30, %s32, %s23
    %p34 = scmp.ge.s32.totalorder %s33, 2
    %s35 = scalar_select %p34, 0, %s33
    %s36 = ssub.s32 %s24, 1
    %p37 = scmp.gt.s32.totalorder %s36, 0
    %s38 = scalar_select %p37, %s36, 0
    %p39 = scmp.lt.s32.totalorder %s38, 1
    %s40 = scalar_select %p39, %s38, 1
    %s41 = ssub.s32 %s31, 1
    %p42 = scmp.gt.s32.totalorder %s41, 0
    %s43 = scalar_select %p42, %s41, 0
    %p44 = scmp.lt.s32.totalorder %s43, 1
    %s45 = scalar_select %p44, %s43, 1
    %s46 = ssub.s32 %s23, %s35
    %s47 = ssub.s32 %s40, %s45
    %s48 = sor.u32 %s46, %s47
    %p49 = scmp.eq.s32.totalorder %s48, 0
    %s51 = sadd.s32 %s50, 1
    %s52 = scalar_select %p49, %s50, %s51
    %p55 = pneg %p49
    %p56 = scmp.eq.s32.totalorder %s16, 7
    %p57 = por %p55, %p56
    %p58 = scmp.ne.s32.totalorder %s50, %s53
    %p59 = scmp.eq.s32.totalorder %s16, 0
    %p60 = por %p58, %p59
    %p61 = scmp.ne.s32.totalorder %s50, %s53
    %p62 = scmp.eq.s32.totalorder %s21, 7
    %p63 = por %p61, %p62
    %p64 = scmp.ne.s32.totalorder %s53, %s54
    %p65 = scmp.eq.s32.totalorder %s21, 0
    %p66 = por %p64, %p65
    %p67 = scmp.ne.s32.totalorder %s53, %s54
    %p68 = scmp.eq.s32.totalorder %s22, 7
    %p69 = por %p67, %p68
    %p71 = scmp.ne.s32.totalorder %s54, %s70
    %p72 = scmp.eq.s32.totalorder %s22, 0
    %p73 = por %p71, %p72
    %s74 = ssub.s32 %s23, %s35
    %p75 = scmp.eq.s32.totalorder %s74, 0
    %s77 = sadd.s32 %s76, 1
    %s78 = scalar_select %p75, %s76, %s77
    %p81 = pneg %p75
    %p82 = scmp.eq.s32.totalorder %s16, 7
    %p83 = por %p81, %p82
    %p84 = scmp.ne.s32.totalorder %s76, %s79
    %p85 = scmp.eq.s32.totalorder %s16, 0
    %p86 = por %p84, %p85
    %p87 = scmp.ne.s32.totalorder %s76, %s79
    %p88 = scmp.eq.s32.totalorder %s21, 7
    %p89 = por %p87, %p88
    %p90 = scmp.ne.s32.totalorder %s79, %s80
    %p91 = scmp.eq.s32.totalorder %s21, 0
    %p92 = por %p90, %p91
    %p93 = scmp.ne.s32.totalorder %s79, %s80
    %p94 = scmp.eq.s32.totalorder %s22, 7
    %p95 = por %p93, %p94
    %p97 = scmp.ne.s32.totalorder %s80, %s96
    %p98 = scmp.eq.s32.totalorder %s22, 0
    %p99 = por %p97, %p98
    %s101 = sadd.s32 %s100, 1
    %p104 = scmp.eq.s32.totalorder %s16, 7
    %p105 = scmp.ne.s32.totalorder %s100, %s102
    %p106 = scmp.eq.s32.totalorder %s16, 0
    %p107 = por %p105, %p106
    %p108 = scmp.ne.s32.totalorder %s100, %s102
    %p109 = scmp.eq.s32.totalorder %s21, 7
    %p110 = por %p108, %p109
    %p111 = scmp.ne.s32.totalorder %s102, %s103
    %p112 = scmp.eq.s32.totalorder %s21, 0
    %p113 = por %p111, %p112
    %p114 = scmp.ne.s32.totalorder %s102, %s103
    %p115 = scmp.eq.s32.totalorder %s22, 7
    %p116 = por %p114, %p115
    %p118 = scmp.ne.s32.totalorder %s103, %s117
    %p119 = scmp.eq.s32.totalorder %s22, 0
    %p120 = por %p118, %p119
    %s122 = sadd.s32 %s121, 1
    %p125 = scmp.eq.s32.totalorder %s16, 7
    %p126 = scmp.ne.s32.totalorder %s121, %s123
    %p127 = scmp.eq.s32.totalorder %s16, 0
    %p128 = por %p126, %p127
    %p129 = scmp.ne.s32.totalorder %s121, %s123
    %p130 = scmp.eq.s32.totalorder %s21, 7
    %p131 = por %p129, %p130
    %p132 = scmp.ne.s32.totalorder %s123, %s124
    %p133 = scmp.eq.s32.totalorder %s21, 0
    %p134 = por %p132, %p133
    %p135 = scmp.ne.s32.totalorder %s123, %s124
    %p136 = scmp.eq.s32.totalorder %s22, 7
    %p137 = por %p135, %p136
    %p139 = scmp.ne.s32.totalorder %s124, %s138
    %p140 = scmp.eq.s32.totalorder %s22, 0
    %p141 = por %p139, %p140
    %s143 = sadd.s32 %s142, 1
    %p146 = scmp.eq.s32.totalorder %s16, 7
    %p147 = scmp.ne.s32.totalorder %s142, %s144
    %p148 = scmp.eq.s32.totalorder %s16, 0
    %p149 = por %p147, %p148
    %p150 = scmp.ne.s32.totalorder %s142, %s144
    %p151 = scmp.eq.s32.totalorder %s21, 7
    %p152 = por %p150, %p151
    %p153 = scmp.ne.s32.totalorder %s144, %s145
    %p154 = scmp.eq.s32.totalorder %s21, 0
    %p155 = por %p153, %p154
    %p156 = scmp.ne.s32.totalorder %s144, %s145
    %p157 = scmp.eq.s32.totalorder %s22, 7
    %p158 = por %p156, %p157
    %p160 = scmp.ne.s32.totalorder %s145, %s159
    %p161 = scmp.eq.s32.totalorder %s22, 0
    %p162 = por %p160, %p161
    %s164 = sadd.s32 %s163, 1
    %p167 = scmp.eq.s32.totalorder %s16, 7
    %p168 = scmp.ne.s32.totalorder %s163, %s165
    %p169 = scmp.eq.s32.totalorder %s16, 0
    %p170 = por %p168, %p169
    %p171 = scmp.ne.s32.totalorder %s163, %s165
    %p172 = scmp.eq.s32.totalorder %s21, 7
    %p173 = por %p171, %p172
    %p174 = scmp.ne.s32.totalorder %s165, %s166
    %p175 = scmp.eq.s32.totalorder %s21, 0
    %p176 = por %p174, %p175
    %p177 = scmp.ne.s32.totalorder %s165, %s166
    %p178 = scmp.eq.s32.totalorder %s22, 7
    %p179 = por %p177, %p178
    %p181 = scmp.ne.s32.totalorder %s166, %s180
    %p182 = scmp.eq.s32.totalorder %s22, 0
    %p183 = por %p181, %p182
    %s185 = sadd.s32 %s184, 1
    %p188 = scmp.eq.s32.totalorder %s16, 7
    %p189 = scmp.ne.s32.totalorder %s184, %s186
    %p190 = scmp.eq.s32.totalorder %s16, 0
    %p191 = por %p189, %p190
    %p192 = scmp.ne.s32.totalorder %s184, %s186
    %p193 = scmp.eq.s32.totalorder %s21, 7
    %p194 = por %p192, %p193
    %p195 = scmp.ne.s32.totalorder %s186, %s187
    %p196 = scmp.eq.s32.totalorder %s21, 0
    %p197 = por %p195, %p196
    %p198 = scmp.ne.s32.totalorder %s186, %s187
    %p199 = scmp.eq.s32.totalorder %s22, 7
    %p200 = por %p198, %p199
    %p202 = scmp.ne.s32.totalorder %s187, %s201
    %p203 = scmp.eq.s32.totalorder %s22, 0
    %p204 = por %p202, %p203
    %s206 = sadd.s32 %s205, 1
    %p209 = scmp.eq.s32.totalorder %s16, 7
    %p210 = scmp.ne.s32.totalorder %s205, %s207
    %p211 = scmp.eq.s32.totalorder %s16, 0
    %p212 = por %p210, %p211
    %p213 = scmp.ne.s32.totalorder %s205, %s207
    %p214 = scmp.eq.s32.totalorder %s21, 7
    %p215 = por %p213, %p214
    %p216 = scmp.ne.s32.totalorder %s207, %s208
    %p217 = scmp.eq.s32.totalorder %s21, 0
    %p218 = por %p216, %p217
    %p219 = scmp.ne.s32.totalorder %s207, %s208
    %p220 = scmp.eq.s32.totalorder %s22, 7
    %p221 = por %p219, %p220
    %p223 = scmp.ne.s32.totalorder %s208, %s222
    %p224 = scmp.eq.s32.totalorder %s22, 0
    %p225 = por %p223, %p224
    %s227 = sadd.s32 %s226, 1
    %p230 = scmp.eq.s32.totalorder %s16, 7
    %p231 = scmp.ne.s32.totalorder %s226, %s228
    %p232 = scmp.eq.s32.totalorder %s16, 0
    %p233 = por %p231, %p232
    %p234 = scmp.ne.s32.totalorder %s226, %s228
    %p235 = scmp.eq.s32.totalorder %s21, 7
    %p236 = por %p234, %p235
    %p237 = scmp.ne.s32.totalorder %s228, %s229
    %p238 = scmp.eq.s32.totalorder %s21, 0
    %p239 = por %p237, %p238
    %p240 = scmp.ne.s32.totalorder %s228, %s229
    %p241 = scmp.eq.s32.totalorder %s22, 7
    %p242 = por %p240, %p241
    %p244 = scmp.ne.s32.totalorder %s229, %s243
    %p245 = scmp.eq.s32.totalorder %s22, 0
    %p246 = por %p244, %p245
    %s248 = sadd.s32 %s247, 1
    %p251 = scmp.eq.s32.totalorder %s16, 7
    %p252 = scmp.ne.s32.totalorder %s247, %s249
    %p253 = scmp.eq.s32.totalorder %s16, 0
    %p254 = por %p252, %p253
    %p255 = scmp.ne.s32.totalorder %s247, %s249
    %p256 = scmp.eq.s32.totalorder %s21, 7
    %p257 = por %p255, %p256
    %p258 = scmp.ne.s32.totalorder %s249, %s250
    %p259 = scmp.eq.s32.totalorder %s21, 0
    %p260 = por %p258, %p259
    %p261 = scmp.ne.s32.totalorder %s249, %s250
    %p262 = scmp.eq.s32.totalorder %s22, 7
    %p263 = por %p261, %p262
    %p265 = scmp.ne.s32.totalorder %s250, %s264
    %p266 = scmp.eq.s32.totalorder %s22, 0
    %p267 = por %p265, %p266
    %s268 = ssub.s32 %s23, %s35
    %s269 = ssub.s32 %s24, %s31
    %s270 = sor.u32 %s268, %s269
    %p271 = scmp.eq.s32.totalorder %s270, 0
    %s273 = sadd.s32 %s272, 1
    %s274 = scalar_select %p271, %s272, %s273
    %p277 = pneg %p271
    %p278 = scmp.eq.s32.totalorder %s16, 7
    %p279 = por %p277, %p278
    %p280 = scmp.ne.s32.totalorder %s272, %s275
    %p281 = scmp.eq.s32.totalorder %s16, 0
    %p282 = por %p280, %p281
    %p283 = scmp.ne.s32.totalorder %s272, %s275
    %p284 = scmp.eq.s32.totalorder %s21, 7
    %p285 = por %p283, %p284
    %p286 = scmp.ne.s32.totalorder %s275, %s276
    %p287 = scmp.eq.s32.totalorder %s21, 0
    %p288 = por %p286, %p287
    %p289 = scmp.ne.s32.totalorder %s275, %s276
    %p290 = scmp.eq.s32.totalorder %s22, 7
    %p291 = por %p289, %p290
    %p293 = scmp.ne.s32.totalorder %s276, %s292
    %p294 = scmp.eq.s32.totalorder %s22, 0
    %p295 = por %p293, %p294
    %p296 = scmp.le.s32.totalorder 1, %s16
    %p297 = scmp.lt.s32.totalorder %s16, 9
    %p298 = pnand %p296, %p297
    %p299 = pneg %p298
    // Predicated region
    $region9: #{_lambda_.5} parent=5 // pred_check
      _
    $region10: #{_lambda_.5} parent=5 // pred_check_branch
      %301 = sbr.rel (%p298) target = $region12
    $region11: #{_lambda_.5} parent=5 // pred_region
      %s302 = ssub.s32 %s16, 1
      // Predicated region
      $region13: #{_lambda_.5} parent=11 // pred_check
        %p303 = pneg %p113
      $region14: #{_lambda_.5} parent=11 // pred_check_branch
        %305 = sbr.rel (%p303) target = $region16
      $region15: #{_lambda_.5} parent=11 // pred_region
        _
      $region16: #{_lambda_.5} parent=11 // pred_fallthru
        _
      // Predicated region
      $region17: #{_lambda_.5} parent=11 // pred_check
        %p306 = pneg %p134
      $region18: #{_lambda_.5} parent=11 // pred_check_branch
        %308 = sbr.rel (%p306) target = $region20
      $region19: #{_lambda_.5} parent=11 // pred_region
        _
      $region20: #{_lambda_.5} parent=11 // pred_fallthru
        _
      // Predicated region
      $region21: #{_lambda_.5} parent=11 // pred_check
        %p309 = pneg %p155
      $region22: #{_lambda_.5} parent=11 // pred_check_branch
        %311 = sbr.rel (%p309) target = $region24
      $region23: #{_lambda_.5} parent=11 // pred_region
        _
      $region24: #{_lambda_.5} parent=11 // pred_fallthru
        _
      // Predicated region
      $region25: #{_lambda_.5} parent=11 // pred_check
        %p312 = pneg %p176
      $region26: #{_lambda_.5} parent=11 // pred_check_branch
        %314 = sbr.rel (%p312) target = $region28
      $region27: #{_lambda_.5} parent=11 // pred_region
        _
      $region28: #{_lambda_.5} parent=11 // pred_fallthru
        _
      // Predicated region
      $region29: #{_lambda_.5} parent=11 // pred_check
        %p315 = pneg %p197
      $region30: #{_lambda_.5} parent=11 // pred_check_branch
        %317 = sbr.rel (%p315) target = $region32
      $region31: #{_lambda_.5} parent=11 // pred_region
        _
      $region32: #{_lambda_.5} parent=11 // pred_fallthru
        _
      // Predicated region
      $region33: #{_lambda_.5} parent=11 // pred_check
        %p318 = pneg %p218
      $region34: #{_lambda_.5} parent=11 // pred_check_branch
        %320 = sbr.rel (%p318) target = $region36
      $region35: #{_lambda_.5} parent=11 // pred_region
        _
      $region36: #{_lambda_.5} parent=11 // pred_fallthru
        _
      // Predicated region
      $region37: #{_lambda_.5} parent=11 // pred_check
        %p321 = pneg %p239
      $region38: #{_lambda_.5} parent=11 // pred_check_branch
        %323 = sbr.rel (%p321) target = $region40
      $region39: #{_lambda_.5} parent=11 // pred_region
        _
      $region40: #{_lambda_.5} parent=11 // pred_fallthru
        _
      // Predicated region
      $region41: #{_lambda_.5} parent=11 // pred_check
        %p324 = pneg %p260
      $region42: #{_lambda_.5} parent=11 // pred_check_branch
        %326 = sbr.rel (%p324) target = $region44
      $region43: #{_lambda_.5} parent=11 // pred_region
        _
      $region44: #{_lambda_.5} parent=11 // pred_fallthru
        _
    $region12: #{_lambda_.5} parent=5 // pred_fallthru
      _
    %p327 = scmp.lt.s32.totalorder %s16, 8
    // Predicated region
    $region45: #{_lambda_.5} parent=5 // pred_check
      %p328 = pneg %p327
    $region46: #{_lambda_.5} parent=5 // pred_check_branch
      %330 = sbr.rel (%p328) target = $region48
    $region47: #{_lambda_.5} parent=5 // pred_region
      // Predicated region
      $region49: #{_lambda_.5} parent=47 // pred_check
        %p331 = pneg %p60
      $region50: #{_lambda_.5} parent=47 // pred_check_branch
        %333 = sbr.rel (%p331) target = $region52
      $region51: #{_lambda_.5} parent=47 // pred_region
        %s334 = ssub.s32 %s24, 1
        %p335 = scmp.gt.s32.totalorder %s334, 0
        %s336 = scalar_select %p335, %s334, 0
        %p337 = scmp.lt.s32.totalorder %s336, 1
        %s338 = scalar_select %p337, %s336, 1
        %s339 = smul.u32 24, %s338
        %p340 = scmp.lt.s32.totalorder %s23, 1
        %s341 = scalar_select %p340, %s23, 1
        %p342 = scmp.lt.s32.totalorder %s339, 47
        %s343 = scalar_select %p342, %s339, 47
        %s344 = smul.addr %s341, 48
        %s345 = sadd.s32 %s343, %s344
        %s346 = smul.addr %s345, 4
        %s347 = scalar_lea.vmem %s0, %s346
        %s348 = ssub.s32 %s24, 1
        %p349 = scmp.gt.s32.totalorder %s348, 0
        %s350 = scalar_select %p349, %s348, 0
        %p351 = scmp.lt.s32.totalorder %s350, 1
        %s352 = scalar_select %p351, %s350, 1
        %s353 = smul.u32 24, %s352
      $region52: #{_lambda_.5} parent=47 // pred_fallthru
        _
      // Predicated region
      $region53: #{_lambda_.5} parent=47 // pred_check
        %p354 = pneg %p86
      $region54: #{_lambda_.5} parent=47 // pred_check_branch
        %356 = sbr.rel (%p354) target = $region56
      $region55: #{_lambda_.5} parent=47 // pred_region
        %p357 = scmp.lt.s32.totalorder %s23, 1
        %s358 = scalar_select %p357, %s23, 1
        %s359 = smul.addr %s358, 8
        %s360 = scalar_lea.vmem %s1, %s359
      $region56: #{_lambda_.5} parent=47 // pred_fallthru
        _
    $region48: #{_lambda_.5} parent=5 // pred_fallthru
      _
    %p361 = scmp.le.s32.totalorder 1, %s16
    %p362 = scmp.lt.s32.totalorder %s16, 9
    %p363 = pnand %p361, %p362
    %p364 = pneg %p363
    // Predicated region
    $region57: #{_lambda_.5} parent=5 // pred_check
      _
    $region58: #{_lambda_.5} parent=5 // pred_check_branch
      %366 = sbr.rel (%p363) target = $region60
    $region59: #{_lambda_.5} parent=5 // pred_region
      %s367 = ssub.s32 %s16, 1
      %s368 = ssub.s32 %s26, 1
      %p369 = scmp.gt.s32.totalorder %s368, 0
      %s370 = scalar_select %p369, %s368, 0
      %p371 = scmp.lt.s32.totalorder %s370, 1
      %s372 = scalar_select %p371, %s370, 1
      %s373 = smul.u32 24, %s372
      %p374 = scmp.lt.s32.totalorder %s25, 1
      %s375 = scalar_select %p374, %s25, 1
      %p376 = scmp.lt.s32.totalorder %s373, 47
      %s377 = scalar_select %p376, %s373, 47
      %s378 = smul.addr %s375, 48
      %s379 = sadd.s32 %s377, %s378
      %s380 = smul.addr %s379, 4
      %s381 = scalar_lea.vmem %s0, %s380
      %p382 = pneg %p66
      %p383 = pneg %p63
      %p384 = scmp.lt.s32.totalorder %s25, 1
      %s385 = scalar_select %p384, %s25, 1
      %s386 = smul.addr %s385, 8
      %s387 = scalar_lea.vmem %s1, %s386
      %p388 = pneg %p92
      %p389 = pneg %p89
      %p390 = pneg %p113
      %p391 = pneg %p110
      %p392 = pneg %p134
      %p393 = pneg %p131
      %p394 = pneg %p155
      %p395 = pneg %p152
      %p396 = pneg %p176
      %p397 = pneg %p173
      %p398 = pneg %p197
      %p399 = pneg %p194
      %p400 = pneg %p218
      %p401 = pneg %p215
      %p402 = pneg %p239
      %p403 = pneg %p236
      %p404 = pneg %p260
      %p405 = pneg %p257
      %p406 = pneg %p288
      %p407 = pneg %p285
      %s408 = smul.u32 24, %s26
      %p409 = scmp.lt.s32.totalorder %s25, 1
      %s410 = scalar_select %p409, %s25, 1
      %p411 = scmp.lt.s32.totalorder %s408, 95
      %s412 = scalar_select %p411, %s408, 95
      %s413 = smul.addr %s410, 96
      %s414 = sadd.s32 %s412, %s413
      %s415 = smul.addr %s414, 4
      %s416 = scalar_lea.vmem %s10, %s415
      %s417 = ssub.s32 %s26, 1
      %p418 = scmp.gt.s32.totalorder %s417, 0
      %s419 = scalar_select %p418, %s417, 0
      %p420 = scmp.lt.s32.totalorder %s419, 1
      %s421 = scalar_select %p420, %s419, 1
      %s422 = smul.u32 24, %s421
      %p423 = scmp.lt.s32.totalorder %s25, 1
      %s424 = scalar_select %p423, %s25, 1
      %p425 = scmp.lt.s32.totalorder %s422, 47
      %s426 = scalar_select %p425, %s422, 47
      %s427 = smul.addr %s424, 48
      %s428 = sadd.s32 %s426, %s427
      %s429 = smul.addr %s428, 4
      %s430 = scalar_lea.vmem %s0, %s429
      %s431 = ssub.s32 %s26, 1
      %p432 = scmp.gt.s32.totalorder %s431, 0
      %s433 = scalar_select %p432, %s431, 0
      %p434 = scmp.lt.s32.totalorder %s433, 1
      %s435 = scalar_select %p434, %s433, 1
      %s436 = smul.u32 24, %s435
      %p437 = scmp.lt.s32.totalorder %s25, 1
      %s438 = scalar_select %p437, %s25, 1
      %s439 = smul.addr %s438, 8
      %s440 = scalar_lea.vmem %s1, %s439
      %s441 = smul.u32 24, %s26
      %p442 = scmp.lt.s32.totalorder %s25, 1
      %s443 = scalar_select %p442, %s25, 1
      %p444 = scmp.lt.s32.totalorder %s441, 95
      %s445 = scalar_select %p444, %s441, 95
      %s446 = smul.addr %s443, 96
      %s447 = sadd.s32 %s445, %s446
      %s448 = smul.addr %s447, 4
      %s449 = scalar_lea.vmem %s10, %s448
      %s450 = smul.u32 24, %s26
      %p452 = scmp.eq.s32.totalorder %s26, 0
      %p453 = scmp.eq.s32.totalorder %s26, 3
      %p454 = por %p452, %p453
      // Predicated region
      $region61: #{_lambda_.5} parent=59 // pred_check
        %p455 = pneg %p454
      $region62: #{_lambda_.5} parent=59 // pred_check_branch
        %457 = sbr.rel (%p455) target = $region64
      $region63: #{_lambda_.5} parent=59 // pred_region
        %vm458 = vcmask 257024
        %459 = vst.msk [vmem:[%s449] sm:$0xf] %vm458, 0
        %460 = vst.msk [vmem:[%s449 + $0x4] sm:$0xf] %vm458, 0
        %461 = vst.msk [vmem:[%s449 + $0x8] sm:$0xf] %vm458, 0
        %462 = vst.msk [vmem:[%s449 + $0xc] sm:$0xf] %vm458, 0
        %463 = vst.msk [vmem:[%s449 + $0x10] sm:$0xf] %vm458, 0
        %464 = vst.msk [vmem:[%s449 + $0x14] sm:$0xf] %vm458, 0
        %465 = vst.msk [vmem:[%s449 + $0x18] sm:$0xf] %vm458, 0
        %466 = vst.msk [vmem:[%s449 + $0x1c] sm:$0xf] %vm458, 0
        %467 = vst.msk [vmem:[%s449 + $0x20] sm:$0xf] %vm458, 0
        %468 = vst.msk [vmem:[%s449 + $0x24] sm:$0xf] %vm458, 0
        %469 = vst.msk [vmem:[%s449 + $0x28] sm:$0xf] %vm458, 0
        %470 = vst.msk [vmem:[%s449 + $0x2c] sm:$0xf] %vm458, 0
        %471 = vst.msk [vmem:[%s449 + $0x30] sm:$0xf] %vm458, 0
        %472 = vst.msk [vmem:[%s449 + $0x34] sm:$0xf] %vm458, 0
        %473 = vst.msk [vmem:[%s449 + $0x38] sm:$0xf] %vm458, 0
        %474 = vst.msk [vmem:[%s449 + $0x3c] sm:$0xf] %vm458, 0
        %475 = vst.msk [vmem:[%s449 + $0x40] sm:$0xf] %vm458, 0
        %476 = vst.msk [vmem:[%s449 + $0x44] sm:$0xf] %vm458, 0
        %477 = vst.msk [vmem:[%s449 + $0x48] sm:$0xf] %vm458, 0
        %478 = vst.msk [vmem:[%s449 + $0x4c] sm:$0xf] %vm458, 0
        %479 = vst.msk [vmem:[%s449 + $0x50] sm:$0xf] %vm458, 0
        %480 = vst.msk [vmem:[%s449 + $0x54] sm:$0xf] %vm458, 0
        %481 = vst.msk [vmem:[%s449 + $0x58] sm:$0xf] %vm458, 0
        %482 = vst.msk [vmem:[%s449 + $0x5c] sm:$0xf] %vm458, 0
      $region64: #{_lambda_.5} parent=59 // pred_fallthru
        _
      %p483 = pneg %p454
      // Predicated region
      $region65: #{_lambda_.5} parent=59 // pred_check
        _
      $region66: #{_lambda_.5} parent=59 // pred_check_branch
        %485 = sbr.rel (%p454) target = $region68
      $region67: #{_lambda_.5} parent=59 // pred_region
        %v486 = vld [vmem:[%s430] sm:$0xf]
        %v487 = vld [vmem:[%s430 + $0x4] sm:$0xf]
        %v488 = vld [vmem:[%s430 + $0x8] sm:$0xf]
        %v489 = vld [vmem:[%s430 + $0xc] sm:$0xf]
        %v490 = vld [vmem:[%s430 + $0x10] sm:$0xf]
        %v491 = vld [vmem:[%s430 + $0x14] sm:$0xf]
        %v492 = vld [vmem:[%s430 + $0x18] sm:$0xf]
        %v493 = vld [vmem:[%s430 + $0x1c] sm:$0xf]
        %v494 = vld [vmem:[%s430 + $0x20] sm:$0xf]
        %v495 = vld [vmem:[%s430 + $0x24] sm:$0xf]
        %v496 = vld [vmem:[%s430 + $0x28] sm:$0xf]
        %v497 = vld [vmem:[%s430 + $0x2c] sm:$0xf]
        %v498 = vld [vmem:[%s430 + $0x30] sm:$0xf]
        %v499 = vld [vmem:[%s430 + $0x34] sm:$0xf]
        %v500 = vld [vmem:[%s430 + $0x38] sm:$0xf]
        %v501 = vld [vmem:[%s430 + $0x3c] sm:$0xf]
        %v502 = vld [vmem:[%s430 + $0x40] sm:$0xf]
        %v503 = vld [vmem:[%s430 + $0x44] sm:$0xf]
        %v504 = vld [vmem:[%s430 + $0x48] sm:$0xf]
        %v505 = vld [vmem:[%s430 + $0x4c] sm:$0xf]
        %v506 = vld [vmem:[%s430 + $0x50] sm:$0xf]
        %v507 = vld [vmem:[%s430 + $0x54] sm:$0xf]
        %v508 = vld [vmem:[%s430 + $0x58] sm:$0xf]
        %v509 = vld [vmem:[%s430 + $0x5c] sm:$0xf]
        %v510 = vld [vmem:[%s440] sm:$0x1]
        %v511 = vmul.f32 %v510, 0.00390625
        %v512 = vld [vmem:[%s4] sm:$0xf]
        %v513 = vld [vmem:[%s4 + $0x4] sm:$0xf]
        %v514 = vld [vmem:[%s4 + $0x8] sm:$0xf]
        %v515 = vld [vmem:[%s4 + $0xc] sm:$0xf]
        %v516 = vunpack.c.l.bf16 %v512
        %v517 = vunpack.c.l.bf16 %v513
        %v518 = vunpack.c.l.bf16 %v514
        %v519 = vunpack.c.l.bf16 %v515
        %v520 = vld [vmem:[%s5] sm:$0x1]
        %vm521 = vcmask 261120
        %v523 = vsel %vm521, %v511, 0
        %525 = vmatpush.msra.mxu0 0.0
        %526 = vmatpush.msra.mxu0 0.0
        %527 = vmatpush.msra.mxu0 0.0
        %528 = vmatpush.msra.mxu0 0.0
        %529 = vmatpush.msra.mxu0 0.0
        %530 = vmatpush.msra.mxu0 0.0
        %531 = vmatpush.msra.mxu0 0.0
        %532 = vmatpush.msra.mxu0 0.0
        %533 = vmatpush.msra.mxu0 0.0
        %534 = vmatpush.msra.mxu0 0.0
        %535 = vmatpush.msra.mxu0 0.0
        %536 = vmatpush.msra.mxu0 0.0
        %537 = vmatpush.msra.mxu0 %v519
        %538 = vmatpush.msra.mxu0 %v518
        %539 = vmatpush.msra.mxu0 %v517
        %540 = vmatpush.msra.mxu0 %v516
        %541 = vmatmul.f32.gmra.mxu0 %v523
        %v542 = vpop.f32.mrf.mxu0
        %v543 = vadd.f32 %v520, %v542
        %544 = vdwg.mxu0
        %v545 = vld [vmem:[%s6] sm:$0xff]
        %v546 = vld [vmem:[%s6 + $0x8] sm:$0xff]
        %v547 = vld [vmem:[%s6 + $0x10] sm:$0xff]
        %v548 = vld [vmem:[%s6 + $0x18] sm:$0xff]
        %v549 = vld [vmem:[%s7] sm:$0x1]
        %v551 = vsel %vm521, %v543, 0
        %553 = vmatpush.msra.mxu0 0.0
        %554 = vmatpush.msra.mxu0 0.0
        %555 = vmatpush.msra.mxu0 0.0
        %556 = vmatpush.msra.mxu0 0.0
        %557 = vmatpush.msra.mxu0 0.0
        %558 = vmatpush.msra.mxu0 0.0
        %559 = vmatpush.msra.mxu0 0.0
        %560 = vmatpush.msra.mxu0 0.0
        %561 = vmatpush.msra.mxu0 0.0
        %562 = vmatpush.msra.mxu0 0.0
        %563 = vmatpush.msra.mxu0 0.0
        %564 = vmatpush.msra.mxu0 0.0
        %565 = vmatpush.msra.mxu0 %v548
        %566 = vmatpush.msra.mxu0 %v547
        %567 = vmatpush.msra.mxu0 %v546
        %568 = vmatpush.msra.mxu0 %v545
        %569 = vmatmul.f32.gmra.mxu0 %v551
        %v570 = vpop.f32.mrf.mxu0
        %v571 = vadd.f32 %v549, %v570
        %572 = vdwg.mxu0
        %v573 = vmax.f32 %v571, 0.0
        %v574 = vld [vmem:[%s8] sm:$0x3]
        %v575 = vld [vmem:[%s9] sm:$0x1]
        %vm576 = vcmask 15360
        %v578 = vsel %vm576, %v573, 0
        %vm580 = vcmask 1041408
        %v582 = vsel %vm580, %v574, 0
        %584 = vmatpush.msra.mxu0 0.0
        %585 = vmatpush.msra.mxu0 0.0
        %586 = vmatpush.msra.mxu0 0.0
        %587 = vmatpush.msra.mxu0 0.0
        %588 = vmatpush.msra.mxu0 0.0
        %589 = vmatpush.msra.mxu0 0.0
        %590 = vmatpush.msra.mxu0 0.0
        %591 = vmatpush.msra.mxu0 0.0
        %592 = vmatpush.msra.mxu0 0.0
        %593 = vmatpush.msra.mxu0 0.0
        %594 = vmatpush.msra.mxu0 0.0
        %595 = vmatpush.msra.mxu0 0.0
        %596 = vmatpush.msra.mxu0 0.0
        %597 = vmatpush.msra.mxu0 0.0
        %598 = vmatpush.msra.mxu0 0.0
        %599 = vmatpush.msra.mxu0 %v582
        %600 = vmatmul.f32.gmra.mxu0 %v578
        %v601 = vpop.f32.mrf.mxu0
        %v602 = vadd.f32 %v575, %v601
        %603 = vdwg.mxu0
        %v604 = vxor.u32 %v602, 2147483648
        %v605 = vmul.f32 %v604, 1.442695
        %v606 = vpow.pop %v605
        %v607 = vadd.f32 %v606, 1.0
        %v608 = vrcp.pop %v607
        %v609 = vmul.f32 %v607, %v608
        %v610 = vsub.f32 1.0, %v609
        %v611 = vmul.f32 %v608, %v610
        %v612 = vadd.f32 %v608, %v611
        %vm613 = vweird.f32 %v607
        %vm614 = vweird.f32 %v608
        %vm615 = vmor %vm613, %vm614
        %v616 = vsel %vm615, %v608, %v612
        %v617 = vand.u32 2147483647, %v607
        %vm618 = vcmp.eq.f32.partialorder %v617, 8.507059e+37
        %v619 = vand.u32 %v607, 2147483648
        %v620 = vor.u32 1.1754944e-38, %v619
        %v621 = vsel %vm618, %v620, %v616
        %v622 = vmul.f32 1.0, %v621
        %v623 = vld [vmem:[%s2] sm:$0xf]
        %v624 = vld [vmem:[%s2 + $0x4] sm:$0xf]
        %v625 = vld [vmem:[%s2 + $0x8] sm:$0xf]
        %v626 = vld [vmem:[%s2 + $0xc] sm:$0xf]
        %v627 = vld [vmem:[%s3] sm:$0x1]
        %v629 = vperm.slane %v627, 0
        %v655 = vunpack.c.l.b16 %v486
        %v656 = vunpack.c.l.b16 %v487
        %v657 = vunpack.c.l.b16 %v488
        %v658 = vunpack.c.l.b16 %v489
        %v659 = vunpack.c.l.b16 %v490
        %v660 = vunpack.c.l.b16 %v491
        %v661 = vunpack.c.l.b16 %v492
        %v662 = vunpack.c.l.b16 %v493
        %v663 = vunpack.c.l.b16 %v494
        %v664 = vunpack.c.l.b16 %v495
        %v665 = vunpack.c.l.b16 %v496
        %v666 = vunpack.c.l.b16 %v497
        %v667 = vunpack.c.l.b16 %v498
        %v668 = vunpack.c.l.b16 %v499
        %v669 = vunpack.c.l.b16 %v500
        %v670 = vunpack.c.l.b16 %v501
        %v671 = vunpack.c.l.b16 %v502
        %v672 = vunpack.c.l.b16 %v503
        %v673 = vunpack.c.l.b16 %v504
        %v674 = vunpack.c.l.b16 %v505
        %v675 = vunpack.c.l.b16 %v506
        %v676 = vunpack.c.l.b16 %v507
        %v677 = vunpack.c.l.b16 %v508
        %v678 = vunpack.c.l.b16 %v509
        %v679 = vpack.c.b16 %v656, %v655
        %v680 = vpack.c.b16 %v658, %v657
        %v681 = vpack.c.b16 %v660, %v659
        %v682 = vpack.c.b16 %v662, %v661
        %v683 = vpack.c.b16 %v664, %v663
        %v684 = vpack.c.b16 %v666, %v665
        %v685 = vpack.c.b16 %v668, %v667
        %v686 = vpack.c.b16 %v670, %v669
        %v687 = vpack.c.b16 %v672, %v671
        %v688 = vpack.c.b16 %v674, %v673
        %v689 = vpack.c.b16 %v676, %v675
        %v690 = vpack.c.b16 %v678, %v677
        %v695 = vunpack.c.l.b16 %v623
        %v696 = vunpack.c.l.b16 %v624
        %v697 = vunpack.c.l.b16 %v625
        %v698 = vunpack.c.l.b16 %v626
        %v699 = vpack.c.b16 %v696, %v695
        %v700 = vpack.c.b16 %v698, %v697
        %v704 = vsel %vm521, %v679, 0
        %v707 = vsel %vm521, %v680, 0
        %v710 = vsel %vm521, %v681, 0
        %v713 = vsel %vm521, %v682, 0
        %v716 = vsel %vm521, %v683, 0
        %v719 = vsel %vm521, %v684, 0
        %v722 = vsel %vm521, %v685, 0
        %v725 = vsel %vm521, %v686, 0
        %v728 = vsel %vm521, %v687, 0
        %v731 = vsel %vm521, %v688, 0
        %v734 = vsel %vm521, %v689, 0
        %v737 = vsel %vm521, %v690, 0
        %739 = vmatpush.bf16.msra.mxu0 0
        %740 = vmatpush.bf16.msra.mxu0 0
        %741 = vmatpush.bf16.msra.mxu0 0
        %742 = vmatpush.bf16.msra.mxu0 0
        %743 = vmatpush.bf16.msra.mxu0 0
        %744 = vmatpush.bf16.msra.mxu0 0
        %745 = vmatpush.bf16.msra.mxu0 %v700
        %746 = vmatpush.bf16.msra.mxu0 %v699
        %747 = vmatmul.bf16.gmra.mxu0 %v704
        %v748 = vpop.f32.mrf.mxu0
        %v749 = vadd.f32 %v629, %v748
        %v750 = vpop.f32.mrf.mxu0
        %v751 = vadd.f32 %v629, %v750
        %752 = vmatmul.bf16.gmra.mxu0 %v707
        %v753 = vpop.f32.mrf.mxu0
        %v754 = vadd.f32 %v629, %v753
        %v755 = vpop.f32.mrf.mxu0
        %v756 = vadd.f32 %v629, %v755
        %757 = vmatmul.bf16.gmra.mxu0 %v710
        %v758 = vpop.f32.mrf.mxu0
        %v759 = vadd.f32 %v629, %v758
        %v760 = vpop.f32.mrf.mxu0
        %v761 = vadd.f32 %v629, %v760
        %762 = vmatmul.bf16.gmra.mxu0 %v713
        %v763 = vpop.f32.mrf.mxu0
        %v764 = vadd.f32 %v629, %v763
        %v765 = vpop.f32.mrf.mxu0
        %v766 = vadd.f32 %v629, %v765
        %767 = vmatmul.bf16.gmra.mxu0 %v716
        %v768 = vpop.f32.mrf.mxu0
        %v769 = vadd.f32 %v629, %v768
        %v770 = vpop.f32.mrf.mxu0
        %v771 = vadd.f32 %v629, %v770
        %772 = vmatmul.bf16.gmra.mxu0 %v719
        %v773 = vpop.f32.mrf.mxu0
        %v774 = vadd.f32 %v629, %v773
        %v775 = vpop.f32.mrf.mxu0
        %v776 = vadd.f32 %v629, %v775
        %777 = vmatmul.bf16.gmra.mxu0 %v722
        %v778 = vpop.f32.mrf.mxu0
        %v779 = vadd.f32 %v629, %v778
        %v780 = vpop.f32.mrf.mxu0
        %v781 = vadd.f32 %v629, %v780
        %782 = vmatmul.bf16.gmra.mxu0 %v725
        %v783 = vpop.f32.mrf.mxu0
        %v784 = vadd.f32 %v629, %v783
        %v785 = vpop.f32.mrf.mxu0
        %v786 = vadd.f32 %v629, %v785
        %787 = vmatmul.bf16.gmra.mxu0 %v728
        %v788 = vpop.f32.mrf.mxu0
        %v789 = vadd.f32 %v629, %v788
        %v790 = vpop.f32.mrf.mxu0
        %v791 = vadd.f32 %v629, %v790
        %792 = vmatmul.bf16.gmra.mxu0 %v731
        %v793 = vpop.f32.mrf.mxu0
        %v794 = vadd.f32 %v629, %v793
        %v795 = vpop.f32.mrf.mxu0
        %v796 = vadd.f32 %v629, %v795
        %797 = vmatmul.bf16.gmra.mxu0 %v734
        %v798 = vpop.f32.mrf.mxu0
        %v799 = vadd.f32 %v629, %v798
        %v800 = vpop.f32.mrf.mxu0
        %v801 = vadd.f32 %v629, %v800
        %802 = vmatmul.bf16.gmra.mxu0 %v737
        %v803 = vpop.f32.mrf.mxu0
        %v804 = vadd.f32 %v629, %v803
        %v805 = vpop.f32.mrf.mxu0
        %v806 = vadd.f32 %v629, %v805
        %807 = vdwg.mxu0
        %v808 = vmax.f32 %v749, 0.0
        %v809 = vmax.f32 %v751, 0.0
        %v810 = vmax.f32 %v754, 0.0
        %v811 = vmax.f32 %v756, 0.0
        %v812 = vmax.f32 %v759, 0.0
        %v813 = vmax.f32 %v761, 0.0
        %v814 = vmax.f32 %v764, 0.0
        %v815 = vmax.f32 %v766, 0.0
        %v816 = vmax.f32 %v769, 0.0
        %v817 = vmax.f32 %v771, 0.0
        %v818 = vmax.f32 %v774, 0.0
        %v819 = vmax.f32 %v776, 0.0
        %v820 = vmax.f32 %v779, 0.0
        %v821 = vmax.f32 %v781, 0.0
        %v822 = vmax.f32 %v784, 0.0
        %v823 = vmax.f32 %v786, 0.0
        %v824 = vmax.f32 %v789, 0.0
        %v825 = vmax.f32 %v791, 0.0
        %v826 = vmax.f32 %v794, 0.0
        %v827 = vmax.f32 %v796, 0.0
        %v828 = vmax.f32 %v799, 0.0
        %v829 = vmax.f32 %v801, 0.0
        %v830 = vmax.f32 %v804, 0.0
        %v831 = vmax.f32 %v806, 0.0
        %v832 = vpack.c.bf16 %v809, %v808
        %v833 = vpack.c.bf16 %v811, %v810
        %v834 = vpack.c.bf16 %v813, %v812
        %v835 = vpack.c.bf16 %v815, %v814
        %v836 = vpack.c.bf16 %v817, %v816
        %v837 = vpack.c.bf16 %v819, %v818
        %v838 = vpack.c.bf16 %v821, %v820
        %v839 = vpack.c.bf16 %v823, %v822
        %v840 = vpack.c.bf16 %v825, %v824
        %v841 = vpack.c.bf16 %v827, %v826
        %v842 = vpack.c.bf16 %v829, %v828
        %v843 = vpack.c.bf16 %v831, %v830
        %v845 = vperm.slane %v520, 0
        %v851 = vunpack.c.l.b16 %v512
        %v852 = vunpack.c.l.b16 %v513
        %v853 = vunpack.c.l.b16 %v514
        %v854 = vunpack.c.l.b16 %v515
        %v855 = vpack.c.b16 %v852, %v851
        %v856 = vpack.c.b16 %v854, %v853
        %v860 = vsel %vm521, %v832, 0
        %v863 = vsel %vm521, %v833, 0
        %v866 = vsel %vm521, %v834, 0
        %v869 = vsel %vm521, %v835, 0
        %v872 = vsel %vm521, %v836, 0
        %v875 = vsel %vm521, %v837, 0
        %v878 = vsel %vm521, %v838, 0
        %v881 = vsel %vm521, %v839, 0
        %v884 = vsel %vm521, %v840, 0
        %v887 = vsel %vm521, %v841, 0
        %v890 = vsel %vm521, %v842, 0
        %v893 = vsel %vm521, %v843, 0
        %895 = vmatpush.bf16.msra.mxu0 0
        %896 = vmatpush.bf16.msra.mxu0 0
        %897 = vmatpush.bf16.msra.mxu0 0
        %898 = vmatpush.bf16.msra.mxu0 0
        %899 = vmatpush.bf16.msra.mxu0 0
        %900 = vmatpush.bf16.msra.mxu0 0
        %901 = vmatpush.bf16.msra.mxu0 %v856
        %902 = vmatpush.bf16.msra.mxu0 %v855
        %903 = vmatmul.bf16.gmra.mxu0 %v860
        %v904 = vpop.f32.mrf.mxu0
        %v905 = vadd.f32 %v845, %v904
        %v906 = vpop.f32.mrf.mxu0
        %v907 = vadd.f32 %v845, %v906
        %908 = vmatmul.bf16.gmra.mxu0 %v863
        %v909 = vpop.f32.mrf.mxu0
        %v910 = vadd.f32 %v845, %v909
        %v911 = vpop.f32.mrf.mxu0
        %v912 = vadd.f32 %v845, %v911
        %913 = vmatmul.bf16.gmra.mxu0 %v866
        %v914 = vpop.f32.mrf.mxu0
        %v915 = vadd.f32 %v845, %v914
        %v916 = vpop.f32.mrf.mxu0
        %v917 = vadd.f32 %v845, %v916
        %918 = vmatmul.bf16.gmra.mxu0 %v869
        %v919 = vpop.f32.mrf.mxu0
        %v920 = vadd.f32 %v845, %v919
        %v921 = vpop.f32.mrf.mxu0
        %v922 = vadd.f32 %v845, %v921
        %923 = vmatmul.bf16.gmra.mxu0 %v872
        %v924 = vpop.f32.mrf.mxu0
        %v925 = vadd.f32 %v845, %v924
        %v926 = vpop.f32.mrf.mxu0
        %v927 = vadd.f32 %v845, %v926
        %928 = vmatmul.bf16.gmra.mxu0 %v875
        %v929 = vpop.f32.mrf.mxu0
        %v930 = vadd.f32 %v845, %v929
        %v931 = vpop.f32.mrf.mxu0
        %v932 = vadd.f32 %v845, %v931
        %933 = vmatmul.bf16.gmra.mxu0 %v878
        %v934 = vpop.f32.mrf.mxu0
        %v935 = vadd.f32 %v845, %v934
        %v936 = vpop.f32.mrf.mxu0
        %v937 = vadd.f32 %v845, %v936
        %938 = vmatmul.bf16.gmra.mxu0 %v881
        %v939 = vpop.f32.mrf.mxu0
        %v940 = vadd.f32 %v845, %v939
        %v941 = vpop.f32.mrf.mxu0
        %v942 = vadd.f32 %v845, %v941
        %943 = vmatmul.bf16.gmra.mxu0 %v884
        %v944 = vpop.f32.mrf.mxu0
        %v945 = vadd.f32 %v845, %v944
        %v946 = vpop.f32.mrf.mxu0
        %v947 = vadd.f32 %v845, %v946
        %948 = vmatmul.bf16.gmra.mxu0 %v887
        %v949 = vpop.f32.mrf.mxu0
        %v950 = vadd.f32 %v845, %v949
        %v951 = vpop.f32.mrf.mxu0
        %v952 = vadd.f32 %v845, %v951
        %953 = vmatmul.bf16.gmra.mxu0 %v890
        %v954 = vpop.f32.mrf.mxu0
        %v955 = vadd.f32 %v845, %v954
        %v956 = vpop.f32.mrf.mxu0
        %v957 = vadd.f32 %v845, %v956
        %958 = vmatmul.bf16.gmra.mxu0 %v893
        %v959 = vpop.f32.mrf.mxu0
        %v960 = vadd.f32 %v845, %v959
        %v961 = vpop.f32.mrf.mxu0
        %v962 = vadd.f32 %v845, %v961
        %963 = vdwg.mxu0
        %v964 = vperm.slane %v622, 0
        %v965 = vmul.f32 %v905, %v964
        %v966 = vmul.f32 %v907, %v964
        %v967 = vmul.f32 %v910, %v964
        %v968 = vmul.f32 %v912, %v964
        %v969 = vmul.f32 %v915, %v964
        %v970 = vmul.f32 %v917, %v964
        %v971 = vmul.f32 %v920, %v964
        %v972 = vmul.f32 %v922, %v964
        %v973 = vmul.f32 %v925, %v964
        %v974 = vmul.f32 %v927, %v964
        %v975 = vmul.f32 %v930, %v964
        %v976 = vmul.f32 %v932, %v964
        %v977 = vmul.f32 %v935, %v964
        %v978 = vmul.f32 %v937, %v964
        %v979 = vmul.f32 %v940, %v964
        %v980 = vmul.f32 %v942, %v964
        %v981 = vmul.f32 %v945, %v964
        %v982 = vmul.f32 %v947, %v964
        %v983 = vmul.f32 %v950, %v964
        %v984 = vmul.f32 %v952, %v964
        %v985 = vmul.f32 %v955, %v964
        %v986 = vmul.f32 %v957, %v964
        %v987 = vmul.f32 %v960, %v964
        %v988 = vmul.f32 %v962, %v964
        %v989 = vunpack.c.l.bf16 %v486
        %v990 = vunpack.c.l.bf16 %v487
        %v991 = vunpack.c.l.bf16 %v488
        %v992 = vunpack.c.l.bf16 %v489
        %v993 = vunpack.c.l.bf16 %v490
        %v994 = vunpack.c.l.bf16 %v491
        %v995 = vunpack.c.l.bf16 %v492
        %v996 = vunpack.c.l.bf16 %v493
        %v997 = vunpack.c.l.bf16 %v494
        %v998 = vunpack.c.l.bf16 %v495
        %v999 = vunpack.c.l.bf16 %v496
        %v1000 = vunpack.c.l.bf16 %v497
        %v1001 = vunpack.c.l.bf16 %v498
        %v1002 = vunpack.c.l.bf16 %v499
        %v1003 = vunpack.c.l.bf16 %v500
        %v1004 = vunpack.c.l.bf16 %v501
        %v1005 = vunpack.c.l.bf16 %v502
        %v1006 = vunpack.c.l.bf16 %v503
        %v1007 = vunpack.c.l.bf16 %v504
        %v1008 = vunpack.c.l.bf16 %v505
        %v1009 = vunpack.c.l.bf16 %v506
        %v1010 = vunpack.c.l.bf16 %v507
        %v1011 = vunpack.c.l.bf16 %v508
        %v1012 = vunpack.c.l.bf16 %v509
        %v1013 = vadd.f32 %v965, %v989
        %v1014 = vadd.f32 %v966, %v990
        %v1015 = vadd.f32 %v967, %v991
        %v1016 = vadd.f32 %v968, %v992
        %v1017 = vadd.f32 %v969, %v993
        %v1018 = vadd.f32 %v970, %v994
        %v1019 = vadd.f32 %v971, %v995
        %v1020 = vadd.f32 %v972, %v996
        %v1021 = vadd.f32 %v973, %v997
        %v1022 = vadd.f32 %v974, %v998
        %v1023 = vadd.f32 %v975, %v999
        %v1024 = vadd.f32 %v976, %v1000
        %v1025 = vadd.f32 %v977, %v1001
        %v1026 = vadd.f32 %v978, %v1002
        %v1027 = vadd.f32 %v979, %v1003
        %v1028 = vadd.f32 %v980, %v1004
        %v1029 = vadd.f32 %v981, %v1005
        %v1030 = vadd.f32 %v982, %v1006
        %v1031 = vadd.f32 %v983, %v1007
        %v1032 = vadd.f32 %v984, %v1008
        %v1033 = vadd.f32 %v985, %v1009
        %v1034 = vadd.f32 %v986, %v1010
        %v1035 = vadd.f32 %v987, %v1011
        %v1036 = vadd.f32 %v988, %v1012
        %v1037 = vlaneseq
        %v1038 = vshrl.u32 %v1037, 7
        %v1039 = vadd.s32 %v1038, 8
        %v1040 = vadd.s32 %v1038, 16
        %v1041 = vadd.s32 %v1038, 24
        %v1042 = vadd.s32 %v1038, 32
        %v1043 = vadd.s32 %v1038, 40
        %v1044 = vadd.s32 %v1038, 48
        %v1045 = vadd.s32 %v1038, 56
        %v1046 = vadd.s32 %v1038, 64
        %v1047 = vadd.s32 %v1038, 72
        %v1048 = vadd.s32 %v1038, 80
        %v1049 = vadd.s32 %v1038, 88
        %v1050 = vadd.s32 %v1038, 96
        %v1051 = vadd.s32 %v1038, 104
        %v1052 = vadd.s32 %v1038, 112
        %v1053 = vadd.s32 %v1038, 120
        %v1054 = vadd.s32 %v1038, 128
        %v1055 = vadd.s32 %v1038, 136
        %v1056 = vadd.s32 %v1038, 144
        %v1057 = vadd.s32 %v1038, 152
        %v1058 = vadd.s32 %v1038, 160
        %v1059 = vadd.s32 %v1038, 168
        %v1060 = vadd.s32 %v1038, 176
        %v1061 = vadd.s32 %v1038, 184
        %v1062 = vcvt.s32.f32 %v1038
        %v1063 = vcvt.s32.f32 %v1039
        %v1064 = vcvt.s32.f32 %v1040
        %v1065 = vcvt.s32.f32 %v1041
        %v1066 = vcvt.s32.f32 %v1042
        %v1067 = vcvt.s32.f32 %v1043
        %v1068 = vcvt.s32.f32 %v1044
        %v1069 = vcvt.s32.f32 %v1045
        %v1070 = vcvt.s32.f32 %v1046
        %v1071 = vcvt.s32.f32 %v1047
        %v1072 = vcvt.s32.f32 %v1048
        %v1073 = vcvt.s32.f32 %v1049
        %v1074 = vcvt.s32.f32 %v1050
        %v1075 = vcvt.s32.f32 %v1051
        %v1076 = vcvt.s32.f32 %v1052
        %v1077 = vcvt.s32.f32 %v1053
        %v1078 = vcvt.s32.f32 %v1054
        %v1079 = vcvt.s32.f32 %v1055
        %v1080 = vcvt.s32.f32 %v1056
        %v1081 = vcvt.s32.f32 %v1057
        %v1082 = vcvt.s32.f32 %v1058
        %v1083 = vcvt.s32.f32 %v1059
        %v1084 = vcvt.s32.f32 %v1060
        %v1085 = vcvt.s32.f32 %v1061
        %v1086 = vadd.f32 %v1062, 0.5
        %v1087 = vadd.f32 %v1063, 0.5
        %v1088 = vadd.f32 %v1064, 0.5
        %v1089 = vadd.f32 %v1065, 0.5
        %v1090 = vadd.f32 %v1066, 0.5
        %v1091 = vadd.f32 %v1067, 0.5
        %v1092 = vadd.f32 %v1068, 0.5
        %v1093 = vadd.f32 %v1069, 0.5
        %v1094 = vadd.f32 %v1070, 0.5
        %v1095 = vadd.f32 %v1071, 0.5
        %v1096 = vadd.f32 %v1072, 0.5
        %v1097 = vadd.f32 %v1073, 0.5
        %v1098 = vadd.f32 %v1074, 0.5
        %v1099 = vadd.f32 %v1075, 0.5
        %v1100 = vadd.f32 %v1076, 0.5
        %v1101 = vadd.f32 %v1077, 0.5
        %v1102 = vadd.f32 %v1078, 0.5
        %v1103 = vadd.f32 %v1079, 0.5
        %v1104 = vadd.f32 %v1080, 0.5
        %v1105 = vadd.f32 %v1081, 0.5
        %v1106 = vadd.f32 %v1082, 0.5
        %v1107 = vadd.f32 %v1083, 0.5
        %v1108 = vadd.f32 %v1084, 0.5
        %v1109 = vadd.f32 %v1085, 0.5
        %v1110 = vmul.f32 %v1086, 0.041666668
        %v1111 = vmul.f32 %v1087, 0.041666668
        %v1112 = vmul.f32 %v1088, 0.041666668
        %v1113 = vmul.f32 %v1089, 0.041666668
        %v1114 = vmul.f32 %v1090, 0.041666668
        %v1115 = vmul.f32 %v1091, 0.041666668
        %v1116 = vmul.f32 %v1092, 0.041666668
        %v1117 = vmul.f32 %v1093, 0.041666668
        %v1118 = vmul.f32 %v1094, 0.041666668
        %v1119 = vmul.f32 %v1095, 0.041666668
        %v1120 = vmul.f32 %v1096, 0.041666668
        %v1121 = vmul.f32 %v1097, 0.041666668
        %v1122 = vmul.f32 %v1098, 0.041666668
        %v1123 = vmul.f32 %v1099, 0.041666668
        %v1124 = vmul.f32 %v1100, 0.041666668
        %v1125 = vmul.f32 %v1101, 0.041666668
        %v1126 = vmul.f32 %v1102, 0.041666668
        %v1127 = vmul.f32 %v1103, 0.041666668
        %v1128 = vmul.f32 %v1104, 0.041666668
        %v1129 = vmul.f32 %v1105, 0.041666668
        %v1130 = vmul.f32 %v1106, 0.041666668
        %v1131 = vmul.f32 %v1107, 0.041666668
        %v1132 = vmul.f32 %v1108, 0.041666668
        %v1133 = vmul.f32 %v1109, 0.041666668
        %v1134 = vfloor.f32 %v1110
        %v1135 = vfloor.f32 %v1111
        %v1136 = vfloor.f32 %v1112
        %v1137 = vfloor.f32 %v1113
        %v1138 = vfloor.f32 %v1114
        %v1139 = vfloor.f32 %v1115
        %v1140 = vfloor.f32 %v1116
        %v1141 = vfloor.f32 %v1117
        %v1142 = vfloor.f32 %v1118
        %v1143 = vfloor.f32 %v1119
        %v1144 = vfloor.f32 %v1120
        %v1145 = vfloor.f32 %v1121
        %v1146 = vfloor.f32 %v1122
        %v1147 = vfloor.f32 %v1123
        %v1148 = vfloor.f32 %v1124
        %v1149 = vfloor.f32 %v1125
        %v1150 = vfloor.f32 %v1126
        %v1151 = vfloor.f32 %v1127
        %v1152 = vfloor.f32 %v1128
        %v1153 = vfloor.f32 %v1129
        %v1154 = vfloor.f32 %v1130
        %v1155 = vfloor.f32 %v1131
        %v1156 = vfloor.f32 %v1132
        %v1157 = vfloor.f32 %v1133
        %v1158 = vmul.f32 %v1134, 24.0
        %v1159 = vmul.f32 %v1135, 24.0
        %v1160 = vmul.f32 %v1136, 24.0
        %v1161 = vmul.f32 %v1137, 24.0
        %v1162 = vmul.f32 %v1138, 24.0
        %v1163 = vmul.f32 %v1139, 24.0
        %v1164 = vmul.f32 %v1140, 24.0
        %v1165 = vmul.f32 %v1141, 24.0
        %v1166 = vmul.f32 %v1142, 24.0
        %v1167 = vmul.f32 %v1143, 24.0
        %v1168 = vmul.f32 %v1144, 24.0
        %v1169 = vmul.f32 %v1145, 24.0
        %v1170 = vmul.f32 %v1146, 24.0
        %v1171 = vmul.f32 %v1147, 24.0
        %v1172 = vmul.f32 %v1148, 24.0
        %v1173 = vmul.f32 %v1149, 24.0
        %v1174 = vmul.f32 %v1150, 24.0
        %v1175 = vmul.f32 %v1151, 24.0
        %v1176 = vmul.f32 %v1152, 24.0
        %v1177 = vmul.f32 %v1153, 24.0
        %v1178 = vmul.f32 %v1154, 24.0
        %v1179 = vmul.f32 %v1155, 24.0
        %v1180 = vmul.f32 %v1156, 24.0
        %v1181 = vmul.f32 %v1157, 24.0
        %v1182 = vsub.f32 %v1062, %v1158
        %v1183 = vsub.f32 %v1063, %v1159
        %v1184 = vsub.f32 %v1064, %v1160
        %v1185 = vsub.f32 %v1065, %v1161
        %v1186 = vsub.f32 %v1066, %v1162
        %v1187 = vsub.f32 %v1067, %v1163
        %v1188 = vsub.f32 %v1068, %v1164
        %v1189 = vsub.f32 %v1069, %v1165
        %v1190 = vsub.f32 %v1070, %v1166
        %v1191 = vsub.f32 %v1071, %v1167
        %v1192 = vsub.f32 %v1072, %v1168
        %v1193 = vsub.f32 %v1073, %v1169
        %v1194 = vsub.f32 %v1074, %v1170
        %v1195 = vsub.f32 %v1075, %v1171
        %v1196 = vsub.f32 %v1076, %v1172
        %v1197 = vsub.f32 %v1077, %v1173
        %v1198 = vsub.f32 %v1078, %v1174
        %v1199 = vsub.f32 %v1079, %v1175
        %v1200 = vsub.f32 %v1080, %v1176
        %v1201 = vsub.f32 %v1081, %v1177
        %v1202 = vsub.f32 %v1082, %v1178
        %v1203 = vsub.f32 %v1083, %v1179
        %v1204 = vsub.f32 %v1084, %v1180
        %v1205 = vsub.f32 %v1085, %v1181
        %vm1206 = vcmp.gt.f32.partialorder %v1182, 0.5
        %vm1207 = vcmp.gt.f32.partialorder %v1183, 0.5
        %vm1208 = vcmp.gt.f32.partialorder %v1184, 0.5
        %vm1209 = vcmp.gt.f32.partialorder %v1185, 0.5
        %vm1210 = vcmp.gt.f32.partialorder %v1186, 0.5
        %vm1211 = vcmp.gt.f32.partialorder %v1187, 0.5
        %vm1212 = vcmp.gt.f32.partialorder %v1188, 0.5
        %vm1213 = vcmp.gt.f32.partialorder %v1189, 0.5
        %vm1214 = vcmp.gt.f32.partialorder %v1190, 0.5
        %vm1215 = vcmp.gt.f32.partialorder %v1191, 0.5
        %vm1216 = vcmp.gt.f32.partialorder %v1192, 0.5
        %vm1217 = vcmp.gt.f32.partialorder %v1193, 0.5
        %vm1218 = vcmp.gt.f32.partialorder %v1194, 0.5
        %vm1219 = vcmp.gt.f32.partialorder %v1195, 0.5
        %vm1220 = vcmp.gt.f32.partialorder %v1196, 0.5
        %vm1221 = vcmp.gt.f32.partialorder %v1197, 0.5
        %vm1222 = vcmp.gt.f32.partialorder %v1198, 0.5
        %vm1223 = vcmp.gt.f32.partialorder %v1199, 0.5
        %vm1224 = vcmp.gt.f32.partialorder %v1200, 0.5
        %vm1225 = vcmp.gt.f32.partialorder %v1201, 0.5
        %vm1226 = vcmp.gt.f32.partialorder %v1202, 0.5
        %vm1227 = vcmp.gt.f32.partialorder %v1203, 0.5
        %vm1228 = vcmp.gt.f32.partialorder %v1204, 0.5
        %vm1229 = vcmp.gt.f32.partialorder %v1205, 0.5
        %vm1230 = vcmp.lt.f32.partialorder %v1182, 16.5
        %vm1231 = vcmp.lt.f32.partialorder %v1183, 16.5
        %vm1232 = vcmp.lt.f32.partialorder %v1184, 16.5
        %vm1233 = vcmp.lt.f32.partialorder %v1185, 16.5
        %vm1234 = vcmp.lt.f32.partialorder %v1186, 16.5
        %vm1235 = vcmp.lt.f32.partialorder %v1187, 16.5
        %vm1236 = vcmp.lt.f32.partialorder %v1188, 16.5
        %vm1237 = vcmp.lt.f32.partialorder %v1189, 16.5
        %vm1238 = vcmp.lt.f32.partialorder %v1190, 16.5
        %vm1239 = vcmp.lt.f32.partialorder %v1191, 16.5
        %vm1240 = vcmp.lt.f32.partialorder %v1192, 16.5
        %vm1241 = vcmp.lt.f32.partialorder %v1193, 16.5
        %vm1242 = vcmp.lt.f32.partialorder %v1194, 16.5
        %vm1243 = vcmp.lt.f32.partialorder %v1195, 16.5
        %vm1244 = vcmp.lt.f32.partialorder %v1196, 16.5
        %vm1245 = vcmp.lt.f32.partialorder %v1197, 16.5
        %vm1246 = vcmp.lt.f32.partialorder %v1198, 16.5
        %vm1247 = vcmp.lt.f32.partialorder %v1199, 16.5
        %vm1248 = vcmp.lt.f32.partialorder %v1200, 16.5
        %vm1249 = vcmp.lt.f32.partialorder %v1201, 16.5
        %vm1250 = vcmp.lt.f32.partialorder %v1202, 16.5
        %vm1251 = vcmp.lt.f32.partialorder %v1203, 16.5
        %vm1252 = vcmp.lt.f32.partialorder %v1204, 16.5
        %vm1253 = vcmp.lt.f32.partialorder %v1205, 16.5
        %vm1254 = vmand %vm1206, %vm1230
        %vm1255 = vmand %vm1207, %vm1231
        %vm1256 = vmand %vm1208, %vm1232
        %vm1257 = vmand %vm1209, %vm1233
        %vm1258 = vmand %vm1210, %vm1234
        %vm1259 = vmand %vm1211, %vm1235
        %vm1260 = vmand %vm1212, %vm1236
        %vm1261 = vmand %vm1213, %vm1237
        %vm1262 = vmand %vm1214, %vm1238
        %vm1263 = vmand %vm1215, %vm1239
        %vm1264 = vmand %vm1216, %vm1240
        %vm1265 = vmand %vm1217, %vm1241
        %vm1266 = vmand %vm1218, %vm1242
        %vm1267 = vmand %vm1219, %vm1243
        %vm1268 = vmand %vm1220, %vm1244
        %vm1269 = vmand %vm1221, %vm1245
        %vm1270 = vmand %vm1222, %vm1246
        %vm1271 = vmand %vm1223, %vm1247
        %vm1272 = vmand %vm1224, %vm1248
        %vm1273 = vmand %vm1225, %vm1249
        %vm1274 = vmand %vm1226, %vm1250
        %vm1275 = vmand %vm1227, %vm1251
        %vm1276 = vmand %vm1228, %vm1252
        %vm1277 = vmand %vm1229, %vm1253
        %v1278 = vsel %vm1254, %v1013, 0.0
        %v1279 = vsel %vm1255, %v1014, 0.0
        %v1280 = vsel %vm1256, %v1015, 0.0
        %v1281 = vsel %vm1257, %v1016, 0.0
        %v1282 = vsel %vm1258, %v1017, 0.0
        %v1283 = vsel %vm1259, %v1018, 0.0
        %v1284 = vsel %vm1260, %v1019, 0.0
        %v1285 = vsel %vm1261, %v1020, 0.0
        %v1286 = vsel %vm1262, %v1021, 0.0
        %v1287 = vsel %vm1263, %v1022, 0.0
        %v1288 = vsel %vm1264, %v1023, 0.0
        %v1289 = vsel %vm1265, %v1024, 0.0
        %v1290 = vsel %vm1266, %v1025, 0.0
        %v1291 = vsel %vm1267, %v1026, 0.0
        %v1292 = vsel %vm1268, %v1027, 0.0
        %v1293 = vsel %vm1269, %v1028, 0.0
        %v1294 = vsel %vm1270, %v1029, 0.0
        %v1295 = vsel %vm1271, %v1030, 0.0
        %v1296 = vsel %vm1272, %v1031, 0.0
        %v1297 = vsel %vm1273, %v1032, 0.0
        %v1298 = vsel %vm1274, %v1033, 0.0
        %v1299 = vsel %vm1275, %v1034, 0.0
        %v1300 = vsel %vm1276, %v1035, 0.0
        %v1301 = vsel %vm1277, %v1036, 0.0
        %v1302 = vpack.c.bf16 %v1278, %v1278
        %v1303 = vpack.c.bf16 %v1279, %v1279
        %v1304 = vpack.c.bf16 %v1280, %v1280
        %v1305 = vpack.c.bf16 %v1281, %v1281
        %v1306 = vpack.c.bf16 %v1282, %v1282
        %v1307 = vpack.c.bf16 %v1283, %v1283
        %v1308 = vpack.c.bf16 %v1284, %v1284
        %v1309 = vpack.c.bf16 %v1285, %v1285
        %v1310 = vpack.c.bf16 %v1286, %v1286
        %v1311 = vpack.c.bf16 %v1287, %v1287
        %v1312 = vpack.c.bf16 %v1288, %v1288
        %v1313 = vpack.c.bf16 %v1289, %v1289
        %v1314 = vpack.c.bf16 %v1290, %v1290
        %v1315 = vpack.c.bf16 %v1291, %v1291
        %v1316 = vpack.c.bf16 %v1292, %v1292
        %v1317 = vpack.c.bf16 %v1293, %v1293
        %v1318 = vpack.c.bf16 %v1294, %v1294
        %v1319 = vpack.c.bf16 %v1295, %v1295
        %v1320 = vpack.c.bf16 %v1296, %v1296
        %v1321 = vpack.c.bf16 %v1297, %v1297
        %v1322 = vpack.c.bf16 %v1298, %v1298
        %v1323 = vpack.c.bf16 %v1299, %v1299
        %v1324 = vpack.c.bf16 %v1300, %v1300
        %v1325 = vpack.c.bf16 %v1301, %v1301
        %vm1326 = vcmask 257024
        %1327 = vst.msk [vmem:[%s449] sm:$0xf] %vm1326, %v1302
        %1328 = vst.msk [vmem:[%s449 + $0x4] sm:$0xf] %vm1326, %v1303
        %1329 = vst.msk [vmem:[%s449 + $0x8] sm:$0xf] %vm1326, %v1304
        %1330 = vst.msk [vmem:[%s449 + $0xc] sm:$0xf] %vm1326, %v1305
        %1331 = vst.msk [vmem:[%s449 + $0x10] sm:$0xf] %vm1326, %v1306
        %1332 = vst.msk [vmem:[%s449 + $0x14] sm:$0xf] %vm1326, %v1307
        %1333 = vst.msk [vmem:[%s449 + $0x18] sm:$0xf] %vm1326, %v1308
        %1334 = vst.msk [vmem:[%s449 + $0x1c] sm:$0xf] %vm1326, %v1309
        %1335 = vst.msk [vmem:[%s449 + $0x20] sm:$0xf] %vm1326, %v1310
        %1336 = vst.msk [vmem:[%s449 + $0x24] sm:$0xf] %vm1326, %v1311
        %1337 = vst.msk [vmem:[%s449 + $0x28] sm:$0xf] %vm1326, %v1312
        %1338 = vst.msk [vmem:[%s449 + $0x2c] sm:$0xf] %vm1326, %v1313
        %1339 = vst.msk [vmem:[%s449 + $0x30] sm:$0xf] %vm1326, %v1314
        %1340 = vst.msk [vmem:[%s449 + $0x34] sm:$0xf] %vm1326, %v1315
        %1341 = vst.msk [vmem:[%s449 + $0x38] sm:$0xf] %vm1326, %v1316
        %1342 = vst.msk [vmem:[%s449 + $0x3c] sm:$0xf] %vm1326, %v1317
        %1343 = vst.msk [vmem:[%s449 + $0x40] sm:$0xf] %vm1326, %v1318
        %1344 = vst.msk [vmem:[%s449 + $0x44] sm:$0xf] %vm1326, %v1319
        %1345 = vst.msk [vmem:[%s449 + $0x48] sm:$0xf] %vm1326, %v1320
        %1346 = vst.msk [vmem:[%s449 + $0x4c] sm:$0xf] %vm1326, %v1321
        %1347 = vst.msk [vmem:[%s449 + $0x50] sm:$0xf] %vm1326, %v1322
        %1348 = vst.msk [vmem:[%s449 + $0x54] sm:$0xf] %vm1326, %v1323
        %1349 = vst.msk [vmem:[%s449 + $0x58] sm:$0xf] %vm1326, %v1324
        %1350 = vst.msk [vmem:[%s449 + $0x5c] sm:$0xf] %vm1326, %v1325
      $region68: #{_lambda_.5} parent=59 // pred_fallthru
        _
      %s1351 = smul.u32 24, %s26
      %p1352 = scmp.lt.s32.totalorder %s25, 1
      %s1353 = scalar_select %p1352, %s25, 1
      %p1354 = scmp.lt.s32.totalorder %s1351, 95
      %s1355 = scalar_select %p1354, %s1351, 95
      %s1356 = smul.addr %s1353, 96
      %s1357 = sadd.s32 %s1355, %s1356
      %s1358 = smul.addr %s1357, 4
      %s1359 = scalar_lea.vmem %s10, %s1358
      // Predicated region
      $region69: #{_lambda_.5} parent=59 // pred_check
        %p1360 = pneg %p285
      $region70: #{_lambda_.5} parent=59 // pred_check_branch
        %1362 = sbr.rel (%p1360) target = $region72
      $region71: #{_lambda_.5} parent=59 // pred_region
        %s1363 = smul.u32 24, %s26
      $region72: #{_lambda_.5} parent=59 // pred_fallthru
        _
    $region60: #{_lambda_.5} parent=5 // pred_fallthru
      _
    %p1364 = scmp.le.s32.totalorder 2, %s16
    // Predicated region
    $region73: #{_lambda_.5} parent=5 // pred_check
      %p1365 = pneg %p1364
    $region74: #{_lambda_.5} parent=5 // pred_check_branch
      %1367 = sbr.rel (%p1365) target = $region76
    $region75: #{_lambda_.5} parent=5 // pred_region
      %s1368 = ssub.s32 %s16, 2
      // Predicated region
      $region77: #{_lambda_.5} parent=75 // pred_check
        %p1369 = pneg %p291
      $region78: #{_lambda_.5} parent=75 // pred_check_branch
        %1371 = sbr.rel (%p1369) target = $region80
      $region79: #{_lambda_.5} parent=75 // pred_region
        %s1372 = smul.u32 24, %s28
        %p1373 = scmp.lt.s32.totalorder %s27, 1
        %s1374 = scalar_select %p1373, %s27, 1
        %p1375 = scmp.lt.s32.totalorder %s1372, 95
        %s1376 = scalar_select %p1375, %s1372, 95
        %s1377 = smul.addr %s1374, 96
        %s1378 = sadd.s32 %s1376, %s1377
        %s1379 = smul.addr %s1378, 4
        %s1380 = scalar_lea.vmem %s10, %s1379
      $region80: #{_lambda_.5} parent=75 // pred_fallthru
        _
    $region76: #{_lambda_.5} parent=5 // pred_fallthru
      _
  $region6: #{_lambda_.5} parent=0 // loop_footer
    %s20 = sadd.s32 1, %s16
  $region7: #{_lambda_.5} parent=0 // loop_footer_branch
    %15 = sbr.rel target = $region3
  $region8: #{_lambda_.5} parent=0 // loop_exit
    _

// kernel: _lambda_.4
$region0: #{_lambda_.4}
  #allocation0 [shape = 'u32[]', space=smem, size = 0x4, offset = 0x4, fixed_abs, tag = 'smem constant byte address 0x4 - core index']
  #allocation1 [shape = 'u32[72,128]{1,0:T(1,128)}', space=vmem, size = 0x9000, scoped, tag = 'internal scratch']
  #allocation2 [shape = 'bf16[304,32]{1,0:T(8,128)(2,1)}', space=vmem, size = 0x13000, scoped, tag = 'scratch operand']
  #allocation3 [shape = 'bf16[256,32]{1,0:T(8,128)(2,1)}', space=vmem, size = 0x10000, scoped, tag = 'scratch operand']
  #allocation4 [shape = 'f32[8,32]{1,0:T(8,128)}', space=vmem, size = 0x1000, scoped, tag = 'scratch operand']
  %s0 = inlined_call_operand.vmem [shape: bf16[2,768,32], index: 0, kind: input, shape index: {}, may-alias: {0,1,2}]
  %s1 = inlined_call_operand.vmem [shape: bf16[2,768,32], index: 1, kind: input, shape index: {}, may-alias: {0,1,2}]
  %s2 = inlined_call_operand.vmem [shape: bf16[2,768,32], index: 2, kind: input, shape index: {}, may-alias: {0,1,2}]
  %s3 = inlined_call_operand.vmem [shape: bf16[9,32,32], index: 3, kind: input, shape index: {}]
  %s4 = inlined_call_operand.vmem [shape: f32[1,32], index: 4, kind: input, shape index: {}]
  %s5 = inlined_call_operand.vmem [shape: bf16[9,32,32], index: 5, kind: input, shape index: {}]
  %s6 = inlined_call_operand.vmem [shape: f32[1,32], index: 6, kind: input, shape index: {}]
  %s7 = inlined_call_operand.vmem [shape: bf16[32,32], index: 7, kind: input, shape index: {}]
  %s8 = inlined_call_operand.vmem [shape: f32[1,32], index: 8, kind: input, shape index: {}]
  %s9 = inlined_call_operand.vmem [shape: bf16[2,384,32], index: 9, kind: output, shape index: {0}]
  %s10 = inlined_call_operand.vmem [shape: f32[2,8,32], index: 10, kind: output, shape index: {1}]
  %11 = xla_tuple %s9, %s10
  %s12 = sld [smem:[#allocation0]]
  $region81: #{_lambda_.4} parent=0
    _
  %s14 = ssub.s32 1, %s12
  %s15 = scalar_select 0, %s14, %s12
  loop: start=0, step=1, limit=6
  $region2: #{_lambda_.4} parent=0 // loop_pre_header
    _
  $region3: #{_lambda_.4} parent=0 // loop_header
    %s17 = sphi 0, %s21
    %p18 = scmp.ge.s32.totalorder %s17, 6
    %s24 = sphi 0, %s36
    %s25 = sphi 0, %s32
    %s26 = sphi 0, %s24
    %s27 = sphi 0, %s25
    %s28 = sphi 0, %s26
    %s29 = sphi 0, %s27
    %s43 = sphi 0, %s45
    %s46 = sphi 0, %s43
    %s47 = sphi 0, %s46
    %s63 = sphi 0, %s47
    %s77 = sphi 0, %s79
    %s80 = sphi 0, %s77
    %s81 = sphi 0, %s80
    %s97 = sphi 0, %s81
    %s109 = sphi 0, %s111
    %s112 = sphi 0, %s109
    %s113 = sphi 0, %s112
    %s129 = sphi 0, %s113
    %s133 = sphi 0, %s133
    %s135 = sphi 0, %s133
    %s136 = sphi 0, %s135
    %s150 = sphi 0, %s136
    %s154 = sphi 0, %s154
    %s156 = sphi 0, %s154
    %s157 = sphi 0, %s156
    %s171 = sphi 0, %s157
    %s175 = sphi 0, %s175
    %s177 = sphi 0, %s175
    %s178 = sphi 0, %s177
    %s192 = sphi 0, %s178
    %s196 = sphi 0, %s196
    %s198 = sphi 0, %s196
    %s199 = sphi 0, %s198
    %s213 = sphi 0, %s199
    %s217 = sphi 0, %s217
    %s219 = sphi 0, %s217
    %s220 = sphi 0, %s219
    %s234 = sphi 0, %s220
    %s238 = sphi 0, %s238
    %s240 = sphi 0, %s238
    %s241 = sphi 0, %s240
    %s255 = sphi 0, %s241
    %s263 = sphi 0, %s265
    %s266 = sphi 0, %s263
    %s267 = sphi 0, %s266
    %s283 = sphi 0, %s267
    %s289 = sphi 0, %s291
    %s292 = sphi 0, %s289
    %s293 = sphi 0, %s292
    %s309 = sphi 0, %s293
  $region4: #{_lambda_.4} parent=0 // loop_header_branch
    %20 = sbr.rel (%p18) target = $region8
  $region5: #{_lambda_.4} parent=0 // loop_body
    %s22 = ssub.s32 %s17, 1
    %s23 = ssub.s32 %s17, 2
    %s30 = sadd.s32 1, %s25
    %p31 = scmp.ge.s32.totalorder %s30, 2
    %s32 = scalar_select %p31, 0, %s30
    %s33 = sadd.s32 1, %s24
    %s34 = scalar_select %p31, %s33, %s24
    %p35 = scmp.ge.s32.totalorder %s34, 2
    %s36 = scalar_select %p35, 0, %s34
    %s37 = sadd.s32 %s25, 1
    %s38 = sadd.s32 %s32, 1
    %s39 = ssub.s32 %s24, %s36
    %s40 = ssub.s32 %s37, %s38
    %s41 = sor.u32 %s39, %s40
    %p42 = scmp.eq.s32.totalorder %s41, 0
    %s44 = sadd.s32 %s43, 1
    %s45 = scalar_select %p42, %s43, %s44
    %p48 = pneg %p42
    %p49 = scmp.eq.s32.totalorder %s17, 3
    %p50 = por %p48, %p49
    %p51 = scmp.ne.s32.totalorder %s43, %s46
    %p52 = scmp.eq.s32.totalorder %s17, 0
    %p53 = por %p51, %p52
    %p54 = scmp.ne.s32.totalorder %s43, %s46
    %p55 = scmp.eq.s32.totalorder %s22, 3
    %p56 = por %p54, %p55
    %p57 = scmp.ne.s32.totalorder %s46, %s47
    %p58 = scmp.eq.s32.totalorder %s22, 0
    %p59 = por %p57, %p58
    %p60 = scmp.ne.s32.totalorder %s46, %s47
    %p61 = scmp.eq.s32.totalorder %s23, 3
    %p62 = por %p60, %p61
    %p64 = scmp.ne.s32.totalorder %s47, %s63
    %p65 = scmp.eq.s32.totalorder %s23, 0
    %p66 = por %p64, %p65
    %s67 = sadd.s32 %s25, 1
    %s68 = smul.u32 %s67, 4
    %s69 = ssub.s32 %s68, 1
    %s70 = sadd.s32 %s32, 1
    %s71 = smul.u32 %s70, 4
    %s72 = ssub.s32 %s71, 1
    %s73 = ssub.s32 %s24, %s36
    %s74 = ssub.s32 %s69, %s72
    %s75 = sor.u32 %s73, %s74
    %p76 = scmp.eq.s32.totalorder %s75, 0
    %s78 = sadd.s32 %s77, 1
    %s79 = scalar_select %p76, %s77, %s78
    %p82 = pneg %p76
    %p83 = scmp.eq.s32.totalorder %s17, 3
    %p84 = por %p82, %p83
    %p85 = scmp.ne.s32.totalorder %s77, %s80
    %p86 = scmp.eq.s32.totalorder %s17, 0
    %p87 = por %p85, %p86
    %p88 = scmp.ne.s32.totalorder %s77, %s80
    %p89 = scmp.eq.s32.totalorder %s22, 3
    %p90 = por %p88, %p89
    %p91 = scmp.ne.s32.totalorder %s80, %s81
    %p92 = scmp.eq.s32.totalorder %s22, 0
    %p93 = por %p91, %p92
    %p94 = scmp.ne.s32.totalorder %s80, %s81
    %p95 = scmp.eq.s32.totalorder %s23, 3
    %p96 = por %p94, %p95
    %p98 = scmp.ne.s32.totalorder %s81, %s97
    %p99 = scmp.eq.s32.totalorder %s23, 0
    %p100 = por %p98, %p99
    %s101 = sadd.s32 %s25, 2
    %s102 = smul.u32 %s101, 4
    %s103 = sadd.s32 %s32, 2
    %s104 = smul.u32 %s103, 4
    %s105 = ssub.s32 %s24, %s36
    %s106 = ssub.s32 %s102, %s104
    %s107 = sor.u32 %s105, %s106
    %p108 = scmp.eq.s32.totalorder %s107, 0
    %s110 = sadd.s32 %s109, 1
    %s111 = scalar_select %p108, %s109, %s110
    %p114 = pneg %p108
    %p115 = scmp.eq.s32.totalorder %s17, 3
    %p116 = por %p114, %p115
    %p117 = scmp.ne.s32.totalorder %s109, %s112
    %p118 = scmp.eq.s32.totalorder %s17, 0
    %p119 = por %p117, %p118
    %p120 = scmp.ne.s32.totalorder %s109, %s112
    %p121 = scmp.eq.s32.totalorder %s22, 3
    %p122 = por %p120, %p121
    %p123 = scmp.ne.s32.totalorder %s112, %s113
    %p124 = scmp.eq.s32.totalorder %s22, 0
    %p125 = por %p123, %p124
    %p126 = scmp.ne.s32.totalorder %s112, %s113
    %p127 = scmp.eq.s32.totalorder %s23, 3
    %p128 = por %p126, %p127
    %p130 = scmp.ne.s32.totalorder %s113, %s129
    %p131 = scmp.eq.s32.totalorder %s23, 0
    %p132 = por %p130, %p131
    %s134 = sadd.s32 %s133, 1
    %p137 = scmp.eq.s32.totalorder %s17, 3
    %p138 = scmp.ne.s32.totalorder %s133, %s135
    %p139 = scmp.eq.s32.totalorder %s17, 0
    %p140 = por %p138, %p139
    %p141 = scmp.ne.s32.totalorder %s133, %s135
    %p142 = scmp.eq.s32.totalorder %s22, 3
    %p143 = por %p141, %p142
    %p144 = scmp.ne.s32.totalorder %s135, %s136
    %p145 = scmp.eq.s32.totalorder %s22, 0
    %p146 = por %p144, %p145
    %p147 = scmp.ne.s32.totalorder %s135, %s136
    %p148 = scmp.eq.s32.totalorder %s23, 3
    %p149 = por %p147, %p148
    %p151 = scmp.ne.s32.totalorder %s136, %s150
    %p152 = scmp.eq.s32.totalorder %s23, 0
    %p153 = por %p151, %p152
    %s155 = sadd.s32 %s154, 1
    %p158 = scmp.eq.s32.totalorder %s17, 3
    %p159 = scmp.ne.s32.totalorder %s154, %s156
    %p160 = scmp.eq.s32.totalorder %s17, 0
    %p161 = por %p159, %p160
    %p162 = scmp.ne.s32.totalorder %s154, %s156
    %p163 = scmp.eq.s32.totalorder %s22, 3
    %p164 = por %p162, %p163
    %p165 = scmp.ne.s32.totalorder %s156, %s157
    %p166 = scmp.eq.s32.totalorder %s22, 0
    %p167 = por %p165, %p166
    %p168 = scmp.ne.s32.totalorder %s156, %s157
    %p169 = scmp.eq.s32.totalorder %s23, 3
    %p170 = por %p168, %p169
    %p172 = scmp.ne.s32.totalorder %s157, %s171
    %p173 = scmp.eq.s32.totalorder %s23, 0
    %p174 = por %p172, %p173
    %s176 = sadd.s32 %s175, 1
    %p179 = scmp.eq.s32.totalorder %s17, 3
    %p180 = scmp.ne.s32.totalorder %s175, %s177
    %p181 = scmp.eq.s32.totalorder %s17, 0
    %p182 = por %p180, %p181
    %p183 = scmp.ne.s32.totalorder %s175, %s177
    %p184 = scmp.eq.s32.totalorder %s22, 3
    %p185 = por %p183, %p184
    %p186 = scmp.ne.s32.totalorder %s177, %s178
    %p187 = scmp.eq.s32.totalorder %s22, 0
    %p188 = por %p186, %p187
    %p189 = scmp.ne.s32.totalorder %s177, %s178
    %p190 = scmp.eq.s32.totalorder %s23, 3
    %p191 = por %p189, %p190
    %p193 = scmp.ne.s32.totalorder %s178, %s192
    %p194 = scmp.eq.s32.totalorder %s23, 0
    %p195 = por %p193, %p194
    %s197 = sadd.s32 %s196, 1
    %p200 = scmp.eq.s32.totalorder %s17, 3
    %p201 = scmp.ne.s32.totalorder %s196, %s198
    %p202 = scmp.eq.s32.totalorder %s17, 0
    %p203 = por %p201, %p202
    %p204 = scmp.ne.s32.totalorder %s196, %s198
    %p205 = scmp.eq.s32.totalorder %s22, 3
    %p206 = por %p204, %p205
    %p207 = scmp.ne.s32.totalorder %s198, %s199
    %p208 = scmp.eq.s32.totalorder %s22, 0
    %p209 = por %p207, %p208
    %p210 = scmp.ne.s32.totalorder %s198, %s199
    %p211 = scmp.eq.s32.totalorder %s23, 3
    %p212 = por %p210, %p211
    %p214 = scmp.ne.s32.totalorder %s199, %s213
    %p215 = scmp.eq.s32.totalorder %s23, 0
    %p216 = por %p214, %p215
    %s218 = sadd.s32 %s217, 1
    %p221 = scmp.eq.s32.totalorder %s17, 3
    %p222 = scmp.ne.s32.totalorder %s217, %s219
    %p223 = scmp.eq.s32.totalorder %s17, 0
    %p224 = por %p222, %p223
    %p225 = scmp.ne.s32.totalorder %s217, %s219
    %p226 = scmp.eq.s32.totalorder %s22, 3
    %p227 = por %p225, %p226
    %p228 = scmp.ne.s32.totalorder %s219, %s220
    %p229 = scmp.eq.s32.totalorder %s22, 0
    %p230 = por %p228, %p229
    %p231 = scmp.ne.s32.totalorder %s219, %s220
    %p232 = scmp.eq.s32.totalorder %s23, 3
    %p233 = por %p231, %p232
    %p235 = scmp.ne.s32.totalorder %s220, %s234
    %p236 = scmp.eq.s32.totalorder %s23, 0
    %p237 = por %p235, %p236
    %s239 = sadd.s32 %s238, 1
    %p242 = scmp.eq.s32.totalorder %s17, 3
    %p243 = scmp.ne.s32.totalorder %s238, %s240
    %p244 = scmp.eq.s32.totalorder %s17, 0
    %p245 = por %p243, %p244
    %p246 = scmp.ne.s32.totalorder %s238, %s240
    %p247 = scmp.eq.s32.totalorder %s22, 3
    %p248 = por %p246, %p247
    %p249 = scmp.ne.s32.totalorder %s240, %s241
    %p250 = scmp.eq.s32.totalorder %s22, 0
    %p251 = por %p249, %p250
    %p252 = scmp.ne.s32.totalorder %s240, %s241
    %p253 = scmp.eq.s32.totalorder %s23, 3
    %p254 = por %p252, %p253
    %p256 = scmp.ne.s32.totalorder %s241, %s255
    %p257 = scmp.eq.s32.totalorder %s23, 0
    %p258 = por %p256, %p257
    %s259 = ssub.s32 %s24, %s36
    %s260 = ssub.s32 %s25, %s32
    %s261 = sor.u32 %s259, %s260
    %p262 = scmp.eq.s32.totalorder %s261, 0
    %s264 = sadd.s32 %s263, 1
    %s265 = scalar_select %p262, %s263, %s264
    %p268 = pneg %p262
    %p269 = scmp.eq.s32.totalorder %s17, 3
    %p270 = por %p268, %p269
    %p271 = scmp.ne.s32.totalorder %s263, %s266
    %p272 = scmp.eq.s32.totalorder %s17, 0
    %p273 = por %p271, %p272
    %p274 = scmp.ne.s32.totalorder %s263, %s266
    %p275 = scmp.eq.s32.totalorder %s22, 3
    %p276 = por %p274, %p275
    %p277 = scmp.ne.s32.totalorder %s266, %s267
    %p278 = scmp.eq.s32.totalorder %s22, 0
    %p279 = por %p277, %p278
    %p280 = scmp.ne.s32.totalorder %s266, %s267
    %p281 = scmp.eq.s32.totalorder %s23, 3
    %p282 = por %p280, %p281
    %p284 = scmp.ne.s32.totalorder %s267, %s283
    %p285 = scmp.eq.s32.totalorder %s23, 0
    %p286 = por %p284, %p285
    %s287 = ssub.s32 %s24, %s36
    %p288 = scmp.eq.s32.totalorder %s287, 0
    %s290 = sadd.s32 %s289, 1
    %s291 = scalar_select %p288, %s289, %s290
    %p294 = pneg %p288
    %p295 = scmp.eq.s32.totalorder %s17, 3
    %p296 = por %p294, %p295
    %p297 = scmp.ne.s32.totalorder %s289, %s292
    %p298 = scmp.eq.s32.totalorder %s17, 0
    %p299 = por %p297, %p298
    %p300 = scmp.ne.s32.totalorder %s289, %s292
    %p301 = scmp.eq.s32.totalorder %s22, 3
    %p302 = por %p300, %p301
    %p303 = scmp.ne.s32.totalorder %s292, %s293
    %p304 = scmp.eq.s32.totalorder %s22, 0
    %p305 = por %p303, %p304
    %p306 = scmp.ne.s32.totalorder %s292, %s293
    %p307 = scmp.eq.s32.totalorder %s23, 3
    %p308 = por %p306, %p307
    %p310 = scmp.ne.s32.totalorder %s293, %s309
    %p311 = scmp.eq.s32.totalorder %s23, 0
    %p312 = por %p310, %p311
    %p313 = scmp.le.s32.totalorder 1, %s17
    %p314 = scmp.lt.s32.totalorder %s17, 5
    %p315 = pnand %p313, %p314
    %p316 = pneg %p315
    // Predicated region
    $region9: #{_lambda_.4} parent=5 // pred_check
      _
    $region10: #{_lambda_.4} parent=5 // pred_check_branch
      %318 = sbr.rel (%p315) target = $region12
    $region11: #{_lambda_.4} parent=5 // pred_region
      %s319 = ssub.s32 %s17, 1
      // Predicated region
      $region13: #{_lambda_.4} parent=11 // pred_check
        %p320 = pneg %p146
      $region14: #{_lambda_.4} parent=11 // pred_check_branch
        %322 = sbr.rel (%p320) target = $region16
      $region15: #{_lambda_.4} parent=11 // pred_region
        _
      $region16: #{_lambda_.4} parent=11 // pred_fallthru
        _
      // Predicated region
      $region17: #{_lambda_.4} parent=11 // pred_check
        %p323 = pneg %p167
      $region18: #{_lambda_.4} parent=11 // pred_check_branch
        %325 = sbr.rel (%p323) target = $region20
      $region19: #{_lambda_.4} parent=11 // pred_region
        _
      $region20: #{_lambda_.4} parent=11 // pred_fallthru
        _
      // Predicated region
      $region21: #{_lambda_.4} parent=11 // pred_check
        %p326 = pneg %p188
      $region22: #{_lambda_.4} parent=11 // pred_check_branch
        %328 = sbr.rel (%p326) target = $region24
      $region23: #{_lambda_.4} parent=11 // pred_region
        _
      $region24: #{_lambda_.4} parent=11 // pred_fallthru
        _
      // Predicated region
      $region25: #{_lambda_.4} parent=11 // pred_check
        %p329 = pneg %p209
      $region26: #{_lambda_.4} parent=11 // pred_check_branch
        %331 = sbr.rel (%p329) target = $region28
      $region27: #{_lambda_.4} parent=11 // pred_region
        _
      $region28: #{_lambda_.4} parent=11 // pred_fallthru
        _
      // Predicated region
      $region29: #{_lambda_.4} parent=11 // pred_check
        %p332 = pneg %p230
      $region30: #{_lambda_.4} parent=11 // pred_check_branch
        %334 = sbr.rel (%p332) target = $region32
      $region31: #{_lambda_.4} parent=11 // pred_region
        _
      $region32: #{_lambda_.4} parent=11 // pred_fallthru
        _
      // Predicated region
      $region33: #{_lambda_.4} parent=11 // pred_check
        %p335 = pneg %p251
      $region34: #{_lambda_.4} parent=11 // pred_check_branch
        %337 = sbr.rel (%p335) target = $region36
      $region35: #{_lambda_.4} parent=11 // pred_region
        _
      $region36: #{_lambda_.4} parent=11 // pred_fallthru
        _
    $region12: #{_lambda_.4} parent=5 // pred_fallthru
      _
    %p338 = scmp.lt.s32.totalorder %s17, 4
    // Predicated region
    $region37: #{_lambda_.4} parent=5 // pred_check
      %p339 = pneg %p338
    $region38: #{_lambda_.4} parent=5 // pred_check_branch
      %341 = sbr.rel (%p339) target = $region40
    $region39: #{_lambda_.4} parent=5 // pred_region
      // Predicated region
      $region41: #{_lambda_.4} parent=39 // pred_check
        %p342 = pneg %p53
      $region42: #{_lambda_.4} parent=39 // pred_check_branch
        %344 = sbr.rel (%p342) target = $region44
      $region43: #{_lambda_.4} parent=39 // pred_region
        %s345 = sadd.s32 %s25, 1
        %s346 = smul.u32 24, %s345
        %p347 = scmp.lt.s32.totalorder %s24, 1
        %s348 = scalar_select %p347, %s24, 1
        %p349 = scmp.lt.s32.totalorder %s346, 95
        %s350 = scalar_select %p349, %s346, 95
        %s351 = smul.addr %s348, 96
        %s352 = sadd.s32 %s350, %s351
        %s353 = smul.addr %s352, 4
        %s354 = scalar_lea.vmem %s0, %s353
        %s355 = sadd.s32 %s25, 1
        %s356 = smul.u32 24, %s355
      $region44: #{_lambda_.4} parent=39 // pred_fallthru
        _
      // Predicated region
      $region45: #{_lambda_.4} parent=39 // pred_check
        %p357 = pneg %p87
      $region46: #{_lambda_.4} parent=39 // pred_check_branch
        %359 = sbr.rel (%p357) target = $region48
      $region47: #{_lambda_.4} parent=39 // pred_region
        %s360 = sadd.s32 %s25, 1
        %s361 = smul.u32 %s360, 4
        %s362 = ssub.s32 %s361, 1
        %s363 = smul.u32 6, %s362
        %p364 = scmp.lt.s32.totalorder %s24, 1
        %s365 = scalar_select %p364, %s24, 1
        %p366 = scmp.lt.s32.totalorder %s363, 95
        %s367 = scalar_select %p366, %s363, 95
        %s368 = smul.addr %s365, 96
        %s369 = sadd.s32 %s367, %s368
        %s370 = smul.addr %s369, 4
        %s371 = scalar_lea.vmem %s1, %s370
        %s372 = sadd.s32 %s25, 1
        %s373 = smul.u32 %s372, 4
        %s374 = ssub.s32 %s373, 1
        %s375 = smul.u32 6, %s374
      $region48: #{_lambda_.4} parent=39 // pred_fallthru
        _
      // Predicated region
      $region49: #{_lambda_.4} parent=39 // pred_check
        %p376 = pneg %p119
      $region50: #{_lambda_.4} parent=39 // pred_check_branch
        %378 = sbr.rel (%p376) target = $region52
      $region51: #{_lambda_.4} parent=39 // pred_region
        %s379 = sadd.s32 %s25, 2
        %s380 = smul.u32 %s379, 4
        %s381 = smul.u32 6, %s380
        %p382 = scmp.lt.s32.totalorder %s24, 1
        %s383 = scalar_select %p382, %s24, 1
        %p384 = scmp.lt.s32.totalorder %s381, 95
        %s385 = scalar_select %p384, %s381, 95
        %s386 = smul.addr %s383, 96
        %s387 = sadd.s32 %s385, %s386
        %s388 = smul.addr %s387, 4
        %s389 = scalar_lea.vmem %s2, %s388
        %s390 = sadd.s32 %s25, 2
        %s391 = smul.u32 %s390, 4
        %s392 = smul.u32 6, %s391
      $region52: #{_lambda_.4} parent=39 // pred_fallthru
        _
    $region40: #{_lambda_.4} parent=5 // pred_fallthru
      _
    %p393 = scmp.le.s32.totalorder 1, %s17
    %p394 = scmp.lt.s32.totalorder %s17, 5
    %p395 = pnand %p393, %p394
    %p396 = pneg %p395
    // Predicated region
    $region53: #{_lambda_.4} parent=5 // pred_check
      _
    $region54: #{_lambda_.4} parent=5 // pred_check_branch
      %398 = sbr.rel (%p395) target = $region56
    $region55: #{_lambda_.4} parent=5 // pred_region
      %s399 = ssub.s32 %s17, 1
      %s400 = sadd.s32 %s27, 1
      %s401 = smul.u32 24, %s400
      %p402 = scmp.lt.s32.totalorder %s26, 1
      %s403 = scalar_select %p402, %s26, 1
      %p404 = scmp.lt.s32.totalorder %s401, 95
      %s405 = scalar_select %p404, %s401, 95
      %s406 = smul.addr %s403, 96
      %s407 = sadd.s32 %s405, %s406
      %s408 = smul.addr %s407, 4
      %s409 = scalar_lea.vmem %s0, %s408
      %p410 = pneg %p59
      %p411 = pneg %p56
      %s412 = sadd.s32 %s27, 1
      %s413 = smul.u32 %s412, 4
      %s414 = ssub.s32 %s413, 1
      %s415 = smul.u32 6, %s414
      %p416 = scmp.lt.s32.totalorder %s26, 1
      %s417 = scalar_select %p416, %s26, 1
      %p418 = scmp.lt.s32.totalorder %s415, 95
      %s419 = scalar_select %p418, %s415, 95
      %s420 = smul.addr %s417, 96
      %s421 = sadd.s32 %s419, %s420
      %s422 = smul.addr %s421, 4
      %s423 = scalar_lea.vmem %s1, %s422
      %p424 = pneg %p93
      %p425 = pneg %p90
      %s426 = sadd.s32 %s27, 2
      %s427 = smul.u32 %s426, 4
      %s428 = smul.u32 6, %s427
      %p429 = scmp.lt.s32.totalorder %s26, 1
      %s430 = scalar_select %p429, %s26, 1
      %p431 = scmp.lt.s32.totalorder %s428, 95
      %s432 = scalar_select %p431, %s428, 95
      %s433 = smul.addr %s430, 96
      %s434 = sadd.s32 %s432, %s433
      %s435 = smul.addr %s434, 4
      %s436 = scalar_lea.vmem %s2, %s435
      %p437 = pneg %p125
      %p438 = pneg %p122
      %p439 = pneg %p146
      %p440 = pneg %p143
      %p441 = pneg %p167
      %p442 = pneg %p164
      %p443 = pneg %p188
      %p444 = pneg %p185
      %p445 = pneg %p209
      %p446 = pneg %p206
      %p447 = pneg %p230
      %p448 = pneg %p227
      %p449 = pneg %p251
      %p450 = pneg %p248
      %p451 = pneg %p279
      %p452 = pneg %p276
      %s453 = smul.u32 24, %s27
      %p454 = scmp.lt.s32.totalorder %s26, 1
      %s455 = scalar_select %p454, %s26, 1
      %p456 = scmp.lt.s32.totalorder %s453, 47
      %s457 = scalar_select %p456, %s453, 47
      %s458 = smul.addr %s455, 48
      %s459 = sadd.s32 %s457, %s458
      %s460 = smul.addr %s459, 4
      %s461 = scalar_lea.vmem %s9, %s460
      %p462 = pneg %p305
      %p463 = pneg %p302
      %p464 = scmp.lt.s32.totalorder %s26, 1
      %s465 = scalar_select %p464, %s26, 1
      %s466 = smul.addr %s465, 8
      %s467 = scalar_lea.vmem %s10, %s466
      %s468 = sadd.s32 %s27, 1
      %s469 = smul.u32 24, %s468
      %p470 = scmp.lt.s32.totalorder %s26, 1
      %s471 = scalar_select %p470, %s26, 1
      %p472 = scmp.lt.s32.totalorder %s469, 95
      %s473 = scalar_select %p472, %s469, 95
      %s474 = smul.addr %s471, 96
      %s475 = sadd.s32 %s473, %s474
      %s476 = smul.addr %s475, 4
      %s477 = scalar_lea.vmem %s0, %s476
      %s478 = sadd.s32 %s27, 1
      %s479 = smul.u32 24, %s478
      %s480 = sadd.s32 %s27, 1
      %s481 = smul.u32 %s480, 4
      %s482 = ssub.s32 %s481, 1
      %s483 = smul.u32 6, %s482
      %p484 = scmp.lt.s32.totalorder %s26, 1
      %s485 = scalar_select %p484, %s26, 1
      %p486 = scmp.lt.s32.totalorder %s483, 95
      %s487 = scalar_select %p486, %s483, 95
      %s488 = smul.addr %s485, 96
      %s489 = sadd.s32 %s487, %s488
      %s490 = smul.addr %s489, 4
      %s491 = scalar_lea.vmem %s1, %s490
      %s492 = sadd.s32 %s27, 1
      %s493 = smul.u32 %s492, 4
      %s494 = ssub.s32 %s493, 1
      %s495 = smul.u32 6, %s494
      %s496 = sadd.s32 %s27, 2
      %s497 = smul.u32 %s496, 4
      %s498 = smul.u32 6, %s497
      %p499 = scmp.lt.s32.totalorder %s26, 1
      %s500 = scalar_select %p499, %s26, 1
      %p501 = scmp.lt.s32.totalorder %s498, 95
      %s502 = scalar_select %p501, %s498, 95
      %s503 = smul.addr %s500, 96
      %s504 = sadd.s32 %s502, %s503
      %s505 = smul.addr %s504, 4
      %s506 = scalar_lea.vmem %s2, %s505
      %s507 = sadd.s32 %s27, 2
      %s508 = smul.u32 %s507, 4
      %s509 = smul.u32 6, %s508
      %s510 = smul.u32 24, %s27
      %p511 = scmp.lt.s32.totalorder %s26, 1
      %s512 = scalar_select %p511, %s26, 1
      %p513 = scmp.lt.s32.totalorder %s510, 47
      %s514 = scalar_select %p513, %s510, 47
      %s515 = smul.addr %s512, 48
      %s516 = sadd.s32 %s514, %s515
      %s517 = smul.addr %s516, 4
      %s518 = scalar_lea.vmem %s9, %s517
      %s519 = smul.u32 24, %s27
      %p520 = scmp.lt.s32.totalorder %s26, 1
      %s521 = scalar_select %p520, %s26, 1
      %s522 = smul.addr %s521, 8
      %s523 = scalar_lea.vmem %s10, %s522
      %vm525 = vcmask 257024
      %526 = vst.msk [vmem:[#allocation2] sm:$0xf] %vm525, 0
      %527 = vst.msk [vmem:[#allocation2 + $0x94] sm:$0xf] %vm525, 0
      %v528 = vld [vmem:[%s491] sm:$0xf]
      %v529 = vld [vmem:[%s491 + $0x4] sm:$0xf]
      %v530 = vld [vmem:[%s491 + $0x8] sm:$0xf]
      %v531 = vld [vmem:[%s491 + $0xc] sm:$0xf]
      %v532 = vld [vmem:[%s491 + $0x10] sm:$0xf]
      %v533 = vld [vmem:[%s491 + $0x14] sm:$0xf]
      %534 = vst.msk [vmem:[#allocation2 + $0x4] sm:$0xf] %vm525, %v528
      %535 = vst.msk [vmem:[#allocation2 + $0x8] sm:$0xf] %vm525, %v529
      %536 = vst.msk [vmem:[#allocation2 + $0xc] sm:$0xf] %vm525, %v530
      %537 = vst.msk [vmem:[#allocation2 + $0x10] sm:$0xf] %vm525, %v531
      %538 = vst.msk [vmem:[#allocation2 + $0x14] sm:$0xf] %vm525, %v532
      %539 = vst.msk [vmem:[#allocation2 + $0x18] sm:$0xf] %vm525, %v533
      %v540 = vld [vmem:[%s477] sm:$0xf]
      %v541 = vld [vmem:[%s477 + $0x4] sm:$0xf]
      %v542 = vld [vmem:[%s477 + $0x8] sm:$0xf]
      %v543 = vld [vmem:[%s477 + $0xc] sm:$0xf]
      %v544 = vld [vmem:[%s477 + $0x10] sm:$0xf]
      %v545 = vld [vmem:[%s477 + $0x14] sm:$0xf]
      %v546 = vld [vmem:[%s477 + $0x18] sm:$0xf]
      %v547 = vld [vmem:[%s477 + $0x1c] sm:$0xf]
      %v548 = vld [vmem:[%s477 + $0x20] sm:$0xf]
      %v549 = vld [vmem:[%s477 + $0x24] sm:$0xf]
      %v550 = vld [vmem:[%s477 + $0x28] sm:$0xf]
      %v551 = vld [vmem:[%s477 + $0x2c] sm:$0xf]
      %v552 = vld [vmem:[%s477 + $0x30] sm:$0xf]
      %v553 = vld [vmem:[%s477 + $0x34] sm:$0xf]
      %v554 = vld [vmem:[%s477 + $0x38] sm:$0xf]
      %v555 = vld [vmem:[%s477 + $0x3c] sm:$0xf]
      %v556 = vld [vmem:[%s477 + $0x40] sm:$0xf]
      %v557 = vld [vmem:[%s477 + $0x44] sm:$0xf]
      %v558 = vld [vmem:[%s477 + $0x48] sm:$0xf]
      %v559 = vld [vmem:[%s477 + $0x4c] sm:$0xf]
      %v560 = vld [vmem:[%s477 + $0x50] sm:$0xf]
      %v561 = vld [vmem:[%s477 + $0x54] sm:$0xf]
      %v562 = vld [vmem:[%s477 + $0x58] sm:$0xf]
      %v563 = vld [vmem:[%s477 + $0x5c] sm:$0xf]
      %564 = vst.msk [vmem:[#allocation2 + $0x1c] sm:$0xf] %vm525, %v540
      %565 = vst.msk [vmem:[#allocation2 + $0x20] sm:$0xf] %vm525, %v541
      %566 = vst.msk [vmem:[#allocation2 + $0x24] sm:$0xf] %vm525, %v542
      %567 = vst.msk [vmem:[#allocation2 + $0x28] sm:$0xf] %vm525, %v543
      %568 = vst.msk [vmem:[#allocation2 + $0x2c] sm:$0xf] %vm525, %v544
      %569 = vst.msk [vmem:[#allocation2 + $0x30] sm:$0xf] %vm525, %v545
      %570 = vst.msk [vmem:[#allocation2 + $0x34] sm:$0xf] %vm525, %v546
      %571 = vst.msk [vmem:[#allocation2 + $0x38] sm:$0xf] %vm525, %v547
      %572 = vst.msk [vmem:[#allocation2 + $0x3c] sm:$0xf] %vm525, %v548
      %573 = vst.msk [vmem:[#allocation2 + $0x40] sm:$0xf] %vm525, %v549
      %574 = vst.msk [vmem:[#allocation2 + $0x44] sm:$0xf] %vm525, %v550
      %575 = vst.msk [vmem:[#allocation2 + $0x48] sm:$0xf] %vm525, %v551
      %576 = vst.msk [vmem:[#allocation2 + $0x4c] sm:$0xf] %vm525, %v552
      %577 = vst.msk [vmem:[#allocation2 + $0x50] sm:$0xf] %vm525, %v553
      %578 = vst.msk [vmem:[#allocation2 + $0x54] sm:$0xf] %vm525, %v554
      %579 = vst.msk [vmem:[#allocation2 + $0x58] sm:$0xf] %vm525, %v555
      %580 = vst.msk [vmem:[#allocation2 + $0x5c] sm:$0xf] %vm525, %v556
      %581 = vst.msk [vmem:[#allocation2 + $0x60] sm:$0xf] %vm525, %v557
      %582 = vst.msk [vmem:[#allocation2 + $0x64] sm:$0xf] %vm525, %v558
      %583 = vst.msk [vmem:[#allocation2 + $0x68] sm:$0xf] %vm525, %v559
      %584 = vst.msk [vmem:[#allocation2 + $0x6c] sm:$0xf] %vm525, %v560
      %585 = vst.msk [vmem:[#allocation2 + $0x70] sm:$0xf] %vm525, %v561
      %586 = vst.msk [vmem:[#allocation2 + $0x74] sm:$0xf] %vm525, %v562
      %587 = vst.msk [vmem:[#allocation2 + $0x78] sm:$0xf] %vm525, %v563
      %v588 = vld [vmem:[%s506] sm:$0xf]
      %v589 = vld [vmem:[%s506 + $0x4] sm:$0xf]
      %v590 = vld [vmem:[%s506 + $0x8] sm:$0xf]
      %v591 = vld [vmem:[%s506 + $0xc] sm:$0xf]
      %v592 = vld [vmem:[%s506 + $0x10] sm:$0xf]
      %v593 = vld [vmem:[%s506 + $0x14] sm:$0xf]
      %594 = vst.msk [vmem:[#allocation2 + $0x7c] sm:$0xf] %vm525, %v588
      %595 = vst.msk [vmem:[#allocation2 + $0x80] sm:$0xf] %vm525, %v589
      %596 = vst.msk [vmem:[#allocation2 + $0x84] sm:$0xf] %vm525, %v590
      %597 = vst.msk [vmem:[#allocation2 + $0x88] sm:$0xf] %vm525, %v591
      %598 = vst.msk [vmem:[#allocation2 + $0x8c] sm:$0xf] %vm525, %v592
      %599 = vst.msk [vmem:[#allocation2 + $0x90] sm:$0xf] %vm525, %v593
      %v600 = vld [vmem:[#allocation2] sm:$0x8]
      %v601 = vld [vmem:[#allocation2 + $0x4] sm:$0xf]
      %v602 = vld [vmem:[#allocation2 + $0x8] sm:$0xf]
      %v603 = vld [vmem:[#allocation2 + $0xc] sm:$0xf]
      %v604 = vld [vmem:[#allocation2 + $0x10] sm:$0xf]
      %v605 = vld [vmem:[#allocation2 + $0x14] sm:$0xf]
      %v606 = vld [vmem:[#allocation2 + $0x18] sm:$0xf]
      %v607 = vld [vmem:[#allocation2 + $0x1c] sm:$0xf]
      %v608 = vld [vmem:[#allocation2 + $0x20] sm:$0xf]
      %v609 = vld [vmem:[#allocation2 + $0x24] sm:$0xf]
      %v610 = vld [vmem:[#allocation2 + $0x28] sm:$0xf]
      %v611 = vld [vmem:[#allocation2 + $0x2c] sm:$0xf]
      %v612 = vld [vmem:[#allocation2 + $0x30] sm:$0xf]
      %v613 = vld [vmem:[#allocation2 + $0x34] sm:$0xf]
      %v614 = vld [vmem:[#allocation2 + $0x38] sm:$0xf]
      %v615 = vld [vmem:[#allocation2 + $0x3c] sm:$0xf]
      %v616 = vld [vmem:[#allocation2 + $0x40] sm:$0xf]
      %v617 = vld [vmem:[#allocation2 + $0x44] sm:$0xf]
      %v618 = vld [vmem:[#allocation2 + $0x48] sm:$0xf]
      %v619 = vld [vmem:[#allocation2 + $0x4c] sm:$0xf]
      %v620 = vld [vmem:[#allocation2 + $0x50] sm:$0xf]
      %v621 = vld [vmem:[#allocation2 + $0x54] sm:$0xf]
      %v622 = vld [vmem:[#allocation2 + $0x58] sm:$0xf]
      %v623 = vld [vmem:[#allocation2 + $0x5c] sm:$0xf]
      %v624 = vld [vmem:[#allocation2 + $0x60] sm:$0xf]
      %v625 = vld [vmem:[#allocation2 + $0x64] sm:$0xf]
      %v626 = vld [vmem:[#allocation2 + $0x68] sm:$0xf]
      %v627 = vld [vmem:[#allocation2 + $0x6c] sm:$0xf]
      %v628 = vld [vmem:[#allocation2 + $0x70] sm:$0xf]
      %v629 = vld [vmem:[#allocation2 + $0x74] sm:$0xf]
      %v630 = vld [vmem:[#allocation2 + $0x78] sm:$0xf]
      %v631 = vld [vmem:[%s3] sm:$0xf]
      %v632 = vld [vmem:[%s3 + $0x4] sm:$0xf]
      %v633 = vld [vmem:[%s3 + $0x8] sm:$0xf]
      %v634 = vld [vmem:[%s3 + $0xc] sm:$0xf]
      %s635 = scalar_lea.vmem %s3, 16
      %v636 = vld [vmem:[%s635] sm:$0xf]
      %v637 = vld [vmem:[%s635 + $0x4] sm:$0xf]
      %v638 = vld [vmem:[%s635 + $0x8] sm:$0xf]
      %v639 = vld [vmem:[%s635 + $0xc] sm:$0xf]
      %v670 = vunpack.c.l.b16 %v601
      %v671 = vunpack.c.l.b16 %v602
      %v672 = vunpack.c.l.b16 %v603
      %v673 = vunpack.c.l.b16 %v604
      %v674 = vunpack.c.l.b16 %v605
      %v675 = vunpack.c.l.b16 %v606
      %v676 = vunpack.c.l.b16 %v607
      %v677 = vunpack.c.l.b16 %v608
      %v678 = vunpack.c.l.b16 %v609
      %v679 = vunpack.c.l.b16 %v610
      %v680 = vunpack.c.l.b16 %v611
      %v681 = vunpack.c.l.b16 %v612
      %v682 = vunpack.c.l.b16 %v613
      %v683 = vunpack.c.l.b16 %v614
      %v684 = vunpack.c.l.b16 %v615
      %v685 = vunpack.c.l.b16 %v616
      %v686 = vunpack.c.l.b16 %v617
      %v687 = vunpack.c.l.b16 %v618
      %v688 = vunpack.c.l.b16 %v619
      %v689 = vunpack.c.l.b16 %v620
      %v690 = vunpack.c.l.b16 %v621
      %v691 = vunpack.c.l.b16 %v622
      %v692 = vunpack.c.l.b16 %v623
      %v693 = vunpack.c.l.b16 %v624
      %v694 = vunpack.c.l.b16 %v625
      %v695 = vunpack.c.l.b16 %v626
      %v696 = vunpack.c.l.b16 %v627
      %v697 = vunpack.c.l.b16 %v628
      %v698 = vunpack.c.l.b16 %v629
      %v699 = vunpack.c.l.b16 %v630
      %v700 = vpack.c.b16 %v671, %v670
      %v701 = vpack.c.b16 %v673, %v672
      %v702 = vpack.c.b16 %v675, %v674
      %v703 = vpack.c.b16 %v677, %v676
      %v704 = vpack.c.b16 %v679, %v678
      %v705 = vpack.c.b16 %v681, %v680
      %v706 = vpack.c.b16 %v683, %v682
      %v707 = vpack.c.b16 %v685, %v684
      %v708 = vpack.c.b16 %v687, %v686
      %v709 = vpack.c.b16 %v689, %v688
      %v710 = vpack.c.b16 %v691, %v690
      %v711 = vpack.c.b16 %v693, %v692
      %v712 = vpack.c.b16 %v695, %v694
      %v713 = vpack.c.b16 %v697, %v696
      %v714 = vpack.c.b16 %v699, %v698
      %v719 = vunpack.c.l.b16 %v636
      %v720 = vunpack.c.l.b16 %v637
      %v721 = vunpack.c.l.b16 %v638
      %v722 = vunpack.c.l.b16 %v639
      %v723 = vpack.c.b16 %v720, %v719
      %v724 = vpack.c.b16 %v722, %v721
      %vm727 = vcmask 261120
      %v729 = vsel %vm727, %v700, 0
      %v732 = vsel %vm727, %v701, 0
      %v735 = vsel %vm727, %v702, 0
      %v738 = vsel %vm727, %v703, 0
      %v741 = vsel %vm727, %v704, 0
      %v744 = vsel %vm727, %v705, 0
      %v747 = vsel %vm727, %v706, 0
      %v750 = vsel %vm727, %v707, 0
      %v753 = vsel %vm727, %v708, 0
      %v756 = vsel %vm727, %v709, 0
      %v759 = vsel %vm727, %v710, 0
      %v762 = vsel %vm727, %v711, 0
      %v765 = vsel %vm727, %v712, 0
      %v768 = vsel %vm727, %v713, 0
      %v771 = vsel %vm727, %v714, 0
      %773 = vmatpush.bf16.msra.mxu0 0
      %774 = vmatpush.bf16.msra.mxu0 0
      %775 = vmatpush.bf16.msra.mxu0 0
      %776 = vmatpush.bf16.msra.mxu0 0
      %777 = vmatpush.bf16.msra.mxu0 0
      %778 = vmatpush.bf16.msra.mxu0 0
      %779 = vmatpush.bf16.msra.mxu0 %v724
      %780 = vmatpush.bf16.msra.mxu0 %v723
      %781 = vmatmul.bf16.gmra.mxu0 %v729
      %v782 = vpop.f32.mrf.mxu0
      %v783 = vadd.f32 0.0, %v782
      %v784 = vpop.f32.mrf.mxu0
      %v785 = vadd.f32 0.0, %v784
      %786 = vmatmul.bf16.gmra.mxu0 %v732
      %v787 = vpop.f32.mrf.mxu0
      %v788 = vadd.f32 0.0, %v787
      %v789 = vpop.f32.mrf.mxu0
      %v790 = vadd.f32 0.0, %v789
      %791 = vmatmul.bf16.gmra.mxu0 %v735
      %v792 = vpop.f32.mrf.mxu0
      %v793 = vadd.f32 0.0, %v792
      %v794 = vpop.f32.mrf.mxu0
      %v795 = vadd.f32 0.0, %v794
      %796 = vmatmul.bf16.gmra.mxu0 %v738
      %v797 = vpop.f32.mrf.mxu0
      %v798 = vadd.f32 0.0, %v797
      %v799 = vpop.f32.mrf.mxu0
      %v800 = vadd.f32 0.0, %v799
      %801 = vmatmul.bf16.gmra.mxu0 %v741
      %v802 = vpop.f32.mrf.mxu0
      %v803 = vadd.f32 0.0, %v802
      %v804 = vpop.f32.mrf.mxu0
      %v805 = vadd.f32 0.0, %v804
      %806 = vmatmul.bf16.gmra.mxu0 %v744
      %v807 = vpop.f32.mrf.mxu0
      %v808 = vadd.f32 0.0, %v807
      %v809 = vpop.f32.mrf.mxu0
      %v810 = vadd.f32 0.0, %v809
      %811 = vmatmul.bf16.gmra.mxu0 %v747
      %v812 = vpop.f32.mrf.mxu0
      %v813 = vadd.f32 0.0, %v812
      %v814 = vpop.f32.mrf.mxu0
      %v815 = vadd.f32 0.0, %v814
      %816 = vmatmul.bf16.gmra.mxu0 %v750
      %v817 = vpop.f32.mrf.mxu0
      %v818 = vadd.f32 0.0, %v817
      %v819 = vpop.f32.mrf.mxu0
      %v820 = vadd.f32 0.0, %v819
      %821 = vmatmul.bf16.gmra.mxu0 %v753
      %v822 = vpop.f32.mrf.mxu0
      %v823 = vadd.f32 0.0, %v822
      %v824 = vpop.f32.mrf.mxu0
      %v825 = vadd.f32 0.0, %v824
      %826 = vmatmul.bf16.gmra.mxu0 %v756
      %v827 = vpop.f32.mrf.mxu0
      %v828 = vadd.f32 0.0, %v827
      %v829 = vpop.f32.mrf.mxu0
      %v830 = vadd.f32 0.0, %v829
      %831 = vmatmul.bf16.gmra.mxu0 %v759
      %v832 = vpop.f32.mrf.mxu0
      %v833 = vadd.f32 0.0, %v832
      %v834 = vpop.f32.mrf.mxu0
      %v835 = vadd.f32 0.0, %v834
      %836 = vmatmul.bf16.gmra.mxu0 %v762
      %v837 = vpop.f32.mrf.mxu0
      %v838 = vadd.f32 0.0, %v837
      %v839 = vpop.f32.mrf.mxu0
      %v840 = vadd.f32 0.0, %v839
      %841 = vmatmul.bf16.gmra.mxu0 %v765
      %v842 = vpop.f32.mrf.mxu0
      %v843 = vadd.f32 0.0, %v842
      %v844 = vpop.f32.mrf.mxu0
      %v845 = vadd.f32 0.0, %v844
      %846 = vmatmul.bf16.gmra.mxu0 %v768
      %v847 = vpop.f32.mrf.mxu0
      %v848 = vadd.f32 0.0, %v847
      %v849 = vpop.f32.mrf.mxu0
      %v850 = vadd.f32 0.0, %v849
      %851 = vmatmul.bf16.gmra.mxu0 %v771
      %v852 = vpop.f32.mrf.mxu0
      %v853 = vadd.f32 0.0, %v852
      %v854 = vpop.f32.mrf.mxu0
      %v855 = vadd.f32 0.0, %v854
      %856 = vdwg.mxu0
      %v858 = vunpack.c.l.b16 %v600
      %v859 = vpack.c.b16 %v670, %v858
      %v860 = vpack.c.b16 %v672, %v671
      %v861 = vpack.c.b16 %v674, %v673
      %v862 = vpack.c.b16 %v676, %v675
      %v863 = vpack.c.b16 %v678, %v677
      %v864 = vpack.c.b16 %v680, %v679
      %v865 = vpack.c.b16 %v682, %v681
      %v866 = vpack.c.b16 %v684, %v683
      %v867 = vpack.c.b16 %v686, %v685
      %v868 = vpack.c.b16 %v688, %v687
      %v869 = vpack.c.b16 %v690, %v689
      %v870 = vpack.c.b16 %v692, %v691
      %v871 = vpack.c.b16 %v694, %v693
      %v872 = vpack.c.b16 %v696, %v695
      %v873 = vpack.c.b16 %v698, %v697
      %v874 = vpack.c.b16 %v699, %v699
      %vm875 = vsmask.f32 4352
      %v877 = vshrl.u32 %v859, 16
      %v879 = vrot.slane %v877, 3
      %v880 = vshll.u32 %v859, 16
      %v882 = vrot.slane %v880, 4
      %v883 = vor.u32 %v879, %v882
      %v885 = vshrl.u32 %v860, 16
      %v887 = vrot.slane %v885, 3
      %v888 = vshll.u32 %v860, 16
      %v890 = vrot.slane %v888, 4
      %v891 = vor.u32 %v887, %v890
      %v892 = vsel %vm875, %v883, %v891
      %v894 = vshrl.u32 %v861, 16
      %v896 = vrot.slane %v894, 3
      %v897 = vshll.u32 %v861, 16
      %v899 = vrot.slane %v897, 4
      %v900 = vor.u32 %v896, %v899
      %v901 = vsel %vm875, %v891, %v900
      %v903 = vshrl.u32 %v862, 16
      %v905 = vrot.slane %v903, 3
      %v906 = vshll.u32 %v862, 16
      %v908 = vrot.slane %v906, 4
      %v909 = vor.u32 %v905, %v908
      %v910 = vsel %vm875, %v900, %v909
      %v912 = vshrl.u32 %v863, 16
      %v914 = vrot.slane %v912, 3
      %v915 = vshll.u32 %v863, 16
      %v917 = vrot.slane %v915, 4
      %v918 = vor.u32 %v914, %v917
      %v919 = vsel %vm875, %v909, %v918
      %v921 = vshrl.u32 %v864, 16
      %v923 = vrot.slane %v921, 3
      %v924 = vshll.u32 %v864, 16
      %v926 = vrot.slane %v924, 4
      %v927 = vor.u32 %v923, %v926
      %v928 = vsel %vm875, %v918, %v927
      %v930 = vshrl.u32 %v865, 16
      %v932 = vrot.slane %v930, 3
      %v933 = vshll.u32 %v865, 16
      %v935 = vrot.slane %v933, 4
      %v936 = vor.u32 %v932, %v935
      %v937 = vsel %vm875, %v927, %v936
      %v939 = vshrl.u32 %v866, 16
      %v941 = vrot.slane %v939, 3
      %v942 = vshll.u32 %v866, 16
      %v944 = vrot.slane %v942, 4
      %v945 = vor.u32 %v941, %v944
      %v946 = vsel %vm875, %v936, %v945
      %v948 = vshrl.u32 %v867, 16
      %v950 = vrot.slane %v948, 3
      %v951 = vshll.u32 %v867, 16
      %v953 = vrot.slane %v951, 4
      %v954 = vor.u32 %v950, %v953
      %v955 = vsel %vm875, %v945, %v954
      %v957 = vshrl.u32 %v868, 16
      %v959 = vrot.slane %v957, 3
      %v960 = vshll.u32 %v868, 16
      %v962 = vrot.slane %v960, 4
      %v963 = vor.u32 %v959, %v962
      %v964 = vsel %vm875, %v954, %v963
      %v966 = vshrl.u32 %v869, 16
      %v968 = vrot.slane %v966, 3
      %v969 = vshll.u32 %v869, 16
      %v971 = vrot.slane %v969, 4
      %v972 = vor.u32 %v968, %v971
      %v973 = vsel %vm875, %v963, %v972
      %v975 = vshrl.u32 %v870, 16
      %v977 = vrot.slane %v975, 3
      %v978 = vshll.u32 %v870, 16
      %v980 = vrot.slane %v978, 4
      %v981 = vor.u32 %v977, %v980
      %v982 = vsel %vm875, %v972, %v981
      %v984 = vshrl.u32 %v871, 16
      %v986 = vrot.slane %v984, 3
      %v987 = vshll.u32 %v871, 16
      %v989 = vrot.slane %v987, 4
      %v990 = vor.u32 %v986, %v989
      %v991 = vsel %vm875, %v981, %v990
      %v993 = vshrl.u32 %v872, 16
      %v995 = vrot.slane %v993, 3
      %v996 = vshll.u32 %v872, 16
      %v998 = vrot.slane %v996, 4
      %v999 = vor.u32 %v995, %v998
      %v1000 = vsel %vm875, %v990, %v999
      %v1002 = vshrl.u32 %v873, 16
      %v1004 = vrot.slane %v1002, 3
      %v1005 = vshll.u32 %v873, 16
      %v1007 = vrot.slane %v1005, 4
      %v1008 = vor.u32 %v1004, %v1007
      %v1009 = vsel %vm875, %v999, %v1008
      %v1011 = vshrl.u32 %v874, 16
      %v1013 = vrot.slane %v1011, 3
      %v1014 = vshll.u32 %v874, 16
      %v1016 = vrot.slane %v1014, 4
      %v1017 = vor.u32 %v1013, %v1016
      %v1018 = vsel %vm875, %v1008, %v1017
      %v1023 = vunpack.c.l.b16 %v631
      %v1024 = vunpack.c.l.b16 %v632
      %v1025 = vunpack.c.l.b16 %v633
      %v1026 = vunpack.c.l.b16 %v634
      %v1027 = vpack.c.b16 %v1024, %v1023
      %v1028 = vpack.c.b16 %v1026, %v1025
      %v1032 = vsel %vm727, %v892, 0
      %v1035 = vsel %vm727, %v901, 0
      %v1038 = vsel %vm727, %v910, 0
      %v1041 = vsel %vm727, %v919, 0
      %v1044 = vsel %vm727, %v928, 0
      %v1047 = vsel %vm727, %v937, 0
      %v1050 = vsel %vm727, %v946, 0
      %v1053 = vsel %vm727, %v955, 0
      %v1056 = vsel %vm727, %v964, 0
      %v1059 = vsel %vm727, %v973, 0
      %v1062 = vsel %vm727, %v982, 0
      %v1065 = vsel %vm727, %v991, 0
      %v1068 = vsel %vm727, %v1000, 0
      %v1071 = vsel %vm727, %v1009, 0
      %v1074 = vsel %vm727, %v1018, 0
      %1076 = vmatpush.bf16.msra.mxu0 0
      %1077 = vmatpush.bf16.msra.mxu0 0
      %1078 = vmatpush.bf16.msra.mxu0 0
      %1079 = vmatpush.bf16.msra.mxu0 0
      %1080 = vmatpush.bf16.msra.mxu0 0
      %1081 = vmatpush.bf16.msra.mxu0 0
      %1082 = vmatpush.bf16.msra.mxu0 %v1028
      %1083 = vmatpush.bf16.msra.mxu0 %v1027
      %1084 = vmatmul.bf16.gmra.mxu0 %v1032
      %v1085 = vpop.f32.mrf.mxu0
      %v1086 = vadd.f32 %v783, %v1085
      %v1087 = vpop.f32.mrf.mxu0
      %v1088 = vadd.f32 %v785, %v1087
      %1089 = vmatmul.bf16.gmra.mxu0 %v1035
      %v1090 = vpop.f32.mrf.mxu0
      %v1091 = vadd.f32 %v788, %v1090
      %v1092 = vpop.f32.mrf.mxu0
      %v1093 = vadd.f32 %v790, %v1092
      %1094 = vmatmul.bf16.gmra.mxu0 %v1038
      %v1095 = vpop.f32.mrf.mxu0
      %v1096 = vadd.f32 %v793, %v1095
      %v1097 = vpop.f32.mrf.mxu0
      %v1098 = vadd.f32 %v795, %v1097
      %1099 = vmatmul.bf16.gmra.mxu0 %v1041
      %v1100 = vpop.f32.mrf.mxu0
      %v1101 = vadd.f32 %v798, %v1100
      %v1102 = vpop.f32.mrf.mxu0
      %v1103 = vadd.f32 %v800, %v1102
      %1104 = vmatmul.bf16.gmra.mxu0 %v1044
      %v1105 = vpop.f32.mrf.mxu0
      %v1106 = vadd.f32 %v803, %v1105
      %v1107 = vpop.f32.mrf.mxu0
      %v1108 = vadd.f32 %v805, %v1107
      %1109 = vmatmul.bf16.gmra.mxu0 %v1047
      %v1110 = vpop.f32.mrf.mxu0
      %v1111 = vadd.f32 %v808, %v1110
      %v1112 = vpop.f32.mrf.mxu0
      %v1113 = vadd.f32 %v810, %v1112
      %1114 = vmatmul.bf16.gmra.mxu0 %v1050
      %v1115 = vpop.f32.mrf.mxu0
      %v1116 = vadd.f32 %v813, %v1115
      %v1117 = vpop.f32.mrf.mxu0
      %v1118 = vadd.f32 %v815, %v1117
      %1119 = vmatmul.bf16.gmra.mxu0 %v1053
      %v1120 = vpop.f32.mrf.mxu0
      %v1121 = vadd.f32 %v818, %v1120
      %v1122 = vpop.f32.mrf.mxu0
      %v1123 = vadd.f32 %v820, %v1122
      %1124 = vmatmul.bf16.gmra.mxu0 %v1056
      %v1125 = vpop.f32.mrf.mxu0
      %v1126 = vadd.f32 %v823, %v1125
      %v1127 = vpop.f32.mrf.mxu0
      %v1128 = vadd.f32 %v825, %v1127
      %1129 = vmatmul.bf16.gmra.mxu0 %v1059
      %v1130 = vpop.f32.mrf.mxu0
      %v1131 = vadd.f32 %v828, %v1130
      %v1132 = vpop.f32.mrf.mxu0
      %v1133 = vadd.f32 %v830, %v1132
      %1134 = vmatmul.bf16.gmra.mxu0 %v1062
      %v1135 = vpop.f32.mrf.mxu0
      %v1136 = vadd.f32 %v833, %v1135
      %v1137 = vpop.f32.mrf.mxu0
      %v1138 = vadd.f32 %v835, %v1137
      %1139 = vmatmul.bf16.gmra.mxu0 %v1065
      %v1140 = vpop.f32.mrf.mxu0
      %v1141 = vadd.f32 %v838, %v1140
      %v1142 = vpop.f32.mrf.mxu0
      %v1143 = vadd.f32 %v840, %v1142
      %1144 = vmatmul.bf16.gmra.mxu0 %v1068
      %v1145 = vpop.f32.mrf.mxu0
      %v1146 = vadd.f32 %v843, %v1145
      %v1147 = vpop.f32.mrf.mxu0
      %v1148 = vadd.f32 %v845, %v1147
      %1149 = vmatmul.bf16.gmra.mxu0 %v1071
      %v1150 = vpop.f32.mrf.mxu0
      %v1151 = vadd.f32 %v848, %v1150
      %v1152 = vpop.f32.mrf.mxu0
      %v1153 = vadd.f32 %v850, %v1152
      %1154 = vmatmul.bf16.gmra.mxu0 %v1074
      %v1155 = vpop.f32.mrf.mxu0
      %v1156 = vadd.f32 %v853, %v1155
      %v1157 = vpop.f32.mrf.mxu0
      %v1158 = vadd.f32 %v855, %v1157
      %1159 = vdwg.mxu0
      %v1160 = vld [vmem:[#allocation2 + $0x4] sm:$0xf]
      %v1161 = vld [vmem:[#allocation2 + $0x8] sm:$0xf]
      %v1162 = vld [vmem:[#allocation2 + $0xc] sm:$0xf]
      %v1163 = vld [vmem:[#allocation2 + $0x10] sm:$0xf]
      %v1164 = vld [vmem:[#allocation2 + $0x14] sm:$0xf]
      %v1165 = vld [vmem:[#allocation2 + $0x18] sm:$0xf]
      %v1166 = vld [vmem:[#allocation2 + $0x1c] sm:$0xf]
      %v1167 = vld [vmem:[#allocation2 + $0x20] sm:$0xf]
      %v1168 = vld [vmem:[#allocation2 + $0x24] sm:$0xf]
      %v1169 = vld [vmem:[#allocation2 + $0x28] sm:$0xf]
      %v1170 = vld [vmem:[#allocation2 + $0x2c] sm:$0xf]
      %v1171 = vld [vmem:[#allocation2 + $0x30] sm:$0xf]
      %v1172 = vld [vmem:[#allocation2 + $0x34] sm:$0xf]
      %v1173 = vld [vmem:[#allocation2 + $0x38] sm:$0xf]
      %v1174 = vld [vmem:[#allocation2 + $0x3c] sm:$0xf]
      %v1175 = vld [vmem:[#allocation2 + $0x40] sm:$0xf]
      %v1176 = vld [vmem:[#allocation2 + $0x44] sm:$0xf]
      %v1177 = vld [vmem:[#allocation2 + $0x48] sm:$0xf]
      %v1178 = vld [vmem:[#allocation2 + $0x4c] sm:$0xf]
      %v1179 = vld [vmem:[#allocation2 + $0x50] sm:$0xf]
      %v1180 = vld [vmem:[#allocation2 + $0x54] sm:$0xf]
      %v1181 = vld [vmem:[#allocation2 + $0x58] sm:$0xf]
      %v1182 = vld [vmem:[#allocation2 + $0x5c] sm:$0xf]
      %v1183 = vld [vmem:[#allocation2 + $0x60] sm:$0xf]
      %v1184 = vld [vmem:[#allocation2 + $0x64] sm:$0xf]
      %v1185 = vld [vmem:[#allocation2 + $0x68] sm:$0xf]
      %v1186 = vld [vmem:[#allocation2 + $0x6c] sm:$0xf]
      %v1187 = vld [vmem:[#allocation2 + $0x70] sm:$0xf]
      %v1188 = vld [vmem:[#allocation2 + $0x74] sm:$0xf]
      %v1189 = vld [vmem:[#allocation2 + $0x78] sm:$0xf]
      %v1190 = vld [vmem:[#allocation2 + $0x7c] sm:$0x1]
      %s1191 = scalar_lea.vmem %s3, 32
      %v1192 = vld [vmem:[%s1191] sm:$0xf]
      %v1193 = vld [vmem:[%s1191 + $0x4] sm:$0xf]
      %v1194 = vld [vmem:[%s1191 + $0x8] sm:$0xf]
      %v1195 = vld [vmem:[%s1191 + $0xc] sm:$0xf]
      %v1227 = vunpack.c.l.b16 %v1160
      %v1228 = vunpack.c.l.b16 %v1161
      %v1229 = vunpack.c.l.b16 %v1162
      %v1230 = vunpack.c.l.b16 %v1163
      %v1231 = vunpack.c.l.b16 %v1164
      %v1232 = vunpack.c.l.b16 %v1165
      %v1233 = vunpack.c.l.b16 %v1166
      %v1234 = vunpack.c.l.b16 %v1167
      %v1235 = vunpack.c.l.b16 %v1168
      %v1236 = vunpack.c.l.b16 %v1169
      %v1237 = vunpack.c.l.b16 %v1170
      %v1238 = vunpack.c.l.b16 %v1171
      %v1239 = vunpack.c.l.b16 %v1172
      %v1240 = vunpack.c.l.b16 %v1173
      %v1241 = vunpack.c.l.b16 %v1174
      %v1242 = vunpack.c.l.b16 %v1175
      %v1243 = vunpack.c.l.b16 %v1176
      %v1244 = vunpack.c.l.b16 %v1177
      %v1245 = vunpack.c.l.b16 %v1178
      %v1246 = vunpack.c.l.b16 %v1179
      %v1247 = vunpack.c.l.b16 %v1180
      %v1248 = vunpack.c.l.b16 %v1181
      %v1249 = vunpack.c.l.b16 %v1182
      %v1250 = vunpack.c.l.b16 %v1183
      %v1251 = vunpack.c.l.b16 %v1184
      %v1252 = vunpack.c.l.b16 %v1185
      %v1253 = vunpack.c.l.b16 %v1186
      %v1254 = vunpack.c.l.b16 %v1187
      %v1255 = vunpack.c.l.b16 %v1188
      %v1256 = vunpack.c.l.b16 %v1189
      %v1257 = vunpack.c.l.b16 %v1190
      %v1258 = vpack.c.b16 %v1228, %v1227
      %v1259 = vpack.c.b16 %v1230, %v1229
      %v1260 = vpack.c.b16 %v1232, %v1231
      %v1261 = vpack.c.b16 %v1234, %v1233
      %v1262 = vpack.c.b16 %v1236, %v1235
      %v1263 = vpack.c.b16 %v1238, %v1237
      %v1264 = vpack.c.b16 %v1240, %v1239
      %v1265 = vpack.c.b16 %v1242, %v1241
      %v1266 = vpack.c.b16 %v1244, %v1243
      %v1267 = vpack.c.b16 %v1246, %v1245
      %v1268 = vpack.c.b16 %v1248, %v1247
      %v1269 = vpack.c.b16 %v1250, %v1249
      %v1270 = vpack.c.b16 %v1252, %v1251
      %v1271 = vpack.c.b16 %v1254, %v1253
      %v1272 = vpack.c.b16 %v1256, %v1255
      %v1273 = vpack.c.b16 %v1257, %v1257
      %vm1274 = vsmask.f32 7424
      %v1276 = vshrl.u32 %v1258, 16
      %v1278 = vshll.u32 %v1258, 16
      %v1280 = vrot.slane %v1278, 1
      %v1281 = vor.u32 %v1276, %v1280
      %v1283 = vshll.u32 %v1259, 16
      %v1285 = vrot.slane %v1283, 1
      %v1286 = vsel %vm1274, %v1281, %v1285
      %v1287 = vshrl.u32 %v1259, 16
      %v1289 = vor.u32 %v1287, %v1285
      %v1291 = vshll.u32 %v1260, 16
      %v1293 = vrot.slane %v1291, 1
      %v1294 = vsel %vm1274, %v1289, %v1293
      %v1295 = vshrl.u32 %v1260, 16
      %v1297 = vor.u32 %v1295, %v1293
      %v1299 = vshll.u32 %v1261, 16
      %v1301 = vrot.slane %v1299, 1
      %v1302 = vsel %vm1274, %v1297, %v1301
      %v1303 = vshrl.u32 %v1261, 16
      %v1305 = vor.u32 %v1303, %v1301
      %v1307 = vshll.u32 %v1262, 16
      %v1309 = vrot.slane %v1307, 1
      %v1310 = vsel %vm1274, %v1305, %v1309
      %v1311 = vshrl.u32 %v1262, 16
      %v1313 = vor.u32 %v1311, %v1309
      %v1315 = vshll.u32 %v1263, 16
      %v1317 = vrot.slane %v1315, 1
      %v1318 = vsel %vm1274, %v1313, %v1317
      %v1319 = vshrl.u32 %v1263, 16
      %v1321 = vor.u32 %v1319, %v1317
      %v1323 = vshll.u32 %v1264, 16
      %v1325 = vrot.slane %v1323, 1
      %v1326 = vsel %vm1274, %v1321, %v1325
      %v1327 = vshrl.u32 %v1264, 16
      %v1329 = vor.u32 %v1327, %v1325
      %v1331 = vshll.u32 %v1265, 16
      %v1333 = vrot.slane %v1331, 1
      %v1334 = vsel %vm1274, %v1329, %v1333
      %v1335 = vshrl.u32 %v1265, 16
      %v1337 = vor.u32 %v1335, %v1333
      %v1339 = vshll.u32 %v1266, 16
      %v1341 = vrot.slane %v1339, 1
      %v1342 = vsel %vm1274, %v1337, %v1341
      %v1343 = vshrl.u32 %v1266, 16
      %v1345 = vor.u32 %v1343, %v1341
      %v1347 = vshll.u32 %v1267, 16
      %v1349 = vrot.slane %v1347, 1
      %v1350 = vsel %vm1274, %v1345, %v1349
      %v1351 = vshrl.u32 %v1267, 16
      %v1353 = vor.u32 %v1351, %v1349
      %v1355 = vshll.u32 %v1268, 16
      %v1357 = vrot.slane %v1355, 1
      %v1358 = vsel %vm1274, %v1353, %v1357
      %v1359 = vshrl.u32 %v1268, 16
      %v1361 = vor.u32 %v1359, %v1357
      %v1363 = vshll.u32 %v1269, 16
      %v1365 = vrot.slane %v1363, 1
      %v1366 = vsel %vm1274, %v1361, %v1365
      %v1367 = vshrl.u32 %v1269, 16
      %v1369 = vor.u32 %v1367, %v1365
      %v1371 = vshll.u32 %v1270, 16
      %v1373 = vrot.slane %v1371, 1
      %v1374 = vsel %vm1274, %v1369, %v1373
      %v1375 = vshrl.u32 %v1270, 16
      %v1377 = vor.u32 %v1375, %v1373
      %v1379 = vshll.u32 %v1271, 16
      %v1381 = vrot.slane %v1379, 1
      %v1382 = vsel %vm1274, %v1377, %v1381
      %v1383 = vshrl.u32 %v1271, 16
      %v1385 = vor.u32 %v1383, %v1381
      %v1387 = vshll.u32 %v1272, 16
      %v1389 = vrot.slane %v1387, 1
      %v1390 = vsel %vm1274, %v1385, %v1389
      %v1391 = vshrl.u32 %v1272, 16
      %v1393 = vor.u32 %v1391, %v1389
      %v1395 = vshll.u32 %v1273, 16
      %v1397 = vrot.slane %v1395, 1
      %v1398 = vsel %vm1274, %v1393, %v1397
      %v1403 = vunpack.c.l.b16 %v1192
      %v1404 = vunpack.c.l.b16 %v1193
      %v1405 = vunpack.c.l.b16 %v1194
      %v1406 = vunpack.c.l.b16 %v1195
      %v1407 = vpack.c.b16 %v1404, %v1403
      %v1408 = vpack.c.b16 %v1406, %v1405
      %v1412 = vsel %vm727, %v1286, 0
      %v1415 = vsel %vm727, %v1294, 0
      %v1418 = vsel %vm727, %v1302, 0
      %v1421 = vsel %vm727, %v1310, 0
      %v1424 = vsel %vm727, %v1318, 0
      %v1427 = vsel %vm727, %v1326, 0
      %v1430 = vsel %vm727, %v1334, 0
      %v1433 = vsel %vm727, %v1342, 0
      %v1436 = vsel %vm727, %v1350, 0
      %v1439 = vsel %vm727, %v1358, 0
      %v1442 = vsel %vm727, %v1366, 0
      %v1445 = vsel %vm727, %v1374, 0
      %v1448 = vsel %vm727, %v1382, 0
      %v1451 = vsel %vm727, %v1390, 0
      %v1454 = vsel %vm727, %v1398, 0
      %1456 = vmatpush.bf16.msra.mxu0 0
      %1457 = vmatpush.bf16.msra.mxu0 0
      %1458 = vmatpush.bf16.msra.mxu0 0
      %1459 = vmatpush.bf16.msra.mxu0 0
      %1460 = vmatpush.bf16.msra.mxu0 0
      %1461 = vmatpush.bf16.msra.mxu0 0
      %1462 = vmatpush.bf16.msra.mxu0 %v1408
      %1463 = vmatpush.bf16.msra.mxu0 %v1407
      %1464 = vmatmul.bf16.gmra.mxu0 %v1412
      %v1465 = vpop.f32.mrf.mxu0
      %v1466 = vadd.f32 0.0, %v1465
      %v1467 = vpop.f32.mrf.mxu0
      %v1468 = vadd.f32 0.0, %v1467
      %1469 = vmatmul.bf16.gmra.mxu0 %v1415
      %v1470 = vpop.f32.mrf.mxu0
      %v1471 = vadd.f32 0.0, %v1470
      %v1472 = vpop.f32.mrf.mxu0
      %v1473 = vadd.f32 0.0, %v1472
      %1474 = vmatmul.bf16.gmra.mxu0 %v1418
      %v1475 = vpop.f32.mrf.mxu0
      %v1476 = vadd.f32 0.0, %v1475
      %v1477 = vpop.f32.mrf.mxu0
      %v1478 = vadd.f32 0.0, %v1477
      %1479 = vmatmul.bf16.gmra.mxu0 %v1421
      %v1480 = vpop.f32.mrf.mxu0
      %v1481 = vadd.f32 0.0, %v1480
      %v1482 = vpop.f32.mrf.mxu0
      %v1483 = vadd.f32 0.0, %v1482
      %1484 = vmatmul.bf16.gmra.mxu0 %v1424
      %v1485 = vpop.f32.mrf.mxu0
      %v1486 = vadd.f32 0.0, %v1485
      %v1487 = vpop.f32.mrf.mxu0
      %v1488 = vadd.f32 0.0, %v1487
      %1489 = vmatmul.bf16.gmra.mxu0 %v1427
      %v1490 = vpop.f32.mrf.mxu0
      %v1491 = vadd.f32 0.0, %v1490
      %v1492 = vpop.f32.mrf.mxu0
      %v1493 = vadd.f32 0.0, %v1492
      %1494 = vmatmul.bf16.gmra.mxu0 %v1430
      %v1495 = vpop.f32.mrf.mxu0
      %v1496 = vadd.f32 0.0, %v1495
      %v1497 = vpop.f32.mrf.mxu0
      %v1498 = vadd.f32 0.0, %v1497
      %1499 = vmatmul.bf16.gmra.mxu0 %v1433
      %v1500 = vpop.f32.mrf.mxu0
      %v1501 = vadd.f32 0.0, %v1500
      %v1502 = vpop.f32.mrf.mxu0
      %v1503 = vadd.f32 0.0, %v1502
      %1504 = vmatmul.bf16.gmra.mxu0 %v1436
      %v1505 = vpop.f32.mrf.mxu0
      %v1506 = vadd.f32 0.0, %v1505
      %v1507 = vpop.f32.mrf.mxu0
      %v1508 = vadd.f32 0.0, %v1507
      %1509 = vmatmul.bf16.gmra.mxu0 %v1439
      %v1510 = vpop.f32.mrf.mxu0
      %v1511 = vadd.f32 0.0, %v1510
      %v1512 = vpop.f32.mrf.mxu0
      %v1513 = vadd.f32 0.0, %v1512
      %1514 = vmatmul.bf16.gmra.mxu0 %v1442
      %v1515 = vpop.f32.mrf.mxu0
      %v1516 = vadd.f32 0.0, %v1515
      %v1517 = vpop.f32.mrf.mxu0
      %v1518 = vadd.f32 0.0, %v1517
      %1519 = vmatmul.bf16.gmra.mxu0 %v1445
      %v1520 = vpop.f32.mrf.mxu0
      %v1521 = vadd.f32 0.0, %v1520
      %v1522 = vpop.f32.mrf.mxu0
      %v1523 = vadd.f32 0.0, %v1522
      %1524 = vmatmul.bf16.gmra.mxu0 %v1448
      %v1525 = vpop.f32.mrf.mxu0
      %v1526 = vadd.f32 0.0, %v1525
      %v1527 = vpop.f32.mrf.mxu0
      %v1528 = vadd.f32 0.0, %v1527
      %1529 = vmatmul.bf16.gmra.mxu0 %v1451
      %v1530 = vpop.f32.mrf.mxu0
      %v1531 = vadd.f32 0.0, %v1530
      %v1532 = vpop.f32.mrf.mxu0
      %v1533 = vadd.f32 0.0, %v1532
      %1534 = vmatmul.bf16.gmra.mxu0 %v1454
      %v1535 = vpop.f32.mrf.mxu0
      %v1536 = vadd.f32 0.0, %v1535
      %v1537 = vpop.f32.mrf.mxu0
      %v1538 = vadd.f32 0.0, %v1537
      %1539 = vdwg.mxu0
      %v1540 = vadd.f32 %v1086, %v1466
      %v1541 = vadd.f32 %v1088, %v1468
      %v1542 = vadd.f32 %v1091, %v1471
      %v1543 = vadd.f32 %v1093, %v1473
      %v1544 = vadd.f32 %v1096, %v1476
      %v1545 = vadd.f32 %v1098, %v1478
      %v1546 = vadd.f32 %v1101, %v1481
      %v1547 = vadd.f32 %v1103, %v1483
      %v1548 = vadd.f32 %v1106, %v1486
      %v1549 = vadd.f32 %v1108, %v1488
      %v1550 = vadd.f32 %v1111, %v1491
      %v1551 = vadd.f32 %v1113, %v1493
      %v1552 = vadd.f32 %v1116, %v1496
      %v1553 = vadd.f32 %v1118, %v1498
      %v1554 = vadd.f32 %v1121, %v1501
      %v1555 = vadd.f32 %v1123, %v1503
      %v1556 = vadd.f32 %v1126, %v1506
      %v1557 = vadd.f32 %v1128, %v1508
      %v1558 = vadd.f32 %v1131, %v1511
      %v1559 = vadd.f32 %v1133, %v1513
      %v1560 = vadd.f32 %v1136, %v1516
      %v1561 = vadd.f32 %v1138, %v1518
      %v1562 = vadd.f32 %v1141, %v1521
      %v1563 = vadd.f32 %v1143, %v1523
      %v1564 = vadd.f32 %v1146, %v1526
      %v1565 = vadd.f32 %v1148, %v1528
      %v1566 = vadd.f32 %v1151, %v1531
      %v1567 = vadd.f32 %v1153, %v1533
      %v1568 = vadd.f32 %v1156, %v1536
      %v1569 = vadd.f32 %v1158, %v1538
      %v1570 = vld [vmem:[#allocation2 + $0xc] sm:$0x8]
      %v1571 = vld [vmem:[#allocation2 + $0x10] sm:$0xf]
      %v1572 = vld [vmem:[#allocation2 + $0x14] sm:$0xf]
      %v1573 = vld [vmem:[#allocation2 + $0x18] sm:$0xf]
      %v1574 = vld [vmem:[#allocation2 + $0x1c] sm:$0xf]
      %v1575 = vld [vmem:[#allocation2 + $0x20] sm:$0xf]
      %v1576 = vld [vmem:[#allocation2 + $0x24] sm:$0xf]
      %v1577 = vld [vmem:[#allocation2 + $0x28] sm:$0xf]
      %v1578 = vld [vmem:[#allocation2 + $0x2c] sm:$0xf]
      %v1579 = vld [vmem:[#allocation2 + $0x30] sm:$0xf]
      %v1580 = vld [vmem:[#allocation2 + $0x34] sm:$0xf]
      %v1581 = vld [vmem:[#allocation2 + $0x38] sm:$0xf]
      %v1582 = vld [vmem:[#allocation2 + $0x3c] sm:$0xf]
      %v1583 = vld [vmem:[#allocation2 + $0x40] sm:$0xf]
      %v1584 = vld [vmem:[#allocation2 + $0x44] sm:$0xf]
      %v1585 = vld [vmem:[#allocation2 + $0x48] sm:$0xf]
      %v1586 = vld [vmem:[#allocation2 + $0x4c] sm:$0xf]
      %v1587 = vld [vmem:[#allocation2 + $0x50] sm:$0xf]
      %v1588 = vld [vmem:[#allocation2 + $0x54] sm:$0xf]
      %v1589 = vld [vmem:[#allocation2 + $0x58] sm:$0xf]
      %v1590 = vld [vmem:[#allocation2 + $0x5c] sm:$0xf]
      %v1591 = vld [vmem:[#allocation2 + $0x60] sm:$0xf]
      %v1592 = vld [vmem:[#allocation2 + $0x64] sm:$0xf]
      %v1593 = vld [vmem:[#allocation2 + $0x68] sm:$0xf]
      %v1594 = vld [vmem:[#allocation2 + $0x6c] sm:$0xf]
      %v1595 = vld [vmem:[#allocation2 + $0x70] sm:$0xf]
      %v1596 = vld [vmem:[#allocation2 + $0x74] sm:$0xf]
      %v1597 = vld [vmem:[#allocation2 + $0x78] sm:$0xf]
      %v1598 = vld [vmem:[#allocation2 + $0x7c] sm:$0xf]
      %v1599 = vld [vmem:[#allocation2 + $0x80] sm:$0xf]
      %v1600 = vld [vmem:[#allocation2 + $0x84] sm:$0xf]
      %s1601 = scalar_lea.vmem %s3, 48
      %v1602 = vld [vmem:[%s1601] sm:$0xf]
      %v1603 = vld [vmem:[%s1601 + $0x4] sm:$0xf]
      %v1604 = vld [vmem:[%s1601 + $0x8] sm:$0xf]
      %v1605 = vld [vmem:[%s1601 + $0xc] sm:$0xf]
      %v1637 = vunpack.c.l.b16 %v1570
      %v1638 = vunpack.c.l.b16 %v1571
      %v1639 = vunpack.c.l.b16 %v1572
      %v1640 = vunpack.c.l.b16 %v1573
      %v1641 = vunpack.c.l.b16 %v1574
      %v1642 = vunpack.c.l.b16 %v1575
      %v1643 = vunpack.c.l.b16 %v1576
      %v1644 = vunpack.c.l.b16 %v1577
      %v1645 = vunpack.c.l.b16 %v1578
      %v1646 = vunpack.c.l.b16 %v1579
      %v1647 = vunpack.c.l.b16 %v1580
      %v1648 = vunpack.c.l.b16 %v1581
      %v1649 = vunpack.c.l.b16 %v1582
      %v1650 = vunpack.c.l.b16 %v1583
      %v1651 = vunpack.c.l.b16 %v1584
      %v1652 = vunpack.c.l.b16 %v1585
      %v1653 = vunpack.c.l.b16 %v1586
      %v1654 = vunpack.c.l.b16 %v1587
      %v1655 = vunpack.c.l.b16 %v1588
      %v1656 = vunpack.c.l.b16 %v1589
      %v1657 = vunpack.c.l.b16 %v1590
      %v1658 = vunpack.c.l.b16 %v1591
      %v1659 = vunpack.c.l.b16 %v1592
      %v1660 = vunpack.c.l.b16 %v1593
      %v1661 = vunpack.c.l.b16 %v1594
      %v1662 = vunpack.c.l.b16 %v1595
      %v1663 = vunpack.c.l.b16 %v1596
      %v1664 = vunpack.c.l.b16 %v1597
      %v1665 = vunpack.c.l.b16 %v1598
      %v1666 = vunpack.c.l.b16 %v1599
      %v1667 = vunpack.c.l.b16 %v1600
      %v1668 = vpack.c.b16 %v1638, %v1637
      %v1669 = vpack.c.b16 %v1640, %v1639
      %v1670 = vpack.c.b16 %v1642, %v1641
      %v1671 = vpack.c.b16 %v1644, %v1643
      %v1672 = vpack.c.b16 %v1646, %v1645
      %v1673 = vpack.c.b16 %v1648, %v1647
      %v1674 = vpack.c.b16 %v1650, %v1649
      %v1675 = vpack.c.b16 %v1652, %v1651
      %v1676 = vpack.c.b16 %v1654, %v1653
      %v1677 = vpack.c.b16 %v1656, %v1655
      %v1678 = vpack.c.b16 %v1658, %v1657
      %v1679 = vpack.c.b16 %v1660, %v1659
      %v1680 = vpack.c.b16 %v1662, %v1661
      %v1681 = vpack.c.b16 %v1664, %v1663
      %v1682 = vpack.c.b16 %v1666, %v1665
      %v1683 = vpack.c.b16 %v1667, %v1667
      %v1685 = vshrl.u32 %v1668, 16
      %v1687 = vrot.slane %v1685, 3
      %v1688 = vshll.u32 %v1668, 16
      %v1690 = vrot.slane %v1688, 4
      %v1691 = vor.u32 %v1687, %v1690
      %v1693 = vshrl.u32 %v1669, 16
      %v1695 = vrot.slane %v1693, 3
      %v1696 = vshll.u32 %v1669, 16
      %v1698 = vrot.slane %v1696, 4
      %v1699 = vor.u32 %v1695, %v1698
      %v1700 = vsel %vm875, %v1691, %v1699
      %v1702 = vshrl.u32 %v1670, 16
      %v1704 = vrot.slane %v1702, 3
      %v1705 = vshll.u32 %v1670, 16
      %v1707 = vrot.slane %v1705, 4
      %v1708 = vor.u32 %v1704, %v1707
      %v1709 = vsel %vm875, %v1699, %v1708
      %v1711 = vshrl.u32 %v1671, 16
      %v1713 = vrot.slane %v1711, 3
      %v1714 = vshll.u32 %v1671, 16
      %v1716 = vrot.slane %v1714, 4
      %v1717 = vor.u32 %v1713, %v1716
      %v1718 = vsel %vm875, %v1708, %v1717
      %v1720 = vshrl.u32 %v1672, 16
      %v1722 = vrot.slane %v1720, 3
      %v1723 = vshll.u32 %v1672, 16
      %v1725 = vrot.slane %v1723, 4
      %v1726 = vor.u32 %v1722, %v1725
      %v1727 = vsel %vm875, %v1717, %v1726
      %v1729 = vshrl.u32 %v1673, 16
      %v1731 = vrot.slane %v1729, 3
      %v1732 = vshll.u32 %v1673, 16
      %v1734 = vrot.slane %v1732, 4
      %v1735 = vor.u32 %v1731, %v1734
      %v1736 = vsel %vm875, %v1726, %v1735
      %v1738 = vshrl.u32 %v1674, 16
      %v1740 = vrot.slane %v1738, 3
      %v1741 = vshll.u32 %v1674, 16
      %v1743 = vrot.slane %v1741, 4
      %v1744 = vor.u32 %v1740, %v1743
      %v1745 = vsel %vm875, %v1735, %v1744
      %v1747 = vshrl.u32 %v1675, 16
      %v1749 = vrot.slane %v1747, 3
      %v1750 = vshll.u32 %v1675, 16
      %v1752 = vrot.slane %v1750, 4
      %v1753 = vor.u32 %v1749, %v1752
      %v1754 = vsel %vm875, %v1744, %v1753
      %v1756 = vshrl.u32 %v1676, 16
      %v1758 = vrot.slane %v1756, 3
      %v1759 = vshll.u32 %v1676, 16
      %v1761 = vrot.slane %v1759, 4
      %v1762 = vor.u32 %v1758, %v1761
      %v1763 = vsel %vm875, %v1753, %v1762
      %v1765 = vshrl.u32 %v1677, 16
      %v1767 = vrot.slane %v1765, 3
      %v1768 = vshll.u32 %v1677, 16
      %v1770 = vrot.slane %v1768, 4
      %v1771 = vor.u32 %v1767, %v1770
      %v1772 = vsel %vm875, %v1762, %v1771
      %v1774 = vshrl.u32 %v1678, 16
      %v1776 = vrot.slane %v1774, 3
      %v1777 = vshll.u32 %v1678, 16
      %v1779 = vrot.slane %v1777, 4
      %v1780 = vor.u32 %v1776, %v1779
      %v1781 = vsel %vm875, %v1771, %v1780
      %v1783 = vshrl.u32 %v1679, 16
      %v1785 = vrot.slane %v1783, 3
      %v1786 = vshll.u32 %v1679, 16
      %v1788 = vrot.slane %v1786, 4
      %v1789 = vor.u32 %v1785, %v1788
      %v1790 = vsel %vm875, %v1780, %v1789
      %v1792 = vshrl.u32 %v1680, 16
      %v1794 = vrot.slane %v1792, 3
      %v1795 = vshll.u32 %v1680, 16
      %v1797 = vrot.slane %v1795, 4
      %v1798 = vor.u32 %v1794, %v1797
      %v1799 = vsel %vm875, %v1789, %v1798
      %v1801 = vshrl.u32 %v1681, 16
      %v1803 = vrot.slane %v1801, 3
      %v1804 = vshll.u32 %v1681, 16
      %v1806 = vrot.slane %v1804, 4
      %v1807 = vor.u32 %v1803, %v1806
      %v1808 = vsel %vm875, %v1798, %v1807
      %v1810 = vshrl.u32 %v1682, 16
      %v1812 = vrot.slane %v1810, 3
      %v1813 = vshll.u32 %v1682, 16
      %v1815 = vrot.slane %v1813, 4
      %v1816 = vor.u32 %v1812, %v1815
      %v1817 = vsel %vm875, %v1807, %v1816
      %v1819 = vshrl.u32 %v1683, 16
      %v1821 = vrot.slane %v1819, 3
      %v1822 = vshll.u32 %v1683, 16
      %v1824 = vrot.slane %v1822, 4
      %v1825 = vor.u32 %v1821, %v1824
      %v1826 = vsel %vm875, %v1816, %v1825
      %v1831 = vunpack.c.l.b16 %v1602
      %v1832 = vunpack.c.l.b16 %v1603
      %v1833 = vunpack.c.l.b16 %v1604
      %v1834 = vunpack.c.l.b16 %v1605
      %v1835 = vpack.c.b16 %v1832, %v1831
      %v1836 = vpack.c.b16 %v1834, %v1833
      %v1840 = vsel %vm727, %v1700, 0
      %v1843 = vsel %vm727, %v1709, 0
      %v1846 = vsel %vm727, %v1718, 0
      %v1849 = vsel %vm727, %v1727, 0
      %v1852 = vsel %vm727, %v1736, 0
      %v1855 = vsel %vm727, %v1745, 0
      %v1858 = vsel %vm727, %v1754, 0
      %v1861 = vsel %vm727, %v1763, 0
      %v1864 = vsel %vm727, %v1772, 0
      %v1867 = vsel %vm727, %v1781, 0
      %v1870 = vsel %vm727, %v1790, 0
      %v1873 = vsel %vm727, %v1799, 0
      %v1876 = vsel %vm727, %v1808, 0
      %v1879 = vsel %vm727, %v1817, 0
      %v1882 = vsel %vm727, %v1826, 0
      %1884 = vmatpush.bf16.msra.mxu0 0
      %1885 = vmatpush.bf16.msra.mxu0 0
      %1886 = vmatpush.bf16.msra.mxu0 0
      %1887 = vmatpush.bf16.msra.mxu0 0
      %1888 = vmatpush.bf16.msra.mxu0 0
      %1889 = vmatpush.bf16.msra.mxu0 0
      %1890 = vmatpush.bf16.msra.mxu0 %v1836
      %1891 = vmatpush.bf16.msra.mxu0 %v1835
      %1892 = vmatmul.bf16.gmra.mxu0 %v1840
      %v1893 = vpop.f32.mrf.mxu0
      %v1894 = vadd.f32 0.0, %v1893
      %v1895 = vpop.f32.mrf.mxu0
      %v1896 = vadd.f32 0.0, %v1895
      %1897 = vmatmul.bf16.gmra.mxu0 %v1843
      %v1898 = vpop.f32.mrf.mxu0
      %v1899 = vadd.f32 0.0, %v1898
      %v1900 = vpop.f32.mrf.mxu0
      %v1901 = vadd.f32 0.0, %v1900
      %1902 = vmatmul.bf16.gmra.mxu0 %v1846
      %v1903 = vpop.f32.mrf.mxu0
      %v1904 = vadd.f32 0.0, %v1903
      %v1905 = vpop.f32.mrf.mxu0
      %v1906 = vadd.f32 0.0, %v1905
      %1907 = vmatmul.bf16.gmra.mxu0 %v1849
      %v1908 = vpop.f32.mrf.mxu0
      %v1909 = vadd.f32 0.0, %v1908
      %v1910 = vpop.f32.mrf.mxu0
      %v1911 = vadd.f32 0.0, %v1910
      %1912 = vmatmul.bf16.gmra.mxu0 %v1852
      %v1913 = vpop.f32.mrf.mxu0
      %v1914 = vadd.f32 0.0, %v1913
      %v1915 = vpop.f32.mrf.mxu0
      %v1916 = vadd.f32 0.0, %v1915
      %1917 = vmatmul.bf16.gmra.mxu0 %v1855
      %v1918 = vpop.f32.mrf.mxu0
      %v1919 = vadd.f32 0.0, %v1918
      %v1920 = vpop.f32.mrf.mxu0
      %v1921 = vadd.f32 0.0, %v1920
      %1922 = vmatmul.bf16.gmra.mxu0 %v1858
      %v1923 = vpop.f32.mrf.mxu0
      %v1924 = vadd.f32 0.0, %v1923
      %v1925 = vpop.f32.mrf.mxu0
      %v1926 = vadd.f32 0.0, %v1925
      %1927 = vmatmul.bf16.gmra.mxu0 %v1861
      %v1928 = vpop.f32.mrf.mxu0
      %v1929 = vadd.f32 0.0, %v1928
      %v1930 = vpop.f32.mrf.mxu0
      %v1931 = vadd.f32 0.0, %v1930
      %1932 = vmatmul.bf16.gmra.mxu0 %v1864
      %v1933 = vpop.f32.mrf.mxu0
      %v1934 = vadd.f32 0.0, %v1933
      %v1935 = vpop.f32.mrf.mxu0
      %v1936 = vadd.f32 0.0, %v1935
      %1937 = vmatmul.bf16.gmra.mxu0 %v1867
      %v1938 = vpop.f32.mrf.mxu0
      %v1939 = vadd.f32 0.0, %v1938
      %v1940 = vpop.f32.mrf.mxu0
      %v1941 = vadd.f32 0.0, %v1940
      %1942 = vmatmul.bf16.gmra.mxu0 %v1870
      %v1943 = vpop.f32.mrf.mxu0
      %v1944 = vadd.f32 0.0, %v1943
      %v1945 = vpop.f32.mrf.mxu0
      %v1946 = vadd.f32 0.0, %v1945
      %1947 = vmatmul.bf16.gmra.mxu0 %v1873
      %v1948 = vpop.f32.mrf.mxu0
      %v1949 = vadd.f32 0.0, %v1948
      %v1950 = vpop.f32.mrf.mxu0
      %v1951 = vadd.f32 0.0, %v1950
      %1952 = vmatmul.bf16.gmra.mxu0 %v1876
      %v1953 = vpop.f32.mrf.mxu0
      %v1954 = vadd.f32 0.0, %v1953
      %v1955 = vpop.f32.mrf.mxu0
      %v1956 = vadd.f32 0.0, %v1955
      %1957 = vmatmul.bf16.gmra.mxu0 %v1879
      %v1958 = vpop.f32.mrf.mxu0
      %v1959 = vadd.f32 0.0, %v1958
      %v1960 = vpop.f32.mrf.mxu0
      %v1961 = vadd.f32 0.0, %v1960
      %1962 = vmatmul.bf16.gmra.mxu0 %v1882
      %v1963 = vpop.f32.mrf.mxu0
      %v1964 = vadd.f32 0.0, %v1963
      %v1965 = vpop.f32.mrf.mxu0
      %v1966 = vadd.f32 0.0, %v1965
      %1967 = vdwg.mxu0
      %v1968 = vadd.f32 %v1540, %v1894
      %v1969 = vadd.f32 %v1541, %v1896
      %v1970 = vadd.f32 %v1542, %v1899
      %v1971 = vadd.f32 %v1543, %v1901
      %v1972 = vadd.f32 %v1544, %v1904
      %v1973 = vadd.f32 %v1545, %v1906
      %v1974 = vadd.f32 %v1546, %v1909
      %v1975 = vadd.f32 %v1547, %v1911
      %v1976 = vadd.f32 %v1548, %v1914
      %v1977 = vadd.f32 %v1549, %v1916
      %v1978 = vadd.f32 %v1550, %v1919
      %v1979 = vadd.f32 %v1551, %v1921
      %v1980 = vadd.f32 %v1552, %v1924
      %v1981 = vadd.f32 %v1553, %v1926
      %v1982 = vadd.f32 %v1554, %v1929
      %v1983 = vadd.f32 %v1555, %v1931
      %v1984 = vadd.f32 %v1556, %v1934
      %v1985 = vadd.f32 %v1557, %v1936
      %v1986 = vadd.f32 %v1558, %v1939
      %v1987 = vadd.f32 %v1559, %v1941
      %v1988 = vadd.f32 %v1560, %v1944
      %v1989 = vadd.f32 %v1561, %v1946
      %v1990 = vadd.f32 %v1562, %v1949
      %v1991 = vadd.f32 %v1563, %v1951
      %v1992 = vadd.f32 %v1564, %v1954
      %v1993 = vadd.f32 %v1565, %v1956
      %v1994 = vadd.f32 %v1566, %v1959
      %v1995 = vadd.f32 %v1567, %v1961
      %v1996 = vadd.f32 %v1568, %v1964
      %v1997 = vadd.f32 %v1569, %v1966
      %s1998 = scalar_lea.vmem %s3, 64
      %v1999 = vld [vmem:[%s1998] sm:$0xf]
      %v2000 = vld [vmem:[%s1998 + $0x4] sm:$0xf]
      %v2001 = vld [vmem:[%s1998 + $0x8] sm:$0xf]
      %v2002 = vld [vmem:[%s1998 + $0xc] sm:$0xf]
      %v2003 = vpack.c.b16 %v1639, %v1638
      %v2004 = vpack.c.b16 %v1641, %v1640
      %v2005 = vpack.c.b16 %v1643, %v1642
      %v2006 = vpack.c.b16 %v1645, %v1644
      %v2007 = vpack.c.b16 %v1647, %v1646
      %v2008 = vpack.c.b16 %v1649, %v1648
      %v2009 = vpack.c.b16 %v1651, %v1650
      %v2010 = vpack.c.b16 %v1653, %v1652
      %v2011 = vpack.c.b16 %v1655, %v1654
      %v2012 = vpack.c.b16 %v1657, %v1656
      %v2013 = vpack.c.b16 %v1659, %v1658
      %v2014 = vpack.c.b16 %v1661, %v1660
      %v2015 = vpack.c.b16 %v1663, %v1662
      %v2016 = vpack.c.b16 %v1665, %v1664
      %v2017 = vpack.c.b16 %v1667, %v1666
      %v2022 = vunpack.c.l.b16 %v1999
      %v2023 = vunpack.c.l.b16 %v2000
      %v2024 = vunpack.c.l.b16 %v2001
      %v2025 = vunpack.c.l.b16 %v2002
      %v2026 = vpack.c.b16 %v2023, %v2022
      %v2027 = vpack.c.b16 %v2025, %v2024
      %v2031 = vsel %vm727, %v2003, 0
      %v2034 = vsel %vm727, %v2004, 0
      %v2037 = vsel %vm727, %v2005, 0
      %v2040 = vsel %vm727, %v2006, 0
      %v2043 = vsel %vm727, %v2007, 0
      %v2046 = vsel %vm727, %v2008, 0
      %v2049 = vsel %vm727, %v2009, 0
      %v2052 = vsel %vm727, %v2010, 0
      %v2055 = vsel %vm727, %v2011, 0
      %v2058 = vsel %vm727, %v2012, 0
      %v2061 = vsel %vm727, %v2013, 0
      %v2064 = vsel %vm727, %v2014, 0
      %v2067 = vsel %vm727, %v2015, 0
      %v2070 = vsel %vm727, %v2016, 0
      %v2073 = vsel %vm727, %v2017, 0
      %2075 = vmatpush.bf16.msra.mxu0 0
      %2076 = vmatpush.bf16.msra.mxu0 0
      %2077 = vmatpush.bf16.msra.mxu0 0
      %2078 = vmatpush.bf16.msra.mxu0 0
      %2079 = vmatpush.bf16.msra.mxu0 0
      %2080 = vmatpush.bf16.msra.mxu0 0
      %2081 = vmatpush.bf16.msra.mxu0 %v2027
      %2082 = vmatpush.bf16.msra.mxu0 %v2026
      %2083 = vmatmul.bf16.gmra.mxu0 %v2031
      %v2084 = vpop.f32.mrf.mxu0
      %v2085 = vadd.f32 0.0, %v2084
      %v2086 = vpop.f32.mrf.mxu0
      %v2087 = vadd.f32 0.0, %v2086
      %2088 = vmatmul.bf16.gmra.mxu0 %v2034
      %v2089 = vpop.f32.mrf.mxu0
      %v2090 = vadd.f32 0.0, %v2089
      %v2091 = vpop.f32.mrf.mxu0
      %v2092 = vadd.f32 0.0, %v2091
      %2093 = vmatmul.bf16.gmra.mxu0 %v2037
      %v2094 = vpop.f32.mrf.mxu0
      %v2095 = vadd.f32 0.0, %v2094
      %v2096 = vpop.f32.mrf.mxu0
      %v2097 = vadd.f32 0.0, %v2096
      %2098 = vmatmul.bf16.gmra.mxu0 %v2040
      %v2099 = vpop.f32.mrf.mxu0
      %v2100 = vadd.f32 0.0, %v2099
      %v2101 = vpop.f32.mrf.mxu0
      %v2102 = vadd.f32 0.0, %v2101
      %2103 = vmatmul.bf16.gmra.mxu0 %v2043
      %v2104 = vpop.f32.mrf.mxu0
      %v2105 = vadd.f32 0.0, %v2104
      %v2106 = vpop.f32.mrf.mxu0
      %v2107 = vadd.f32 0.0, %v2106
      %2108 = vmatmul.bf16.gmra.mxu0 %v2046
      %v2109 = vpop.f32.mrf.mxu0
      %v2110 = vadd.f32 0.0, %v2109
      %v2111 = vpop.f32.mrf.mxu0
      %v2112 = vadd.f32 0.0, %v2111
      %2113 = vmatmul.bf16.gmra.mxu0 %v2049
      %v2114 = vpop.f32.mrf.mxu0
      %v2115 = vadd.f32 0.0, %v2114
      %v2116 = vpop.f32.mrf.mxu0
      %v2117 = vadd.f32 0.0, %v2116
      %2118 = vmatmul.bf16.gmra.mxu0 %v2052
      %v2119 = vpop.f32.mrf.mxu0
      %v2120 = vadd.f32 0.0, %v2119
      %v2121 = vpop.f32.mrf.mxu0
      %v2122 = vadd.f32 0.0, %v2121
      %2123 = vmatmul.bf16.gmra.mxu0 %v2055
      %v2124 = vpop.f32.mrf.mxu0
      %v2125 = vadd.f32 0.0, %v2124
      %v2126 = vpop.f32.mrf.mxu0
      %v2127 = vadd.f32 0.0, %v2126
      %2128 = vmatmul.bf16.gmra.mxu0 %v2058
      %v2129 = vpop.f32.mrf.mxu0
      %v2130 = vadd.f32 0.0, %v2129
      %v2131 = vpop.f32.mrf.mxu0
      %v2132 = vadd.f32 0.0, %v2131
      %2133 = vmatmul.bf16.gmra.mxu0 %v2061
      %v2134 = vpop.f32.mrf.mxu0
      %v2135 = vadd.f32 0.0, %v2134
      %v2136 = vpop.f32.mrf.mxu0
      %v2137 = vadd.f32 0.0, %v2136
      %2138 = vmatmul.bf16.gmra.mxu0 %v2064
      %v2139 = vpop.f32.mrf.mxu0
      %v2140 = vadd.f32 0.0, %v2139
      %v2141 = vpop.f32.mrf.mxu0
      %v2142 = vadd.f32 0.0, %v2141
      %2143 = vmatmul.bf16.gmra.mxu0 %v2067
      %v2144 = vpop.f32.mrf.mxu0
      %v2145 = vadd.f32 0.0, %v2144
      %v2146 = vpop.f32.mrf.mxu0
      %v2147 = vadd.f32 0.0, %v2146
      %2148 = vmatmul.bf16.gmra.mxu0 %v2070
      %v2149 = vpop.f32.mrf.mxu0
      %v2150 = vadd.f32 0.0, %v2149
      %v2151 = vpop.f32.mrf.mxu0
      %v2152 = vadd.f32 0.0, %v2151
      %2153 = vmatmul.bf16.gmra.mxu0 %v2073
      %v2154 = vpop.f32.mrf.mxu0
      %v2155 = vadd.f32 0.0, %v2154
      %v2156 = vpop.f32.mrf.mxu0
      %v2157 = vadd.f32 0.0, %v2156
      %2158 = vdwg.mxu0
      %v2159 = vadd.f32 %v1968, %v2085
      %v2160 = vadd.f32 %v1969, %v2087
      %v2161 = vadd.f32 %v1970, %v2090
      %v2162 = vadd.f32 %v1971, %v2092
      %v2163 = vadd.f32 %v1972, %v2095
      %v2164 = vadd.f32 %v1973, %v2097
      %v2165 = vadd.f32 %v1974, %v2100
      %v2166 = vadd.f32 %v1975, %v2102
      %v2167 = vadd.f32 %v1976, %v2105
      %v2168 = vadd.f32 %v1977, %v2107
      %v2169 = vadd.f32 %v1978, %v2110
      %v2170 = vadd.f32 %v1979, %v2112
      %v2171 = vadd.f32 %v1980, %v2115
      %v2172 = vadd.f32 %v1981, %v2117
      %v2173 = vadd.f32 %v1982, %v2120
      %v2174 = vadd.f32 %v1983, %v2122
      %v2175 = vadd.f32 %v1984, %v2125
      %v2176 = vadd.f32 %v1985, %v2127
      %v2177 = vadd.f32 %v1986, %v2130
      %v2178 = vadd.f32 %v1987, %v2132
      %v2179 = vadd.f32 %v1988, %v2135
      %v2180 = vadd.f32 %v1989, %v2137
      %v2181 = vadd.f32 %v1990, %v2140
      %v2182 = vadd.f32 %v1991, %v2142
      %v2183 = vadd.f32 %v1992, %v2145
      %v2184 = vadd.f32 %v1993, %v2147
      %v2185 = vadd.f32 %v1994, %v2150
      %v2186 = vadd.f32 %v1995, %v2152
      %v2187 = vadd.f32 %v1996, %v2155
      %v2188 = vadd.f32 %v1997, %v2157
      %v2189 = vld [vmem:[#allocation2 + $0x10] sm:$0xf]
      %v2190 = vld [vmem:[#allocation2 + $0x14] sm:$0xf]
      %v2191 = vld [vmem:[#allocation2 + $0x18] sm:$0xf]
      %v2192 = vld [vmem:[#allocation2 + $0x1c] sm:$0xf]
      %v2193 = vld [vmem:[#allocation2 + $0x20] sm:$0xf]
      %v2194 = vld [vmem:[#allocation2 + $0x24] sm:$0xf]
      %v2195 = vld [vmem:[#allocation2 + $0x28] sm:$0xf]
      %v2196 = vld [vmem:[#allocation2 + $0x2c] sm:$0xf]
      %v2197 = vld [vmem:[#allocation2 + $0x30] sm:$0xf]
      %v2198 = vld [vmem:[#allocation2 + $0x34] sm:$0xf]
      %v2199 = vld [vmem:[#allocation2 + $0x38] sm:$0xf]
      %v2200 = vld [vmem:[#allocation2 + $0x3c] sm:$0xf]
      %v2201 = vld [vmem:[#allocation2 + $0x40] sm:$0xf]
      %v2202 = vld [vmem:[#allocation2 + $0x44] sm:$0xf]
      %v2203 = vld [vmem:[#allocation2 + $0x48] sm:$0xf]
      %v2204 = vld [vmem:[#allocation2 + $0x4c] sm:$0xf]
      %v2205 = vld [vmem:[#allocation2 + $0x50] sm:$0xf]
      %v2206 = vld [vmem:[#allocation2 + $0x54] sm:$0xf]
      %v2207 = vld [vmem:[#allocation2 + $0x58] sm:$0xf]
      %v2208 = vld [vmem:[#allocation2 + $0x5c] sm:$0xf]
      %v2209 = vld [vmem:[#allocation2 + $0x60] sm:$0xf]
      %v2210 = vld [vmem:[#allocation2 + $0x64] sm:$0xf]
      %v2211 = vld [vmem:[#allocation2 + $0x68] sm:$0xf]
      %v2212 = vld [vmem:[#allocation2 + $0x6c] sm:$0xf]
      %v2213 = vld [vmem:[#allocation2 + $0x70] sm:$0xf]
      %v2214 = vld [vmem:[#allocation2 + $0x74] sm:$0xf]
      %v2215 = vld [vmem:[#allocation2 + $0x78] sm:$0xf]
      %v2216 = vld [vmem:[#allocation2 + $0x7c] sm:$0xf]
      %v2217 = vld [vmem:[#allocation2 + $0x80] sm:$0xf]
      %v2218 = vld [vmem:[#allocation2 + $0x84] sm:$0xf]
      %v2219 = vld [vmem:[#allocation2 + $0x88] sm:$0x1]
      %s2220 = scalar_lea.vmem %s3, 80
      %v2221 = vld [vmem:[%s2220] sm:$0xf]
      %v2222 = vld [vmem:[%s2220 + $0x4] sm:$0xf]
      %v2223 = vld [vmem:[%s2220 + $0x8] sm:$0xf]
      %v2224 = vld [vmem:[%s2220 + $0xc] sm:$0xf]
      %v2256 = vunpack.c.l.b16 %v2189
      %v2257 = vunpack.c.l.b16 %v2190
      %v2258 = vunpack.c.l.b16 %v2191
      %v2259 = vunpack.c.l.b16 %v2192
      %v2260 = vunpack.c.l.b16 %v2193
      %v2261 = vunpack.c.l.b16 %v2194
      %v2262 = vunpack.c.l.b16 %v2195
      %v2263 = vunpack.c.l.b16 %v2196
      %v2264 = vunpack.c.l.b16 %v2197
      %v2265 = vunpack.c.l.b16 %v2198
      %v2266 = vunpack.c.l.b16 %v2199
      %v2267 = vunpack.c.l.b16 %v2200
      %v2268 = vunpack.c.l.b16 %v2201
      %v2269 = vunpack.c.l.b16 %v2202
      %v2270 = vunpack.c.l.b16 %v2203
      %v2271 = vunpack.c.l.b16 %v2204
      %v2272 = vunpack.c.l.b16 %v2205
      %v2273 = vunpack.c.l.b16 %v2206
      %v2274 = vunpack.c.l.b16 %v2207
      %v2275 = vunpack.c.l.b16 %v2208
      %v2276 = vunpack.c.l.b16 %v2209
      %v2277 = vunpack.c.l.b16 %v2210
      %v2278 = vunpack.c.l.b16 %v2211
      %v2279 = vunpack.c.l.b16 %v2212
      %v2280 = vunpack.c.l.b16 %v2213
      %v2281 = vunpack.c.l.b16 %v2214
      %v2282 = vunpack.c.l.b16 %v2215
      %v2283 = vunpack.c.l.b16 %v2216
      %v2284 = vunpack.c.l.b16 %v2217
      %v2285 = vunpack.c.l.b16 %v2218
      %v2286 = vunpack.c.l.b16 %v2219
      %v2287 = vpack.c.b16 %v2257, %v2256
      %v2288 = vpack.c.b16 %v2259, %v2258
      %v2289 = vpack.c.b16 %v2261, %v2260
      %v2290 = vpack.c.b16 %v2263, %v2262
      %v2291 = vpack.c.b16 %v2265, %v2264
      %v2292 = vpack.c.b16 %v2267, %v2266
      %v2293 = vpack.c.b16 %v2269, %v2268
      %v2294 = vpack.c.b16 %v2271, %v2270
      %v2295 = vpack.c.b16 %v2273, %v2272
      %v2296 = vpack.c.b16 %v2275, %v2274
      %v2297 = vpack.c.b16 %v2277, %v2276
      %v2298 = vpack.c.b16 %v2279, %v2278
      %v2299 = vpack.c.b16 %v2281, %v2280
      %v2300 = vpack.c.b16 %v2283, %v2282
      %v2301 = vpack.c.b16 %v2285, %v2284
      %v2302 = vpack.c.b16 %v2286, %v2286
      %v2304 = vshrl.u32 %v2287, 16
      %v2306 = vshll.u32 %v2287, 16
      %v2308 = vrot.slane %v2306, 1
      %v2309 = vor.u32 %v2304, %v2308
      %v2311 = vshll.u32 %v2288, 16
      %v2313 = vrot.slane %v2311, 1
      %v2314 = vsel %vm1274, %v2309, %v2313
      %v2315 = vshrl.u32 %v2288, 16
      %v2317 = vor.u32 %v2315, %v2313
      %v2319 = vshll.u32 %v2289, 16
      %v2321 = vrot.slane %v2319, 1
      %v2322 = vsel %vm1274, %v2317, %v2321
      %v2323 = vshrl.u32 %v2289, 16
      %v2325 = vor.u32 %v2323, %v2321
      %v2327 = vshll.u32 %v2290, 16
      %v2329 = vrot.slane %v2327, 1
      %v2330 = vsel %vm1274, %v2325, %v2329
      %v2331 = vshrl.u32 %v2290, 16
      %v2333 = vor.u32 %v2331, %v2329
      %v2335 = vshll.u32 %v2291, 16
      %v2337 = vrot.slane %v2335, 1
      %v2338 = vsel %vm1274, %v2333, %v2337
      %v2339 = vshrl.u32 %v2291, 16
      %v2341 = vor.u32 %v2339, %v2337
      %v2343 = vshll.u32 %v2292, 16
      %v2345 = vrot.slane %v2343, 1
      %v2346 = vsel %vm1274, %v2341, %v2345
      %v2347 = vshrl.u32 %v2292, 16
      %v2349 = vor.u32 %v2347, %v2345
      %v2351 = vshll.u32 %v2293, 16
      %v2353 = vrot.slane %v2351, 1
      %v2354 = vsel %vm1274, %v2349, %v2353
      %v2355 = vshrl.u32 %v2293, 16
      %v2357 = vor.u32 %v2355, %v2353
      %v2359 = vshll.u32 %v2294, 16
      %v2361 = vrot.slane %v2359, 1
      %v2362 = vsel %vm1274, %v2357, %v2361
      %v2363 = vshrl.u32 %v2294, 16
      %v2365 = vor.u32 %v2363, %v2361
      %v2367 = vshll.u32 %v2295, 16
      %v2369 = vrot.slane %v2367, 1
      %v2370 = vsel %vm1274, %v2365, %v2369
      %v2371 = vshrl.u32 %v2295, 16
      %v2373 = vor.u32 %v2371, %v2369
      %v2375 = vshll.u32 %v2296, 16
      %v2377 = vrot.slane %v2375, 1
      %v2378 = vsel %vm1274, %v2373, %v2377
      %v2379 = vshrl.u32 %v2296, 16
      %v2381 = vor.u32 %v2379, %v2377
      %v2383 = vshll.u32 %v2297, 16
      %v2385 = vrot.slane %v2383, 1
      %v2386 = vsel %vm1274, %v2381, %v2385
      %v2387 = vshrl.u32 %v2297, 16
      %v2389 = vor.u32 %v2387, %v2385
      %v2391 = vshll.u32 %v2298, 16
      %v2393 = vrot.slane %v2391, 1
      %v2394 = vsel %vm1274, %v2389, %v2393
      %v2395 = vshrl.u32 %v2298, 16
      %v2397 = vor.u32 %v2395, %v2393
      %v2399 = vshll.u32 %v2299, 16
      %v2401 = vrot.slane %v2399, 1
      %v2402 = vsel %vm1274, %v2397, %v2401
      %v2403 = vshrl.u32 %v2299, 16
      %v2405 = vor.u32 %v2403, %v2401
      %v2407 = vshll.u32 %v2300, 16
      %v2409 = vrot.slane %v2407, 1
      %v2410 = vsel %vm1274, %v2405, %v2409
      %v2411 = vshrl.u32 %v2300, 16
      %v2413 = vor.u32 %v2411, %v2409
      %v2415 = vshll.u32 %v2301, 16
      %v2417 = vrot.slane %v2415, 1
      %v2418 = vsel %vm1274, %v2413, %v2417
      %v2419 = vshrl.u32 %v2301, 16
      %v2421 = vor.u32 %v2419, %v2417
      %v2423 = vshll.u32 %v2302, 16
      %v2425 = vrot.slane %v2423, 1
      %v2426 = vsel %vm1274, %v2421, %v2425
      %v2431 = vunpack.c.l.b16 %v2221
      %v2432 = vunpack.c.l.b16 %v2222
      %v2433 = vunpack.c.l.b16 %v2223
      %v2434 = vunpack.c.l.b16 %v2224
      %v2435 = vpack.c.b16 %v2432, %v2431
      %v2436 = vpack.c.b16 %v2434, %v2433
      %v2440 = vsel %vm727, %v2314, 0
      %v2443 = vsel %vm727, %v2322, 0
      %v2446 = vsel %vm727, %v2330, 0
      %v2449 = vsel %vm727, %v2338, 0
      %v2452 = vsel %vm727, %v2346, 0
      %v2455 = vsel %vm727, %v2354, 0
      %v2458 = vsel %vm727, %v2362, 0
      %v2461 = vsel %vm727, %v2370, 0
      %v2464 = vsel %vm727, %v2378, 0
      %v2467 = vsel %vm727, %v2386, 0
      %v2470 = vsel %vm727, %v2394, 0
      %v2473 = vsel %vm727, %v2402, 0
      %v2476 = vsel %vm727, %v2410, 0
      %v2479 = vsel %vm727, %v2418, 0
      %v2482 = vsel %vm727, %v2426, 0
      %2484 = vmatpush.bf16.msra.mxu0 0
      %2485 = vmatpush.bf16.msra.mxu0 0
      %2486 = vmatpush.bf16.msra.mxu0 0
      %2487 = vmatpush.bf16.msra.mxu0 0
      %2488 = vmatpush.bf16.msra.mxu0 0
      %2489 = vmatpush.bf16.msra.mxu0 0
      %2490 = vmatpush.bf16.msra.mxu0 %v2436
      %2491 = vmatpush.bf16.msra.mxu0 %v2435
      %2492 = vmatmul.bf16.gmra.mxu0 %v2440
      %v2493 = vpop.f32.mrf.mxu0
      %v2494 = vadd.f32 0.0, %v2493
      %v2495 = vpop.f32.mrf.mxu0
      %v2496 = vadd.f32 0.0, %v2495
      %2497 = vmatmul.bf16.gmra.mxu0 %v2443
      %v2498 = vpop.f32.mrf.mxu0
      %v2499 = vadd.f32 0.0, %v2498
      %v2500 = vpop.f32.mrf.mxu0
      %v2501 = vadd.f32 0.0, %v2500
      %2502 = vmatmul.bf16.gmra.mxu0 %v2446
      %v2503 = vpop.f32.mrf.mxu0
      %v2504 = vadd.f32 0.0, %v2503
      %v2505 = vpop.f32.mrf.mxu0
      %v2506 = vadd.f32 0.0, %v2505
      %2507 = vmatmul.bf16.gmra.mxu0 %v2449
      %v2508 = vpop.f32.mrf.mxu0
      %v2509 = vadd.f32 0.0, %v2508
      %v2510 = vpop.f32.mrf.mxu0
      %v2511 = vadd.f32 0.0, %v2510
      %2512 = vmatmul.bf16.gmra.mxu0 %v2452
      %v2513 = vpop.f32.mrf.mxu0
      %v2514 = vadd.f32 0.0, %v2513
      %v2515 = vpop.f32.mrf.mxu0
      %v2516 = vadd.f32 0.0, %v2515
      %2517 = vmatmul.bf16.gmra.mxu0 %v2455
      %v2518 = vpop.f32.mrf.mxu0
      %v2519 = vadd.f32 0.0, %v2518
      %v2520 = vpop.f32.mrf.mxu0
      %v2521 = vadd.f32 0.0, %v2520
      %2522 = vmatmul.bf16.gmra.mxu0 %v2458
      %v2523 = vpop.f32.mrf.mxu0
      %v2524 = vadd.f32 0.0, %v2523
      %v2525 = vpop.f32.mrf.mxu0
      %v2526 = vadd.f32 0.0, %v2525
      %2527 = vmatmul.bf16.gmra.mxu0 %v2461
      %v2528 = vpop.f32.mrf.mxu0
      %v2529 = vadd.f32 0.0, %v2528
      %v2530 = vpop.f32.mrf.mxu0
      %v2531 = vadd.f32 0.0, %v2530
      %2532 = vmatmul.bf16.gmra.mxu0 %v2464
      %v2533 = vpop.f32.mrf.mxu0
      %v2534 = vadd.f32 0.0, %v2533
      %v2535 = vpop.f32.mrf.mxu0
      %v2536 = vadd.f32 0.0, %v2535
      %2537 = vmatmul.bf16.gmra.mxu0 %v2467
      %v2538 = vpop.f32.mrf.mxu0
      %v2539 = vadd.f32 0.0, %v2538
      %v2540 = vpop.f32.mrf.mxu0
      %v2541 = vadd.f32 0.0, %v2540
      %2542 = vmatmul.bf16.gmra.mxu0 %v2470
      %v2543 = vpop.f32.mrf.mxu0
      %v2544 = vadd.f32 0.0, %v2543
      %v2545 = vpop.f32.mrf.mxu0
      %v2546 = vadd.f32 0.0, %v2545
      %2547 = vmatmul.bf16.gmra.mxu0 %v2473
      %v2548 = vpop.f32.mrf.mxu0
      %v2549 = vadd.f32 0.0, %v2548
      %v2550 = vpop.f32.mrf.mxu0
      %v2551 = vadd.f32 0.0, %v2550
      %2552 = vmatmul.bf16.gmra.mxu0 %v2476
      %v2553 = vpop.f32.mrf.mxu0
      %v2554 = vadd.f32 0.0, %v2553
      %v2555 = vpop.f32.mrf.mxu0
      %v2556 = vadd.f32 0.0, %v2555
      %2557 = vmatmul.bf16.gmra.mxu0 %v2479
      %v2558 = vpop.f32.mrf.mxu0
      %v2559 = vadd.f32 0.0, %v2558
      %v2560 = vpop.f32.mrf.mxu0
      %v2561 = vadd.f32 0.0, %v2560
      %2562 = vmatmul.bf16.gmra.mxu0 %v2482
      %v2563 = vpop.f32.mrf.mxu0
      %v2564 = vadd.f32 0.0, %v2563
      %v2565 = vpop.f32.mrf.mxu0
      %v2566 = vadd.f32 0.0, %v2565
      %2567 = vdwg.mxu0
      %v2568 = vadd.f32 %v2159, %v2494
      %v2569 = vadd.f32 %v2160, %v2496
      %v2570 = vadd.f32 %v2161, %v2499
      %v2571 = vadd.f32 %v2162, %v2501
      %v2572 = vadd.f32 %v2163, %v2504
      %v2573 = vadd.f32 %v2164, %v2506
      %v2574 = vadd.f32 %v2165, %v2509
      %v2575 = vadd.f32 %v2166, %v2511
      %v2576 = vadd.f32 %v2167, %v2514
      %v2577 = vadd.f32 %v2168, %v2516
      %v2578 = vadd.f32 %v2169, %v2519
      %v2579 = vadd.f32 %v2170, %v2521
      %v2580 = vadd.f32 %v2171, %v2524
      %v2581 = vadd.f32 %v2172, %v2526
      %v2582 = vadd.f32 %v2173, %v2529
      %v2583 = vadd.f32 %v2174, %v2531
      %v2584 = vadd.f32 %v2175, %v2534
      %v2585 = vadd.f32 %v2176, %v2536
      %v2586 = vadd.f32 %v2177, %v2539
      %v2587 = vadd.f32 %v2178, %v2541
      %v2588 = vadd.f32 %v2179, %v2544
      %v2589 = vadd.f32 %v2180, %v2546
      %v2590 = vadd.f32 %v2181, %v2549
      %v2591 = vadd.f32 %v2182, %v2551
      %v2592 = vadd.f32 %v2183, %v2554
      %v2593 = vadd.f32 %v2184, %v2556
      %v2594 = vadd.f32 %v2185, %v2559
      %v2595 = vadd.f32 %v2186, %v2561
      %v2596 = vadd.f32 %v2187, %v2564
      %v2597 = vadd.f32 %v2188, %v2566
      %v2598 = vld [vmem:[#allocation2 + $0x18] sm:$0x8]
      %v2599 = vld [vmem:[#allocation2 + $0x1c] sm:$0xf]
      %v2600 = vld [vmem:[#allocation2 + $0x20] sm:$0xf]
      %v2601 = vld [vmem:[#allocation2 + $0x24] sm:$0xf]
      %v2602 = vld [vmem:[#allocation2 + $0x28] sm:$0xf]
      %v2603 = vld [vmem:[#allocation2 + $0x2c] sm:$0xf]
      %v2604 = vld [vmem:[#allocation2 + $0x30] sm:$0xf]
      %v2605 = vld [vmem:[#allocation2 + $0x34] sm:$0xf]
      %v2606 = vld [vmem:[#allocation2 + $0x38] sm:$0xf]
      %v2607 = vld [vmem:[#allocation2 + $0x3c] sm:$0xf]
      %v2608 = vld [vmem:[#allocation2 + $0x40] sm:$0xf]
      %v2609 = vld [vmem:[#allocation2 + $0x44] sm:$0xf]
      %v2610 = vld [vmem:[#allocation2 + $0x48] sm:$0xf]
      %v2611 = vld [vmem:[#allocation2 + $0x4c] sm:$0xf]
      %v2612 = vld [vmem:[#allocation2 + $0x50] sm:$0xf]
      %v2613 = vld [vmem:[#allocation2 + $0x54] sm:$0xf]
      %v2614 = vld [vmem:[#allocation2 + $0x58] sm:$0xf]
      %v2615 = vld [vmem:[#allocation2 + $0x5c] sm:$0xf]
      %v2616 = vld [vmem:[#allocation2 + $0x60] sm:$0xf]
      %v2617 = vld [vmem:[#allocation2 + $0x64] sm:$0xf]
      %v2618 = vld [vmem:[#allocation2 + $0x68] sm:$0xf]
      %v2619 = vld [vmem:[#allocation2 + $0x6c] sm:$0xf]
      %v2620 = vld [vmem:[#allocation2 + $0x70] sm:$0xf]
      %v2621 = vld [vmem:[#allocation2 + $0x74] sm:$0xf]
      %v2622 = vld [vmem:[#allocation2 + $0x78] sm:$0xf]
      %v2623 = vld [vmem:[#allocation2 + $0x7c] sm:$0xf]
      %v2624 = vld [vmem:[#allocation2 + $0x80] sm:$0xf]
      %v2625 = vld [vmem:[#allocation2 + $0x84] sm:$0xf]
      %v2626 = vld [vmem:[#allocation2 + $0x88] sm:$0xf]
      %v2627 = vld [vmem:[#allocation2 + $0x8c] sm:$0xf]
      %v2628 = vld [vmem:[#allocation2 + $0x90] sm:$0xf]
      %s2629 = scalar_lea.vmem %s3, 96
      %v2630 = vld [vmem:[%s2629] sm:$0xf]
      %v2631 = vld [vmem:[%s2629 + $0x4] sm:$0xf]
      %v2632 = vld [vmem:[%s2629 + $0x8] sm:$0xf]
      %v2633 = vld [vmem:[%s2629 + $0xc] sm:$0xf]
      %v2665 = vunpack.c.l.b16 %v2598
      %v2666 = vunpack.c.l.b16 %v2599
      %v2667 = vunpack.c.l.b16 %v2600
      %v2668 = vunpack.c.l.b16 %v2601
      %v2669 = vunpack.c.l.b16 %v2602
      %v2670 = vunpack.c.l.b16 %v2603
      %v2671 = vunpack.c.l.b16 %v2604
      %v2672 = vunpack.c.l.b16 %v2605
      %v2673 = vunpack.c.l.b16 %v2606
      %v2674 = vunpack.c.l.b16 %v2607
      %v2675 = vunpack.c.l.b16 %v2608
      %v2676 = vunpack.c.l.b16 %v2609
      %v2677 = vunpack.c.l.b16 %v2610
      %v2678 = vunpack.c.l.b16 %v2611
      %v2679 = vunpack.c.l.b16 %v2612
      %v2680 = vunpack.c.l.b16 %v2613
      %v2681 = vunpack.c.l.b16 %v2614
      %v2682 = vunpack.c.l.b16 %v2615
      %v2683 = vunpack.c.l.b16 %v2616
      %v2684 = vunpack.c.l.b16 %v2617
      %v2685 = vunpack.c.l.b16 %v2618
      %v2686 = vunpack.c.l.b16 %v2619
      %v2687 = vunpack.c.l.b16 %v2620
      %v2688 = vunpack.c.l.b16 %v2621
      %v2689 = vunpack.c.l.b16 %v2622
      %v2690 = vunpack.c.l.b16 %v2623
      %v2691 = vunpack.c.l.b16 %v2624
      %v2692 = vunpack.c.l.b16 %v2625
      %v2693 = vunpack.c.l.b16 %v2626
      %v2694 = vunpack.c.l.b16 %v2627
      %v2695 = vunpack.c.l.b16 %v2628
      %v2696 = vpack.c.b16 %v2666, %v2665
      %v2697 = vpack.c.b16 %v2668, %v2667
      %v2698 = vpack.c.b16 %v2670, %v2669
      %v2699 = vpack.c.b16 %v2672, %v2671
      %v2700 = vpack.c.b16 %v2674, %v2673
      %v2701 = vpack.c.b16 %v2676, %v2675
      %v2702 = vpack.c.b16 %v2678, %v2677
      %v2703 = vpack.c.b16 %v2680, %v2679
      %v2704 = vpack.c.b16 %v2682, %v2681
      %v2705 = vpack.c.b16 %v2684, %v2683
      %v2706 = vpack.c.b16 %v2686, %v2685
      %v2707 = vpack.c.b16 %v2688, %v2687
      %v2708 = vpack.c.b16 %v2690, %v2689
      %v2709 = vpack.c.b16 %v2692, %v2691
      %v2710 = vpack.c.b16 %v2694, %v2693
      %v2711 = vpack.c.b16 %v2695, %v2695
      %v2713 = vshrl.u32 %v2696, 16
      %v2715 = vrot.slane %v2713, 3
      %v2716 = vshll.u32 %v2696, 16
      %v2718 = vrot.slane %v2716, 4
      %v2719 = vor.u32 %v2715, %v2718
      %v2721 = vshrl.u32 %v2697, 16
      %v2723 = vrot.slane %v2721, 3
      %v2724 = vshll.u32 %v2697, 16
      %v2726 = vrot.slane %v2724, 4
      %v2727 = vor.u32 %v2723, %v2726
      %v2728 = vsel %vm875, %v2719, %v2727
      %v2730 = vshrl.u32 %v2698, 16
      %v2732 = vrot.slane %v2730, 3
      %v2733 = vshll.u32 %v2698, 16
      %v2735 = vrot.slane %v2733, 4
      %v2736 = vor.u32 %v2732, %v2735
      %v2737 = vsel %vm875, %v2727, %v2736
      %v2739 = vshrl.u32 %v2699, 16
      %v2741 = vrot.slane %v2739, 3
      %v2742 = vshll.u32 %v2699, 16
      %v2744 = vrot.slane %v2742, 4
      %v2745 = vor.u32 %v2741, %v2744
      %v2746 = vsel %vm875, %v2736, %v2745
      %v2748 = vshrl.u32 %v2700, 16
      %v2750 = vrot.slane %v2748, 3
      %v2751 = vshll.u32 %v2700, 16
      %v2753 = vrot.slane %v2751, 4
      %v2754 = vor.u32 %v2750, %v2753
      %v2755 = vsel %vm875, %v2745, %v2754
      %v2757 = vshrl.u32 %v2701, 16
      %v2759 = vrot.slane %v2757, 3
      %v2760 = vshll.u32 %v2701, 16
      %v2762 = vrot.slane %v2760, 4
      %v2763 = vor.u32 %v2759, %v2762
      %v2764 = vsel %vm875, %v2754, %v2763
      %v2766 = vshrl.u32 %v2702, 16
      %v2768 = vrot.slane %v2766, 3
      %v2769 = vshll.u32 %v2702, 16
      %v2771 = vrot.slane %v2769, 4
      %v2772 = vor.u32 %v2768, %v2771
      %v2773 = vsel %vm875, %v2763, %v2772
      %v2775 = vshrl.u32 %v2703, 16
      %v2777 = vrot.slane %v2775, 3
      %v2778 = vshll.u32 %v2703, 16
      %v2780 = vrot.slane %v2778, 4
      %v2781 = vor.u32 %v2777, %v2780
      %v2782 = vsel %vm875, %v2772, %v2781
      %v2784 = vshrl.u32 %v2704, 16
      %v2786 = vrot.slane %v2784, 3
      %v2787 = vshll.u32 %v2704, 16
      %v2789 = vrot.slane %v2787, 4
      %v2790 = vor.u32 %v2786, %v2789
      %v2791 = vsel %vm875, %v2781, %v2790
      %v2793 = vshrl.u32 %v2705, 16
      %v2795 = vrot.slane %v2793, 3
      %v2796 = vshll.u32 %v2705, 16
      %v2798 = vrot.slane %v2796, 4
      %v2799 = vor.u32 %v2795, %v2798
      %v2800 = vsel %vm875, %v2790, %v2799
      %v2802 = vshrl.u32 %v2706, 16
      %v2804 = vrot.slane %v2802, 3
      %v2805 = vshll.u32 %v2706, 16
      %v2807 = vrot.slane %v2805, 4
      %v2808 = vor.u32 %v2804, %v2807
      %v2809 = vsel %vm875, %v2799, %v2808
      %v2811 = vshrl.u32 %v2707, 16
      %v2813 = vrot.slane %v2811, 3
      %v2814 = vshll.u32 %v2707, 16
      %v2816 = vrot.slane %v2814, 4
      %v2817 = vor.u32 %v2813, %v2816
      %v2818 = vsel %vm875, %v2808, %v2817
      %v2820 = vshrl.u32 %v2708, 16
      %v2822 = vrot.slane %v2820, 3
      %v2823 = vshll.u32 %v2708, 16
      %v2825 = vrot.slane %v2823, 4
      %v2826 = vor.u32 %v2822, %v2825
      %v2827 = vsel %vm875, %v2817, %v2826
      %v2829 = vshrl.u32 %v2709, 16
      %v2831 = vrot.slane %v2829, 3
      %v2832 = vshll.u32 %v2709, 16
      %v2834 = vrot.slane %v2832, 4
      %v2835 = vor.u32 %v2831, %v2834
      %v2836 = vsel %vm875, %v2826, %v2835
      %v2838 = vshrl.u32 %v2710, 16
      %v2840 = vrot.slane %v2838, 3
      %v2841 = vshll.u32 %v2710, 16
      %v2843 = vrot.slane %v2841, 4
      %v2844 = vor.u32 %v2840, %v2843
      %v2845 = vsel %vm875, %v2835, %v2844
      %v2847 = vshrl.u32 %v2711, 16
      %v2849 = vrot.slane %v2847, 3
      %v2850 = vshll.u32 %v2711, 16
      %v2852 = vrot.slane %v2850, 4
      %v2853 = vor.u32 %v2849, %v2852
      %v2854 = vsel %vm875, %v2844, %v2853
      %v2859 = vunpack.c.l.b16 %v2630
      %v2860 = vunpack.c.l.b16 %v2631
      %v2861 = vunpack.c.l.b16 %v2632
      %v2862 = vunpack.c.l.b16 %v2633
      %v2863 = vpack.c.b16 %v2860, %v2859
      %v2864 = vpack.c.b16 %v2862, %v2861
      %v2868 = vsel %vm727, %v2728, 0
      %v2871 = vsel %vm727, %v2737, 0
      %v2874 = vsel %vm727, %v2746, 0
      %v2877 = vsel %vm727, %v2755, 0
      %v2880 = vsel %vm727, %v2764, 0
      %v2883 = vsel %vm727, %v2773, 0
      %v2886 = vsel %vm727, %v2782, 0
      %v2889 = vsel %vm727, %v2791, 0
      %v2892 = vsel %vm727, %v2800, 0
      %v2895 = vsel %vm727, %v2809, 0
      %v2898 = vsel %vm727, %v2818, 0
      %v2901 = vsel %vm727, %v2827, 0
      %v2904 = vsel %vm727, %v2836, 0
      %v2907 = vsel %vm727, %v2845, 0
      %v2910 = vsel %vm727, %v2854, 0
      %2912 = vmatpush.bf16.msra.mxu0 0
      %2913 = vmatpush.bf16.msra.mxu0 0
      %2914 = vmatpush.bf16.msra.mxu0 0
      %2915 = vmatpush.bf16.msra.mxu0 0
      %2916 = vmatpush.bf16.msra.mxu0 0
      %2917 = vmatpush.bf16.msra.mxu0 0
      %2918 = vmatpush.bf16.msra.mxu0 %v2864
      %2919 = vmatpush.bf16.msra.mxu0 %v2863
      %2920 = vmatmul.bf16.gmra.mxu0 %v2868
      %v2921 = vpop.f32.mrf.mxu0
      %v2922 = vadd.f32 0.0, %v2921
      %v2923 = vpop.f32.mrf.mxu0
      %v2924 = vadd.f32 0.0, %v2923
      %2925 = vmatmul.bf16.gmra.mxu0 %v2871
      %v2926 = vpop.f32.mrf.mxu0
      %v2927 = vadd.f32 0.0, %v2926
      %v2928 = vpop.f32.mrf.mxu0
      %v2929 = vadd.f32 0.0, %v2928
      %2930 = vmatmul.bf16.gmra.mxu0 %v2874
      %v2931 = vpop.f32.mrf.mxu0
      %v2932 = vadd.f32 0.0, %v2931
      %v2933 = vpop.f32.mrf.mxu0
      %v2934 = vadd.f32 0.0, %v2933
      %2935 = vmatmul.bf16.gmra.mxu0 %v2877
      %v2936 = vpop.f32.mrf.mxu0
      %v2937 = vadd.f32 0.0, %v2936
      %v2938 = vpop.f32.mrf.mxu0
      %v2939 = vadd.f32 0.0, %v2938
      %2940 = vmatmul.bf16.gmra.mxu0 %v2880
      %v2941 = vpop.f32.mrf.mxu0
      %v2942 = vadd.f32 0.0, %v2941
      %v2943 = vpop.f32.mrf.mxu0
      %v2944 = vadd.f32 0.0, %v2943
      %2945 = vmatmul.bf16.gmra.mxu0 %v2883
      %v2946 = vpop.f32.mrf.mxu0
      %v2947 = vadd.f32 0.0, %v2946
      %v2948 = vpop.f32.mrf.mxu0
      %v2949 = vadd.f32 0.0, %v2948
      %2950 = vmatmul.bf16.gmra.mxu0 %v2886
      %v2951 = vpop.f32.mrf.mxu0
      %v2952 = vadd.f32 0.0, %v2951
      %v2953 = vpop.f32.mrf.mxu0
      %v2954 = vadd.f32 0.0, %v2953
      %2955 = vmatmul.bf16.gmra.mxu0 %v2889
      %v2956 = vpop.f32.mrf.mxu0
      %v2957 = vadd.f32 0.0, %v2956
      %v2958 = vpop.f32.mrf.mxu0
      %v2959 = vadd.f32 0.0, %v2958
      %2960 = vmatmul.bf16.gmra.mxu0 %v2892
      %v2961 = vpop.f32.mrf.mxu0
      %v2962 = vadd.f32 0.0, %v2961
      %v2963 = vpop.f32.mrf.mxu0
      %v2964 = vadd.f32 0.0, %v2963
      %2965 = vmatmul.bf16.gmra.mxu0 %v2895
      %v2966 = vpop.f32.mrf.mxu0
      %v2967 = vadd.f32 0.0, %v2966
      %v2968 = vpop.f32.mrf.mxu0
      %v2969 = vadd.f32 0.0, %v2968
      %2970 = vmatmul.bf16.gmra.mxu0 %v2898
      %v2971 = vpop.f32.mrf.mxu0
      %v2972 = vadd.f32 0.0, %v2971
      %v2973 = vpop.f32.mrf.mxu0
      %v2974 = vadd.f32 0.0, %v2973
      %2975 = vmatmul.bf16.gmra.mxu0 %v2901
      %v2976 = vpop.f32.mrf.mxu0
      %v2977 = vadd.f32 0.0, %v2976
      %v2978 = vpop.f32.mrf.mxu0
      %v2979 = vadd.f32 0.0, %v2978
      %2980 = vmatmul.bf16.gmra.mxu0 %v2904
      %v2981 = vpop.f32.mrf.mxu0
      %v2982 = vadd.f32 0.0, %v2981
      %v2983 = vpop.f32.mrf.mxu0
      %v2984 = vadd.f32 0.0, %v2983
      %2985 = vmatmul.bf16.gmra.mxu0 %v2907
      %v2986 = vpop.f32.mrf.mxu0
      %v2987 = vadd.f32 0.0, %v2986
      %v2988 = vpop.f32.mrf.mxu0
      %v2989 = vadd.f32 0.0, %v2988
      %2990 = vmatmul.bf16.gmra.mxu0 %v2910
      %v2991 = vpop.f32.mrf.mxu0
      %v2992 = vadd.f32 0.0, %v2991
      %v2993 = vpop.f32.mrf.mxu0
      %v2994 = vadd.f32 0.0, %v2993
      %2995 = vdwg.mxu0
      %v2996 = vadd.f32 %v2568, %v2922
      %v2997 = vadd.f32 %v2569, %v2924
      %v2998 = vadd.f32 %v2570, %v2927
      %v2999 = vadd.f32 %v2571, %v2929
      %v3000 = vadd.f32 %v2572, %v2932
      %v3001 = vadd.f32 %v2573, %v2934
      %v3002 = vadd.f32 %v2574, %v2937
      %v3003 = vadd.f32 %v2575, %v2939
      %v3004 = vadd.f32 %v2576, %v2942
      %v3005 = vadd.f32 %v2577, %v2944
      %v3006 = vadd.f32 %v2578, %v2947
      %v3007 = vadd.f32 %v2579, %v2949
      %v3008 = vadd.f32 %v2580, %v2952
      %v3009 = vadd.f32 %v2581, %v2954
      %v3010 = vadd.f32 %v2582, %v2957
      %v3011 = vadd.f32 %v2583, %v2959
      %v3012 = vadd.f32 %v2584, %v2962
      %v3013 = vadd.f32 %v2585, %v2964
      %v3014 = vadd.f32 %v2586, %v2967
      %v3015 = vadd.f32 %v2587, %v2969
      %v3016 = vadd.f32 %v2588, %v2972
      %v3017 = vadd.f32 %v2589, %v2974
      %v3018 = vadd.f32 %v2590, %v2977
      %v3019 = vadd.f32 %v2591, %v2979
      %v3020 = vadd.f32 %v2592, %v2982
      %v3021 = vadd.f32 %v2593, %v2984
      %v3022 = vadd.f32 %v2594, %v2987
      %v3023 = vadd.f32 %v2595, %v2989
      %v3024 = vadd.f32 %v2596, %v2992
      %v3025 = vadd.f32 %v2597, %v2994
      %s3026 = scalar_lea.vmem %s3, 112
      %v3027 = vld [vmem:[%s3026] sm:$0xf]
      %v3028 = vld [vmem:[%s3026 + $0x4] sm:$0xf]
      %v3029 = vld [vmem:[%s3026 + $0x8] sm:$0xf]
      %v3030 = vld [vmem:[%s3026 + $0xc] sm:$0xf]
      %v3031 = vpack.c.b16 %v2667, %v2666
      %v3032 = vpack.c.b16 %v2669, %v2668
      %v3033 = vpack.c.b16 %v2671, %v2670
      %v3034 = vpack.c.b16 %v2673, %v2672
      %v3035 = vpack.c.b16 %v2675, %v2674
      %v3036 = vpack.c.b16 %v2677, %v2676
      %v3037 = vpack.c.b16 %v2679, %v2678
      %v3038 = vpack.c.b16 %v2681, %v2680
      %v3039 = vpack.c.b16 %v2683, %v2682
      %v3040 = vpack.c.b16 %v2685, %v2684
      %v3041 = vpack.c.b16 %v2687, %v2686
      %v3042 = vpack.c.b16 %v2689, %v2688
      %v3043 = vpack.c.b16 %v2691, %v2690
      %v3044 = vpack.c.b16 %v2693, %v2692
      %v3045 = vpack.c.b16 %v2695, %v2694
      %v3050 = vunpack.c.l.b16 %v3027
      %v3051 = vunpack.c.l.b16 %v3028
      %v3052 = vunpack.c.l.b16 %v3029
      %v3053 = vunpack.c.l.b16 %v3030
      %v3054 = vpack.c.b16 %v3051, %v3050
      %v3055 = vpack.c.b16 %v3053, %v3052
      %v3059 = vsel %vm727, %v3031, 0
      %v3062 = vsel %vm727, %v3032, 0
      %v3065 = vsel %vm727, %v3033, 0
      %v3068 = vsel %vm727, %v3034, 0
      %v3071 = vsel %vm727, %v3035, 0
      %v3074 = vsel %vm727, %v3036, 0
      %v3077 = vsel %vm727, %v3037, 0
      %v3080 = vsel %vm727, %v3038, 0
      %v3083 = vsel %vm727, %v3039, 0
      %v3086 = vsel %vm727, %v3040, 0
      %v3089 = vsel %vm727, %v3041, 0
      %v3092 = vsel %vm727, %v3042, 0
      %v3095 = vsel %vm727, %v3043, 0
      %v3098 = vsel %vm727, %v3044, 0
      %v3101 = vsel %vm727, %v3045, 0
      %3103 = vmatpush.bf16.msra.mxu0 0
      %3104 = vmatpush.bf16.msra.mxu0 0
      %3105 = vmatpush.bf16.msra.mxu0 0
      %3106 = vmatpush.bf16.msra.mxu0 0
      %3107 = vmatpush.bf16.msra.mxu0 0
      %3108 = vmatpush.bf16.msra.mxu0 0
      %3109 = vmatpush.bf16.msra.mxu0 %v3055
      %3110 = vmatpush.bf16.msra.mxu0 %v3054
      %3111 = vmatmul.bf16.gmra.mxu0 %v3059
      %v3112 = vpop.f32.mrf.mxu0
      %v3113 = vadd.f32 0.0, %v3112
      %v3114 = vpop.f32.mrf.mxu0
      %v3115 = vadd.f32 0.0, %v3114
      %3116 = vmatmul.bf16.gmra.mxu0 %v3062
      %v3117 = vpop.f32.mrf.mxu0
      %v3118 = vadd.f32 0.0, %v3117
      %v3119 = vpop.f32.mrf.mxu0
      %v3120 = vadd.f32 0.0, %v3119
      %3121 = vmatmul.bf16.gmra.mxu0 %v3065
      %v3122 = vpop.f32.mrf.mxu0
      %v3123 = vadd.f32 0.0, %v3122
      %v3124 = vpop.f32.mrf.mxu0
      %v3125 = vadd.f32 0.0, %v3124
      %3126 = vmatmul.bf16.gmra.mxu0 %v3068
      %v3127 = vpop.f32.mrf.mxu0
      %v3128 = vadd.f32 0.0, %v3127
      %v3129 = vpop.f32.mrf.mxu0
      %v3130 = vadd.f32 0.0, %v3129
      %3131 = vmatmul.bf16.gmra.mxu0 %v3071
      %v3132 = vpop.f32.mrf.mxu0
      %v3133 = vadd.f32 0.0, %v3132
      %v3134 = vpop.f32.mrf.mxu0
      %v3135 = vadd.f32 0.0, %v3134
      %3136 = vmatmul.bf16.gmra.mxu0 %v3074
      %v3137 = vpop.f32.mrf.mxu0
      %v3138 = vadd.f32 0.0, %v3137
      %v3139 = vpop.f32.mrf.mxu0
      %v3140 = vadd.f32 0.0, %v3139
      %3141 = vmatmul.bf16.gmra.mxu0 %v3077
      %v3142 = vpop.f32.mrf.mxu0
      %v3143 = vadd.f32 0.0, %v3142
      %v3144 = vpop.f32.mrf.mxu0
      %v3145 = vadd.f32 0.0, %v3144
      %3146 = vmatmul.bf16.gmra.mxu0 %v3080
      %v3147 = vpop.f32.mrf.mxu0
      %v3148 = vadd.f32 0.0, %v3147
      %v3149 = vpop.f32.mrf.mxu0
      %v3150 = vadd.f32 0.0, %v3149
      %3151 = vmatmul.bf16.gmra.mxu0 %v3083
      %v3152 = vpop.f32.mrf.mxu0
      %v3153 = vadd.f32 0.0, %v3152
      %v3154 = vpop.f32.mrf.mxu0
      %v3155 = vadd.f32 0.0, %v3154
      %3156 = vmatmul.bf16.gmra.mxu0 %v3086
      %v3157 = vpop.f32.mrf.mxu0
      %v3158 = vadd.f32 0.0, %v3157
      %v3159 = vpop.f32.mrf.mxu0
      %v3160 = vadd.f32 0.0, %v3159
      %3161 = vmatmul.bf16.gmra.mxu0 %v3089
      %v3162 = vpop.f32.mrf.mxu0
      %v3163 = vadd.f32 0.0, %v3162
      %v3164 = vpop.f32.mrf.mxu0
      %v3165 = vadd.f32 0.0, %v3164
      %3166 = vmatmul.bf16.gmra.mxu0 %v3092
      %v3167 = vpop.f32.mrf.mxu0
      %v3168 = vadd.f32 0.0, %v3167
      %v3169 = vpop.f32.mrf.mxu0
      %v3170 = vadd.f32 0.0, %v3169
      %3171 = vmatmul.bf16.gmra.mxu0 %v3095
      %v3172 = vpop.f32.mrf.mxu0
      %v3173 = vadd.f32 0.0, %v3172
      %v3174 = vpop.f32.mrf.mxu0
      %v3175 = vadd.f32 0.0, %v3174
      %3176 = vmatmul.bf16.gmra.mxu0 %v3098
      %v3177 = vpop.f32.mrf.mxu0
      %v3178 = vadd.f32 0.0, %v3177
      %v3179 = vpop.f32.mrf.mxu0
      %v3180 = vadd.f32 0.0, %v3179
      %3181 = vmatmul.bf16.gmra.mxu0 %v3101
      %v3182 = vpop.f32.mrf.mxu0
      %v3183 = vadd.f32 0.0, %v3182
      %v3184 = vpop.f32.mrf.mxu0
      %v3185 = vadd.f32 0.0, %v3184
      %3186 = vdwg.mxu0
      %v3187 = vadd.f32 %v2996, %v3113
      %v3188 = vadd.f32 %v2997, %v3115
      %v3189 = vadd.f32 %v2998, %v3118
      %v3190 = vadd.f32 %v2999, %v3120
      %v3191 = vadd.f32 %v3000, %v3123
      %v3192 = vadd.f32 %v3001, %v3125
      %v3193 = vadd.f32 %v3002, %v3128
      %v3194 = vadd.f32 %v3003, %v3130
      %v3195 = vadd.f32 %v3004, %v3133
      %v3196 = vadd.f32 %v3005, %v3135
      %v3197 = vadd.f32 %v3006, %v3138
      %v3198 = vadd.f32 %v3007, %v3140
      %v3199 = vadd.f32 %v3008, %v3143
      %v3200 = vadd.f32 %v3009, %v3145
      %v3201 = vadd.f32 %v3010, %v3148
      %v3202 = vadd.f32 %v3011, %v3150
      %v3203 = vadd.f32 %v3012, %v3153
      %v3204 = vadd.f32 %v3013, %v3155
      %v3205 = vadd.f32 %v3014, %v3158
      %v3206 = vadd.f32 %v3015, %v3160
      %v3207 = vadd.f32 %v3016, %v3163
      %v3208 = vadd.f32 %v3017, %v3165
      %v3209 = vadd.f32 %v3018, %v3168
      %v3210 = vadd.f32 %v3019, %v3170
      %v3211 = vadd.f32 %v3020, %v3173
      %v3212 = vadd.f32 %v3021, %v3175
      %v3213 = vadd.f32 %v3022, %v3178
      %v3214 = vadd.f32 %v3023, %v3180
      %v3215 = vadd.f32 %v3024, %v3183
      %v3216 = vadd.f32 %v3025, %v3185
      %v3217 = vld [vmem:[#allocation2 + $0x1c] sm:$0xf]
      %v3218 = vld [vmem:[#allocation2 + $0x20] sm:$0xf]
      %v3219 = vld [vmem:[#allocation2 + $0x24] sm:$0xf]
      %v3220 = vld [vmem:[#allocation2 + $0x28] sm:$0xf]
      %v3221 = vld [vmem:[#allocation2 + $0x2c] sm:$0xf]
      %v3222 = vld [vmem:[#allocation2 + $0x30] sm:$0xf]
      %v3223 = vld [vmem:[#allocation2 + $0x34] sm:$0xf]
      %v3224 = vld [vmem:[#allocation2 + $0x38] sm:$0xf]
      %v3225 = vld [vmem:[#allocation2 + $0x3c] sm:$0xf]
      %v3226 = vld [vmem:[#allocation2 + $0x40] sm:$0xf]
      %v3227 = vld [vmem:[#allocation2 + $0x44] sm:$0xf]
      %v3228 = vld [vmem:[#allocation2 + $0x48] sm:$0xf]
      %v3229 = vld [vmem:[#allocation2 + $0x4c] sm:$0xf]
      %v3230 = vld [vmem:[#allocation2 + $0x50] sm:$0xf]
      %v3231 = vld [vmem:[#allocation2 + $0x54] sm:$0xf]
      %v3232 = vld [vmem:[#allocation2 + $0x58] sm:$0xf]
      %v3233 = vld [vmem:[#allocation2 + $0x5c] sm:$0xf]
      %v3234 = vld [vmem:[#allocation2 + $0x60] sm:$0xf]
      %v3235 = vld [vmem:[#allocation2 + $0x64] sm:$0xf]
      %v3236 = vld [vmem:[#allocation2 + $0x68] sm:$0xf]
      %v3237 = vld [vmem:[#allocation2 + $0x6c] sm:$0xf]
      %v3238 = vld [vmem:[#allocation2 + $0x70] sm:$0xf]
      %v3239 = vld [vmem:[#allocation2 + $0x74] sm:$0xf]
      %v3240 = vld [vmem:[#allocation2 + $0x78] sm:$0xf]
      %v3241 = vld [vmem:[#allocation2 + $0x7c] sm:$0xf]
      %v3242 = vld [vmem:[#allocation2 + $0x80] sm:$0xf]
      %v3243 = vld [vmem:[#allocation2 + $0x84] sm:$0xf]
      %v3244 = vld [vmem:[#allocation2 + $0x88] sm:$0xf]
      %v3245 = vld [vmem:[#allocation2 + $0x8c] sm:$0xf]
      %v3246 = vld [vmem:[#allocation2 + $0x90] sm:$0xf]
      %v3247 = vld [vmem:[#allocation2 + $0x94] sm:$0x1]
      %s3248 = scalar_lea.vmem %s3, 128
      %v3249 = vld [vmem:[%s3248] sm:$0xf]
      %v3250 = vld [vmem:[%s3248 + $0x4] sm:$0xf]
      %v3251 = vld [vmem:[%s3248 + $0x8] sm:$0xf]
      %v3252 = vld [vmem:[%s3248 + $0xc] sm:$0xf]
      %v3284 = vunpack.c.l.b16 %v3217
      %v3285 = vunpack.c.l.b16 %v3218
      %v3286 = vunpack.c.l.b16 %v3219
      %v3287 = vunpack.c.l.b16 %v3220
      %v3288 = vunpack.c.l.b16 %v3221
      %v3289 = vunpack.c.l.b16 %v3222
      %v3290 = vunpack.c.l.b16 %v3223
      %v3291 = vunpack.c.l.b16 %v3224
      %v3292 = vunpack.c.l.b16 %v3225
      %v3293 = vunpack.c.l.b16 %v3226
      %v3294 = vunpack.c.l.b16 %v3227
      %v3295 = vunpack.c.l.b16 %v3228
      %v3296 = vunpack.c.l.b16 %v3229
      %v3297 = vunpack.c.l.b16 %v3230
      %v3298 = vunpack.c.l.b16 %v3231
      %v3299 = vunpack.c.l.b16 %v3232
      %v3300 = vunpack.c.l.b16 %v3233
      %v3301 = vunpack.c.l.b16 %v3234
      %v3302 = vunpack.c.l.b16 %v3235
      %v3303 = vunpack.c.l.b16 %v3236
      %v3304 = vunpack.c.l.b16 %v3237
      %v3305 = vunpack.c.l.b16 %v3238
      %v3306 = vunpack.c.l.b16 %v3239
      %v3307 = vunpack.c.l.b16 %v3240
      %v3308 = vunpack.c.l.b16 %v3241
      %v3309 = vunpack.c.l.b16 %v3242
      %v3310 = vunpack.c.l.b16 %v3243
      %v3311 = vunpack.c.l.b16 %v3244
      %v3312 = vunpack.c.l.b16 %v3245
      %v3313 = vunpack.c.l.b16 %v3246
      %v3314 = vunpack.c.l.b16 %v3247
      %v3315 = vpack.c.b16 %v3285, %v3284
      %v3316 = vpack.c.b16 %v3287, %v3286
      %v3317 = vpack.c.b16 %v3289, %v3288
      %v3318 = vpack.c.b16 %v3291, %v3290
      %v3319 = vpack.c.b16 %v3293, %v3292
      %v3320 = vpack.c.b16 %v3295, %v3294
      %v3321 = vpack.c.b16 %v3297, %v3296
      %v3322 = vpack.c.b16 %v3299, %v3298
      %v3323 = vpack.c.b16 %v3301, %v3300
      %v3324 = vpack.c.b16 %v3303, %v3302
      %v3325 = vpack.c.b16 %v3305, %v3304
      %v3326 = vpack.c.b16 %v3307, %v3306
      %v3327 = vpack.c.b16 %v3309, %v3308
      %v3328 = vpack.c.b16 %v3311, %v3310
      %v3329 = vpack.c.b16 %v3313, %v3312
      %v3330 = vpack.c.b16 %v3314, %v3314
      %v3332 = vshrl.u32 %v3315, 16
      %v3334 = vshll.u32 %v3315, 16
      %v3336 = vrot.slane %v3334, 1
      %v3337 = vor.u32 %v3332, %v3336
      %v3339 = vshll.u32 %v3316, 16
      %v3341 = vrot.slane %v3339, 1
      %v3342 = vsel %vm1274, %v3337, %v3341
      %v3343 = vshrl.u32 %v3316, 16
      %v3345 = vor.u32 %v3343, %v3341
      %v3347 = vshll.u32 %v3317, 16
      %v3349 = vrot.slane %v3347, 1
      %v3350 = vsel %vm1274, %v3345, %v3349
      %v3351 = vshrl.u32 %v3317, 16
      %v3353 = vor.u32 %v3351, %v3349
      %v3355 = vshll.u32 %v3318, 16
      %v3357 = vrot.slane %v3355, 1
      %v3358 = vsel %vm1274, %v3353, %v3357
      %v3359 = vshrl.u32 %v3318, 16
      %v3361 = vor.u32 %v3359, %v3357
      %v3363 = vshll.u32 %v3319, 16
      %v3365 = vrot.slane %v3363, 1
      %v3366 = vsel %vm1274, %v3361, %v3365
      %v3367 = vshrl.u32 %v3319, 16
      %v3369 = vor.u32 %v3367, %v3365
      %v3371 = vshll.u32 %v3320, 16
      %v3373 = vrot.slane %v3371, 1
      %v3374 = vsel %vm1274, %v3369, %v3373
      %v3375 = vshrl.u32 %v3320, 16
      %v3377 = vor.u32 %v3375, %v3373
      %v3379 = vshll.u32 %v3321, 16
      %v3381 = vrot.slane %v3379, 1
      %v3382 = vsel %vm1274, %v3377, %v3381
      %v3383 = vshrl.u32 %v3321, 16
      %v3385 = vor.u32 %v3383, %v3381
      %v3387 = vshll.u32 %v3322, 16
      %v3389 = vrot.slane %v3387, 1
      %v3390 = vsel %vm1274, %v3385, %v3389
      %v3391 = vshrl.u32 %v3322, 16
      %v3393 = vor.u32 %v3391, %v3389
      %v3395 = vshll.u32 %v3323, 16
      %v3397 = vrot.slane %v3395, 1
      %v3398 = vsel %vm1274, %v3393, %v3397
      %v3399 = vshrl.u32 %v3323, 16
      %v3401 = vor.u32 %v3399, %v3397
      %v3403 = vshll.u32 %v3324, 16
      %v3405 = vrot.slane %v3403, 1
      %v3406 = vsel %vm1274, %v3401, %v3405
      %v3407 = vshrl.u32 %v3324, 16
      %v3409 = vor.u32 %v3407, %v3405
      %v3411 = vshll.u32 %v3325, 16
      %v3413 = vrot.slane %v3411, 1
      %v3414 = vsel %vm1274, %v3409, %v3413
      %v3415 = vshrl.u32 %v3325, 16
      %v3417 = vor.u32 %v3415, %v3413
      %v3419 = vshll.u32 %v3326, 16
      %v3421 = vrot.slane %v3419, 1
      %v3422 = vsel %vm1274, %v3417, %v3421
      %v3423 = vshrl.u32 %v3326, 16
      %v3425 = vor.u32 %v3423, %v3421
      %v3427 = vshll.u32 %v3327, 16
      %v3429 = vrot.slane %v3427, 1
      %v3430 = vsel %vm1274, %v3425, %v3429
      %v3431 = vshrl.u32 %v3327, 16
      %v3433 = vor.u32 %v3431, %v3429
      %v3435 = vshll.u32 %v3328, 16
      %v3437 = vrot.slane %v3435, 1
      %v3438 = vsel %vm1274, %v3433, %v3437
      %v3439 = vshrl.u32 %v3328, 16
      %v3441 = vor.u32 %v3439, %v3437
      %v3443 = vshll.u32 %v3329, 16
      %v3445 = vrot.slane %v3443, 1
      %v3446 = vsel %vm1274, %v3441, %v3445
      %v3447 = vshrl.u32 %v3329, 16
      %v3449 = vor.u32 %v3447, %v3445
      %v3451 = vshll.u32 %v3330, 16
      %v3453 = vrot.slane %v3451, 1
      %v3454 = vsel %vm1274, %v3449, %v3453
      %v3459 = vunpack.c.l.b16 %v3249
      %v3460 = vunpack.c.l.b16 %v3250
      %v3461 = vunpack.c.l.b16 %v3251
      %v3462 = vunpack.c.l.b16 %v3252
      %v3463 = vpack.c.b16 %v3460, %v3459
      %v3464 = vpack.c.b16 %v3462, %v3461
      %v3468 = vsel %vm727, %v3342, 0
      %v3471 = vsel %vm727, %v3350, 0
      %v3474 = vsel %vm727, %v3358, 0
      %v3477 = vsel %vm727, %v3366, 0
      %v3480 = vsel %vm727, %v3374, 0
      %v3483 = vsel %vm727, %v3382, 0
      %v3486 = vsel %vm727, %v3390, 0
      %v3489 = vsel %vm727, %v3398, 0
      %v3492 = vsel %vm727, %v3406, 0
      %v3495 = vsel %vm727, %v3414, 0
      %v3498 = vsel %vm727, %v3422, 0
      %v3501 = vsel %vm727, %v3430, 0
      %v3504 = vsel %vm727, %v3438, 0
      %v3507 = vsel %vm727, %v3446, 0
      %v3510 = vsel %vm727, %v3454, 0
      %3512 = vmatpush.bf16.msra.mxu0 0
      %3513 = vmatpush.bf16.msra.mxu0 0
      %3514 = vmatpush.bf16.msra.mxu0 0
      %3515 = vmatpush.bf16.msra.mxu0 0
      %3516 = vmatpush.bf16.msra.mxu0 0
      %3517 = vmatpush.bf16.msra.mxu0 0
      %3518 = vmatpush.bf16.msra.mxu0 %v3464
      %3519 = vmatpush.bf16.msra.mxu0 %v3463
      %3520 = vmatmul.bf16.gmra.mxu0 %v3468
      %v3521 = vpop.f32.mrf.mxu0
      %v3522 = vadd.f32 0.0, %v3521
      %v3523 = vpop.f32.mrf.mxu0
      %v3524 = vadd.f32 0.0, %v3523
      %3525 = vmatmul.bf16.gmra.mxu0 %v3471
      %v3526 = vpop.f32.mrf.mxu0
      %v3527 = vadd.f32 0.0, %v3526
      %v3528 = vpop.f32.mrf.mxu0
      %v3529 = vadd.f32 0.0, %v3528
      %3530 = vmatmul.bf16.gmra.mxu0 %v3474
      %v3531 = vpop.f32.mrf.mxu0
      %v3532 = vadd.f32 0.0, %v3531
      %v3533 = vpop.f32.mrf.mxu0
      %v3534 = vadd.f32 0.0, %v3533
      %3535 = vmatmul.bf16.gmra.mxu0 %v3477
      %v3536 = vpop.f32.mrf.mxu0
      %v3537 = vadd.f32 0.0, %v3536
      %v3538 = vpop.f32.mrf.mxu0
      %v3539 = vadd.f32 0.0, %v3538
      %3540 = vmatmul.bf16.gmra.mxu0 %v3480
      %v3541 = vpop.f32.mrf.mxu0
      %v3542 = vadd.f32 0.0, %v3541
      %v3543 = vpop.f32.mrf.mxu0
      %v3544 = vadd.f32 0.0, %v3543
      %3545 = vmatmul.bf16.gmra.mxu0 %v3483
      %v3546 = vpop.f32.mrf.mxu0
      %v3547 = vadd.f32 0.0, %v3546
      %v3548 = vpop.f32.mrf.mxu0
      %v3549 = vadd.f32 0.0, %v3548
      %3550 = vmatmul.bf16.gmra.mxu0 %v3486
      %v3551 = vpop.f32.mrf.mxu0
      %v3552 = vadd.f32 0.0, %v3551
      %v3553 = vpop.f32.mrf.mxu0
      %v3554 = vadd.f32 0.0, %v3553
      %3555 = vmatmul.bf16.gmra.mxu0 %v3489
      %v3556 = vpop.f32.mrf.mxu0
      %v3557 = vadd.f32 0.0, %v3556
      %v3558 = vpop.f32.mrf.mxu0
      %v3559 = vadd.f32 0.0, %v3558
      %3560 = vmatmul.bf16.gmra.mxu0 %v3492
      %v3561 = vpop.f32.mrf.mxu0
      %v3562 = vadd.f32 0.0, %v3561
      %v3563 = vpop.f32.mrf.mxu0
      %v3564 = vadd.f32 0.0, %v3563
      %3565 = vmatmul.bf16.gmra.mxu0 %v3495
      %v3566 = vpop.f32.mrf.mxu0
      %v3567 = vadd.f32 0.0, %v3566
      %v3568 = vpop.f32.mrf.mxu0
      %v3569 = vadd.f32 0.0, %v3568
      %3570 = vmatmul.bf16.gmra.mxu0 %v3498
      %v3571 = vpop.f32.mrf.mxu0
      %v3572 = vadd.f32 0.0, %v3571
      %v3573 = vpop.f32.mrf.mxu0
      %v3574 = vadd.f32 0.0, %v3573
      %3575 = vmatmul.bf16.gmra.mxu0 %v3501
      %v3576 = vpop.f32.mrf.mxu0
      %v3577 = vadd.f32 0.0, %v3576
      %v3578 = vpop.f32.mrf.mxu0
      %v3579 = vadd.f32 0.0, %v3578
      %3580 = vmatmul.bf16.gmra.mxu0 %v3504
      %v3581 = vpop.f32.mrf.mxu0
      %v3582 = vadd.f32 0.0, %v3581
      %v3583 = vpop.f32.mrf.mxu0
      %v3584 = vadd.f32 0.0, %v3583
      %3585 = vmatmul.bf16.gmra.mxu0 %v3507
      %v3586 = vpop.f32.mrf.mxu0
      %v3587 = vadd.f32 0.0, %v3586
      %v3588 = vpop.f32.mrf.mxu0
      %v3589 = vadd.f32 0.0, %v3588
      %3590 = vmatmul.bf16.gmra.mxu0 %v3510
      %v3591 = vpop.f32.mrf.mxu0
      %v3592 = vadd.f32 0.0, %v3591
      %v3593 = vpop.f32.mrf.mxu0
      %v3594 = vadd.f32 0.0, %v3593
      %3595 = vdwg.mxu0
      %v3596 = vadd.f32 %v3187, %v3522
      %v3597 = vadd.f32 %v3188, %v3524
      %v3598 = vadd.f32 %v3189, %v3527
      %v3599 = vadd.f32 %v3190, %v3529
      %v3600 = vadd.f32 %v3191, %v3532
      %v3601 = vadd.f32 %v3192, %v3534
      %v3602 = vadd.f32 %v3193, %v3537
      %v3603 = vadd.f32 %v3194, %v3539
      %v3604 = vadd.f32 %v3195, %v3542
      %v3605 = vadd.f32 %v3196, %v3544
      %v3606 = vadd.f32 %v3197, %v3547
      %v3607 = vadd.f32 %v3198, %v3549
      %v3608 = vadd.f32 %v3199, %v3552
      %v3609 = vadd.f32 %v3200, %v3554
      %v3610 = vadd.f32 %v3201, %v3557
      %v3611 = vadd.f32 %v3202, %v3559
      %v3612 = vadd.f32 %v3203, %v3562
      %v3613 = vadd.f32 %v3204, %v3564
      %v3614 = vadd.f32 %v3205, %v3567
      %v3615 = vadd.f32 %v3206, %v3569
      %v3616 = vadd.f32 %v3207, %v3572
      %v3617 = vadd.f32 %v3208, %v3574
      %v3618 = vadd.f32 %v3209, %v3577
      %v3619 = vadd.f32 %v3210, %v3579
      %v3620 = vadd.f32 %v3211, %v3582
      %v3621 = vadd.f32 %v3212, %v3584
      %v3622 = vadd.f32 %v3213, %v3587
      %v3623 = vadd.f32 %v3214, %v3589
      %v3624 = vadd.f32 %v3215, %v3592
      %v3625 = vadd.f32 %v3216, %v3594
      %v3626 = vld [vmem:[%s4] sm:$0x1]
      %v3628 = vperm.slane %v3626, 0
      %v3630 = vadd.f32 %v3596, %v3628
      %v3631 = vadd.f32 %v3597, %v3628
      %v3632 = vadd.f32 %v3598, %v3628
      %v3633 = vadd.f32 %v3599, %v3628
      %v3634 = vadd.f32 %v3600, %v3628
      %v3635 = vadd.f32 %v3601, %v3628
      %v3636 = vadd.f32 %v3602, %v3628
      %v3637 = vadd.f32 %v3603, %v3628
      %v3638 = vadd.f32 %v3604, %v3628
      %v3639 = vadd.f32 %v3605, %v3628
      %v3640 = vadd.f32 %v3606, %v3628
      %v3641 = vadd.f32 %v3607, %v3628
      %v3642 = vadd.f32 %v3608, %v3628
      %v3643 = vadd.f32 %v3609, %v3628
      %v3644 = vadd.f32 %v3610, %v3628
      %v3645 = vadd.f32 %v3611, %v3628
      %v3646 = vadd.f32 %v3612, %v3628
      %v3647 = vadd.f32 %v3613, %v3628
      %v3648 = vadd.f32 %v3614, %v3628
      %v3649 = vadd.f32 %v3615, %v3628
      %v3650 = vadd.f32 %v3616, %v3628
      %v3651 = vadd.f32 %v3617, %v3628
      %v3652 = vadd.f32 %v3618, %v3628
      %v3653 = vadd.f32 %v3619, %v3628
      %v3654 = vadd.f32 %v3620, %v3628
      %v3655 = vadd.f32 %v3621, %v3628
      %v3656 = vadd.f32 %v3622, %v3628
      %v3657 = vadd.f32 %v3623, %v3628
      %v3658 = vadd.f32 %v3624, %v3628
      %v3659 = vadd.f32 %v3625, %v3628
      %v3660 = vmax.f32 %v3630, 0.0
      %v3661 = vmax.f32 %v3631, 0.0
      %v3662 = vmax.f32 %v3632, 0.0
      %v3663 = vmax.f32 %v3633, 0.0
      %v3664 = vmax.f32 %v3634, 0.0
      %v3665 = vmax.f32 %v3635, 0.0
      %v3666 = vmax.f32 %v3636, 0.0
      %v3667 = vmax.f32 %v3637, 0.0
      %v3668 = vmax.f32 %v3638, 0.0
      %v3669 = vmax.f32 %v3639, 0.0
      %v3670 = vmax.f32 %v3640, 0.0
      %v3671 = vmax.f32 %v3641, 0.0
      %v3672 = vmax.f32 %v3642, 0.0
      %v3673 = vmax.f32 %v3643, 0.0
      %v3674 = vmax.f32 %v3644, 0.0
      %v3675 = vmax.f32 %v3645, 0.0
      %v3676 = vmax.f32 %v3646, 0.0
      %v3677 = vmax.f32 %v3647, 0.0
      %v3678 = vmax.f32 %v3648, 0.0
      %v3679 = vmax.f32 %v3649, 0.0
      %v3680 = vmax.f32 %v3650, 0.0
      %v3681 = vmax.f32 %v3651, 0.0
      %v3682 = vmax.f32 %v3652, 0.0
      %v3683 = vmax.f32 %v3653, 0.0
      %v3684 = vmax.f32 %v3654, 0.0
      %v3685 = vmax.f32 %v3655, 0.0
      %v3686 = vmax.f32 %v3656, 0.0
      %v3687 = vmax.f32 %v3657, 0.0
      %v3688 = vmax.f32 %v3658, 0.0
      %v3689 = vmax.f32 %v3659, 0.0
      %v3690 = vlaneseq
      %v3691 = vshrl.u32 %v3690, 7
      %v3692 = vadd.s32 %v3691, 8
      %v3693 = vadd.s32 %v3691, 16
      %v3694 = vadd.s32 %v3691, 24
      %v3695 = vadd.s32 %v3691, 32
      %v3696 = vadd.s32 %v3691, 40
      %v3697 = vadd.s32 %v3691, 48
      %v3698 = vadd.s32 %v3691, 56
      %v3699 = vadd.s32 %v3691, 64
      %v3700 = vadd.s32 %v3691, 72
      %v3701 = vadd.s32 %v3691, 80
      %v3702 = vadd.s32 %v3691, 88
      %v3703 = vadd.s32 %v3691, 96
      %v3704 = vadd.s32 %v3691, 104
      %v3705 = vadd.s32 %v3691, 112
      %v3706 = vadd.s32 %v3691, 120
      %v3707 = vadd.s32 %v3691, 128
      %v3708 = vadd.s32 %v3691, 136
      %v3709 = vadd.s32 %v3691, 144
      %v3710 = vadd.s32 %v3691, 152
      %v3711 = vadd.s32 %v3691, 160
      %v3712 = vadd.s32 %v3691, 168
      %v3713 = vadd.s32 %v3691, 176
      %v3714 = vadd.s32 %v3691, 184
      %v3715 = vadd.s32 %v3691, 192
      %v3716 = vadd.s32 %v3691, 200
      %v3717 = vadd.s32 %v3691, 208
      %v3718 = vadd.s32 %v3691, 216
      %v3719 = vadd.s32 %v3691, 224
      %v3720 = vadd.s32 %v3691, 232
      %v3721 = vcvt.s32.f32 %v3691
      %v3722 = vcvt.s32.f32 %v3692
      %v3723 = vcvt.s32.f32 %v3693
      %v3724 = vcvt.s32.f32 %v3694
      %v3725 = vcvt.s32.f32 %v3695
      %v3726 = vcvt.s32.f32 %v3696
      %v3727 = vcvt.s32.f32 %v3697
      %v3728 = vcvt.s32.f32 %v3698
      %v3729 = vcvt.s32.f32 %v3699
      %v3730 = vcvt.s32.f32 %v3700
      %v3731 = vcvt.s32.f32 %v3701
      %v3732 = vcvt.s32.f32 %v3702
      %v3733 = vcvt.s32.f32 %v3703
      %v3734 = vcvt.s32.f32 %v3704
      %v3735 = vcvt.s32.f32 %v3705
      %v3736 = vcvt.s32.f32 %v3706
      %v3737 = vcvt.s32.f32 %v3707
      %v3738 = vcvt.s32.f32 %v3708
      %v3739 = vcvt.s32.f32 %v3709
      %v3740 = vcvt.s32.f32 %v3710
      %v3741 = vcvt.s32.f32 %v3711
      %v3742 = vcvt.s32.f32 %v3712
      %v3743 = vcvt.s32.f32 %v3713
      %v3744 = vcvt.s32.f32 %v3714
      %v3745 = vcvt.s32.f32 %v3715
      %v3746 = vcvt.s32.f32 %v3716
      %v3747 = vcvt.s32.f32 %v3717
      %v3748 = vcvt.s32.f32 %v3718
      %v3749 = vcvt.s32.f32 %v3719
      %v3750 = vcvt.s32.f32 %v3720
      %v3751 = vadd.f32 %v3721, 0.5
      %v3752 = vadd.f32 %v3722, 0.5
      %v3753 = vadd.f32 %v3723, 0.5
      %v3754 = vadd.f32 %v3724, 0.5
      %v3755 = vadd.f32 %v3725, 0.5
      %v3756 = vadd.f32 %v3726, 0.5
      %v3757 = vadd.f32 %v3727, 0.5
      %v3758 = vadd.f32 %v3728, 0.5
      %v3759 = vadd.f32 %v3729, 0.5
      %v3760 = vadd.f32 %v3730, 0.5
      %v3761 = vadd.f32 %v3731, 0.5
      %v3762 = vadd.f32 %v3732, 0.5
      %v3763 = vadd.f32 %v3733, 0.5
      %v3764 = vadd.f32 %v3734, 0.5
      %v3765 = vadd.f32 %v3735, 0.5
      %v3766 = vadd.f32 %v3736, 0.5
      %v3767 = vadd.f32 %v3737, 0.5
      %v3768 = vadd.f32 %v3738, 0.5
      %v3769 = vadd.f32 %v3739, 0.5
      %v3770 = vadd.f32 %v3740, 0.5
      %v3771 = vadd.f32 %v3741, 0.5
      %v3772 = vadd.f32 %v3742, 0.5
      %v3773 = vadd.f32 %v3743, 0.5
      %v3774 = vadd.f32 %v3744, 0.5
      %v3775 = vadd.f32 %v3745, 0.5
      %v3776 = vadd.f32 %v3746, 0.5
      %v3777 = vadd.f32 %v3747, 0.5
      %v3778 = vadd.f32 %v3748, 0.5
      %v3779 = vadd.f32 %v3749, 0.5
      %v3780 = vadd.f32 %v3750, 0.5
      %v3781 = vmul.f32 %v3751, 0.041666668
      %v3782 = vmul.f32 %v3752, 0.041666668
      %v3783 = vmul.f32 %v3753, 0.041666668
      %v3784 = vmul.f32 %v3754, 0.041666668
      %v3785 = vmul.f32 %v3755, 0.041666668
      %v3786 = vmul.f32 %v3756, 0.041666668
      %v3787 = vmul.f32 %v3757, 0.041666668
      %v3788 = vmul.f32 %v3758, 0.041666668
      %v3789 = vmul.f32 %v3759, 0.041666668
      %v3790 = vmul.f32 %v3760, 0.041666668
      %v3791 = vmul.f32 %v3761, 0.041666668
      %v3792 = vmul.f32 %v3762, 0.041666668
      %v3793 = vmul.f32 %v3763, 0.041666668
      %v3794 = vmul.f32 %v3764, 0.041666668
      %v3795 = vmul.f32 %v3765, 0.041666668
      %v3796 = vmul.f32 %v3766, 0.041666668
      %v3797 = vmul.f32 %v3767, 0.041666668
      %v3798 = vmul.f32 %v3768, 0.041666668
      %v3799 = vmul.f32 %v3769, 0.041666668
      %v3800 = vmul.f32 %v3770, 0.041666668
      %v3801 = vmul.f32 %v3771, 0.041666668
      %v3802 = vmul.f32 %v3772, 0.041666668
      %v3803 = vmul.f32 %v3773, 0.041666668
      %v3804 = vmul.f32 %v3774, 0.041666668
      %v3805 = vmul.f32 %v3775, 0.041666668
      %v3806 = vmul.f32 %v3776, 0.041666668
      %v3807 = vmul.f32 %v3777, 0.041666668
      %v3808 = vmul.f32 %v3778, 0.041666668
      %v3809 = vmul.f32 %v3779, 0.041666668
      %v3810 = vmul.f32 %v3780, 0.041666668
      %v3811 = vfloor.f32 %v3781
      %v3812 = vfloor.f32 %v3782
      %v3813 = vfloor.f32 %v3783
      %v3814 = vfloor.f32 %v3784
      %v3815 = vfloor.f32 %v3785
      %v3816 = vfloor.f32 %v3786
      %v3817 = vfloor.f32 %v3787
      %v3818 = vfloor.f32 %v3788
      %v3819 = vfloor.f32 %v3789
      %v3820 = vfloor.f32 %v3790
      %v3821 = vfloor.f32 %v3791
      %v3822 = vfloor.f32 %v3792
      %v3823 = vfloor.f32 %v3793
      %v3824 = vfloor.f32 %v3794
      %v3825 = vfloor.f32 %v3795
      %v3826 = vfloor.f32 %v3796
      %v3827 = vfloor.f32 %v3797
      %v3828 = vfloor.f32 %v3798
      %v3829 = vfloor.f32 %v3799
      %v3830 = vfloor.f32 %v3800
      %v3831 = vfloor.f32 %v3801
      %v3832 = vfloor.f32 %v3802
      %v3833 = vfloor.f32 %v3803
      %v3834 = vfloor.f32 %v3804
      %v3835 = vfloor.f32 %v3805
      %v3836 = vfloor.f32 %v3806
      %v3837 = vfloor.f32 %v3807
      %v3838 = vfloor.f32 %v3808
      %v3839 = vfloor.f32 %v3809
      %v3840 = vfloor.f32 %v3810
      %v3841 = vmul.f32 %v3811, 24.0
      %v3842 = vmul.f32 %v3812, 24.0
      %v3843 = vmul.f32 %v3813, 24.0
      %v3844 = vmul.f32 %v3814, 24.0
      %v3845 = vmul.f32 %v3815, 24.0
      %v3846 = vmul.f32 %v3816, 24.0
      %v3847 = vmul.f32 %v3817, 24.0
      %v3848 = vmul.f32 %v3818, 24.0
      %v3849 = vmul.f32 %v3819, 24.0
      %v3850 = vmul.f32 %v3820, 24.0
      %v3851 = vmul.f32 %v3821, 24.0
      %v3852 = vmul.f32 %v3822, 24.0
      %v3853 = vmul.f32 %v3823, 24.0
      %v3854 = vmul.f32 %v3824, 24.0
      %v3855 = vmul.f32 %v3825, 24.0
      %v3856 = vmul.f32 %v3826, 24.0
      %v3857 = vmul.f32 %v3827, 24.0
      %v3858 = vmul.f32 %v3828, 24.0
      %v3859 = vmul.f32 %v3829, 24.0
      %v3860 = vmul.f32 %v3830, 24.0
      %v3861 = vmul.f32 %v3831, 24.0
      %v3862 = vmul.f32 %v3832, 24.0
      %v3863 = vmul.f32 %v3833, 24.0
      %v3864 = vmul.f32 %v3834, 24.0
      %v3865 = vmul.f32 %v3835, 24.0
      %v3866 = vmul.f32 %v3836, 24.0
      %v3867 = vmul.f32 %v3837, 24.0
      %v3868 = vmul.f32 %v3838, 24.0
      %v3869 = vmul.f32 %v3839, 24.0
      %v3870 = vmul.f32 %v3840, 24.0
      %v3871 = vsub.f32 %v3721, %v3841
      %v3872 = vsub.f32 %v3722, %v3842
      %v3873 = vsub.f32 %v3723, %v3843
      %v3874 = vsub.f32 %v3724, %v3844
      %v3875 = vsub.f32 %v3725, %v3845
      %v3876 = vsub.f32 %v3726, %v3846
      %v3877 = vsub.f32 %v3727, %v3847
      %v3878 = vsub.f32 %v3728, %v3848
      %v3879 = vsub.f32 %v3729, %v3849
      %v3880 = vsub.f32 %v3730, %v3850
      %v3881 = vsub.f32 %v3731, %v3851
      %v3882 = vsub.f32 %v3732, %v3852
      %v3883 = vsub.f32 %v3733, %v3853
      %v3884 = vsub.f32 %v3734, %v3854
      %v3885 = vsub.f32 %v3735, %v3855
      %v3886 = vsub.f32 %v3736, %v3856
      %v3887 = vsub.f32 %v3737, %v3857
      %v3888 = vsub.f32 %v3738, %v3858
      %v3889 = vsub.f32 %v3739, %v3859
      %v3890 = vsub.f32 %v3740, %v3860
      %v3891 = vsub.f32 %v3741, %v3861
      %v3892 = vsub.f32 %v3742, %v3862
      %v3893 = vsub.f32 %v3743, %v3863
      %v3894 = vsub.f32 %v3744, %v3864
      %v3895 = vsub.f32 %v3745, %v3865
      %v3896 = vsub.f32 %v3746, %v3866
      %v3897 = vsub.f32 %v3747, %v3867
      %v3898 = vsub.f32 %v3748, %v3868
      %v3899 = vsub.f32 %v3749, %v3869
      %v3900 = vsub.f32 %v3750, %v3870
      %vm3901 = vcmp.gt.f32.partialorder %v3871, 0.5
      %vm3902 = vcmp.gt.f32.partialorder %v3872, 0.5
      %vm3903 = vcmp.gt.f32.partialorder %v3873, 0.5
      %vm3904 = vcmp.gt.f32.partialorder %v3874, 0.5
      %vm3905 = vcmp.gt.f32.partialorder %v3875, 0.5
      %vm3906 = vcmp.gt.f32.partialorder %v3876, 0.5
      %vm3907 = vcmp.gt.f32.partialorder %v3877, 0.5
      %vm3908 = vcmp.gt.f32.partialorder %v3878, 0.5
      %vm3909 = vcmp.gt.f32.partialorder %v3879, 0.5
      %vm3910 = vcmp.gt.f32.partialorder %v3880, 0.5
      %vm3911 = vcmp.gt.f32.partialorder %v3881, 0.5
      %vm3912 = vcmp.gt.f32.partialorder %v3882, 0.5
      %vm3913 = vcmp.gt.f32.partialorder %v3883, 0.5
      %vm3914 = vcmp.gt.f32.partialorder %v3884, 0.5
      %vm3915 = vcmp.gt.f32.partialorder %v3885, 0.5
      %vm3916 = vcmp.gt.f32.partialorder %v3886, 0.5
      %vm3917 = vcmp.gt.f32.partialorder %v3887, 0.5
      %vm3918 = vcmp.gt.f32.partialorder %v3888, 0.5
      %vm3919 = vcmp.gt.f32.partialorder %v3889, 0.5
      %vm3920 = vcmp.gt.f32.partialorder %v3890, 0.5
      %vm3921 = vcmp.gt.f32.partialorder %v3891, 0.5
      %vm3922 = vcmp.gt.f32.partialorder %v3892, 0.5
      %vm3923 = vcmp.gt.f32.partialorder %v3893, 0.5
      %vm3924 = vcmp.gt.f32.partialorder %v3894, 0.5
      %vm3925 = vcmp.gt.f32.partialorder %v3895, 0.5
      %vm3926 = vcmp.gt.f32.partialorder %v3896, 0.5
      %vm3927 = vcmp.gt.f32.partialorder %v3897, 0.5
      %vm3928 = vcmp.gt.f32.partialorder %v3898, 0.5
      %vm3929 = vcmp.gt.f32.partialorder %v3899, 0.5
      %vm3930 = vcmp.gt.f32.partialorder %v3900, 0.5
      %vm3931 = vcmp.lt.f32.partialorder %v3871, 16.5
      %vm3932 = vcmp.lt.f32.partialorder %v3872, 16.5
      %vm3933 = vcmp.lt.f32.partialorder %v3873, 16.5
      %vm3934 = vcmp.lt.f32.partialorder %v3874, 16.5
      %vm3935 = vcmp.lt.f32.partialorder %v3875, 16.5
      %vm3936 = vcmp.lt.f32.partialorder %v3876, 16.5
      %vm3937 = vcmp.lt.f32.partialorder %v3877, 16.5
      %vm3938 = vcmp.lt.f32.partialorder %v3878, 16.5
      %vm3939 = vcmp.lt.f32.partialorder %v3879, 16.5
      %vm3940 = vcmp.lt.f32.partialorder %v3880, 16.5
      %vm3941 = vcmp.lt.f32.partialorder %v3881, 16.5
      %vm3942 = vcmp.lt.f32.partialorder %v3882, 16.5
      %vm3943 = vcmp.lt.f32.partialorder %v3883, 16.5
      %vm3944 = vcmp.lt.f32.partialorder %v3884, 16.5
      %vm3945 = vcmp.lt.f32.partialorder %v3885, 16.5
      %vm3946 = vcmp.lt.f32.partialorder %v3886, 16.5
      %vm3947 = vcmp.lt.f32.partialorder %v3887, 16.5
      %vm3948 = vcmp.lt.f32.partialorder %v3888, 16.5
      %vm3949 = vcmp.lt.f32.partialorder %v3889, 16.5
      %vm3950 = vcmp.lt.f32.partialorder %v3890, 16.5
      %vm3951 = vcmp.lt.f32.partialorder %v3891, 16.5
      %vm3952 = vcmp.lt.f32.partialorder %v3892, 16.5
      %vm3953 = vcmp.lt.f32.partialorder %v3893, 16.5
      %vm3954 = vcmp.lt.f32.partialorder %v3894, 16.5
      %vm3955 = vcmp.lt.f32.partialorder %v3895, 16.5
      %vm3956 = vcmp.lt.f32.partialorder %v3896, 16.5
      %vm3957 = vcmp.lt.f32.partialorder %v3897, 16.5
      %vm3958 = vcmp.lt.f32.partialorder %v3898, 16.5
      %vm3959 = vcmp.lt.f32.partialorder %v3899, 16.5
      %vm3960 = vcmp.lt.f32.partialorder %v3900, 16.5
      %vm3961 = vmand %vm3901, %vm3931
      %vm3962 = vmand %vm3902, %vm3932
      %vm3963 = vmand %vm3903, %vm3933
      %vm3964 = vmand %vm3904, %vm3934
      %vm3965 = vmand %vm3905, %vm3935
      %vm3966 = vmand %vm3906, %vm3936
      %vm3967 = vmand %vm3907, %vm3937
      %vm3968 = vmand %vm3908, %vm3938
      %vm3969 = vmand %vm3909, %vm3939
      %vm3970 = vmand %vm3910, %vm3940
      %vm3971 = vmand %vm3911, %vm3941
      %vm3972 = vmand %vm3912, %vm3942
      %vm3973 = vmand %vm3913, %vm3943
      %vm3974 = vmand %vm3914, %vm3944
      %vm3975 = vmand %vm3915, %vm3945
      %vm3976 = vmand %vm3916, %vm3946
      %vm3977 = vmand %vm3917, %vm3947
      %vm3978 = vmand %vm3918, %vm3948
      %vm3979 = vmand %vm3919, %vm3949
      %vm3980 = vmand %vm3920, %vm3950
      %vm3981 = vmand %vm3921, %vm3951
      %vm3982 = vmand %vm3922, %vm3952
      %vm3983 = vmand %vm3923, %vm3953
      %vm3984 = vmand %vm3924, %vm3954
      %vm3985 = vmand %vm3925, %vm3955
      %vm3986 = vmand %vm3926, %vm3956
      %vm3987 = vmand %vm3927, %vm3957
      %vm3988 = vmand %vm3928, %vm3958
      %vm3989 = vmand %vm3929, %vm3959
      %vm3990 = vmand %vm3930, %vm3960
      %s3991 = smul.u32 %s27, 8
      %s3992 = ssub.s32 %s3991, 1
      %s3993 = scvt.s32.f32 %s3992
      %v3994 = vstv %s3993
      %v3995 = vadd.f32 %v3811, %v3994
      %v3996 = vadd.f32 %v3812, %v3994
      %v3997 = vadd.f32 %v3813, %v3994
      %v3998 = vadd.f32 %v3814, %v3994
      %v3999 = vadd.f32 %v3815, %v3994
      %v4000 = vadd.f32 %v3816, %v3994
      %v4001 = vadd.f32 %v3817, %v3994
      %v4002 = vadd.f32 %v3818, %v3994
      %v4003 = vadd.f32 %v3819, %v3994
      %v4004 = vadd.f32 %v3820, %v3994
      %v4005 = vadd.f32 %v3821, %v3994
      %v4006 = vadd.f32 %v3822, %v3994
      %v4007 = vadd.f32 %v3823, %v3994
      %v4008 = vadd.f32 %v3824, %v3994
      %v4009 = vadd.f32 %v3825, %v3994
      %v4010 = vadd.f32 %v3826, %v3994
      %v4011 = vadd.f32 %v3827, %v3994
      %v4012 = vadd.f32 %v3828, %v3994
      %v4013 = vadd.f32 %v3829, %v3994
      %v4014 = vadd.f32 %v3830, %v3994
      %v4015 = vadd.f32 %v3831, %v3994
      %v4016 = vadd.f32 %v3832, %v3994
      %v4017 = vadd.f32 %v3833, %v3994
      %v4018 = vadd.f32 %v3834, %v3994
      %v4019 = vadd.f32 %v3835, %v3994
      %v4020 = vadd.f32 %v3836, %v3994
      %v4021 = vadd.f32 %v3837, %v3994
      %v4022 = vadd.f32 %v3838, %v3994
      %v4023 = vadd.f32 %v3839, %v3994
      %v4024 = vadd.f32 %v3840, %v3994
      %vm4025 = vcmp.gt.f32.partialorder %v3995, -0.5
      %vm4026 = vcmp.gt.f32.partialorder %v3996, -0.5
      %vm4027 = vcmp.gt.f32.partialorder %v3997, -0.5
      %vm4028 = vcmp.gt.f32.partialorder %v3998, -0.5
      %vm4029 = vcmp.gt.f32.partialorder %v3999, -0.5
      %vm4030 = vcmp.gt.f32.partialorder %v4000, -0.5
      %vm4031 = vcmp.gt.f32.partialorder %v4001, -0.5
      %vm4032 = vcmp.gt.f32.partialorder %v4002, -0.5
      %vm4033 = vcmp.gt.f32.partialorder %v4003, -0.5
      %vm4034 = vcmp.gt.f32.partialorder %v4004, -0.5
      %vm4035 = vcmp.gt.f32.partialorder %v4005, -0.5
      %vm4036 = vcmp.gt.f32.partialorder %v4006, -0.5
      %vm4037 = vcmp.gt.f32.partialorder %v4007, -0.5
      %vm4038 = vcmp.gt.f32.partialorder %v4008, -0.5
      %vm4039 = vcmp.gt.f32.partialorder %v4009, -0.5
      %vm4040 = vcmp.gt.f32.partialorder %v4010, -0.5
      %vm4041 = vcmp.gt.f32.partialorder %v4011, -0.5
      %vm4042 = vcmp.gt.f32.partialorder %v4012, -0.5
      %vm4043 = vcmp.gt.f32.partialorder %v4013, -0.5
      %vm4044 = vcmp.gt.f32.partialorder %v4014, -0.5
      %vm4045 = vcmp.gt.f32.partialorder %v4015, -0.5
      %vm4046 = vcmp.gt.f32.partialorder %v4016, -0.5
      %vm4047 = vcmp.gt.f32.partialorder %v4017, -0.5
      %vm4048 = vcmp.gt.f32.partialorder %v4018, -0.5
      %vm4049 = vcmp.gt.f32.partialorder %v4019, -0.5
      %vm4050 = vcmp.gt.f32.partialorder %v4020, -0.5
      %vm4051 = vcmp.gt.f32.partialorder %v4021, -0.5
      %vm4052 = vcmp.gt.f32.partialorder %v4022, -0.5
      %vm4053 = vcmp.gt.f32.partialorder %v4023, -0.5
      %vm4054 = vcmp.gt.f32.partialorder %v4024, -0.5
      %vm4055 = vmand %vm3961, %vm4025
      %vm4056 = vmand %vm3962, %vm4026
      %vm4057 = vmand %vm3963, %vm4027
      %vm4058 = vmand %vm3964, %vm4028
      %vm4059 = vmand %vm3965, %vm4029
      %vm4060 = vmand %vm3966, %vm4030
      %vm4061 = vmand %vm3967, %vm4031
      %vm4062 = vmand %vm3968, %vm4032
      %vm4063 = vmand %vm3969, %vm4033
      %vm4064 = vmand %vm3970, %vm4034
      %vm4065 = vmand %vm3971, %vm4035
      %vm4066 = vmand %vm3972, %vm4036
      %vm4067 = vmand %vm3973, %vm4037
      %vm4068 = vmand %vm3974, %vm4038
      %vm4069 = vmand %vm3975, %vm4039
      %vm4070 = vmand %vm3976, %vm4040
      %vm4071 = vmand %vm3977, %vm4041
      %vm4072 = vmand %vm3978, %vm4042
      %vm4073 = vmand %vm3979, %vm4043
      %vm4074 = vmand %vm3980, %vm4044
      %vm4075 = vmand %vm3981, %vm4045
      %vm4076 = vmand %vm3982, %vm4046
      %vm4077 = vmand %vm3983, %vm4047
      %vm4078 = vmand %vm3984, %vm4048
      %vm4079 = vmand %vm3985, %vm4049
      %vm4080 = vmand %vm3986, %vm4050
      %vm4081 = vmand %vm3987, %vm4051
      %vm4082 = vmand %vm3988, %vm4052
      %vm4083 = vmand %vm3989, %vm4053
      %vm4084 = vmand %vm3990, %vm4054
      %vm4085 = vcmp.lt.f32.partialorder %v3995, 15.5
      %vm4086 = vcmp.lt.f32.partialorder %v3996, 15.5
      %vm4087 = vcmp.lt.f32.partialorder %v3997, 15.5
      %vm4088 = vcmp.lt.f32.partialorder %v3998, 15.5
      %vm4089 = vcmp.lt.f32.partialorder %v3999, 15.5
      %vm4090 = vcmp.lt.f32.partialorder %v4000, 15.5
      %vm4091 = vcmp.lt.f32.partialorder %v4001, 15.5
      %vm4092 = vcmp.lt.f32.partialorder %v4002, 15.5
      %vm4093 = vcmp.lt.f32.partialorder %v4003, 15.5
      %vm4094 = vcmp.lt.f32.partialorder %v4004, 15.5
      %vm4095 = vcmp.lt.f32.partialorder %v4005, 15.5
      %vm4096 = vcmp.lt.f32.partialorder %v4006, 15.5
      %vm4097 = vcmp.lt.f32.partialorder %v4007, 15.5
      %vm4098 = vcmp.lt.f32.partialorder %v4008, 15.5
      %vm4099 = vcmp.lt.f32.partialorder %v4009, 15.5
      %vm4100 = vcmp.lt.f32.partialorder %v4010, 15.5
      %vm4101 = vcmp.lt.f32.partialorder %v4011, 15.5
      %vm4102 = vcmp.lt.f32.partialorder %v4012, 15.5
      %vm4103 = vcmp.lt.f32.partialorder %v4013, 15.5
      %vm4104 = vcmp.lt.f32.partialorder %v4014, 15.5
      %vm4105 = vcmp.lt.f32.partialorder %v4015, 15.5
      %vm4106 = vcmp.lt.f32.partialorder %v4016, 15.5
      %vm4107 = vcmp.lt.f32.partialorder %v4017, 15.5
      %vm4108 = vcmp.lt.f32.partialorder %v4018, 15.5
      %vm4109 = vcmp.lt.f32.partialorder %v4019, 15.5
      %vm4110 = vcmp.lt.f32.partialorder %v4020, 15.5
      %vm4111 = vcmp.lt.f32.partialorder %v4021, 15.5
      %vm4112 = vcmp.lt.f32.partialorder %v4022, 15.5
      %vm4113 = vcmp.lt.f32.partialorder %v4023, 15.5
      %vm4114 = vcmp.lt.f32.partialorder %v4024, 15.5
      %vm4115 = vmand %vm4055, %vm4085
      %vm4116 = vmand %vm4056, %vm4086
      %vm4117 = vmand %vm4057, %vm4087
      %vm4118 = vmand %vm4058, %vm4088
      %vm4119 = vmand %vm4059, %vm4089
      %vm4120 = vmand %vm4060, %vm4090
      %vm4121 = vmand %vm4061, %vm4091
      %vm4122 = vmand %vm4062, %vm4092
      %vm4123 = vmand %vm4063, %vm4093
      %vm4124 = vmand %vm4064, %vm4094
      %vm4125 = vmand %vm4065, %vm4095
      %vm4126 = vmand %vm4066, %vm4096
      %vm4127 = vmand %vm4067, %vm4097
      %vm4128 = vmand %vm4068, %vm4098
      %vm4129 = vmand %vm4069, %vm4099
      %vm4130 = vmand %vm4070, %vm4100
      %vm4131 = vmand %vm4071, %vm4101
      %vm4132 = vmand %vm4072, %vm4102
      %vm4133 = vmand %vm4073, %vm4103
      %vm4134 = vmand %vm4074, %vm4104
      %vm4135 = vmand %vm4075, %vm4105
      %vm4136 = vmand %vm4076, %vm4106
      %vm4137 = vmand %vm4077, %vm4107
      %vm4138 = vmand %vm4078, %vm4108
      %vm4139 = vmand %vm4079, %vm4109
      %vm4140 = vmand %vm4080, %vm4110
      %vm4141 = vmand %vm4081, %vm4111
      %vm4142 = vmand %vm4082, %vm4112
      %vm4143 = vmand %vm4083, %vm4113
      %vm4144 = vmand %vm4084, %vm4114
      %v4145 = vsel %vm4115, %v3660, 0.0
      %v4146 = vsel %vm4116, %v3661, 0.0
      %v4147 = vsel %vm4117, %v3662, 0.0
      %v4148 = vsel %vm4118, %v3663, 0.0
      %v4149 = vsel %vm4119, %v3664, 0.0
      %v4150 = vsel %vm4120, %v3665, 0.0
      %v4151 = vsel %vm4121, %v3666, 0.0
      %v4152 = vsel %vm4122, %v3667, 0.0
      %v4153 = vsel %vm4123, %v3668, 0.0
      %v4154 = vsel %vm4124, %v3669, 0.0
      %v4155 = vsel %vm4125, %v3670, 0.0
      %v4156 = vsel %vm4126, %v3671, 0.0
      %v4157 = vsel %vm4127, %v3672, 0.0
      %v4158 = vsel %vm4128, %v3673, 0.0
      %v4159 = vsel %vm4129, %v3674, 0.0
      %v4160 = vsel %vm4130, %v3675, 0.0
      %v4161 = vsel %vm4131, %v3676, 0.0
      %v4162 = vsel %vm4132, %v3677, 0.0
      %v4163 = vsel %vm4133, %v3678, 0.0
      %v4164 = vsel %vm4134, %v3679, 0.0
      %v4165 = vsel %vm4135, %v3680, 0.0
      %v4166 = vsel %vm4136, %v3681, 0.0
      %v4167 = vsel %vm4137, %v3682, 0.0
      %v4168 = vsel %vm4138, %v3683, 0.0
      %v4169 = vsel %vm4139, %v3684, 0.0
      %v4170 = vsel %vm4140, %v3685, 0.0
      %v4171 = vsel %vm4141, %v3686, 0.0
      %v4172 = vsel %vm4142, %v3687, 0.0
      %v4173 = vsel %vm4143, %v3688, 0.0
      %v4174 = vsel %vm4144, %v3689, 0.0
      %4175 = vst.msk [vmem:[#allocation3] sm:$0xf] %vm525, 0
      %4176 = vst.msk [vmem:[#allocation3 + $0x7c] sm:$0xf] %vm525, 0
      %v4177 = vpack.c.bf16 %v4145, %v4145
      %v4178 = vpack.c.bf16 %v4146, %v4146
      %v4179 = vpack.c.bf16 %v4147, %v4147
      %v4180 = vpack.c.bf16 %v4148, %v4148
      %v4181 = vpack.c.bf16 %v4149, %v4149
      %v4182 = vpack.c.bf16 %v4150, %v4150
      %v4183 = vpack.c.bf16 %v4151, %v4151
      %v4184 = vpack.c.bf16 %v4152, %v4152
      %v4185 = vpack.c.bf16 %v4153, %v4153
      %v4186 = vpack.c.bf16 %v4154, %v4154
      %v4187 = vpack.c.bf16 %v4155, %v4155
      %v4188 = vpack.c.bf16 %v4156, %v4156
      %v4189 = vpack.c.bf16 %v4157, %v4157
      %v4190 = vpack.c.bf16 %v4158, %v4158
      %v4191 = vpack.c.bf16 %v4159, %v4159
      %v4192 = vpack.c.bf16 %v4160, %v4160
      %v4193 = vpack.c.bf16 %v4161, %v4161
      %v4194 = vpack.c.bf16 %v4162, %v4162
      %v4195 = vpack.c.bf16 %v4163, %v4163
      %v4196 = vpack.c.bf16 %v4164, %v4164
      %v4197 = vpack.c.bf16 %v4165, %v4165
      %v4198 = vpack.c.bf16 %v4166, %v4166
      %v4199 = vpack.c.bf16 %v4167, %v4167
      %v4200 = vpack.c.bf16 %v4168, %v4168
      %v4201 = vpack.c.bf16 %v4169, %v4169
      %v4202 = vpack.c.bf16 %v4170, %v4170
      %v4203 = vpack.c.bf16 %v4171, %v4171
      %v4204 = vpack.c.bf16 %v4172, %v4172
      %v4205 = vpack.c.bf16 %v4173, %v4173
      %v4206 = vpack.c.bf16 %v4174, %v4174
      %4207 = vst.msk [vmem:[#allocation3 + $0x4] sm:$0xf] %vm525, %v4177
      %4208 = vst.msk [vmem:[#allocation3 + $0x8] sm:$0xf] %vm525, %v4178
      %4209 = vst.msk [vmem:[#allocation3 + $0xc] sm:$0xf] %vm525, %v4179
      %4210 = vst.msk [vmem:[#allocation3 + $0x10] sm:$0xf] %vm525, %v4180
      %4211 = vst.msk [vmem:[#allocation3 + $0x14] sm:$0xf] %vm525, %v4181
      %4212 = vst.msk [vmem:[#allocation3 + $0x18] sm:$0xf] %vm525, %v4182
      %4213 = vst.msk [vmem:[#allocation3 + $0x1c] sm:$0xf] %vm525, %v4183
      %4214 = vst.msk [vmem:[#allocation3 + $0x20] sm:$0xf] %vm525, %v4184
      %4215 = vst.msk [vmem:[#allocation3 + $0x24] sm:$0xf] %vm525, %v4185
      %4216 = vst.msk [vmem:[#allocation3 + $0x28] sm:$0xf] %vm525, %v4186
      %4217 = vst.msk [vmem:[#allocation3 + $0x2c] sm:$0xf] %vm525, %v4187
      %4218 = vst.msk [vmem:[#allocation3 + $0x30] sm:$0xf] %vm525, %v4188
      %4219 = vst.msk [vmem:[#allocation3 + $0x34] sm:$0xf] %vm525, %v4189
      %4220 = vst.msk [vmem:[#allocation3 + $0x38] sm:$0xf] %vm525, %v4190
      %4221 = vst.msk [vmem:[#allocation3 + $0x3c] sm:$0xf] %vm525, %v4191
      %4222 = vst.msk [vmem:[#allocation3 + $0x40] sm:$0xf] %vm525, %v4192
      %4223 = vst.msk [vmem:[#allocation3 + $0x44] sm:$0xf] %vm525, %v4193
      %4224 = vst.msk [vmem:[#allocation3 + $0x48] sm:$0xf] %vm525, %v4194
      %4225 = vst.msk [vmem:[#allocation3 + $0x4c] sm:$0xf] %vm525, %v4195
      %4226 = vst.msk [vmem:[#allocation3 + $0x50] sm:$0xf] %vm525, %v4196
      %4227 = vst.msk [vmem:[#allocation3 + $0x54] sm:$0xf] %vm525, %v4197
      %4228 = vst.msk [vmem:[#allocation3 + $0x58] sm:$0xf] %vm525, %v4198
      %4229 = vst.msk [vmem:[#allocation3 + $0x5c] sm:$0xf] %vm525, %v4199
      %4230 = vst.msk [vmem:[#allocation3 + $0x60] sm:$0xf] %vm525, %v4200
      %4231 = vst.msk [vmem:[#allocation3 + $0x64] sm:$0xf] %vm525, %v4201
      %4232 = vst.msk [vmem:[#allocation3 + $0x68] sm:$0xf] %vm525, %v4202
      %4233 = vst.msk [vmem:[#allocation3 + $0x6c] sm:$0xf] %vm525, %v4203
      %4234 = vst.msk [vmem:[#allocation3 + $0x70] sm:$0xf] %vm525, %v4204
      %4235 = vst.msk [vmem:[#allocation3 + $0x74] sm:$0xf] %vm525, %v4205
      %4236 = vst.msk [vmem:[#allocation3 + $0x78] sm:$0xf] %vm525, %v4206
      %v4237 = vld [vmem:[#allocation3] sm:$0x8]
      %v4238 = vld [vmem:[#allocation3 + $0x4] sm:$0xf]
      %v4239 = vld [vmem:[#allocation3 + $0x8] sm:$0xf]
      %v4240 = vld [vmem:[#allocation3 + $0xc] sm:$0xf]
      %v4241 = vld [vmem:[#allocation3 + $0x10] sm:$0xf]
      %v4242 = vld [vmem:[#allocation3 + $0x14] sm:$0xf]
      %v4243 = vld [vmem:[#allocation3 + $0x18] sm:$0xf]
      %v4244 = vld [vmem:[#allocation3 + $0x1c] sm:$0xf]
      %v4245 = vld [vmem:[#allocation3 + $0x20] sm:$0xf]
      %v4246 = vld [vmem:[#allocation3 + $0x24] sm:$0xf]
      %v4247 = vld [vmem:[#allocation3 + $0x28] sm:$0xf]
      %v4248 = vld [vmem:[#allocation3 + $0x2c] sm:$0xf]
      %v4249 = vld [vmem:[#allocation3 + $0x30] sm:$0xf]
      %v4250 = vld [vmem:[#allocation3 + $0x34] sm:$0xf]
      %v4251 = vld [vmem:[#allocation3 + $0x38] sm:$0xf]
      %v4252 = vld [vmem:[#allocation3 + $0x3c] sm:$0xf]
      %v4253 = vld [vmem:[#allocation3 + $0x40] sm:$0xf]
      %v4254 = vld [vmem:[#allocation3 + $0x44] sm:$0xf]
      %v4255 = vld [vmem:[#allocation3 + $0x48] sm:$0xf]
      %v4256 = vld [vmem:[#allocation3 + $0x4c] sm:$0xf]
      %v4257 = vld [vmem:[#allocation3 + $0x50] sm:$0xf]
      %v4258 = vld [vmem:[#allocation3 + $0x54] sm:$0xf]
      %v4259 = vld [vmem:[#allocation3 + $0x58] sm:$0xf]
      %v4260 = vld [vmem:[#allocation3 + $0x5c] sm:$0xf]
      %v4261 = vld [vmem:[#allocation3 + $0x60] sm:$0xf]
      %v4262 = vld [vmem:[%s5] sm:$0xf]
      %v4263 = vld [vmem:[%s5 + $0x4] sm:$0xf]
      %v4264 = vld [vmem:[%s5 + $0x8] sm:$0xf]
      %v4265 = vld [vmem:[%s5 + $0xc] sm:$0xf]
      %s4266 = scalar_lea.vmem %s5, 16
      %v4267 = vld [vmem:[%s4266] sm:$0xf]
      %v4268 = vld [vmem:[%s4266 + $0x4] sm:$0xf]
      %v4269 = vld [vmem:[%s4266 + $0x8] sm:$0xf]
      %v4270 = vld [vmem:[%s4266 + $0xc] sm:$0xf]
      %v4295 = vunpack.c.l.b16 %v4238
      %v4296 = vunpack.c.l.b16 %v4239
      %v4297 = vunpack.c.l.b16 %v4240
      %v4298 = vunpack.c.l.b16 %v4241
      %v4299 = vunpack.c.l.b16 %v4242
      %v4300 = vunpack.c.l.b16 %v4243
      %v4301 = vunpack.c.l.b16 %v4244
      %v4302 = vunpack.c.l.b16 %v4245
      %v4303 = vunpack.c.l.b16 %v4246
      %v4304 = vunpack.c.l.b16 %v4247
      %v4305 = vunpack.c.l.b16 %v4248
      %v4306 = vunpack.c.l.b16 %v4249
      %v4307 = vunpack.c.l.b16 %v4250
      %v4308 = vunpack.c.l.b16 %v4251
      %v4309 = vunpack.c.l.b16 %v4252
      %v4310 = vunpack.c.l.b16 %v4253
      %v4311 = vunpack.c.l.b16 %v4254
      %v4312 = vunpack.c.l.b16 %v4255
      %v4313 = vunpack.c.l.b16 %v4256
      %v4314 = vunpack.c.l.b16 %v4257
      %v4315 = vunpack.c.l.b16 %v4258
      %v4316 = vunpack.c.l.b16 %v4259
      %v4317 = vunpack.c.l.b16 %v4260
      %v4318 = vunpack.c.l.b16 %v4261
      %v4319 = vpack.c.b16 %v4296, %v4295
      %v4320 = vpack.c.b16 %v4298, %v4297
      %v4321 = vpack.c.b16 %v4300, %v4299
      %v4322 = vpack.c.b16 %v4302, %v4301
      %v4323 = vpack.c.b16 %v4304, %v4303
      %v4324 = vpack.c.b16 %v4306, %v4305
      %v4325 = vpack.c.b16 %v4308, %v4307
      %v4326 = vpack.c.b16 %v4310, %v4309
      %v4327 = vpack.c.b16 %v4312, %v4311
      %v4328 = vpack.c.b16 %v4314, %v4313
      %v4329 = vpack.c.b16 %v4316, %v4315
      %v4330 = vpack.c.b16 %v4318, %v4317
      %v4335 = vunpack.c.l.b16 %v4267
      %v4336 = vunpack.c.l.b16 %v4268
      %v4337 = vunpack.c.l.b16 %v4269
      %v4338 = vunpack.c.l.b16 %v4270
      %v4339 = vpack.c.b16 %v4336, %v4335
      %v4340 = vpack.c.b16 %v4338, %v4337
      %v4344 = vsel %vm727, %v4319, 0
      %v4347 = vsel %vm727, %v4320, 0
      %v4350 = vsel %vm727, %v4321, 0
      %v4353 = vsel %vm727, %v4322, 0
      %v4356 = vsel %vm727, %v4323, 0
      %v4359 = vsel %vm727, %v4324, 0
      %v4362 = vsel %vm727, %v4325, 0
      %v4365 = vsel %vm727, %v4326, 0
      %v4368 = vsel %vm727, %v4327, 0
      %v4371 = vsel %vm727, %v4328, 0
      %v4374 = vsel %vm727, %v4329, 0
      %v4377 = vsel %vm727, %v4330, 0
      %4379 = vmatpush.bf16.msra.mxu0 0
      %4380 = vmatpush.bf16.msra.mxu0 0
      %4381 = vmatpush.bf16.msra.mxu0 0
      %4382 = vmatpush.bf16.msra.mxu0 0
      %4383 = vmatpush.bf16.msra.mxu0 0
      %4384 = vmatpush.bf16.msra.mxu0 0
      %4385 = vmatpush.bf16.msra.mxu0 %v4340
      %4386 = vmatpush.bf16.msra.mxu0 %v4339
      %4387 = vmatmul.bf16.gmra.mxu0 %v4344
      %v4388 = vpop.f32.mrf.mxu0
      %v4389 = vadd.f32 0.0, %v4388
      %v4390 = vpop.f32.mrf.mxu0
      %v4391 = vadd.f32 0.0, %v4390
      %4392 = vmatmul.bf16.gmra.mxu0 %v4347
      %v4393 = vpop.f32.mrf.mxu0
      %v4394 = vadd.f32 0.0, %v4393
      %v4395 = vpop.f32.mrf.mxu0
      %v4396 = vadd.f32 0.0, %v4395
      %4397 = vmatmul.bf16.gmra.mxu0 %v4350
      %v4398 = vpop.f32.mrf.mxu0
      %v4399 = vadd.f32 0.0, %v4398
      %v4400 = vpop.f32.mrf.mxu0
      %v4401 = vadd.f32 0.0, %v4400
      %4402 = vmatmul.bf16.gmra.mxu0 %v4353
      %v4403 = vpop.f32.mrf.mxu0
      %v4404 = vadd.f32 0.0, %v4403
      %v4405 = vpop.f32.mrf.mxu0
      %v4406 = vadd.f32 0.0, %v4405
      %4407 = vmatmul.bf16.gmra.mxu0 %v4356
      %v4408 = vpop.f32.mrf.mxu0
      %v4409 = vadd.f32 0.0, %v4408
      %v4410 = vpop.f32.mrf.mxu0
      %v4411 = vadd.f32 0.0, %v4410
      %4412 = vmatmul.bf16.gmra.mxu0 %v4359
      %v4413 = vpop.f32.mrf.mxu0
      %v4414 = vadd.f32 0.0, %v4413
      %v4415 = vpop.f32.mrf.mxu0
      %v4416 = vadd.f32 0.0, %v4415
      %4417 = vmatmul.bf16.gmra.mxu0 %v4362
      %v4418 = vpop.f32.mrf.mxu0
      %v4419 = vadd.f32 0.0, %v4418
      %v4420 = vpop.f32.mrf.mxu0
      %v4421 = vadd.f32 0.0, %v4420
      %4422 = vmatmul.bf16.gmra.mxu0 %v4365
      %v4423 = vpop.f32.mrf.mxu0
      %v4424 = vadd.f32 0.0, %v4423
      %v4425 = vpop.f32.mrf.mxu0
      %v4426 = vadd.f32 0.0, %v4425
      %4427 = vmatmul.bf16.gmra.mxu0 %v4368
      %v4428 = vpop.f32.mrf.mxu0
      %v4429 = vadd.f32 0.0, %v4428
      %v4430 = vpop.f32.mrf.mxu0
      %v4431 = vadd.f32 0.0, %v4430
      %4432 = vmatmul.bf16.gmra.mxu0 %v4371
      %v4433 = vpop.f32.mrf.mxu0
      %v4434 = vadd.f32 0.0, %v4433
      %v4435 = vpop.f32.mrf.mxu0
      %v4436 = vadd.f32 0.0, %v4435
      %4437 = vmatmul.bf16.gmra.mxu0 %v4374
      %v4438 = vpop.f32.mrf.mxu0
      %v4439 = vadd.f32 0.0, %v4438
      %v4440 = vpop.f32.mrf.mxu0
      %v4441 = vadd.f32 0.0, %v4440
      %4442 = vmatmul.bf16.gmra.mxu0 %v4377
      %v4443 = vpop.f32.mrf.mxu0
      %v4444 = vadd.f32 0.0, %v4443
      %v4445 = vpop.f32.mrf.mxu0
      %v4446 = vadd.f32 0.0, %v4445
      %4447 = vdwg.mxu0
      %v4449 = vunpack.c.l.b16 %v4237
      %v4450 = vpack.c.b16 %v4295, %v4449
      %v4451 = vpack.c.b16 %v4297, %v4296
      %v4452 = vpack.c.b16 %v4299, %v4298
      %v4453 = vpack.c.b16 %v4301, %v4300
      %v4454 = vpack.c.b16 %v4303, %v4302
      %v4455 = vpack.c.b16 %v4305, %v4304
      %v4456 = vpack.c.b16 %v4307, %v4306
      %v4457 = vpack.c.b16 %v4309, %v4308
      %v4458 = vpack.c.b16 %v4311, %v4310
      %v4459 = vpack.c.b16 %v4313, %v4312
      %v4460 = vpack.c.b16 %v4315, %v4314
      %v4461 = vpack.c.b16 %v4317, %v4316
      %v4462 = vpack.c.b16 %v4318, %v4318
      %v4464 = vshrl.u32 %v4450, 16
      %v4466 = vrot.slane %v4464, 3
      %v4467 = vshll.u32 %v4450, 16
      %v4469 = vrot.slane %v4467, 4
      %v4470 = vor.u32 %v4466, %v4469
      %v4472 = vshrl.u32 %v4451, 16
      %v4474 = vrot.slane %v4472, 3
      %v4475 = vshll.u32 %v4451, 16
      %v4477 = vrot.slane %v4475, 4
      %v4478 = vor.u32 %v4474, %v4477
      %v4479 = vsel %vm875, %v4470, %v4478
      %v4481 = vshrl.u32 %v4452, 16
      %v4483 = vrot.slane %v4481, 3
      %v4484 = vshll.u32 %v4452, 16
      %v4486 = vrot.slane %v4484, 4
      %v4487 = vor.u32 %v4483, %v4486
      %v4488 = vsel %vm875, %v4478, %v4487
      %v4490 = vshrl.u32 %v4453, 16
      %v4492 = vrot.slane %v4490, 3
      %v4493 = vshll.u32 %v4453, 16
      %v4495 = vrot.slane %v4493, 4
      %v4496 = vor.u32 %v4492, %v4495
      %v4497 = vsel %vm875, %v4487, %v4496
      %v4499 = vshrl.u32 %v4454, 16
      %v4501 = vrot.slane %v4499, 3
      %v4502 = vshll.u32 %v4454, 16
      %v4504 = vrot.slane %v4502, 4
      %v4505 = vor.u32 %v4501, %v4504
      %v4506 = vsel %vm875, %v4496, %v4505
      %v4508 = vshrl.u32 %v4455, 16
      %v4510 = vrot.slane %v4508, 3
      %v4511 = vshll.u32 %v4455, 16
      %v4513 = vrot.slane %v4511, 4
      %v4514 = vor.u32 %v4510, %v4513
      %v4515 = vsel %vm875, %v4505, %v4514
      %v4517 = vshrl.u32 %v4456, 16
      %v4519 = vrot.slane %v4517, 3
      %v4520 = vshll.u32 %v4456, 16
      %v4522 = vrot.slane %v4520, 4
      %v4523 = vor.u32 %v4519, %v4522
      %v4524 = vsel %vm875, %v4514, %v4523
      %v4526 = vshrl.u32 %v4457, 16
      %v4528 = vrot.slane %v4526, 3
      %v4529 = vshll.u32 %v4457, 16
      %v4531 = vrot.slane %v4529, 4
      %v4532 = vor.u32 %v4528, %v4531
      %v4533 = vsel %vm875, %v4523, %v4532
      %v4535 = vshrl.u32 %v4458, 16
      %v4537 = vrot.slane %v4535, 3
      %v4538 = vshll.u32 %v4458, 16
      %v4540 = vrot.slane %v4538, 4
      %v4541 = vor.u32 %v4537, %v4540
      %v4542 = vsel %vm875, %v4532, %v4541
      %v4544 = vshrl.u32 %v4459, 16
      %v4546 = vrot.slane %v4544, 3
      %v4547 = vshll.u32 %v4459, 16
      %v4549 = vrot.slane %v4547, 4
      %v4550 = vor.u32 %v4546, %v4549
      %v4551 = vsel %vm875, %v4541, %v4550
      %v4553 = vshrl.u32 %v4460, 16
      %v4555 = vrot.slane %v4553, 3
      %v4556 = vshll.u32 %v4460, 16
      %v4558 = vrot.slane %v4556, 4
      %v4559 = vor.u32 %v4555, %v4558
      %v4560 = vsel %vm875, %v4550, %v4559
      %v4562 = vshrl.u32 %v4461, 16
      %v4564 = vrot.slane %v4562, 3
      %v4565 = vshll.u32 %v4461, 16
      %v4567 = vrot.slane %v4565, 4
      %v4568 = vor.u32 %v4564, %v4567
      %v4569 = vsel %vm875, %v4559, %v4568
      %v4571 = vshrl.u32 %v4462, 16
      %v4573 = vrot.slane %v4571, 3
      %v4574 = vshll.u32 %v4462, 16
      %v4576 = vrot.slane %v4574, 4
      %v4577 = vor.u32 %v4573, %v4576
      %v4578 = vsel %vm875, %v4568, %v4577
      %v4583 = vunpack.c.l.b16 %v4262
      %v4584 = vunpack.c.l.b16 %v4263
      %v4585 = vunpack.c.l.b16 %v4264
      %v4586 = vunpack.c.l.b16 %v4265
      %v4587 = vpack.c.b16 %v4584, %v4583
      %v4588 = vpack.c.b16 %v4586, %v4585
      %v4592 = vsel %vm727, %v4479, 0
      %v4595 = vsel %vm727, %v4488, 0
      %v4598 = vsel %vm727, %v4497, 0
      %v4601 = vsel %vm727, %v4506, 0
      %v4604 = vsel %vm727, %v4515, 0
      %v4607 = vsel %vm727, %v4524, 0
      %v4610 = vsel %vm727, %v4533, 0
      %v4613 = vsel %vm727, %v4542, 0
      %v4616 = vsel %vm727, %v4551, 0
      %v4619 = vsel %vm727, %v4560, 0
      %v4622 = vsel %vm727, %v4569, 0
      %v4625 = vsel %vm727, %v4578, 0
      %4627 = vmatpush.bf16.msra.mxu0 0
      %4628 = vmatpush.bf16.msra.mxu0 0
      %4629 = vmatpush.bf16.msra.mxu0 0
      %4630 = vmatpush.bf16.msra.mxu0 0
      %4631 = vmatpush.bf16.msra.mxu0 0
      %4632 = vmatpush.bf16.msra.mxu0 0
      %4633 = vmatpush.bf16.msra.mxu0 %v4588
      %4634 = vmatpush.bf16.msra.mxu0 %v4587
      %4635 = vmatmul.bf16.gmra.mxu0 %v4592
      %v4636 = vpop.f32.mrf.mxu0
      %v4637 = vadd.f32 %v4389, %v4636
      %v4638 = vpop.f32.mrf.mxu0
      %v4639 = vadd.f32 %v4391, %v4638
      %4640 = vmatmul.bf16.gmra.mxu0 %v4595
      %v4641 = vpop.f32.mrf.mxu0
      %v4642 = vadd.f32 %v4394, %v4641
      %v4643 = vpop.f32.mrf.mxu0
      %v4644 = vadd.f32 %v4396, %v4643
      %4645 = vmatmul.bf16.gmra.mxu0 %v4598
      %v4646 = vpop.f32.mrf.mxu0
      %v4647 = vadd.f32 %v4399, %v4646
      %v4648 = vpop.f32.mrf.mxu0
      %v4649 = vadd.f32 %v4401, %v4648
      %4650 = vmatmul.bf16.gmra.mxu0 %v4601
      %v4651 = vpop.f32.mrf.mxu0
      %v4652 = vadd.f32 %v4404, %v4651
      %v4653 = vpop.f32.mrf.mxu0
      %v4654 = vadd.f32 %v4406, %v4653
      %4655 = vmatmul.bf16.gmra.mxu0 %v4604
      %v4656 = vpop.f32.mrf.mxu0
      %v4657 = vadd.f32 %v4409, %v4656
      %v4658 = vpop.f32.mrf.mxu0
      %v4659 = vadd.f32 %v4411, %v4658
      %4660 = vmatmul.bf16.gmra.mxu0 %v4607
      %v4661 = vpop.f32.mrf.mxu0
      %v4662 = vadd.f32 %v4414, %v4661
      %v4663 = vpop.f32.mrf.mxu0
      %v4664 = vadd.f32 %v4416, %v4663
      %4665 = vmatmul.bf16.gmra.mxu0 %v4610
      %v4666 = vpop.f32.mrf.mxu0
      %v4667 = vadd.f32 %v4419, %v4666
      %v4668 = vpop.f32.mrf.mxu0
      %v4669 = vadd.f32 %v4421, %v4668
      %4670 = vmatmul.bf16.gmra.mxu0 %v4613
      %v4671 = vpop.f32.mrf.mxu0
      %v4672 = vadd.f32 %v4424, %v4671
      %v4673 = vpop.f32.mrf.mxu0
      %v4674 = vadd.f32 %v4426, %v4673
      %4675 = vmatmul.bf16.gmra.mxu0 %v4616
      %v4676 = vpop.f32.mrf.mxu0
      %v4677 = vadd.f32 %v4429, %v4676
      %v4678 = vpop.f32.mrf.mxu0
      %v4679 = vadd.f32 %v4431, %v4678
      %4680 = vmatmul.bf16.gmra.mxu0 %v4619
      %v4681 = vpop.f32.mrf.mxu0
      %v4682 = vadd.f32 %v4434, %v4681
      %v4683 = vpop.f32.mrf.mxu0
      %v4684 = vadd.f32 %v4436, %v4683
      %4685 = vmatmul.bf16.gmra.mxu0 %v4622
      %v4686 = vpop.f32.mrf.mxu0
      %v4687 = vadd.f32 %v4439, %v4686
      %v4688 = vpop.f32.mrf.mxu0
      %v4689 = vadd.f32 %v4441, %v4688
      %4690 = vmatmul.bf16.gmra.mxu0 %v4625
      %v4691 = vpop.f32.mrf.mxu0
      %v4692 = vadd.f32 %v4444, %v4691
      %v4693 = vpop.f32.mrf.mxu0
      %v4694 = vadd.f32 %v4446, %v4693
      %4695 = vdwg.mxu0
      %v4696 = vld [vmem:[#allocation3 + $0x4] sm:$0xf]
      %v4697 = vld [vmem:[#allocation3 + $0x8] sm:$0xf]
      %v4698 = vld [vmem:[#allocation3 + $0xc] sm:$0xf]
      %v4699 = vld [vmem:[#allocation3 + $0x10] sm:$0xf]
      %v4700 = vld [vmem:[#allocation3 + $0x14] sm:$0xf]
      %v4701 = vld [vmem:[#allocation3 + $0x18] sm:$0xf]
      %v4702 = vld [vmem:[#allocation3 + $0x1c] sm:$0xf]
      %v4703 = vld [vmem:[#allocation3 + $0x20] sm:$0xf]
      %v4704 = vld [vmem:[#allocation3 + $0x24] sm:$0xf]
      %v4705 = vld [vmem:[#allocation3 + $0x28] sm:$0xf]
      %v4706 = vld [vmem:[#allocation3 + $0x2c] sm:$0xf]
      %v4707 = vld [vmem:[#allocation3 + $0x30] sm:$0xf]
      %v4708 = vld [vmem:[#allocation3 + $0x34] sm:$0xf]
      %v4709 = vld [vmem:[#allocation3 + $0x38] sm:$0xf]
      %v4710 = vld [vmem:[#allocation3 + $0x3c] sm:$0xf]
      %v4711 = vld [vmem:[#allocation3 + $0x40] sm:$0xf]
      %v4712 = vld [vmem:[#allocation3 + $0x44] sm:$0xf]
      %v4713 = vld [vmem:[#allocation3 + $0x48] sm:$0xf]
      %v4714 = vld [vmem:[#allocation3 + $0x4c] sm:$0xf]
      %v4715 = vld [vmem:[#allocation3 + $0x50] sm:$0xf]
      %v4716 = vld [vmem:[#allocation3 + $0x54] sm:$0xf]
      %v4717 = vld [vmem:[#allocation3 + $0x58] sm:$0xf]
      %v4718 = vld [vmem:[#allocation3 + $0x5c] sm:$0xf]
      %v4719 = vld [vmem:[#allocation3 + $0x60] sm:$0xf]
      %v4720 = vld [vmem:[#allocation3 + $0x64] sm:$0x1]
      %s4721 = scalar_lea.vmem %s5, 32
      %v4722 = vld [vmem:[%s4721] sm:$0xf]
      %v4723 = vld [vmem:[%s4721 + $0x4] sm:$0xf]
      %v4724 = vld [vmem:[%s4721 + $0x8] sm:$0xf]
      %v4725 = vld [vmem:[%s4721 + $0xc] sm:$0xf]
      %v4751 = vunpack.c.l.b16 %v4696
      %v4752 = vunpack.c.l.b16 %v4697
      %v4753 = vunpack.c.l.b16 %v4698
      %v4754 = vunpack.c.l.b16 %v4699
      %v4755 = vunpack.c.l.b16 %v4700
      %v4756 = vunpack.c.l.b16 %v4701
      %v4757 = vunpack.c.l.b16 %v4702
      %v4758 = vunpack.c.l.b16 %v4703
      %v4759 = vunpack.c.l.b16 %v4704
      %v4760 = vunpack.c.l.b16 %v4705
      %v4761 = vunpack.c.l.b16 %v4706
      %v4762 = vunpack.c.l.b16 %v4707
      %v4763 = vunpack.c.l.b16 %v4708
      %v4764 = vunpack.c.l.b16 %v4709
      %v4765 = vunpack.c.l.b16 %v4710
      %v4766 = vunpack.c.l.b16 %v4711
      %v4767 = vunpack.c.l.b16 %v4712
      %v4768 = vunpack.c.l.b16 %v4713
      %v4769 = vunpack.c.l.b16 %v4714
      %v4770 = vunpack.c.l.b16 %v4715
      %v4771 = vunpack.c.l.b16 %v4716
      %v4772 = vunpack.c.l.b16 %v4717
      %v4773 = vunpack.c.l.b16 %v4718
      %v4774 = vunpack.c.l.b16 %v4719
      %v4775 = vunpack.c.l.b16 %v4720
      %v4776 = vpack.c.b16 %v4752, %v4751
      %v4777 = vpack.c.b16 %v4754, %v4753
      %v4778 = vpack.c.b16 %v4756, %v4755
      %v4779 = vpack.c.b16 %v4758, %v4757
      %v4780 = vpack.c.b16 %v4760, %v4759
      %v4781 = vpack.c.b16 %v4762, %v4761
      %v4782 = vpack.c.b16 %v4764, %v4763
      %v4783 = vpack.c.b16 %v4766, %v4765
      %v4784 = vpack.c.b16 %v4768, %v4767
      %v4785 = vpack.c.b16 %v4770, %v4769
      %v4786 = vpack.c.b16 %v4772, %v4771
      %v4787 = vpack.c.b16 %v4774, %v4773
      %v4788 = vpack.c.b16 %v4775, %v4775
      %v4790 = vshrl.u32 %v4776, 16
      %v4792 = vshll.u32 %v4776, 16
      %v4794 = vrot.slane %v4792, 1
      %v4795 = vor.u32 %v4790, %v4794
      %v4797 = vshll.u32 %v4777, 16
      %v4799 = vrot.slane %v4797, 1
      %v4800 = vsel %vm1274, %v4795, %v4799
      %v4801 = vshrl.u32 %v4777, 16
      %v4803 = vor.u32 %v4801, %v4799
      %v4805 = vshll.u32 %v4778, 16
      %v4807 = vrot.slane %v4805, 1
      %v4808 = vsel %vm1274, %v4803, %v4807
      %v4809 = vshrl.u32 %v4778, 16
      %v4811 = vor.u32 %v4809, %v4807
      %v4813 = vshll.u32 %v4779, 16
      %v4815 = vrot.slane %v4813, 1
      %v4816 = vsel %vm1274, %v4811, %v4815
      %v4817 = vshrl.u32 %v4779, 16
      %v4819 = vor.u32 %v4817, %v4815
      %v4821 = vshll.u32 %v4780, 16
      %v4823 = vrot.slane %v4821, 1
      %v4824 = vsel %vm1274, %v4819, %v4823
      %v4825 = vshrl.u32 %v4780, 16
      %v4827 = vor.u32 %v4825, %v4823
      %v4829 = vshll.u32 %v4781, 16
      %v4831 = vrot.slane %v4829, 1
      %v4832 = vsel %vm1274, %v4827, %v4831
      %v4833 = vshrl.u32 %v4781, 16
      %v4835 = vor.u32 %v4833, %v4831
      %v4837 = vshll.u32 %v4782, 16
      %v4839 = vrot.slane %v4837, 1
      %v4840 = vsel %vm1274, %v4835, %v4839
      %v4841 = vshrl.u32 %v4782, 16
      %v4843 = vor.u32 %v4841, %v4839
      %v4845 = vshll.u32 %v4783, 16
      %v4847 = vrot.slane %v4845, 1
      %v4848 = vsel %vm1274, %v4843, %v4847
      %v4849 = vshrl.u32 %v4783, 16
      %v4851 = vor.u32 %v4849, %v4847
      %v4853 = vshll.u32 %v4784, 16
      %v4855 = vrot.slane %v4853, 1
      %v4856 = vsel %vm1274, %v4851, %v4855
      %v4857 = vshrl.u32 %v4784, 16
      %v4859 = vor.u32 %v4857, %v4855
      %v4861 = vshll.u32 %v4785, 16
      %v4863 = vrot.slane %v4861, 1
      %v4864 = vsel %vm1274, %v4859, %v4863
      %v4865 = vshrl.u32 %v4785, 16
      %v4867 = vor.u32 %v4865, %v4863
      %v4869 = vshll.u32 %v4786, 16
      %v4871 = vrot.slane %v4869, 1
      %v4872 = vsel %vm1274, %v4867, %v4871
      %v4873 = vshrl.u32 %v4786, 16
      %v4875 = vor.u32 %v4873, %v4871
      %v4877 = vshll.u32 %v4787, 16
      %v4879 = vrot.slane %v4877, 1
      %v4880 = vsel %vm1274, %v4875, %v4879
      %v4881 = vshrl.u32 %v4787, 16
      %v4883 = vor.u32 %v4881, %v4879
      %v4885 = vshll.u32 %v4788, 16
      %v4887 = vrot.slane %v4885, 1
      %v4888 = vsel %vm1274, %v4883, %v4887
      %v4893 = vunpack.c.l.b16 %v4722
      %v4894 = vunpack.c.l.b16 %v4723
      %v4895 = vunpack.c.l.b16 %v4724
      %v4896 = vunpack.c.l.b16 %v4725
      %v4897 = vpack.c.b16 %v4894, %v4893
      %v4898 = vpack.c.b16 %v4896, %v4895
      %v4902 = vsel %vm727, %v4800, 0
      %v4905 = vsel %vm727, %v4808, 0
      %v4908 = vsel %vm727, %v4816, 0
      %v4911 = vsel %vm727, %v4824, 0
      %v4914 = vsel %vm727, %v4832, 0
      %v4917 = vsel %vm727, %v4840, 0
      %v4920 = vsel %vm727, %v4848, 0
      %v4923 = vsel %vm727, %v4856, 0
      %v4926 = vsel %vm727, %v4864, 0
      %v4929 = vsel %vm727, %v4872, 0
      %v4932 = vsel %vm727, %v4880, 0
      %v4935 = vsel %vm727, %v4888, 0
      %4937 = vmatpush.bf16.msra.mxu0 0
      %4938 = vmatpush.bf16.msra.mxu0 0
      %4939 = vmatpush.bf16.msra.mxu0 0
      %4940 = vmatpush.bf16.msra.mxu0 0
      %4941 = vmatpush.bf16.msra.mxu0 0
      %4942 = vmatpush.bf16.msra.mxu0 0
      %4943 = vmatpush.bf16.msra.mxu0 %v4898
      %4944 = vmatpush.bf16.msra.mxu0 %v4897
      %4945 = vmatmul.bf16.gmra.mxu0 %v4902
      %v4946 = vpop.f32.mrf.mxu0
      %v4947 = vadd.f32 0.0, %v4946
      %v4948 = vpop.f32.mrf.mxu0
      %v4949 = vadd.f32 0.0, %v4948
      %4950 = vmatmul.bf16.gmra.mxu0 %v4905
      %v4951 = vpop.f32.mrf.mxu0
      %v4952 = vadd.f32 0.0, %v4951
      %v4953 = vpop.f32.mrf.mxu0
      %v4954 = vadd.f32 0.0, %v4953
      %4955 = vmatmul.bf16.gmra.mxu0 %v4908
      %v4956 = vpop.f32.mrf.mxu0
      %v4957 = vadd.f32 0.0, %v4956
      %v4958 = vpop.f32.mrf.mxu0
      %v4959 = vadd.f32 0.0, %v4958
      %4960 = vmatmul.bf16.gmra.mxu0 %v4911
      %v4961 = vpop.f32.mrf.mxu0
      %v4962 = vadd.f32 0.0, %v4961
      %v4963 = vpop.f32.mrf.mxu0
      %v4964 = vadd.f32 0.0, %v4963
      %4965 = vmatmul.bf16.gmra.mxu0 %v4914
      %v4966 = vpop.f32.mrf.mxu0
      %v4967 = vadd.f32 0.0, %v4966
      %v4968 = vpop.f32.mrf.mxu0
      %v4969 = vadd.f32 0.0, %v4968
      %4970 = vmatmul.bf16.gmra.mxu0 %v4917
      %v4971 = vpop.f32.mrf.mxu0
      %v4972 = vadd.f32 0.0, %v4971
      %v4973 = vpop.f32.mrf.mxu0
      %v4974 = vadd.f32 0.0, %v4973
      %4975 = vmatmul.bf16.gmra.mxu0 %v4920
      %v4976 = vpop.f32.mrf.mxu0
      %v4977 = vadd.f32 0.0, %v4976
      %v4978 = vpop.f32.mrf.mxu0
      %v4979 = vadd.f32 0.0, %v4978
      %4980 = vmatmul.bf16.gmra.mxu0 %v4923
      %v4981 = vpop.f32.mrf.mxu0
      %v4982 = vadd.f32 0.0, %v4981
      %v4983 = vpop.f32.mrf.mxu0
      %v4984 = vadd.f32 0.0, %v4983
      %4985 = vmatmul.bf16.gmra.mxu0 %v4926
      %v4986 = vpop.f32.mrf.mxu0
      %v4987 = vadd.f32 0.0, %v4986
      %v4988 = vpop.f32.mrf.mxu0
      %v4989 = vadd.f32 0.0, %v4988
      %4990 = vmatmul.bf16.gmra.mxu0 %v4929
      %v4991 = vpop.f32.mrf.mxu0
      %v4992 = vadd.f32 0.0, %v4991
      %v4993 = vpop.f32.mrf.mxu0
      %v4994 = vadd.f32 0.0, %v4993
      %4995 = vmatmul.bf16.gmra.mxu0 %v4932
      %v4996 = vpop.f32.mrf.mxu0
      %v4997 = vadd.f32 0.0, %v4996
      %v4998 = vpop.f32.mrf.mxu0
      %v4999 = vadd.f32 0.0, %v4998
      %5000 = vmatmul.bf16.gmra.mxu0 %v4935
      %v5001 = vpop.f32.mrf.mxu0
      %v5002 = vadd.f32 0.0, %v5001
      %v5003 = vpop.f32.mrf.mxu0
      %v5004 = vadd.f32 0.0, %v5003
      %5005 = vdwg.mxu0
      %v5006 = vadd.f32 %v4637, %v4947
      %v5007 = vadd.f32 %v4639, %v4949
      %v5008 = vadd.f32 %v4642, %v4952
      %v5009 = vadd.f32 %v4644, %v4954
      %v5010 = vadd.f32 %v4647, %v4957
      %v5011 = vadd.f32 %v4649, %v4959
      %v5012 = vadd.f32 %v4652, %v4962
      %v5013 = vadd.f32 %v4654, %v4964
      %v5014 = vadd.f32 %v4657, %v4967
      %v5015 = vadd.f32 %v4659, %v4969
      %v5016 = vadd.f32 %v4662, %v4972
      %v5017 = vadd.f32 %v4664, %v4974
      %v5018 = vadd.f32 %v4667, %v4977
      %v5019 = vadd.f32 %v4669, %v4979
      %v5020 = vadd.f32 %v4672, %v4982
      %v5021 = vadd.f32 %v4674, %v4984
      %v5022 = vadd.f32 %v4677, %v4987
      %v5023 = vadd.f32 %v4679, %v4989
      %v5024 = vadd.f32 %v4682, %v4992
      %v5025 = vadd.f32 %v4684, %v4994
      %v5026 = vadd.f32 %v4687, %v4997
      %v5027 = vadd.f32 %v4689, %v4999
      %v5028 = vadd.f32 %v4692, %v5002
      %v5029 = vadd.f32 %v4694, %v5004
      %v5030 = vld [vmem:[#allocation3 + $0xc] sm:$0x8]
      %v5031 = vld [vmem:[#allocation3 + $0x10] sm:$0xf]
      %v5032 = vld [vmem:[#allocation3 + $0x14] sm:$0xf]
      %v5033 = vld [vmem:[#allocation3 + $0x18] sm:$0xf]
      %v5034 = vld [vmem:[#allocation3 + $0x1c] sm:$0xf]
      %v5035 = vld [vmem:[#allocation3 + $0x20] sm:$0xf]
      %v5036 = vld [vmem:[#allocation3 + $0x24] sm:$0xf]
      %v5037 = vld [vmem:[#allocation3 + $0x28] sm:$0xf]
      %v5038 = vld [vmem:[#allocation3 + $0x2c] sm:$0xf]
      %v5039 = vld [vmem:[#allocation3 + $0x30] sm:$0xf]
      %v5040 = vld [vmem:[#allocation3 + $0x34] sm:$0xf]
      %v5041 = vld [vmem:[#allocation3 + $0x38] sm:$0xf]
      %v5042 = vld [vmem:[#allocation3 + $0x3c] sm:$0xf]
      %v5043 = vld [vmem:[#allocation3 + $0x40] sm:$0xf]
      %v5044 = vld [vmem:[#allocation3 + $0x44] sm:$0xf]
      %v5045 = vld [vmem:[#allocation3 + $0x48] sm:$0xf]
      %v5046 = vld [vmem:[#allocation3 + $0x4c] sm:$0xf]
      %v5047 = vld [vmem:[#allocation3 + $0x50] sm:$0xf]
      %v5048 = vld [vmem:[#allocation3 + $0x54] sm:$0xf]
      %v5049 = vld [vmem:[#allocation3 + $0x58] sm:$0xf]
      %v5050 = vld [vmem:[#allocation3 + $0x5c] sm:$0xf]
      %v5051 = vld [vmem:[#allocation3 + $0x60] sm:$0xf]
      %v5052 = vld [vmem:[#allocation3 + $0x64] sm:$0xf]
      %v5053 = vld [vmem:[#allocation3 + $0x68] sm:$0xf]
      %v5054 = vld [vmem:[#allocation3 + $0x6c] sm:$0xf]
      %s5055 = scalar_lea.vmem %s5, 48
      %v5056 = vld [vmem:[%s5055] sm:$0xf]
      %v5057 = vld [vmem:[%s5055 + $0x4] sm:$0xf]
      %v5058 = vld [vmem:[%s5055 + $0x8] sm:$0xf]
      %v5059 = vld [vmem:[%s5055 + $0xc] sm:$0xf]
      %v5085 = vunpack.c.l.b16 %v5030
      %v5086 = vunpack.c.l.b16 %v5031
      %v5087 = vunpack.c.l.b16 %v5032
      %v5088 = vunpack.c.l.b16 %v5033
      %v5089 = vunpack.c.l.b16 %v5034
      %v5090 = vunpack.c.l.b16 %v5035
      %v5091 = vunpack.c.l.b16 %v5036
      %v5092 = vunpack.c.l.b16 %v5037
      %v5093 = vunpack.c.l.b16 %v5038
      %v5094 = vunpack.c.l.b16 %v5039
      %v5095 = vunpack.c.l.b16 %v5040
      %v5096 = vunpack.c.l.b16 %v5041
      %v5097 = vunpack.c.l.b16 %v5042
      %v5098 = vunpack.c.l.b16 %v5043
      %v5099 = vunpack.c.l.b16 %v5044
      %v5100 = vunpack.c.l.b16 %v5045
      %v5101 = vunpack.c.l.b16 %v5046
      %v5102 = vunpack.c.l.b16 %v5047
      %v5103 = vunpack.c.l.b16 %v5048
      %v5104 = vunpack.c.l.b16 %v5049
      %v5105 = vunpack.c.l.b16 %v5050
      %v5106 = vunpack.c.l.b16 %v5051
      %v5107 = vunpack.c.l.b16 %v5052
      %v5108 = vunpack.c.l.b16 %v5053
      %v5109 = vunpack.c.l.b16 %v5054
      %v5110 = vpack.c.b16 %v5086, %v5085
      %v5111 = vpack.c.b16 %v5088, %v5087
      %v5112 = vpack.c.b16 %v5090, %v5089
      %v5113 = vpack.c.b16 %v5092, %v5091
      %v5114 = vpack.c.b16 %v5094, %v5093
      %v5115 = vpack.c.b16 %v5096, %v5095
      %v5116 = vpack.c.b16 %v5098, %v5097
      %v5117 = vpack.c.b16 %v5100, %v5099
      %v5118 = vpack.c.b16 %v5102, %v5101
      %v5119 = vpack.c.b16 %v5104, %v5103
      %v5120 = vpack.c.b16 %v5106, %v5105
      %v5121 = vpack.c.b16 %v5108, %v5107
      %v5122 = vpack.c.b16 %v5109, %v5109
      %v5124 = vshrl.u32 %v5110, 16
      %v5126 = vrot.slane %v5124, 3
      %v5127 = vshll.u32 %v5110, 16
      %v5129 = vrot.slane %v5127, 4
      %v5130 = vor.u32 %v5126, %v5129
      %v5132 = vshrl.u32 %v5111, 16
      %v5134 = vrot.slane %v5132, 3
      %v5135 = vshll.u32 %v5111, 16
      %v5137 = vrot.slane %v5135, 4
      %v5138 = vor.u32 %v5134, %v5137
      %v5139 = vsel %vm875, %v5130, %v5138
      %v5141 = vshrl.u32 %v5112, 16
      %v5143 = vrot.slane %v5141, 3
      %v5144 = vshll.u32 %v5112, 16
      %v5146 = vrot.slane %v5144, 4
      %v5147 = vor.u32 %v5143, %v5146
      %v5148 = vsel %vm875, %v5138, %v5147
      %v5150 = vshrl.u32 %v5113, 16
      %v5152 = vrot.slane %v5150, 3
      %v5153 = vshll.u32 %v5113, 16
      %v5155 = vrot.slane %v5153, 4
      %v5156 = vor.u32 %v5152, %v5155
      %v5157 = vsel %vm875, %v5147, %v5156
      %v5159 = vshrl.u32 %v5114, 16
      %v5161 = vrot.slane %v5159, 3
      %v5162 = vshll.u32 %v5114, 16
      %v5164 = vrot.slane %v5162, 4
      %v5165 = vor.u32 %v5161, %v5164
      %v5166 = vsel %vm875, %v5156, %v5165
      %v5168 = vshrl.u32 %v5115, 16
      %v5170 = vrot.slane %v5168, 3
      %v5171 = vshll.u32 %v5115, 16
      %v5173 = vrot.slane %v5171, 4
      %v5174 = vor.u32 %v5170, %v5173
      %v5175 = vsel %vm875, %v5165, %v5174
      %v5177 = vshrl.u32 %v5116, 16
      %v5179 = vrot.slane %v5177, 3
      %v5180 = vshll.u32 %v5116, 16
      %v5182 = vrot.slane %v5180, 4
      %v5183 = vor.u32 %v5179, %v5182
      %v5184 = vsel %vm875, %v5174, %v5183
      %v5186 = vshrl.u32 %v5117, 16
      %v5188 = vrot.slane %v5186, 3
      %v5189 = vshll.u32 %v5117, 16
      %v5191 = vrot.slane %v5189, 4
      %v5192 = vor.u32 %v5188, %v5191
      %v5193 = vsel %vm875, %v5183, %v5192
      %v5195 = vshrl.u32 %v5118, 16
      %v5197 = vrot.slane %v5195, 3
      %v5198 = vshll.u32 %v5118, 16
      %v5200 = vrot.slane %v5198, 4
      %v5201 = vor.u32 %v5197, %v5200
      %v5202 = vsel %vm875, %v5192, %v5201
      %v5204 = vshrl.u32 %v5119, 16
      %v5206 = vrot.slane %v5204, 3
      %v5207 = vshll.u32 %v5119, 16
      %v5209 = vrot.slane %v5207, 4
      %v5210 = vor.u32 %v5206, %v5209
      %v5211 = vsel %vm875, %v5201, %v5210
      %v5213 = vshrl.u32 %v5120, 16
      %v5215 = vrot.slane %v5213, 3
      %v5216 = vshll.u32 %v5120, 16
      %v5218 = vrot.slane %v5216, 4
      %v5219 = vor.u32 %v5215, %v5218
      %v5220 = vsel %vm875, %v5210, %v5219
      %v5222 = vshrl.u32 %v5121, 16
      %v5224 = vrot.slane %v5222, 3
      %v5225 = vshll.u32 %v5121, 16
      %v5227 = vrot.slane %v5225, 4
      %v5228 = vor.u32 %v5224, %v5227
      %v5229 = vsel %vm875, %v5219, %v5228
      %v5231 = vshrl.u32 %v5122, 16
      %v5233 = vrot.slane %v5231, 3
      %v5234 = vshll.u32 %v5122, 16
      %v5236 = vrot.slane %v5234, 4
      %v5237 = vor.u32 %v5233, %v5236
      %v5238 = vsel %vm875, %v5228, %v5237
      %v5243 = vunpack.c.l.b16 %v5056
      %v5244 = vunpack.c.l.b16 %v5057
      %v5245 = vunpack.c.l.b16 %v5058
      %v5246 = vunpack.c.l.b16 %v5059
      %v5247 = vpack.c.b16 %v5244, %v5243
      %v5248 = vpack.c.b16 %v5246, %v5245
      %v5252 = vsel %vm727, %v5139, 0
      %v5255 = vsel %vm727, %v5148, 0
      %v5258 = vsel %vm727, %v5157, 0
      %v5261 = vsel %vm727, %v5166, 0
      %v5264 = vsel %vm727, %v5175, 0
      %v5267 = vsel %vm727, %v5184, 0
      %v5270 = vsel %vm727, %v5193, 0
      %v5273 = vsel %vm727, %v5202, 0
      %v5276 = vsel %vm727, %v5211, 0
      %v5279 = vsel %vm727, %v5220, 0
      %v5282 = vsel %vm727, %v5229, 0
      %v5285 = vsel %vm727, %v5238, 0
      %5287 = vmatpush.bf16.msra.mxu0 0
      %5288 = vmatpush.bf16.msra.mxu0 0
      %5289 = vmatpush.bf16.msra.mxu0 0
      %5290 = vmatpush.bf16.msra.mxu0 0
      %5291 = vmatpush.bf16.msra.mxu0 0
      %5292 = vmatpush.bf16.msra.mxu0 0
      %5293 = vmatpush.bf16.msra.mxu0 %v5248
      %5294 = vmatpush.bf16.msra.mxu0 %v5247
      %5295 = vmatmul.bf16.gmra.mxu0 %v5252
      %v5296 = vpop.f32.mrf.mxu0
      %v5297 = vadd.f32 0.0, %v5296
      %v5298 = vpop.f32.mrf.mxu0
      %v5299 = vadd.f32 0.0, %v5298
      %5300 = vmatmul.bf16.gmra.mxu0 %v5255
      %v5301 = vpop.f32.mrf.mxu0
      %v5302 = vadd.f32 0.0, %v5301
      %v5303 = vpop.f32.mrf.mxu0
      %v5304 = vadd.f32 0.0, %v5303
      %5305 = vmatmul.bf16.gmra.mxu0 %v5258
      %v5306 = vpop.f32.mrf.mxu0
      %v5307 = vadd.f32 0.0, %v5306
      %v5308 = vpop.f32.mrf.mxu0
      %v5309 = vadd.f32 0.0, %v5308
      %5310 = vmatmul.bf16.gmra.mxu0 %v5261
      %v5311 = vpop.f32.mrf.mxu0
      %v5312 = vadd.f32 0.0, %v5311
      %v5313 = vpop.f32.mrf.mxu0
      %v5314 = vadd.f32 0.0, %v5313
      %5315 = vmatmul.bf16.gmra.mxu0 %v5264
      %v5316 = vpop.f32.mrf.mxu0
      %v5317 = vadd.f32 0.0, %v5316
      %v5318 = vpop.f32.mrf.mxu0
      %v5319 = vadd.f32 0.0, %v5318
      %5320 = vmatmul.bf16.gmra.mxu0 %v5267
      %v5321 = vpop.f32.mrf.mxu0
      %v5322 = vadd.f32 0.0, %v5321
      %v5323 = vpop.f32.mrf.mxu0
      %v5324 = vadd.f32 0.0, %v5323
      %5325 = vmatmul.bf16.gmra.mxu0 %v5270
      %v5326 = vpop.f32.mrf.mxu0
      %v5327 = vadd.f32 0.0, %v5326
      %v5328 = vpop.f32.mrf.mxu0
      %v5329 = vadd.f32 0.0, %v5328
      %5330 = vmatmul.bf16.gmra.mxu0 %v5273
      %v5331 = vpop.f32.mrf.mxu0
      %v5332 = vadd.f32 0.0, %v5331
      %v5333 = vpop.f32.mrf.mxu0
      %v5334 = vadd.f32 0.0, %v5333
      %5335 = vmatmul.bf16.gmra.mxu0 %v5276
      %v5336 = vpop.f32.mrf.mxu0
      %v5337 = vadd.f32 0.0, %v5336
      %v5338 = vpop.f32.mrf.mxu0
      %v5339 = vadd.f32 0.0, %v5338
      %5340 = vmatmul.bf16.gmra.mxu0 %v5279
      %v5341 = vpop.f32.mrf.mxu0
      %v5342 = vadd.f32 0.0, %v5341
      %v5343 = vpop.f32.mrf.mxu0
      %v5344 = vadd.f32 0.0, %v5343
      %5345 = vmatmul.bf16.gmra.mxu0 %v5282
      %v5346 = vpop.f32.mrf.mxu0
      %v5347 = vadd.f32 0.0, %v5346
      %v5348 = vpop.f32.mrf.mxu0
      %v5349 = vadd.f32 0.0, %v5348
      %5350 = vmatmul.bf16.gmra.mxu0 %v5285
      %v5351 = vpop.f32.mrf.mxu0
      %v5352 = vadd.f32 0.0, %v5351
      %v5353 = vpop.f32.mrf.mxu0
      %v5354 = vadd.f32 0.0, %v5353
      %5355 = vdwg.mxu0
      %v5356 = vadd.f32 %v5006, %v5297
      %v5357 = vadd.f32 %v5007, %v5299
      %v5358 = vadd.f32 %v5008, %v5302
      %v5359 = vadd.f32 %v5009, %v5304
      %v5360 = vadd.f32 %v5010, %v5307
      %v5361 = vadd.f32 %v5011, %v5309
      %v5362 = vadd.f32 %v5012, %v5312
      %v5363 = vadd.f32 %v5013, %v5314
      %v5364 = vadd.f32 %v5014, %v5317
      %v5365 = vadd.f32 %v5015, %v5319
      %v5366 = vadd.f32 %v5016, %v5322
      %v5367 = vadd.f32 %v5017, %v5324
      %v5368 = vadd.f32 %v5018, %v5327
      %v5369 = vadd.f32 %v5019, %v5329
      %v5370 = vadd.f32 %v5020, %v5332
      %v5371 = vadd.f32 %v5021, %v5334
      %v5372 = vadd.f32 %v5022, %v5337
      %v5373 = vadd.f32 %v5023, %v5339
      %v5374 = vadd.f32 %v5024, %v5342
      %v5375 = vadd.f32 %v5025, %v5344
      %v5376 = vadd.f32 %v5026, %v5347
      %v5377 = vadd.f32 %v5027, %v5349
      %v5378 = vadd.f32 %v5028, %v5352
      %v5379 = vadd.f32 %v5029, %v5354
      %s5380 = scalar_lea.vmem %s5, 64
      %v5381 = vld [vmem:[%s5380] sm:$0xf]
      %v5382 = vld [vmem:[%s5380 + $0x4] sm:$0xf]
      %v5383 = vld [vmem:[%s5380 + $0x8] sm:$0xf]
      %v5384 = vld [vmem:[%s5380 + $0xc] sm:$0xf]
      %v5385 = vpack.c.b16 %v5087, %v5086
      %v5386 = vpack.c.b16 %v5089, %v5088
      %v5387 = vpack.c.b16 %v5091, %v5090
      %v5388 = vpack.c.b16 %v5093, %v5092
      %v5389 = vpack.c.b16 %v5095, %v5094
      %v5390 = vpack.c.b16 %v5097, %v5096
      %v5391 = vpack.c.b16 %v5099, %v5098
      %v5392 = vpack.c.b16 %v5101, %v5100
      %v5393 = vpack.c.b16 %v5103, %v5102
      %v5394 = vpack.c.b16 %v5105, %v5104
      %v5395 = vpack.c.b16 %v5107, %v5106
      %v5396 = vpack.c.b16 %v5109, %v5108
      %v5401 = vunpack.c.l.b16 %v5381
      %v5402 = vunpack.c.l.b16 %v5382
      %v5403 = vunpack.c.l.b16 %v5383
      %v5404 = vunpack.c.l.b16 %v5384
      %v5405 = vpack.c.b16 %v5402, %v5401
      %v5406 = vpack.c.b16 %v5404, %v5403
      %v5410 = vsel %vm727, %v5385, 0
      %v5413 = vsel %vm727, %v5386, 0
      %v5416 = vsel %vm727, %v5387, 0
      %v5419 = vsel %vm727, %v5388, 0
      %v5422 = vsel %vm727, %v5389, 0
      %v5425 = vsel %vm727, %v5390, 0
      %v5428 = vsel %vm727, %v5391, 0
      %v5431 = vsel %vm727, %v5392, 0
      %v5434 = vsel %vm727, %v5393, 0
      %v5437 = vsel %vm727, %v5394, 0
      %v5440 = vsel %vm727, %v5395, 0
      %v5443 = vsel %vm727, %v5396, 0
      %5445 = vmatpush.bf16.msra.mxu0 0
      %5446 = vmatpush.bf16.msra.mxu0 0
      %5447 = vmatpush.bf16.msra.mxu0 0
      %5448 = vmatpush.bf16.msra.mxu0 0
      %5449 = vmatpush.bf16.msra.mxu0 0
      %5450 = vmatpush.bf16.msra.mxu0 0
      %5451 = vmatpush.bf16.msra.mxu0 %v5406
      %5452 = vmatpush.bf16.msra.mxu0 %v5405
      %5453 = vmatmul.bf16.gmra.mxu0 %v5410
      %v5454 = vpop.f32.mrf.mxu0
      %v5455 = vadd.f32 0.0, %v5454
      %v5456 = vpop.f32.mrf.mxu0
      %v5457 = vadd.f32 0.0, %v5456
      %5458 = vmatmul.bf16.gmra.mxu0 %v5413
      %v5459 = vpop.f32.mrf.mxu0
      %v5460 = vadd.f32 0.0, %v5459
      %v5461 = vpop.f32.mrf.mxu0
      %v5462 = vadd.f32 0.0, %v5461
      %5463 = vmatmul.bf16.gmra.mxu0 %v5416
      %v5464 = vpop.f32.mrf.mxu0
      %v5465 = vadd.f32 0.0, %v5464
      %v5466 = vpop.f32.mrf.mxu0
      %v5467 = vadd.f32 0.0, %v5466
      %5468 = vmatmul.bf16.gmra.mxu0 %v5419
      %v5469 = vpop.f32.mrf.mxu0
      %v5470 = vadd.f32 0.0, %v5469
      %v5471 = vpop.f32.mrf.mxu0
      %v5472 = vadd.f32 0.0, %v5471
      %5473 = vmatmul.bf16.gmra.mxu0 %v5422
      %v5474 = vpop.f32.mrf.mxu0
      %v5475 = vadd.f32 0.0, %v5474
      %v5476 = vpop.f32.mrf.mxu0
      %v5477 = vadd.f32 0.0, %v5476
      %5478 = vmatmul.bf16.gmra.mxu0 %v5425
      %v5479 = vpop.f32.mrf.mxu0
      %v5480 = vadd.f32 0.0, %v5479
      %v5481 = vpop.f32.mrf.mxu0
      %v5482 = vadd.f32 0.0, %v5481
      %5483 = vmatmul.bf16.gmra.mxu0 %v5428
      %v5484 = vpop.f32.mrf.mxu0
      %v5485 = vadd.f32 0.0, %v5484
      %v5486 = vpop.f32.mrf.mxu0
      %v5487 = vadd.f32 0.0, %v5486
      %5488 = vmatmul.bf16.gmra.mxu0 %v5431
      %v5489 = vpop.f32.mrf.mxu0
      %v5490 = vadd.f32 0.0, %v5489
      %v5491 = vpop.f32.mrf.mxu0
      %v5492 = vadd.f32 0.0, %v5491
      %5493 = vmatmul.bf16.gmra.mxu0 %v5434
      %v5494 = vpop.f32.mrf.mxu0
      %v5495 = vadd.f32 0.0, %v5494
      %v5496 = vpop.f32.mrf.mxu0
      %v5497 = vadd.f32 0.0, %v5496
      %5498 = vmatmul.bf16.gmra.mxu0 %v5437
      %v5499 = vpop.f32.mrf.mxu0
      %v5500 = vadd.f32 0.0, %v5499
      %v5501 = vpop.f32.mrf.mxu0
      %v5502 = vadd.f32 0.0, %v5501
      %5503 = vmatmul.bf16.gmra.mxu0 %v5440
      %v5504 = vpop.f32.mrf.mxu0
      %v5505 = vadd.f32 0.0, %v5504
      %v5506 = vpop.f32.mrf.mxu0
      %v5507 = vadd.f32 0.0, %v5506
      %5508 = vmatmul.bf16.gmra.mxu0 %v5443
      %v5509 = vpop.f32.mrf.mxu0
      %v5510 = vadd.f32 0.0, %v5509
      %v5511 = vpop.f32.mrf.mxu0
      %v5512 = vadd.f32 0.0, %v5511
      %5513 = vdwg.mxu0
      %v5514 = vadd.f32 %v5356, %v5455
      %v5515 = vadd.f32 %v5357, %v5457
      %v5516 = vadd.f32 %v5358, %v5460
      %v5517 = vadd.f32 %v5359, %v5462
      %v5518 = vadd.f32 %v5360, %v5465
      %v5519 = vadd.f32 %v5361, %v5467
      %v5520 = vadd.f32 %v5362, %v5470
      %v5521 = vadd.f32 %v5363, %v5472
      %v5522 = vadd.f32 %v5364, %v5475
      %v5523 = vadd.f32 %v5365, %v5477
      %v5524 = vadd.f32 %v5366, %v5480
      %v5525 = vadd.f32 %v5367, %v5482
      %v5526 = vadd.f32 %v5368, %v5485
      %v5527 = vadd.f32 %v5369, %v5487
      %v5528 = vadd.f32 %v5370, %v5490
      %v5529 = vadd.f32 %v5371, %v5492
      %v5530 = vadd.f32 %v5372, %v5495
      %v5531 = vadd.f32 %v5373, %v5497
      %v5532 = vadd.f32 %v5374, %v5500
      %v5533 = vadd.f32 %v5375, %v5502
      %v5534 = vadd.f32 %v5376, %v5505
      %v5535 = vadd.f32 %v5377, %v5507
      %v5536 = vadd.f32 %v5378, %v5510
      %v5537 = vadd.f32 %v5379, %v5512
      %v5538 = vld [vmem:[#allocation3 + $0x10] sm:$0xf]
      %v5539 = vld [vmem:[#allocation3 + $0x14] sm:$0xf]
      %v5540 = vld [vmem:[#allocation3 + $0x18] sm:$0xf]
      %v5541 = vld [vmem:[#allocation3 + $0x1c] sm:$0xf]
      %v5542 = vld [vmem:[#allocation3 + $0x20] sm:$0xf]
      %v5543 = vld [vmem:[#allocation3 + $0x24] sm:$0xf]
      %v5544 = vld [vmem:[#allocation3 + $0x28] sm:$0xf]
      %v5545 = vld [vmem:[#allocation3 + $0x2c] sm:$0xf]
      %v5546 = vld [vmem:[#allocation3 + $0x30] sm:$0xf]
      %v5547 = vld [vmem:[#allocation3 + $0x34] sm:$0xf]
      %v5548 = vld [vmem:[#allocation3 + $0x38] sm:$0xf]
      %v5549 = vld [vmem:[#allocation3 + $0x3c] sm:$0xf]
      %v5550 = vld [vmem:[#allocation3 + $0x40] sm:$0xf]
      %v5551 = vld [vmem:[#allocation3 + $0x44] sm:$0xf]
      %v5552 = vld [vmem:[#allocation3 + $0x48] sm:$0xf]
      %v5553 = vld [vmem:[#allocation3 + $0x4c] sm:$0xf]
      %v5554 = vld [vmem:[#allocation3 + $0x50] sm:$0xf]
      %v5555 = vld [vmem:[#allocation3 + $0x54] sm:$0xf]
      %v5556 = vld [vmem:[#allocation3 + $0x58] sm:$0xf]
      %v5557 = vld [vmem:[#allocation3 + $0x5c] sm:$0xf]
      %v5558 = vld [vmem:[#allocation3 + $0x60] sm:$0xf]
      %v5559 = vld [vmem:[#allocation3 + $0x64] sm:$0xf]
      %v5560 = vld [vmem:[#allocation3 + $0x68] sm:$0xf]
      %v5561 = vld [vmem:[#allocation3 + $0x6c] sm:$0xf]
      %v5562 = vld [vmem:[#allocation3 + $0x70] sm:$0x1]
      %s5563 = scalar_lea.vmem %s5, 80
      %v5564 = vld [vmem:[%s5563] sm:$0xf]
      %v5565 = vld [vmem:[%s5563 + $0x4] sm:$0xf]
      %v5566 = vld [vmem:[%s5563 + $0x8] sm:$0xf]
      %v5567 = vld [vmem:[%s5563 + $0xc] sm:$0xf]
      %v5593 = vunpack.c.l.b16 %v5538
      %v5594 = vunpack.c.l.b16 %v5539
      %v5595 = vunpack.c.l.b16 %v5540
      %v5596 = vunpack.c.l.b16 %v5541
      %v5597 = vunpack.c.l.b16 %v5542
      %v5598 = vunpack.c.l.b16 %v5543
      %v5599 = vunpack.c.l.b16 %v5544
      %v5600 = vunpack.c.l.b16 %v5545
      %v5601 = vunpack.c.l.b16 %v5546
      %v5602 = vunpack.c.l.b16 %v5547
      %v5603 = vunpack.c.l.b16 %v5548
      %v5604 = vunpack.c.l.b16 %v5549
      %v5605 = vunpack.c.l.b16 %v5550
      %v5606 = vunpack.c.l.b16 %v5551
      %v5607 = vunpack.c.l.b16 %v5552
      %v5608 = vunpack.c.l.b16 %v5553
      %v5609 = vunpack.c.l.b16 %v5554
      %v5610 = vunpack.c.l.b16 %v5555
      %v5611 = vunpack.c.l.b16 %v5556
      %v5612 = vunpack.c.l.b16 %v5557
      %v5613 = vunpack.c.l.b16 %v5558
      %v5614 = vunpack.c.l.b16 %v5559
      %v5615 = vunpack.c.l.b16 %v5560
      %v5616 = vunpack.c.l.b16 %v5561
      %v5617 = vunpack.c.l.b16 %v5562
      %v5618 = vpack.c.b16 %v5594, %v5593
      %v5619 = vpack.c.b16 %v5596, %v5595
      %v5620 = vpack.c.b16 %v5598, %v5597
      %v5621 = vpack.c.b16 %v5600, %v5599
      %v5622 = vpack.c.b16 %v5602, %v5601
      %v5623 = vpack.c.b16 %v5604, %v5603
      %v5624 = vpack.c.b16 %v5606, %v5605
      %v5625 = vpack.c.b16 %v5608, %v5607
      %v5626 = vpack.c.b16 %v5610, %v5609
      %v5627 = vpack.c.b16 %v5612, %v5611
      %v5628 = vpack.c.b16 %v5614, %v5613
      %v5629 = vpack.c.b16 %v5616, %v5615
      %v5630 = vpack.c.b16 %v5617, %v5617
      %v5632 = vshrl.u32 %v5618, 16
      %v5634 = vshll.u32 %v5618, 16
      %v5636 = vrot.slane %v5634, 1
      %v5637 = vor.u32 %v5632, %v5636
      %v5639 = vshll.u32 %v5619, 16
      %v5641 = vrot.slane %v5639, 1
      %v5642 = vsel %vm1274, %v5637, %v5641
      %v5643 = vshrl.u32 %v5619, 16
      %v5645 = vor.u32 %v5643, %v5641
      %v5647 = vshll.u32 %v5620, 16
      %v5649 = vrot.slane %v5647, 1
      %v5650 = vsel %vm1274, %v5645, %v5649
      %v5651 = vshrl.u32 %v5620, 16
      %v5653 = vor.u32 %v5651, %v5649
      %v5655 = vshll.u32 %v5621, 16
      %v5657 = vrot.slane %v5655, 1
      %v5658 = vsel %vm1274, %v5653, %v5657
      %v5659 = vshrl.u32 %v5621, 16
      %v5661 = vor.u32 %v5659, %v5657
      %v5663 = vshll.u32 %v5622, 16
      %v5665 = vrot.slane %v5663, 1
      %v5666 = vsel %vm1274, %v5661, %v5665
      %v5667 = vshrl.u32 %v5622, 16
      %v5669 = vor.u32 %v5667, %v5665
      %v5671 = vshll.u32 %v5623, 16
      %v5673 = vrot.slane %v5671, 1
      %v5674 = vsel %vm1274, %v5669, %v5673
      %v5675 = vshrl.u32 %v5623, 16
      %v5677 = vor.u32 %v5675, %v5673
      %v5679 = vshll.u32 %v5624, 16
      %v5681 = vrot.slane %v5679, 1
      %v5682 = vsel %vm1274, %v5677, %v5681
      %v5683 = vshrl.u32 %v5624, 16
      %v5685 = vor.u32 %v5683, %v5681
      %v5687 = vshll.u32 %v5625, 16
      %v5689 = vrot.slane %v5687, 1
      %v5690 = vsel %vm1274, %v5685, %v5689
      %v5691 = vshrl.u32 %v5625, 16
      %v5693 = vor.u32 %v5691, %v5689
      %v5695 = vshll.u32 %v5626, 16
      %v5697 = vrot.slane %v5695, 1
      %v5698 = vsel %vm1274, %v5693, %v5697
      %v5699 = vshrl.u32 %v5626, 16
      %v5701 = vor.u32 %v5699, %v5697
      %v5703 = vshll.u32 %v5627, 16
      %v5705 = vrot.slane %v5703, 1
      %v5706 = vsel %vm1274, %v5701, %v5705
      %v5707 = vshrl.u32 %v5627, 16
      %v5709 = vor.u32 %v5707, %v5705
      %v5711 = vshll.u32 %v5628, 16
      %v5713 = vrot.slane %v5711, 1
      %v5714 = vsel %vm1274, %v5709, %v5713
      %v5715 = vshrl.u32 %v5628, 16
      %v5717 = vor.u32 %v5715, %v5713
      %v5719 = vshll.u32 %v5629, 16
      %v5721 = vrot.slane %v5719, 1
      %v5722 = vsel %vm1274, %v5717, %v5721
      %v5723 = vshrl.u32 %v5629, 16
      %v5725 = vor.u32 %v5723, %v5721
      %v5727 = vshll.u32 %v5630, 16
      %v5729 = vrot.slane %v5727, 1
      %v5730 = vsel %vm1274, %v5725, %v5729
      %v5735 = vunpack.c.l.b16 %v5564
      %v5736 = vunpack.c.l.b16 %v5565
      %v5737 = vunpack.c.l.b16 %v5566
      %v5738 = vunpack.c.l.b16 %v5567
      %v5739 = vpack.c.b16 %v5736, %v5735
      %v5740 = vpack.c.b16 %v5738, %v5737
      %v5744 = vsel %vm727, %v5642, 0
      %v5747 = vsel %vm727, %v5650, 0
      %v5750 = vsel %vm727, %v5658, 0
      %v5753 = vsel %vm727, %v5666, 0
      %v5756 = vsel %vm727, %v5674, 0
      %v5759 = vsel %vm727, %v5682, 0
      %v5762 = vsel %vm727, %v5690, 0
      %v5765 = vsel %vm727, %v5698, 0
      %v5768 = vsel %vm727, %v5706, 0
      %v5771 = vsel %vm727, %v5714, 0
      %v5774 = vsel %vm727, %v5722, 0
      %v5777 = vsel %vm727, %v5730, 0
      %5779 = vmatpush.bf16.msra.mxu0 0
      %5780 = vmatpush.bf16.msra.mxu0 0
      %5781 = vmatpush.bf16.msra.mxu0 0
      %5782 = vmatpush.bf16.msra.mxu0 0
      %5783 = vmatpush.bf16.msra.mxu0 0
      %5784 = vmatpush.bf16.msra.mxu0 0
      %5785 = vmatpush.bf16.msra.mxu0 %v5740
      %5786 = vmatpush.bf16.msra.mxu0 %v5739
      %5787 = vmatmul.bf16.gmra.mxu0 %v5744
      %v5788 = vpop.f32.mrf.mxu0
      %v5789 = vadd.f32 0.0, %v5788
      %v5790 = vpop.f32.mrf.mxu0
      %v5791 = vadd.f32 0.0, %v5790
      %5792 = vmatmul.bf16.gmra.mxu0 %v5747
      %v5793 = vpop.f32.mrf.mxu0
      %v5794 = vadd.f32 0.0, %v5793
      %v5795 = vpop.f32.mrf.mxu0
      %v5796 = vadd.f32 0.0, %v5795
      %5797 = vmatmul.bf16.gmra.mxu0 %v5750
      %v5798 = vpop.f32.mrf.mxu0
      %v5799 = vadd.f32 0.0, %v5798
      %v5800 = vpop.f32.mrf.mxu0
      %v5801 = vadd.f32 0.0, %v5800
      %5802 = vmatmul.bf16.gmra.mxu0 %v5753
      %v5803 = vpop.f32.mrf.mxu0
      %v5804 = vadd.f32 0.0, %v5803
      %v5805 = vpop.f32.mrf.mxu0
      %v5806 = vadd.f32 0.0, %v5805
      %5807 = vmatmul.bf16.gmra.mxu0 %v5756
      %v5808 = vpop.f32.mrf.mxu0
      %v5809 = vadd.f32 0.0, %v5808
      %v5810 = vpop.f32.mrf.mxu0
      %v5811 = vadd.f32 0.0, %v5810
      %5812 = vmatmul.bf16.gmra.mxu0 %v5759
      %v5813 = vpop.f32.mrf.mxu0
      %v5814 = vadd.f32 0.0, %v5813
      %v5815 = vpop.f32.mrf.mxu0
      %v5816 = vadd.f32 0.0, %v5815
      %5817 = vmatmul.bf16.gmra.mxu0 %v5762
      %v5818 = vpop.f32.mrf.mxu0
      %v5819 = vadd.f32 0.0, %v5818
      %v5820 = vpop.f32.mrf.mxu0
      %v5821 = vadd.f32 0.0, %v5820
      %5822 = vmatmul.bf16.gmra.mxu0 %v5765
      %v5823 = vpop.f32.mrf.mxu0
      %v5824 = vadd.f32 0.0, %v5823
      %v5825 = vpop.f32.mrf.mxu0
      %v5826 = vadd.f32 0.0, %v5825
      %5827 = vmatmul.bf16.gmra.mxu0 %v5768
      %v5828 = vpop.f32.mrf.mxu0
      %v5829 = vadd.f32 0.0, %v5828
      %v5830 = vpop.f32.mrf.mxu0
      %v5831 = vadd.f32 0.0, %v5830
      %5832 = vmatmul.bf16.gmra.mxu0 %v5771
      %v5833 = vpop.f32.mrf.mxu0
      %v5834 = vadd.f32 0.0, %v5833
      %v5835 = vpop.f32.mrf.mxu0
      %v5836 = vadd.f32 0.0, %v5835
      %5837 = vmatmul.bf16.gmra.mxu0 %v5774
      %v5838 = vpop.f32.mrf.mxu0
      %v5839 = vadd.f32 0.0, %v5838
      %v5840 = vpop.f32.mrf.mxu0
      %v5841 = vadd.f32 0.0, %v5840
      %5842 = vmatmul.bf16.gmra.mxu0 %v5777
      %v5843 = vpop.f32.mrf.mxu0
      %v5844 = vadd.f32 0.0, %v5843
      %v5845 = vpop.f32.mrf.mxu0
      %v5846 = vadd.f32 0.0, %v5845
      %5847 = vdwg.mxu0
      %v5848 = vadd.f32 %v5514, %v5789
      %v5849 = vadd.f32 %v5515, %v5791
      %v5850 = vadd.f32 %v5516, %v5794
      %v5851 = vadd.f32 %v5517, %v5796
      %v5852 = vadd.f32 %v5518, %v5799
      %v5853 = vadd.f32 %v5519, %v5801
      %v5854 = vadd.f32 %v5520, %v5804
      %v5855 = vadd.f32 %v5521, %v5806
      %v5856 = vadd.f32 %v5522, %v5809
      %v5857 = vadd.f32 %v5523, %v5811
      %v5858 = vadd.f32 %v5524, %v5814
      %v5859 = vadd.f32 %v5525, %v5816
      %v5860 = vadd.f32 %v5526, %v5819
      %v5861 = vadd.f32 %v5527, %v5821
      %v5862 = vadd.f32 %v5528, %v5824
      %v5863 = vadd.f32 %v5529, %v5826
      %v5864 = vadd.f32 %v5530, %v5829
      %v5865 = vadd.f32 %v5531, %v5831
      %v5866 = vadd.f32 %v5532, %v5834
      %v5867 = vadd.f32 %v5533, %v5836
      %v5868 = vadd.f32 %v5534, %v5839
      %v5869 = vadd.f32 %v5535, %v5841
      %v5870 = vadd.f32 %v5536, %v5844
      %v5871 = vadd.f32 %v5537, %v5846
      %v5872 = vld [vmem:[#allocation3 + $0x18] sm:$0x8]
      %v5873 = vld [vmem:[#allocation3 + $0x1c] sm:$0xf]
      %v5874 = vld [vmem:[#allocation3 + $0x20] sm:$0xf]
      %v5875 = vld [vmem:[#allocation3 + $0x24] sm:$0xf]
      %v5876 = vld [vmem:[#allocation3 + $0x28] sm:$0xf]
      %v5877 = vld [vmem:[#allocation3 + $0x2c] sm:$0xf]
      %v5878 = vld [vmem:[#allocation3 + $0x30] sm:$0xf]
      %v5879 = vld [vmem:[#allocation3 + $0x34] sm:$0xf]
      %v5880 = vld [vmem:[#allocation3 + $0x38] sm:$0xf]
      %v5881 = vld [vmem:[#allocation3 + $0x3c] sm:$0xf]
      %v5882 = vld [vmem:[#allocation3 + $0x40] sm:$0xf]
      %v5883 = vld [vmem:[#allocation3 + $0x44] sm:$0xf]
      %v5884 = vld [vmem:[#allocation3 + $0x48] sm:$0xf]
      %v5885 = vld [vmem:[#allocation3 + $0x4c] sm:$0xf]
      %v5886 = vld [vmem:[#allocation3 + $0x50] sm:$0xf]
      %v5887 = vld [vmem:[#allocation3 + $0x54] sm:$0xf]
      %v5888 = vld [vmem:[#allocation3 + $0x58] sm:$0xf]
      %v5889 = vld [vmem:[#allocation3 + $0x5c] sm:$0xf]
      %v5890 = vld [vmem:[#allocation3 + $0x60] sm:$0xf]
      %v5891 = vld [vmem:[#allocation3 + $0x64] sm:$0xf]
      %v5892 = vld [vmem:[#allocation3 + $0x68] sm:$0xf]
      %v5893 = vld [vmem:[#allocation3 + $0x6c] sm:$0xf]
      %v5894 = vld [vmem:[#allocation3 + $0x70] sm:$0xf]
      %v5895 = vld [vmem:[#allocation3 + $0x74] sm:$0xf]
      %v5896 = vld [vmem:[#allocation3 + $0x78] sm:$0xf]
      %s5897 = scalar_lea.vmem %s5, 96
      %v5898 = vld [vmem:[%s5897] sm:$0xf]
      %v5899 = vld [vmem:[%s5897 + $0x4] sm:$0xf]
      %v5900 = vld [vmem:[%s5897 + $0x8] sm:$0xf]
      %v5901 = vld [vmem:[%s5897 + $0xc] sm:$0xf]
      %v5927 = vunpack.c.l.b16 %v5872
      %v5928 = vunpack.c.l.b16 %v5873
      %v5929 = vunpack.c.l.b16 %v5874
      %v5930 = vunpack.c.l.b16 %v5875
      %v5931 = vunpack.c.l.b16 %v5876
      %v5932 = vunpack.c.l.b16 %v5877
      %v5933 = vunpack.c.l.b16 %v5878
      %v5934 = vunpack.c.l.b16 %v5879
      %v5935 = vunpack.c.l.b16 %v5880
      %v5936 = vunpack.c.l.b16 %v5881
      %v5937 = vunpack.c.l.b16 %v5882
      %v5938 = vunpack.c.l.b16 %v5883
      %v5939 = vunpack.c.l.b16 %v5884
      %v5940 = vunpack.c.l.b16 %v5885
      %v5941 = vunpack.c.l.b16 %v5886
      %v5942 = vunpack.c.l.b16 %v5887
      %v5943 = vunpack.c.l.b16 %v5888
      %v5944 = vunpack.c.l.b16 %v5889
      %v5945 = vunpack.c.l.b16 %v5890
      %v5946 = vunpack.c.l.b16 %v5891
      %v5947 = vunpack.c.l.b16 %v5892
      %v5948 = vunpack.c.l.b16 %v5893
      %v5949 = vunpack.c.l.b16 %v5894
      %v5950 = vunpack.c.l.b16 %v5895
      %v5951 = vunpack.c.l.b16 %v5896
      %v5952 = vpack.c.b16 %v5928, %v5927
      %v5953 = vpack.c.b16 %v5930, %v5929
      %v5954 = vpack.c.b16 %v5932, %v5931
      %v5955 = vpack.c.b16 %v5934, %v5933
      %v5956 = vpack.c.b16 %v5936, %v5935
      %v5957 = vpack.c.b16 %v5938, %v5937
      %v5958 = vpack.c.b16 %v5940, %v5939
      %v5959 = vpack.c.b16 %v5942, %v5941
      %v5960 = vpack.c.b16 %v5944, %v5943
      %v5961 = vpack.c.b16 %v5946, %v5945
      %v5962 = vpack.c.b16 %v5948, %v5947
      %v5963 = vpack.c.b16 %v5950, %v5949
      %v5964 = vpack.c.b16 %v5951, %v5951
      %v5966 = vshrl.u32 %v5952, 16
      %v5968 = vrot.slane %v5966, 3
      %v5969 = vshll.u32 %v5952, 16
      %v5971 = vrot.slane %v5969, 4
      %v5972 = vor.u32 %v5968, %v5971
      %v5974 = vshrl.u32 %v5953, 16
      %v5976 = vrot.slane %v5974, 3
      %v5977 = vshll.u32 %v5953, 16
      %v5979 = vrot.slane %v5977, 4
      %v5980 = vor.u32 %v5976, %v5979
      %v5981 = vsel %vm875, %v5972, %v5980
      %v5983 = vshrl.u32 %v5954, 16
      %v5985 = vrot.slane %v5983, 3
      %v5986 = vshll.u32 %v5954, 16
      %v5988 = vrot.slane %v5986, 4
      %v5989 = vor.u32 %v5985, %v5988
      %v5990 = vsel %vm875, %v5980, %v5989
      %v5992 = vshrl.u32 %v5955, 16
      %v5994 = vrot.slane %v5992, 3
      %v5995 = vshll.u32 %v5955, 16
      %v5997 = vrot.slane %v5995, 4
      %v5998 = vor.u32 %v5994, %v5997
      %v5999 = vsel %vm875, %v5989, %v5998
      %v6001 = vshrl.u32 %v5956, 16
      %v6003 = vrot.slane %v6001, 3
      %v6004 = vshll.u32 %v5956, 16
      %v6006 = vrot.slane %v6004, 4
      %v6007 = vor.u32 %v6003, %v6006
      %v6008 = vsel %vm875, %v5998, %v6007
      %v6010 = vshrl.u32 %v5957, 16
      %v6012 = vrot.slane %v6010, 3
      %v6013 = vshll.u32 %v5957, 16
      %v6015 = vrot.slane %v6013, 4
      %v6016 = vor.u32 %v6012, %v6015
      %v6017 = vsel %vm875, %v6007, %v6016
      %v6019 = vshrl.u32 %v5958, 16
      %v6021 = vrot.slane %v6019, 3
      %v6022 = vshll.u32 %v5958, 16
      %v6024 = vrot.slane %v6022, 4
      %v6025 = vor.u32 %v6021, %v6024
      %v6026 = vsel %vm875, %v6016, %v6025
      %v6028 = vshrl.u32 %v5959, 16
      %v6030 = vrot.slane %v6028, 3
      %v6031 = vshll.u32 %v5959, 16
      %v6033 = vrot.slane %v6031, 4
      %v6034 = vor.u32 %v6030, %v6033
      %v6035 = vsel %vm875, %v6025, %v6034
      %v6037 = vshrl.u32 %v5960, 16
      %v6039 = vrot.slane %v6037, 3
      %v6040 = vshll.u32 %v5960, 16
      %v6042 = vrot.slane %v6040, 4
      %v6043 = vor.u32 %v6039, %v6042
      %v6044 = vsel %vm875, %v6034, %v6043
      %v6046 = vshrl.u32 %v5961, 16
      %v6048 = vrot.slane %v6046, 3
      %v6049 = vshll.u32 %v5961, 16
      %v6051 = vrot.slane %v6049, 4
      %v6052 = vor.u32 %v6048, %v6051
      %v6053 = vsel %vm875, %v6043, %v6052
      %v6055 = vshrl.u32 %v5962, 16
      %v6057 = vrot.slane %v6055, 3
      %v6058 = vshll.u32 %v5962, 16
      %v6060 = vrot.slane %v6058, 4
      %v6061 = vor.u32 %v6057, %v6060
      %v6062 = vsel %vm875, %v6052, %v6061
      %v6064 = vshrl.u32 %v5963, 16
      %v6066 = vrot.slane %v6064, 3
      %v6067 = vshll.u32 %v5963, 16
      %v6069 = vrot.slane %v6067, 4
      %v6070 = vor.u32 %v6066, %v6069
      %v6071 = vsel %vm875, %v6061, %v6070
      %v6073 = vshrl.u32 %v5964, 16
      %v6075 = vrot.slane %v6073, 3
      %v6076 = vshll.u32 %v5964, 16
      %v6078 = vrot.slane %v6076, 4
      %v6079 = vor.u32 %v6075, %v6078
      %v6080 = vsel %vm875, %v6070, %v6079
      %v6085 = vunpack.c.l.b16 %v5898
      %v6086 = vunpack.c.l.b16 %v5899
      %v6087 = vunpack.c.l.b16 %v5900
      %v6088 = vunpack.c.l.b16 %v5901
      %v6089 = vpack.c.b16 %v6086, %v6085
      %v6090 = vpack.c.b16 %v6088, %v6087
      %v6094 = vsel %vm727, %v5981, 0
      %v6097 = vsel %vm727, %v5990, 0
      %v6100 = vsel %vm727, %v5999, 0
      %v6103 = vsel %vm727, %v6008, 0
      %v6106 = vsel %vm727, %v6017, 0
      %v6109 = vsel %vm727, %v6026, 0
      %v6112 = vsel %vm727, %v6035, 0
      %v6115 = vsel %vm727, %v6044, 0
      %v6118 = vsel %vm727, %v6053, 0
      %v6121 = vsel %vm727, %v6062, 0
      %v6124 = vsel %vm727, %v6071, 0
      %v6127 = vsel %vm727, %v6080, 0
      %6129 = vmatpush.bf16.msra.mxu0 0
      %6130 = vmatpush.bf16.msra.mxu0 0
      %6131 = vmatpush.bf16.msra.mxu0 0
      %6132 = vmatpush.bf16.msra.mxu0 0
      %6133 = vmatpush.bf16.msra.mxu0 0
      %6134 = vmatpush.bf16.msra.mxu0 0
      %6135 = vmatpush.bf16.msra.mxu0 %v6090
      %6136 = vmatpush.bf16.msra.mxu0 %v6089
      %6137 = vmatmul.bf16.gmra.mxu0 %v6094
      %v6138 = vpop.f32.mrf.mxu0
      %v6139 = vadd.f32 0.0, %v6138
      %v6140 = vpop.f32.mrf.mxu0
      %v6141 = vadd.f32 0.0, %v6140
      %6142 = vmatmul.bf16.gmra.mxu0 %v6097
      %v6143 = vpop.f32.mrf.mxu0
      %v6144 = vadd.f32 0.0, %v6143
      %v6145 = vpop.f32.mrf.mxu0
      %v6146 = vadd.f32 0.0, %v6145
      %6147 = vmatmul.bf16.gmra.mxu0 %v6100
      %v6148 = vpop.f32.mrf.mxu0
      %v6149 = vadd.f32 0.0, %v6148
      %v6150 = vpop.f32.mrf.mxu0
      %v6151 = vadd.f32 0.0, %v6150
      %6152 = vmatmul.bf16.gmra.mxu0 %v6103
      %v6153 = vpop.f32.mrf.mxu0
      %v6154 = vadd.f32 0.0, %v6153
      %v6155 = vpop.f32.mrf.mxu0
      %v6156 = vadd.f32 0.0, %v6155
      %6157 = vmatmul.bf16.gmra.mxu0 %v6106
      %v6158 = vpop.f32.mrf.mxu0
      %v6159 = vadd.f32 0.0, %v6158
      %v6160 = vpop.f32.mrf.mxu0
      %v6161 = vadd.f32 0.0, %v6160
      %6162 = vmatmul.bf16.gmra.mxu0 %v6109
      %v6163 = vpop.f32.mrf.mxu0
      %v6164 = vadd.f32 0.0, %v6163
      %v6165 = vpop.f32.mrf.mxu0
      %v6166 = vadd.f32 0.0, %v6165
      %6167 = vmatmul.bf16.gmra.mxu0 %v6112
      %v6168 = vpop.f32.mrf.mxu0
      %v6169 = vadd.f32 0.0, %v6168
      %v6170 = vpop.f32.mrf.mxu0
      %v6171 = vadd.f32 0.0, %v6170
      %6172 = vmatmul.bf16.gmra.mxu0 %v6115
      %v6173 = vpop.f32.mrf.mxu0
      %v6174 = vadd.f32 0.0, %v6173
      %v6175 = vpop.f32.mrf.mxu0
      %v6176 = vadd.f32 0.0, %v6175
      %6177 = vmatmul.bf16.gmra.mxu0 %v6118
      %v6178 = vpop.f32.mrf.mxu0
      %v6179 = vadd.f32 0.0, %v6178
      %v6180 = vpop.f32.mrf.mxu0
      %v6181 = vadd.f32 0.0, %v6180
      %6182 = vmatmul.bf16.gmra.mxu0 %v6121
      %v6183 = vpop.f32.mrf.mxu0
      %v6184 = vadd.f32 0.0, %v6183
      %v6185 = vpop.f32.mrf.mxu0
      %v6186 = vadd.f32 0.0, %v6185
      %6187 = vmatmul.bf16.gmra.mxu0 %v6124
      %v6188 = vpop.f32.mrf.mxu0
      %v6189 = vadd.f32 0.0, %v6188
      %v6190 = vpop.f32.mrf.mxu0
      %v6191 = vadd.f32 0.0, %v6190
      %6192 = vmatmul.bf16.gmra.mxu0 %v6127
      %v6193 = vpop.f32.mrf.mxu0
      %v6194 = vadd.f32 0.0, %v6193
      %v6195 = vpop.f32.mrf.mxu0
      %v6196 = vadd.f32 0.0, %v6195
      %6197 = vdwg.mxu0
      %v6198 = vadd.f32 %v5848, %v6139
      %v6199 = vadd.f32 %v5849, %v6141
      %v6200 = vadd.f32 %v5850, %v6144
      %v6201 = vadd.f32 %v5851, %v6146
      %v6202 = vadd.f32 %v5852, %v6149
      %v6203 = vadd.f32 %v5853, %v6151
      %v6204 = vadd.f32 %v5854, %v6154
      %v6205 = vadd.f32 %v5855, %v6156
      %v6206 = vadd.f32 %v5856, %v6159
      %v6207 = vadd.f32 %v5857, %v6161
      %v6208 = vadd.f32 %v5858, %v6164
      %v6209 = vadd.f32 %v5859, %v6166
      %v6210 = vadd.f32 %v5860, %v6169
      %v6211 = vadd.f32 %v5861, %v6171
      %v6212 = vadd.f32 %v5862, %v6174
      %v6213 = vadd.f32 %v5863, %v6176
      %v6214 = vadd.f32 %v5864, %v6179
      %v6215 = vadd.f32 %v5865, %v6181
      %v6216 = vadd.f32 %v5866, %v6184
      %v6217 = vadd.f32 %v5867, %v6186
      %v6218 = vadd.f32 %v5868, %v6189
      %v6219 = vadd.f32 %v5869, %v6191
      %v6220 = vadd.f32 %v5870, %v6194
      %v6221 = vadd.f32 %v5871, %v6196
      %s6222 = scalar_lea.vmem %s5, 112
      %v6223 = vld [vmem:[%s6222] sm:$0xf]
      %v6224 = vld [vmem:[%s6222 + $0x4] sm:$0xf]
      %v6225 = vld [vmem:[%s6222 + $0x8] sm:$0xf]
      %v6226 = vld [vmem:[%s6222 + $0xc] sm:$0xf]
      %v6227 = vpack.c.b16 %v5929, %v5928
      %v6228 = vpack.c.b16 %v5931, %v5930
      %v6229 = vpack.c.b16 %v5933, %v5932
      %v6230 = vpack.c.b16 %v5935, %v5934
      %v6231 = vpack.c.b16 %v5937, %v5936
      %v6232 = vpack.c.b16 %v5939, %v5938
      %v6233 = vpack.c.b16 %v5941, %v5940
      %v6234 = vpack.c.b16 %v5943, %v5942
      %v6235 = vpack.c.b16 %v5945, %v5944
      %v6236 = vpack.c.b16 %v5947, %v5946
      %v6237 = vpack.c.b16 %v5949, %v5948
      %v6238 = vpack.c.b16 %v5951, %v5950
      %v6243 = vunpack.c.l.b16 %v6223
      %v6244 = vunpack.c.l.b16 %v6224
      %v6245 = vunpack.c.l.b16 %v6225
      %v6246 = vunpack.c.l.b16 %v6226
      %v6247 = vpack.c.b16 %v6244, %v6243
      %v6248 = vpack.c.b16 %v6246, %v6245
      %v6252 = vsel %vm727, %v6227, 0
      %v6255 = vsel %vm727, %v6228, 0
      %v6258 = vsel %vm727, %v6229, 0
      %v6261 = vsel %vm727, %v6230, 0
      %v6264 = vsel %vm727, %v6231, 0
      %v6267 = vsel %vm727, %v6232, 0
      %v6270 = vsel %vm727, %v6233, 0
      %v6273 = vsel %vm727, %v6234, 0
      %v6276 = vsel %vm727, %v6235, 0
      %v6279 = vsel %vm727, %v6236, 0
      %v6282 = vsel %vm727, %v6237, 0
      %v6285 = vsel %vm727, %v6238, 0
      %6287 = vmatpush.bf16.msra.mxu0 0
      %6288 = vmatpush.bf16.msra.mxu0 0
      %6289 = vmatpush.bf16.msra.mxu0 0
      %6290 = vmatpush.bf16.msra.mxu0 0
      %6291 = vmatpush.bf16.msra.mxu0 0
      %6292 = vmatpush.bf16.msra.mxu0 0
      %6293 = vmatpush.bf16.msra.mxu0 %v6248
      %6294 = vmatpush.bf16.msra.mxu0 %v6247
      %6295 = vmatmul.bf16.gmra.mxu0 %v6252
      %v6296 = vpop.f32.mrf.mxu0
      %v6297 = vadd.f32 0.0, %v6296
      %v6298 = vpop.f32.mrf.mxu0
      %v6299 = vadd.f32 0.0, %v6298
      %6300 = vmatmul.bf16.gmra.mxu0 %v6255
      %v6301 = vpop.f32.mrf.mxu0
      %v6302 = vadd.f32 0.0, %v6301
      %v6303 = vpop.f32.mrf.mxu0
      %v6304 = vadd.f32 0.0, %v6303
      %6305 = vmatmul.bf16.gmra.mxu0 %v6258
      %v6306 = vpop.f32.mrf.mxu0
      %v6307 = vadd.f32 0.0, %v6306
      %v6308 = vpop.f32.mrf.mxu0
      %v6309 = vadd.f32 0.0, %v6308
      %6310 = vmatmul.bf16.gmra.mxu0 %v6261
      %v6311 = vpop.f32.mrf.mxu0
      %v6312 = vadd.f32 0.0, %v6311
      %v6313 = vpop.f32.mrf.mxu0
      %v6314 = vadd.f32 0.0, %v6313
      %6315 = vmatmul.bf16.gmra.mxu0 %v6264
      %v6316 = vpop.f32.mrf.mxu0
      %v6317 = vadd.f32 0.0, %v6316
      %v6318 = vpop.f32.mrf.mxu0
      %v6319 = vadd.f32 0.0, %v6318
      %6320 = vmatmul.bf16.gmra.mxu0 %v6267
      %v6321 = vpop.f32.mrf.mxu0
      %v6322 = vadd.f32 0.0, %v6321
      %v6323 = vpop.f32.mrf.mxu0
      %v6324 = vadd.f32 0.0, %v6323
      %6325 = vmatmul.bf16.gmra.mxu0 %v6270
      %v6326 = vpop.f32.mrf.mxu0
      %v6327 = vadd.f32 0.0, %v6326
      %v6328 = vpop.f32.mrf.mxu0
      %v6329 = vadd.f32 0.0, %v6328
      %6330 = vmatmul.bf16.gmra.mxu0 %v6273
      %v6331 = vpop.f32.mrf.mxu0
      %v6332 = vadd.f32 0.0, %v6331
      %v6333 = vpop.f32.mrf.mxu0
      %v6334 = vadd.f32 0.0, %v6333
      %6335 = vmatmul.bf16.gmra.mxu0 %v6276
      %v6336 = vpop.f32.mrf.mxu0
      %v6337 = vadd.f32 0.0, %v6336
      %v6338 = vpop.f32.mrf.mxu0
      %v6339 = vadd.f32 0.0, %v6338
      %6340 = vmatmul.bf16.gmra.mxu0 %v6279
      %v6341 = vpop.f32.mrf.mxu0
      %v6342 = vadd.f32 0.0, %v6341
      %v6343 = vpop.f32.mrf.mxu0
      %v6344 = vadd.f32 0.0, %v6343
      %6345 = vmatmul.bf16.gmra.mxu0 %v6282
      %v6346 = vpop.f32.mrf.mxu0
      %v6347 = vadd.f32 0.0, %v6346
      %v6348 = vpop.f32.mrf.mxu0
      %v6349 = vadd.f32 0.0, %v6348
      %6350 = vmatmul.bf16.gmra.mxu0 %v6285
      %v6351 = vpop.f32.mrf.mxu0
      %v6352 = vadd.f32 0.0, %v6351
      %v6353 = vpop.f32.mrf.mxu0
      %v6354 = vadd.f32 0.0, %v6353
      %6355 = vdwg.mxu0
      %v6356 = vadd.f32 %v6198, %v6297
      %v6357 = vadd.f32 %v6199, %v6299
      %v6358 = vadd.f32 %v6200, %v6302
      %v6359 = vadd.f32 %v6201, %v6304
      %v6360 = vadd.f32 %v6202, %v6307
      %v6361 = vadd.f32 %v6203, %v6309
      %v6362 = vadd.f32 %v6204, %v6312
      %v6363 = vadd.f32 %v6205, %v6314
      %v6364 = vadd.f32 %v6206, %v6317
      %v6365 = vadd.f32 %v6207, %v6319
      %v6366 = vadd.f32 %v6208, %v6322
      %v6367 = vadd.f32 %v6209, %v6324
      %v6368 = vadd.f32 %v6210, %v6327
      %v6369 = vadd.f32 %v6211, %v6329
      %v6370 = vadd.f32 %v6212, %v6332
      %v6371 = vadd.f32 %v6213, %v6334
      %v6372 = vadd.f32 %v6214, %v6337
      %v6373 = vadd.f32 %v6215, %v6339
      %v6374 = vadd.f32 %v6216, %v6342
      %v6375 = vadd.f32 %v6217, %v6344
      %v6376 = vadd.f32 %v6218, %v6347
      %v6377 = vadd.f32 %v6219, %v6349
      %v6378 = vadd.f32 %v6220, %v6352
      %v6379 = vadd.f32 %v6221, %v6354
      %v6380 = vld [vmem:[#allocation3 + $0x1c] sm:$0xf]
      %v6381 = vld [vmem:[#allocation3 + $0x20] sm:$0xf]
      %v6382 = vld [vmem:[#allocation3 + $0x24] sm:$0xf]
      %v6383 = vld [vmem:[#allocation3 + $0x28] sm:$0xf]
      %v6384 = vld [vmem:[#allocation3 + $0x2c] sm:$0xf]
      %v6385 = vld [vmem:[#allocation3 + $0x30] sm:$0xf]
      %v6386 = vld [vmem:[#allocation3 + $0x34] sm:$0xf]
      %v6387 = vld [vmem:[#allocation3 + $0x38] sm:$0xf]
      %v6388 = vld [vmem:[#allocation3 + $0x3c] sm:$0xf]
      %v6389 = vld [vmem:[#allocation3 + $0x40] sm:$0xf]
      %v6390 = vld [vmem:[#allocation3 + $0x44] sm:$0xf]
      %v6391 = vld [vmem:[#allocation3 + $0x48] sm:$0xf]
      %v6392 = vld [vmem:[#allocation3 + $0x4c] sm:$0xf]
      %v6393 = vld [vmem:[#allocation3 + $0x50] sm:$0xf]
      %v6394 = vld [vmem:[#allocation3 + $0x54] sm:$0xf]
      %v6395 = vld [vmem:[#allocation3 + $0x58] sm:$0xf]
      %v6396 = vld [vmem:[#allocation3 + $0x5c] sm:$0xf]
      %v6397 = vld [vmem:[#allocation3 + $0x60] sm:$0xf]
      %v6398 = vld [vmem:[#allocation3 + $0x64] sm:$0xf]
      %v6399 = vld [vmem:[#allocation3 + $0x68] sm:$0xf]
      %v6400 = vld [vmem:[#allocation3 + $0x6c] sm:$0xf]
      %v6401 = vld [vmem:[#allocation3 + $0x70] sm:$0xf]
      %v6402 = vld [vmem:[#allocation3 + $0x74] sm:$0xf]
      %v6403 = vld [vmem:[#allocation3 + $0x78] sm:$0xf]
      %v6404 = vld [vmem:[#allocation3 + $0x7c] sm:$0x1]
      %s6405 = scalar_lea.vmem %s5, 128
      %v6406 = vld [vmem:[%s6405] sm:$0xf]
      %v6407 = vld [vmem:[%s6405 + $0x4] sm:$0xf]
      %v6408 = vld [vmem:[%s6405 + $0x8] sm:$0xf]
      %v6409 = vld [vmem:[%s6405 + $0xc] sm:$0xf]
      %v6435 = vunpack.c.l.b16 %v6380
      %v6436 = vunpack.c.l.b16 %v6381
      %v6437 = vunpack.c.l.b16 %v6382
      %v6438 = vunpack.c.l.b16 %v6383
      %v6439 = vunpack.c.l.b16 %v6384
      %v6440 = vunpack.c.l.b16 %v6385
      %v6441 = vunpack.c.l.b16 %v6386
      %v6442 = vunpack.c.l.b16 %v6387
      %v6443 = vunpack.c.l.b16 %v6388
      %v6444 = vunpack.c.l.b16 %v6389
      %v6445 = vunpack.c.l.b16 %v6390
      %v6446 = vunpack.c.l.b16 %v6391
      %v6447 = vunpack.c.l.b16 %v6392
      %v6448 = vunpack.c.l.b16 %v6393
      %v6449 = vunpack.c.l.b16 %v6394
      %v6450 = vunpack.c.l.b16 %v6395
      %v6451 = vunpack.c.l.b16 %v6396
      %v6452 = vunpack.c.l.b16 %v6397
      %v6453 = vunpack.c.l.b16 %v6398
      %v6454 = vunpack.c.l.b16 %v6399
      %v6455 = vunpack.c.l.b16 %v6400
      %v6456 = vunpack.c.l.b16 %v6401
      %v6457 = vunpack.c.l.b16 %v6402
      %v6458 = vunpack.c.l.b16 %v6403
      %v6459 = vunpack.c.l.b16 %v6404
      %v6460 = vpack.c.b16 %v6436, %v6435
      %v6461 = vpack.c.b16 %v6438, %v6437
      %v6462 = vpack.c.b16 %v6440, %v6439
      %v6463 = vpack.c.b16 %v6442, %v6441
      %v6464 = vpack.c.b16 %v6444, %v6443
      %v6465 = vpack.c.b16 %v6446, %v6445
      %v6466 = vpack.c.b16 %v6448, %v6447
      %v6467 = vpack.c.b16 %v6450, %v6449
      %v6468 = vpack.c.b16 %v6452, %v6451
      %v6469 = vpack.c.b16 %v6454, %v6453
      %v6470 = vpack.c.b16 %v6456, %v6455
      %v6471 = vpack.c.b16 %v6458, %v6457
      %v6472 = vpack.c.b16 %v6459, %v6459
      %v6474 = vshrl.u32 %v6460, 16
      %v6476 = vshll.u32 %v6460, 16
      %v6478 = vrot.slane %v6476, 1
      %v6479 = vor.u32 %v6474, %v6478
      %v6481 = vshll.u32 %v6461, 16
      %v6483 = vrot.slane %v6481, 1
      %v6484 = vsel %vm1274, %v6479, %v6483
      %v6485 = vshrl.u32 %v6461, 16
      %v6487 = vor.u32 %v6485, %v6483
      %v6489 = vshll.u32 %v6462, 16
      %v6491 = vrot.slane %v6489, 1
      %v6492 = vsel %vm1274, %v6487, %v6491
      %v6493 = vshrl.u32 %v6462, 16
      %v6495 = vor.u32 %v6493, %v6491
      %v6497 = vshll.u32 %v6463, 16
      %v6499 = vrot.slane %v6497, 1
      %v6500 = vsel %vm1274, %v6495, %v6499
      %v6501 = vshrl.u32 %v6463, 16
      %v6503 = vor.u32 %v6501, %v6499
      %v6505 = vshll.u32 %v6464, 16
      %v6507 = vrot.slane %v6505, 1
      %v6508 = vsel %vm1274, %v6503, %v6507
      %v6509 = vshrl.u32 %v6464, 16
      %v6511 = vor.u32 %v6509, %v6507
      %v6513 = vshll.u32 %v6465, 16
      %v6515 = vrot.slane %v6513, 1
      %v6516 = vsel %vm1274, %v6511, %v6515
      %v6517 = vshrl.u32 %v6465, 16
      %v6519 = vor.u32 %v6517, %v6515
      %v6521 = vshll.u32 %v6466, 16
      %v6523 = vrot.slane %v6521, 1
      %v6524 = vsel %vm1274, %v6519, %v6523
      %v6525 = vshrl.u32 %v6466, 16
      %v6527 = vor.u32 %v6525, %v6523
      %v6529 = vshll.u32 %v6467, 16
      %v6531 = vrot.slane %v6529, 1
      %v6532 = vsel %vm1274, %v6527, %v6531
      %v6533 = vshrl.u32 %v6467, 16
      %v6535 = vor.u32 %v6533, %v6531
      %v6537 = vshll.u32 %v6468, 16
      %v6539 = vrot.slane %v6537, 1
      %v6540 = vsel %vm1274, %v6535, %v6539
      %v6541 = vshrl.u32 %v6468, 16
      %v6543 = vor.u32 %v6541, %v6539
      %v6545 = vshll.u32 %v6469, 16
      %v6547 = vrot.slane %v6545, 1
      %v6548 = vsel %vm1274, %v6543, %v6547
      %v6549 = vshrl.u32 %v6469, 16
      %v6551 = vor.u32 %v6549, %v6547
      %v6553 = vshll.u32 %v6470, 16
      %v6555 = vrot.slane %v6553, 1
      %v6556 = vsel %vm1274, %v6551, %v6555
      %v6557 = vshrl.u32 %v6470, 16
      %v6559 = vor.u32 %v6557, %v6555
      %v6561 = vshll.u32 %v6471, 16
      %v6563 = vrot.slane %v6561, 1
      %v6564 = vsel %vm1274, %v6559, %v6563
      %v6565 = vshrl.u32 %v6471, 16
      %v6567 = vor.u32 %v6565, %v6563
      %v6569 = vshll.u32 %v6472, 16
      %v6571 = vrot.slane %v6569, 1
      %v6572 = vsel %vm1274, %v6567, %v6571
      %v6577 = vunpack.c.l.b16 %v6406
      %v6578 = vunpack.c.l.b16 %v6407
      %v6579 = vunpack.c.l.b16 %v6408
      %v6580 = vunpack.c.l.b16 %v6409
      %v6581 = vpack.c.b16 %v6578, %v6577
      %v6582 = vpack.c.b16 %v6580, %v6579
      %v6586 = vsel %vm727, %v6484, 0
      %v6589 = vsel %vm727, %v6492, 0
      %v6592 = vsel %vm727, %v6500, 0
      %v6595 = vsel %vm727, %v6508, 0
      %v6598 = vsel %vm727, %v6516, 0
      %v6601 = vsel %vm727, %v6524, 0
      %v6604 = vsel %vm727, %v6532, 0
      %v6607 = vsel %vm727, %v6540, 0
      %v6610 = vsel %vm727, %v6548, 0
      %v6613 = vsel %vm727, %v6556, 0
      %v6616 = vsel %vm727, %v6564, 0
      %v6619 = vsel %vm727, %v6572, 0
      %6621 = vmatpush.bf16.msra.mxu0 0
      %6622 = vmatpush.bf16.msra.mxu0 0
      %6623 = vmatpush.bf16.msra.mxu0 0
      %6624 = vmatpush.bf16.msra.mxu0 0
      %6625 = vmatpush.bf16.msra.mxu0 0
      %6626 = vmatpush.bf16.msra.mxu0 0
      %6627 = vmatpush.bf16.msra.mxu0 %v6582
      %6628 = vmatpush.bf16.msra.mxu0 %v6581
      %6629 = vmatmul.bf16.gmra.mxu0 %v6586
      %v6630 = vpop.f32.mrf.mxu0
      %v6631 = vadd.f32 0.0, %v6630
      %v6632 = vpop.f32.mrf.mxu0
      %v6633 = vadd.f32 0.0, %v6632
      %6634 = vmatmul.bf16.gmra.mxu0 %v6589
      %v6635 = vpop.f32.mrf.mxu0
      %v6636 = vadd.f32 0.0, %v6635
      %v6637 = vpop.f32.mrf.mxu0
      %v6638 = vadd.f32 0.0, %v6637
      %6639 = vmatmul.bf16.gmra.mxu0 %v6592
      %v6640 = vpop.f32.mrf.mxu0
      %v6641 = vadd.f32 0.0, %v6640
      %v6642 = vpop.f32.mrf.mxu0
      %v6643 = vadd.f32 0.0, %v6642
      %6644 = vmatmul.bf16.gmra.mxu0 %v6595
      %v6645 = vpop.f32.mrf.mxu0
      %v6646 = vadd.f32 0.0, %v6645
      %v6647 = vpop.f32.mrf.mxu0
      %v6648 = vadd.f32 0.0, %v6647
      %6649 = vmatmul.bf16.gmra.mxu0 %v6598
      %v6650 = vpop.f32.mrf.mxu0
      %v6651 = vadd.f32 0.0, %v6650
      %v6652 = vpop.f32.mrf.mxu0
      %v6653 = vadd.f32 0.0, %v6652
      %6654 = vmatmul.bf16.gmra.mxu0 %v6601
      %v6655 = vpop.f32.mrf.mxu0
      %v6656 = vadd.f32 0.0, %v6655
      %v6657 = vpop.f32.mrf.mxu0
      %v6658 = vadd.f32 0.0, %v6657
      %6659 = vmatmul.bf16.gmra.mxu0 %v6604
      %v6660 = vpop.f32.mrf.mxu0
      %v6661 = vadd.f32 0.0, %v6660
      %v6662 = vpop.f32.mrf.mxu0
      %v6663 = vadd.f32 0.0, %v6662
      %6664 = vmatmul.bf16.gmra.mxu0 %v6607
      %v6665 = vpop.f32.mrf.mxu0
      %v6666 = vadd.f32 0.0, %v6665
      %v6667 = vpop.f32.mrf.mxu0
      %v6668 = vadd.f32 0.0, %v6667
      %6669 = vmatmul.bf16.gmra.mxu0 %v6610
      %v6670 = vpop.f32.mrf.mxu0
      %v6671 = vadd.f32 0.0, %v6670
      %v6672 = vpop.f32.mrf.mxu0
      %v6673 = vadd.f32 0.0, %v6672
      %6674 = vmatmul.bf16.gmra.mxu0 %v6613
      %v6675 = vpop.f32.mrf.mxu0
      %v6676 = vadd.f32 0.0, %v6675
      %v6677 = vpop.f32.mrf.mxu0
      %v6678 = vadd.f32 0.0, %v6677
      %6679 = vmatmul.bf16.gmra.mxu0 %v6616
      %v6680 = vpop.f32.mrf.mxu0
      %v6681 = vadd.f32 0.0, %v6680
      %v6682 = vpop.f32.mrf.mxu0
      %v6683 = vadd.f32 0.0, %v6682
      %6684 = vmatmul.bf16.gmra.mxu0 %v6619
      %v6685 = vpop.f32.mrf.mxu0
      %v6686 = vadd.f32 0.0, %v6685
      %v6687 = vpop.f32.mrf.mxu0
      %v6688 = vadd.f32 0.0, %v6687
      %6689 = vdwg.mxu0
      %v6690 = vadd.f32 %v6356, %v6631
      %v6691 = vadd.f32 %v6357, %v6633
      %v6692 = vadd.f32 %v6358, %v6636
      %v6693 = vadd.f32 %v6359, %v6638
      %v6694 = vadd.f32 %v6360, %v6641
      %v6695 = vadd.f32 %v6361, %v6643
      %v6696 = vadd.f32 %v6362, %v6646
      %v6697 = vadd.f32 %v6363, %v6648
      %v6698 = vadd.f32 %v6364, %v6651
      %v6699 = vadd.f32 %v6365, %v6653
      %v6700 = vadd.f32 %v6366, %v6656
      %v6701 = vadd.f32 %v6367, %v6658
      %v6702 = vadd.f32 %v6368, %v6661
      %v6703 = vadd.f32 %v6369, %v6663
      %v6704 = vadd.f32 %v6370, %v6666
      %v6705 = vadd.f32 %v6371, %v6668
      %v6706 = vadd.f32 %v6372, %v6671
      %v6707 = vadd.f32 %v6373, %v6673
      %v6708 = vadd.f32 %v6374, %v6676
      %v6709 = vadd.f32 %v6375, %v6678
      %v6710 = vadd.f32 %v6376, %v6681
      %v6711 = vadd.f32 %v6377, %v6683
      %v6712 = vadd.f32 %v6378, %v6686
      %v6713 = vadd.f32 %v6379, %v6688
      %v6714 = vld [vmem:[%s6] sm:$0x1]
      %v6716 = vperm.slane %v6714, 0
      %v6718 = vadd.f32 %v6690, %v6716
      %v6719 = vadd.f32 %v6691, %v6716
      %v6720 = vadd.f32 %v6692, %v6716
      %v6721 = vadd.f32 %v6693, %v6716
      %v6722 = vadd.f32 %v6694, %v6716
      %v6723 = vadd.f32 %v6695, %v6716
      %v6724 = vadd.f32 %v6696, %v6716
      %v6725 = vadd.f32 %v6697, %v6716
      %v6726 = vadd.f32 %v6698, %v6716
      %v6727 = vadd.f32 %v6699, %v6716
      %v6728 = vadd.f32 %v6700, %v6716
      %v6729 = vadd.f32 %v6701, %v6716
      %v6730 = vadd.f32 %v6702, %v6716
      %v6731 = vadd.f32 %v6703, %v6716
      %v6732 = vadd.f32 %v6704, %v6716
      %v6733 = vadd.f32 %v6705, %v6716
      %v6734 = vadd.f32 %v6706, %v6716
      %v6735 = vadd.f32 %v6707, %v6716
      %v6736 = vadd.f32 %v6708, %v6716
      %v6737 = vadd.f32 %v6709, %v6716
      %v6738 = vadd.f32 %v6710, %v6716
      %v6739 = vadd.f32 %v6711, %v6716
      %v6740 = vadd.f32 %v6712, %v6716
      %v6741 = vadd.f32 %v6713, %v6716
      %v6742 = vsel %vm3964, %v6718, 0.0
      %v6743 = vsel %vm3965, %v6719, 0.0
      %v6744 = vsel %vm3966, %v6720, 0.0
      %v6745 = vsel %vm3967, %v6721, 0.0
      %v6746 = vsel %vm3968, %v6722, 0.0
      %v6747 = vsel %vm3969, %v6723, 0.0
      %v6748 = vsel %vm3970, %v6724, 0.0
      %v6749 = vsel %vm3971, %v6725, 0.0
      %v6750 = vsel %vm3972, %v6726, 0.0
      %v6751 = vsel %vm3973, %v6727, 0.0
      %v6752 = vsel %vm3974, %v6728, 0.0
      %v6753 = vsel %vm3975, %v6729, 0.0
      %v6754 = vsel %vm3976, %v6730, 0.0
      %v6755 = vsel %vm3977, %v6731, 0.0
      %v6756 = vsel %vm3978, %v6732, 0.0
      %v6757 = vsel %vm3979, %v6733, 0.0
      %v6758 = vsel %vm3980, %v6734, 0.0
      %v6759 = vsel %vm3981, %v6735, 0.0
      %v6760 = vsel %vm3982, %v6736, 0.0
      %v6761 = vsel %vm3983, %v6737, 0.0
      %v6762 = vsel %vm3984, %v6738, 0.0
      %v6763 = vsel %vm3985, %v6739, 0.0
      %v6764 = vsel %vm3986, %v6740, 0.0
      %v6765 = vsel %vm3987, %v6741, 0.0
      %v6766 = vld [vmem:[%s477] sm:$0xf]
      %v6767 = vld [vmem:[%s477 + $0x4] sm:$0xf]
      %v6768 = vld [vmem:[%s477 + $0x8] sm:$0xf]
      %v6769 = vld [vmem:[%s477 + $0xc] sm:$0xf]
      %v6770 = vld [vmem:[%s477 + $0x10] sm:$0xf]
      %v6771 = vld [vmem:[%s477 + $0x14] sm:$0xf]
      %v6772 = vld [vmem:[%s477 + $0x18] sm:$0xf]
      %v6773 = vld [vmem:[%s477 + $0x1c] sm:$0xf]
      %v6774 = vld [vmem:[%s477 + $0x20] sm:$0xf]
      %v6775 = vld [vmem:[%s477 + $0x24] sm:$0xf]
      %v6776 = vld [vmem:[%s477 + $0x28] sm:$0xf]
      %v6777 = vld [vmem:[%s477 + $0x2c] sm:$0xf]
      %v6778 = vld [vmem:[%s477 + $0x30] sm:$0xf]
      %v6779 = vld [vmem:[%s477 + $0x34] sm:$0xf]
      %v6780 = vld [vmem:[%s477 + $0x38] sm:$0xf]
      %v6781 = vld [vmem:[%s477 + $0x3c] sm:$0xf]
      %v6782 = vld [vmem:[%s477 + $0x40] sm:$0xf]
      %v6783 = vld [vmem:[%s477 + $0x44] sm:$0xf]
      %v6784 = vld [vmem:[%s477 + $0x48] sm:$0xf]
      %v6785 = vld [vmem:[%s477 + $0x4c] sm:$0xf]
      %v6786 = vld [vmem:[%s477 + $0x50] sm:$0xf]
      %v6787 = vld [vmem:[%s477 + $0x54] sm:$0xf]
      %v6788 = vld [vmem:[%s477 + $0x58] sm:$0xf]
      %v6789 = vld [vmem:[%s477 + $0x5c] sm:$0xf]
      %v6790 = vunpack.c.l.bf16 %v6766
      %v6791 = vunpack.c.l.bf16 %v6767
      %v6792 = vunpack.c.l.bf16 %v6768
      %v6793 = vunpack.c.l.bf16 %v6769
      %v6794 = vunpack.c.l.bf16 %v6770
      %v6795 = vunpack.c.l.bf16 %v6771
      %v6796 = vunpack.c.l.bf16 %v6772
      %v6797 = vunpack.c.l.bf16 %v6773
      %v6798 = vunpack.c.l.bf16 %v6774
      %v6799 = vunpack.c.l.bf16 %v6775
      %v6800 = vunpack.c.l.bf16 %v6776
      %v6801 = vunpack.c.l.bf16 %v6777
      %v6802 = vunpack.c.l.bf16 %v6778
      %v6803 = vunpack.c.l.bf16 %v6779
      %v6804 = vunpack.c.l.bf16 %v6780
      %v6805 = vunpack.c.l.bf16 %v6781
      %v6806 = vunpack.c.l.bf16 %v6782
      %v6807 = vunpack.c.l.bf16 %v6783
      %v6808 = vunpack.c.l.bf16 %v6784
      %v6809 = vunpack.c.l.bf16 %v6785
      %v6810 = vunpack.c.l.bf16 %v6786
      %v6811 = vunpack.c.l.bf16 %v6787
      %v6812 = vunpack.c.l.bf16 %v6788
      %v6813 = vunpack.c.l.bf16 %v6789
      %v6814 = vadd.f32 %v6742, %v6790
      %v6815 = vadd.f32 %v6743, %v6791
      %v6816 = vadd.f32 %v6744, %v6792
      %v6817 = vadd.f32 %v6745, %v6793
      %v6818 = vadd.f32 %v6746, %v6794
      %v6819 = vadd.f32 %v6747, %v6795
      %v6820 = vadd.f32 %v6748, %v6796
      %v6821 = vadd.f32 %v6749, %v6797
      %v6822 = vadd.f32 %v6750, %v6798
      %v6823 = vadd.f32 %v6751, %v6799
      %v6824 = vadd.f32 %v6752, %v6800
      %v6825 = vadd.f32 %v6753, %v6801
      %v6826 = vadd.f32 %v6754, %v6802
      %v6827 = vadd.f32 %v6755, %v6803
      %v6828 = vadd.f32 %v6756, %v6804
      %v6829 = vadd.f32 %v6757, %v6805
      %v6830 = vadd.f32 %v6758, %v6806
      %v6831 = vadd.f32 %v6759, %v6807
      %v6832 = vadd.f32 %v6760, %v6808
      %v6833 = vadd.f32 %v6761, %v6809
      %v6834 = vadd.f32 %v6762, %v6810
      %v6835 = vadd.f32 %v6763, %v6811
      %v6836 = vadd.f32 %v6764, %v6812
      %v6837 = vadd.f32 %v6765, %v6813
      %v6838 = vpack.c.bf16 %v6814, %v6814
      %v6839 = vpack.c.bf16 %v6815, %v6815
      %v6840 = vpack.c.bf16 %v6816, %v6816
      %v6841 = vpack.c.bf16 %v6817, %v6817
      %v6842 = vpack.c.bf16 %v6818, %v6818
      %v6843 = vpack.c.bf16 %v6819, %v6819
      %v6844 = vpack.c.bf16 %v6820, %v6820
      %v6845 = vpack.c.bf16 %v6821, %v6821
      %v6846 = vpack.c.bf16 %v6822, %v6822
      %v6847 = vpack.c.bf16 %v6823, %v6823
      %v6848 = vpack.c.bf16 %v6824, %v6824
      %v6849 = vpack.c.bf16 %v6825, %v6825
      %v6850 = vpack.c.bf16 %v6826, %v6826
      %v6851 = vpack.c.bf16 %v6827, %v6827
      %v6852 = vpack.c.bf16 %v6828, %v6828
      %v6853 = vpack.c.bf16 %v6829, %v6829
      %v6854 = vpack.c.bf16 %v6830, %v6830
      %v6855 = vpack.c.bf16 %v6831, %v6831
      %v6856 = vpack.c.bf16 %v6832, %v6832
      %v6857 = vpack.c.bf16 %v6833, %v6833
      %v6858 = vpack.c.bf16 %v6834, %v6834
      %v6859 = vpack.c.bf16 %v6835, %v6835
      %v6860 = vpack.c.bf16 %v6836, %v6836
      %v6861 = vpack.c.bf16 %v6837, %v6837
      %6862 = vst.msk [vmem:[%s518] sm:$0xf] %vm525, %v6838
      %6863 = vst.msk [vmem:[%s518 + $0x4] sm:$0xf] %vm525, %v6839
      %6864 = vst.msk [vmem:[%s518 + $0x8] sm:$0xf] %vm525, %v6840
      %6865 = vst.msk [vmem:[%s518 + $0xc] sm:$0xf] %vm525, %v6841
      %6866 = vst.msk [vmem:[%s518 + $0x10] sm:$0xf] %vm525, %v6842
      %6867 = vst.msk [vmem:[%s518 + $0x14] sm:$0xf] %vm525, %v6843
      %6868 = vst.msk [vmem:[%s518 + $0x18] sm:$0xf] %vm525, %v6844
      %6869 = vst.msk [vmem:[%s518 + $0x1c] sm:$0xf] %vm525, %v6845
      %6870 = vst.msk [vmem:[%s518 + $0x20] sm:$0xf] %vm525, %v6846
      %6871 = vst.msk [vmem:[%s518 + $0x24] sm:$0xf] %vm525, %v6847
      %6872 = vst.msk [vmem:[%s518 + $0x28] sm:$0xf] %vm525, %v6848
      %6873 = vst.msk [vmem:[%s518 + $0x2c] sm:$0xf] %vm525, %v6849
      %6874 = vst.msk [vmem:[%s518 + $0x30] sm:$0xf] %vm525, %v6850
      %6875 = vst.msk [vmem:[%s518 + $0x34] sm:$0xf] %vm525, %v6851
      %6876 = vst.msk [vmem:[%s518 + $0x38] sm:$0xf] %vm525, %v6852
      %6877 = vst.msk [vmem:[%s518 + $0x3c] sm:$0xf] %vm525, %v6853
      %6878 = vst.msk [vmem:[%s518 + $0x40] sm:$0xf] %vm525, %v6854
      %6879 = vst.msk [vmem:[%s518 + $0x44] sm:$0xf] %vm525, %v6855
      %6880 = vst.msk [vmem:[%s518 + $0x48] sm:$0xf] %vm525, %v6856
      %6881 = vst.msk [vmem:[%s518 + $0x4c] sm:$0xf] %vm525, %v6857
      %6882 = vst.msk [vmem:[%s518 + $0x50] sm:$0xf] %vm525, %v6858
      %6883 = vst.msk [vmem:[%s518 + $0x54] sm:$0xf] %vm525, %v6859
      %6884 = vst.msk [vmem:[%s518 + $0x58] sm:$0xf] %vm525, %v6860
      %6885 = vst.msk [vmem:[%s518 + $0x5c] sm:$0xf] %vm525, %v6861
      %v6886 = vld [vmem:[%s7] sm:$0xf]
      %v6887 = vld [vmem:[%s7 + $0x4] sm:$0xf]
      %v6888 = vld [vmem:[%s7 + $0x8] sm:$0xf]
      %v6889 = vld [vmem:[%s7 + $0xc] sm:$0xf]
      %v6890 = vld [vmem:[%s8] sm:$0x1]
      %v6892 = vperm.slane %v6890, 0
      %v6918 = vunpack.c.l.b16 %v6838
      %v6919 = vunpack.c.l.b16 %v6839
      %v6920 = vunpack.c.l.b16 %v6840
      %v6921 = vunpack.c.l.b16 %v6841
      %v6922 = vunpack.c.l.b16 %v6842
      %v6923 = vunpack.c.l.b16 %v6843
      %v6924 = vunpack.c.l.b16 %v6844
      %v6925 = vunpack.c.l.b16 %v6845
      %v6926 = vunpack.c.l.b16 %v6846
      %v6927 = vunpack.c.l.b16 %v6847
      %v6928 = vunpack.c.l.b16 %v6848
      %v6929 = vunpack.c.l.b16 %v6849
      %v6930 = vunpack.c.l.b16 %v6850
      %v6931 = vunpack.c.l.b16 %v6851
      %v6932 = vunpack.c.l.b16 %v6852
      %v6933 = vunpack.c.l.b16 %v6853
      %v6934 = vunpack.c.l.b16 %v6854
      %v6935 = vunpack.c.l.b16 %v6855
      %v6936 = vunpack.c.l.b16 %v6856
      %v6937 = vunpack.c.l.b16 %v6857
      %v6938 = vunpack.c.l.b16 %v6858
      %v6939 = vunpack.c.l.b16 %v6859
      %v6940 = vunpack.c.l.b16 %v6860
      %v6941 = vunpack.c.l.b16 %v6861
      %v6942 = vpack.c.b16 %v6919, %v6918
      %v6943 = vpack.c.b16 %v6921, %v6920
      %v6944 = vpack.c.b16 %v6923, %v6922
      %v6945 = vpack.c.b16 %v6925, %v6924
      %v6946 = vpack.c.b16 %v6927, %v6926
      %v6947 = vpack.c.b16 %v6929, %v6928
      %v6948 = vpack.c.b16 %v6931, %v6930
      %v6949 = vpack.c.b16 %v6933, %v6932
      %v6950 = vpack.c.b16 %v6935, %v6934
      %v6951 = vpack.c.b16 %v6937, %v6936
      %v6952 = vpack.c.b16 %v6939, %v6938
      %v6953 = vpack.c.b16 %v6941, %v6940
      %v6958 = vunpack.c.l.b16 %v6886
      %v6959 = vunpack.c.l.b16 %v6887
      %v6960 = vunpack.c.l.b16 %v6888
      %v6961 = vunpack.c.l.b16 %v6889
      %v6962 = vpack.c.b16 %v6959, %v6958
      %v6963 = vpack.c.b16 %v6961, %v6960
      %v6967 = vsel %vm727, %v6942, 0
      %v6970 = vsel %vm727, %v6943, 0
      %v6973 = vsel %vm727, %v6944, 0
      %v6976 = vsel %vm727, %v6945, 0
      %v6979 = vsel %vm727, %v6946, 0
      %v6982 = vsel %vm727, %v6947, 0
      %v6985 = vsel %vm727, %v6948, 0
      %v6988 = vsel %vm727, %v6949, 0
      %v6991 = vsel %vm727, %v6950, 0
      %v6994 = vsel %vm727, %v6951, 0
      %v6997 = vsel %vm727, %v6952, 0
      %v7000 = vsel %vm727, %v6953, 0
      %7002 = vmatpush.bf16.msra.mxu0 0
      %7003 = vmatpush.bf16.msra.mxu0 0
      %7004 = vmatpush.bf16.msra.mxu0 0
      %7005 = vmatpush.bf16.msra.mxu0 0
      %7006 = vmatpush.bf16.msra.mxu0 0
      %7007 = vmatpush.bf16.msra.mxu0 0
      %7008 = vmatpush.bf16.msra.mxu0 %v6963
      %7009 = vmatpush.bf16.msra.mxu0 %v6962
      %7010 = vmatmul.bf16.gmra.mxu0 %v6967
      %v7011 = vpop.f32.mrf.mxu0
      %v7012 = vadd.f32 %v6892, %v7011
      %v7013 = vpop.f32.mrf.mxu0
      %v7014 = vadd.f32 %v6892, %v7013
      %7015 = vmatmul.bf16.gmra.mxu0 %v6970
      %v7016 = vpop.f32.mrf.mxu0
      %v7017 = vadd.f32 %v6892, %v7016
      %v7018 = vpop.f32.mrf.mxu0
      %v7019 = vadd.f32 %v6892, %v7018
      %7020 = vmatmul.bf16.gmra.mxu0 %v6973
      %v7021 = vpop.f32.mrf.mxu0
      %v7022 = vadd.f32 %v6892, %v7021
      %v7023 = vpop.f32.mrf.mxu0
      %v7024 = vadd.f32 %v6892, %v7023
      %7025 = vmatmul.bf16.gmra.mxu0 %v6976
      %v7026 = vpop.f32.mrf.mxu0
      %v7027 = vadd.f32 %v6892, %v7026
      %v7028 = vpop.f32.mrf.mxu0
      %v7029 = vadd.f32 %v6892, %v7028
      %7030 = vmatmul.bf16.gmra.mxu0 %v6979
      %v7031 = vpop.f32.mrf.mxu0
      %v7032 = vadd.f32 %v6892, %v7031
      %v7033 = vpop.f32.mrf.mxu0
      %v7034 = vadd.f32 %v6892, %v7033
      %7035 = vmatmul.bf16.gmra.mxu0 %v6982
      %v7036 = vpop.f32.mrf.mxu0
      %v7037 = vadd.f32 %v6892, %v7036
      %v7038 = vpop.f32.mrf.mxu0
      %v7039 = vadd.f32 %v6892, %v7038
      %7040 = vmatmul.bf16.gmra.mxu0 %v6985
      %v7041 = vpop.f32.mrf.mxu0
      %v7042 = vadd.f32 %v6892, %v7041
      %v7043 = vpop.f32.mrf.mxu0
      %v7044 = vadd.f32 %v6892, %v7043
      %7045 = vmatmul.bf16.gmra.mxu0 %v6988
      %v7046 = vpop.f32.mrf.mxu0
      %v7047 = vadd.f32 %v6892, %v7046
      %v7048 = vpop.f32.mrf.mxu0
      %v7049 = vadd.f32 %v6892, %v7048
      %7050 = vmatmul.bf16.gmra.mxu0 %v6991
      %v7051 = vpop.f32.mrf.mxu0
      %v7052 = vadd.f32 %v6892, %v7051
      %v7053 = vpop.f32.mrf.mxu0
      %v7054 = vadd.f32 %v6892, %v7053
      %7055 = vmatmul.bf16.gmra.mxu0 %v6994
      %v7056 = vpop.f32.mrf.mxu0
      %v7057 = vadd.f32 %v6892, %v7056
      %v7058 = vpop.f32.mrf.mxu0
      %v7059 = vadd.f32 %v6892, %v7058
      %7060 = vmatmul.bf16.gmra.mxu0 %v6997
      %v7061 = vpop.f32.mrf.mxu0
      %v7062 = vadd.f32 %v6892, %v7061
      %v7063 = vpop.f32.mrf.mxu0
      %v7064 = vadd.f32 %v6892, %v7063
      %7065 = vmatmul.bf16.gmra.mxu0 %v7000
      %v7066 = vpop.f32.mrf.mxu0
      %v7067 = vadd.f32 %v6892, %v7066
      %v7068 = vpop.f32.mrf.mxu0
      %v7069 = vadd.f32 %v6892, %v7068
      %7070 = vdwg.mxu0
      %v7071 = vmax.f32 %v7012, 0.0
      %v7072 = vmax.f32 %v7014, 0.0
      %v7073 = vmax.f32 %v7017, 0.0
      %v7074 = vmax.f32 %v7019, 0.0
      %v7075 = vmax.f32 %v7022, 0.0
      %v7076 = vmax.f32 %v7024, 0.0
      %v7077 = vmax.f32 %v7027, 0.0
      %v7078 = vmax.f32 %v7029, 0.0
      %v7079 = vmax.f32 %v7032, 0.0
      %v7080 = vmax.f32 %v7034, 0.0
      %v7081 = vmax.f32 %v7037, 0.0
      %v7082 = vmax.f32 %v7039, 0.0
      %v7083 = vmax.f32 %v7042, 0.0
      %v7084 = vmax.f32 %v7044, 0.0
      %v7085 = vmax.f32 %v7047, 0.0
      %v7086 = vmax.f32 %v7049, 0.0
      %v7087 = vmax.f32 %v7052, 0.0
      %v7088 = vmax.f32 %v7054, 0.0
      %v7089 = vmax.f32 %v7057, 0.0
      %v7090 = vmax.f32 %v7059, 0.0
      %v7091 = vmax.f32 %v7062, 0.0
      %v7092 = vmax.f32 %v7064, 0.0
      %v7093 = vmax.f32 %v7067, 0.0
      %v7094 = vmax.f32 %v7069, 0.0
      %v7095 = vsel %vm3964, %v7071, 0.0
      %v7096 = vsel %vm3965, %v7072, 0.0
      %v7097 = vsel %vm3966, %v7073, 0.0
      %v7098 = vsel %vm3967, %v7074, 0.0
      %v7099 = vsel %vm3968, %v7075, 0.0
      %v7100 = vsel %vm3969, %v7076, 0.0
      %v7101 = vsel %vm3970, %v7077, 0.0
      %v7102 = vsel %vm3971, %v7078, 0.0
      %v7103 = vsel %vm3972, %v7079, 0.0
      %v7104 = vsel %vm3973, %v7080, 0.0
      %v7105 = vsel %vm3974, %v7081, 0.0
      %v7106 = vsel %vm3975, %v7082, 0.0
      %v7107 = vsel %vm3976, %v7083, 0.0
      %v7108 = vsel %vm3977, %v7084, 0.0
      %v7109 = vsel %vm3978, %v7085, 0.0
      %v7110 = vsel %vm3979, %v7086, 0.0
      %v7111 = vsel %vm3980, %v7087, 0.0
      %v7112 = vsel %vm3981, %v7088, 0.0
      %v7113 = vsel %vm3982, %v7089, 0.0
      %v7114 = vsel %vm3983, %v7090, 0.0
      %v7115 = vsel %vm3984, %v7091, 0.0
      %v7116 = vsel %vm3985, %v7092, 0.0
      %v7117 = vsel %vm3986, %v7093, 0.0
      %v7118 = vsel %vm3987, %v7094, 0.0
      %v7119 = vsel %vm727, %v7095, 0.0
      %v7120 = vsel %vm727, %v7096, 0.0
      %v7121 = vadd.f32 %v7119, %v7120
      %v7122 = vsel %vm727, %v7097, 0.0
      %v7123 = vadd.f32 %v7121, %v7122
      %v7124 = vsel %vm727, %v7098, 0.0
      %v7125 = vadd.f32 %v7123, %v7124
      %v7126 = vsel %vm727, %v7099, 0.0
      %v7127 = vadd.f32 %v7125, %v7126
      %v7128 = vsel %vm727, %v7100, 0.0
      %v7129 = vadd.f32 %v7127, %v7128
      %v7130 = vsel %vm727, %v7101, 0.0
      %v7131 = vadd.f32 %v7129, %v7130
      %v7132 = vsel %vm727, %v7102, 0.0
      %v7133 = vadd.f32 %v7131, %v7132
      %v7134 = vsel %vm727, %v7103, 0.0
      %v7135 = vadd.f32 %v7133, %v7134
      %v7136 = vsel %vm727, %v7104, 0.0
      %v7137 = vadd.f32 %v7135, %v7136
      %v7138 = vsel %vm727, %v7105, 0.0
      %v7139 = vadd.f32 %v7137, %v7138
      %v7140 = vsel %vm727, %v7106, 0.0
      %v7141 = vadd.f32 %v7139, %v7140
      %v7142 = vsel %vm727, %v7107, 0.0
      %v7143 = vadd.f32 %v7141, %v7142
      %v7144 = vsel %vm727, %v7108, 0.0
      %v7145 = vadd.f32 %v7143, %v7144
      %v7146 = vsel %vm727, %v7109, 0.0
      %v7147 = vadd.f32 %v7145, %v7146
      %v7148 = vsel %vm727, %v7110, 0.0
      %v7149 = vadd.f32 %v7147, %v7148
      %v7150 = vsel %vm727, %v7111, 0.0
      %v7151 = vadd.f32 %v7149, %v7150
      %v7152 = vsel %vm727, %v7112, 0.0
      %v7153 = vadd.f32 %v7151, %v7152
      %v7154 = vsel %vm727, %v7113, 0.0
      %v7155 = vadd.f32 %v7153, %v7154
      %v7156 = vsel %vm727, %v7114, 0.0
      %v7157 = vadd.f32 %v7155, %v7156
      %v7158 = vsel %vm727, %v7115, 0.0
      %v7159 = vadd.f32 %v7157, %v7158
      %v7160 = vsel %vm727, %v7116, 0.0
      %v7161 = vadd.f32 %v7159, %v7160
      %v7162 = vsel %vm727, %v7117, 0.0
      %v7163 = vadd.f32 %v7161, %v7162
      %v7164 = vsel %vm727, %v7118, 0.0
      %v7165 = vadd.f32 %v7163, %v7164
      %v7166 = vrot.slane %v7165, 4
      %v7167 = vadd.f32 %v7165, %v7166
      %v7168 = vrot.slane %v7167, 2
      %v7169 = vadd.f32 %v7167, %v7168
      %v7170 = vrot.slane %v7169, 1
      %v7171 = vadd.f32 %v7169, %v7170
      %p7172 = scmp.eq.s32.totalorder %s27, 0
      // Predicated region
      $region57: #{_lambda_.4} parent=55 // pred_check
        %p7173 = pneg %p7172
      $region58: #{_lambda_.4} parent=55 // pred_check_branch
        %7175 = sbr.rel (%p7173) target = $region60
      $region59: #{_lambda_.4} parent=55 // pred_region
        %7176 = vst.msk [vmem:[#allocation4] sm:$0xff] %vm727, 0.0
      $region60: #{_lambda_.4} parent=55 // pred_fallthru
        _
      %v7177 = vld [vmem:[#allocation4] sm:$0xff]
      %v7178 = vadd.f32 %v7177, %v7171
      %7179 = vst.msk [vmem:[#allocation4] sm:$0xff] %vm727, %v7178
      %v7180 = vld [vmem:[#allocation4] sm:$0xff]
      %7181 = vst.msk [vmem:[%s523] sm:$0xff] %vm727, %v7180
      %s7182 = smul.u32 24, %s27
      %p7183 = scmp.lt.s32.totalorder %s26, 1
      %s7184 = scalar_select %p7183, %s26, 1
      %p7185 = scmp.lt.s32.totalorder %s7182, 47
      %s7186 = scalar_select %p7185, %s7182, 47
      %s7187 = smul.addr %s7184, 48
      %s7188 = sadd.s32 %s7186, %s7187
      %s7189 = smul.addr %s7188, 4
      %s7190 = scalar_lea.vmem %s9, %s7189
      %p7191 = scmp.lt.s32.totalorder %s26, 1
      %s7192 = scalar_select %p7191, %s26, 1
      %s7193 = smul.addr %s7192, 8
      %s7194 = scalar_lea.vmem %s10, %s7193
      // Predicated region
      $region61: #{_lambda_.4} parent=55 // pred_check
        %p7195 = pneg %p276
      $region62: #{_lambda_.4} parent=55 // pred_check_branch
        %7197 = sbr.rel (%p7195) target = $region64
      $region63: #{_lambda_.4} parent=55 // pred_region
        %s7198 = smul.u32 24, %s27
      $region64: #{_lambda_.4} parent=55 // pred_fallthru
        _
      // Predicated region
      $region65: #{_lambda_.4} parent=55 // pred_check
        %p7199 = pneg %p302
      $region66: #{_lambda_.4} parent=55 // pred_check_branch
        %7201 = sbr.rel (%p7199) target = $region68
      $region67: #{_lambda_.4} parent=55 // pred_region
        _
      $region68: #{_lambda_.4} parent=55 // pred_fallthru
        _
    $region56: #{_lambda_.4} parent=5 // pred_fallthru
      _
    %p7202 = scmp.le.s32.totalorder 2, %s17
    // Predicated region
    $region69: #{_lambda_.4} parent=5 // pred_check
      %p7203 = pneg %p7202
    $region70: #{_lambda_.4} parent=5 // pred_check_branch
      %7205 = sbr.rel (%p7203) target = $region72
    $region71: #{_lambda_.4} parent=5 // pred_region
      %s7206 = ssub.s32 %s17, 2
      // Predicated region
      $region73: #{_lambda_.4} parent=71 // pred_check
        %p7207 = pneg %p282
      $region74: #{_lambda_.4} parent=71 // pred_check_branch
        %7209 = sbr.rel (%p7207) target = $region76
      $region75: #{_lambda_.4} parent=71 // pred_region
        %s7210 = smul.u32 24, %s29
        %p7211 = scmp.lt.s32.totalorder %s28, 1
        %s7212 = scalar_select %p7211, %s28, 1
        %p7213 = scmp.lt.s32.totalorder %s7210, 47
        %s7214 = scalar_select %p7213, %s7210, 47
        %s7215 = smul.addr %s7212, 48
        %s7216 = sadd.s32 %s7214, %s7215
        %s7217 = smul.addr %s7216, 4
        %s7218 = scalar_lea.vmem %s9, %s7217
      $region76: #{_lambda_.4} parent=71 // pred_fallthru
        _
      // Predicated region
      $region77: #{_lambda_.4} parent=71 // pred_check
        %p7219 = pneg %p308
      $region78: #{_lambda_.4} parent=71 // pred_check_branch
        %7221 = sbr.rel (%p7219) target = $region80
      $region79: #{_lambda_.4} parent=71 // pred_region
        %p7222 = scmp.lt.s32.totalorder %s28, 1
        %s7223 = scalar_select %p7222, %s28, 1
        %s7224 = smul.addr %s7223, 8
        %s7225 = scalar_lea.vmem %s10, %s7224
      $region80: #{_lambda_.4} parent=71 // pred_fallthru
        _
    $region72: #{_lambda_.4} parent=5 // pred_fallthru
      _
  $region6: #{_lambda_.4} parent=0 // loop_footer
    %s21 = sadd.s32 1, %s17
  $region7: #{_lambda_.4} parent=0 // loop_footer_branch
    %16 = sbr.rel target = $region3
  $region8: #{_lambda_.4} parent=0 // loop_exit
    _

</llo_original>
